<compile_context>
chip_gen: v7x
topology: tpu7x:2x2x1
jax: 0.10.0
libtpu: 0.0.40
codegen_flags: <defaults>
</compile_context>

<pallas_src>
import functools

import jax
import jax.numpy as jnp
from jax import lax
from jax.experimental import pallas as pl
from jax.experimental.pallas import tpu as pltpu

NB_CLASSES = 10
PAD_CLASSES = 128          # lane-dense fc2 output, sliced back to 10 in the wrapper


def _digitnet_kernel(x_ref, w1_ref, b1_ref, w2_ref, b2_ref,
                     wf1_ref, bf1_ref, wf2_ref, bf2_ref, o_ref):
    bt = x_ref.shape[4]                       # batch tile (sublane-aligned, 8)

    w1 = w1_ref[...]                          # (3, 3, 1, 32)
    b1 = b1_ref[...]                          # (1, 32)

    # ---- conv1 (1->32, k=3, VALID) + 2x2 maxpool + bias + relu ----------------
    # Produced directly in "parity" layout:
    #   a1p[(alpha, beta)][I, J, n, ci] = a1[n, 2I+alpha, 2J+beta, ci]   (6x6 pooled)
    # Input is pre-packed so x_ref[0, (r%4)*4+(q%4), r//4, q//4, n, 0] = x[n, r, q];
    # every slab below is a unit-stride slice on untiled leading dims.
    xslab = {}

    def xs(off_r, off_c):
        key = (off_r, off_c)
        if key not in xslab:
            p = (off_r % 4) * 4 + (off_c % 4)
            r0, c0 = off_r // 4, off_c // 4
            xslab[key] = x_ref[0, p, r0:r0 + 3, c0:c0 + 3, :, :]   # (3, 3, bt, 1)
        return xslab[key]

    a1p = {}
    for alpha in range(2):
        for beta in range(2):
            best = None
            for a in range(2):
                for b in range(2):
                    acc = None
                    for dy in range(3):
                        for dx in range(3):
                            # VPU shifted multiply-accumulate (conv1 stays off the MXU)
                            term = xs(2 * alpha + a + dy, 2 * beta + b + dx) * w1[dy, dx]
                            acc = term if acc is None else acc + term
                    best = acc if best is None else jnp.maximum(best, acc)
            a1p[(alpha, beta)] = jnp.maximum(best + b1, 0.0)        # (3, 3, bt, 32)

    # ---- conv2 (32->64, k=3) as im2col matmuls -------------------------------
    # All 4 pool offsets (c,d) and 4 output pixels (u,v) are folded into the M
    # dimension (rows ordered (c,d,u,v,n)); one MXU push per weight slice.
    w2 = w2_ref[...]                          # (9, 32, 64), tap-major
    y2 = None
    for dy in range(3):
        for dx in range(3):
            pieces = []
            for c in range(2):
                for d in range(2):
                    alpha, si = (c + dy) % 2, (c + dy) // 2
                    beta, sj = (d + dx) % 2, (d + dx) // 2
                    src = a1p[(alpha, beta)]
                    for u in range(2):
                        for v in range(2):
                            pieces.append(src[si + u, sj + v])      # (bt, 32)
            p_t = jnp.concatenate(pieces, axis=0)                   # (16*bt, 32)
            contrib = jnp.dot(p_t, w2[dy * 3 + dx],
                              preferred_element_type=jnp.float32)   # (16*bt, 64)
            y2 = contrib if y2 is None else y2 + contrib

    # 2x2 maxpool = elementwise max of the 4 aligned pool-offset row blocks.
    m0 = 4 * bt
    pooled = jnp.maximum(jnp.maximum(y2[0:m0], y2[m0:2 * m0]),
                         jnp.maximum(y2[2 * m0:3 * m0], y2[3 * m0:4 * m0]))
    a2 = jnp.maximum(pooled + b2_ref[...], 0.0)    # (4*bt, 64), rows = (u*2+v)*bt + n

    # ---- fc1 + relu (torch NCHW view(-1,256) folded into the weight layout) ---
    wf1 = wf1_ref[...]                        # (4, 64, nh): [u*2+v, cout, h]
    hidden = None
    for uv in range(4):
        h_uv = jnp.dot(a2[uv * bt:(uv + 1) * bt], wf1[uv],
                       preferred_element_type=jnp.float32)          # (bt, nh)
        hidden = h_uv if hidden is None else hidden + h_uv
    hidden = jnp.maximum(hidden + bf1_ref[...], 0.0)

    # ---- fc2, padded to 128 lanes for a dense store ---------------------------
    o_ref[...] = jnp.dot(hidden, wf2_ref[...],
                         preferred_element_type=jnp.float32) + bf2_ref[...]   # (bt, 128)


def _prep_input(x_nchw, bt):
    """(Np,1,14,14) NCHW -> mod-4 phase layout (G,16,4,4,bt,1).

    xq[g, rp*4+cp, rq, cq, nr, 0] = x[g*bt+nr, 0, 4*rq+rp, 4*cq+cp]."""
    n = x_nchw.shape[0]
    g = n // bt
    x = x_nchw[:, 0, :, :]                                # (N, 14, 14)
    x = jnp.pad(x, ((0, 0), (0, 2), (0, 2)))              # (N, 16, 16) (pad never read)
    x = x.reshape(n, 4, 4, 4, 4)                          # (N, Rq, Rp, Cq, Cp)
    x = jnp.transpose(x, (2, 4, 1, 3, 0))                 # (Rp, Cp, Rq, Cq, N)
    x = x.reshape(16, 4, 4, n)                            # P = Rp*4 + Cp
    x = x.reshape(16, 4, 4, g, bt)
    x = jnp.transpose(x, (3, 0, 1, 2, 4))                 # (G, 16, 4, 4, bt)
    return x[..., None].astype(jnp.float32)               # (G, 16, 4, 4, bt, 1)


def _prep_params(params):
    nh = params["wf1"].shape[1]
    w1 = params["w1"].astype(jnp.float32)                                  # (3,3,1,32)
    b1 = params["b1"].reshape(1, 32).astype(jnp.float32)
    w2 = params["w2"].reshape(9, 32, 64).astype(jnp.float32)               # tap-major
    b2 = params["b2"].reshape(1, 64).astype(jnp.float32)
    # torch flatten feature index = cout*4 + (u*2+v); kernel consumes (u*2+v, cout)
    wf1 = jnp.transpose(params["wf1"].reshape(64, 4, nh), (1, 0, 2))       # (4,64,nh)
    wf1 = wf1.astype(jnp.float32)
    bf1 = params["bf1"].reshape(1, nh).astype(jnp.float32)
    wf2 = jnp.zeros((nh, PAD_CLASSES), jnp.float32).at[:, :NB_CLASSES].set(
        params["wf2"].astype(jnp.float32))
    bf2 = jnp.zeros((1, PAD_CLASSES), jnp.float32).at[0, :NB_CLASSES].set(
        params["bf2"].astype(jnp.float32))
    return w1, b1, w2, b2, wf1, bf1, wf2, bf2


@functools.partial(jax.jit, static_argnames=("bt",))
def digitnet_forward(x_nchw, params, bt=8):
    n, cin, h, w = x_nchw.shape
    assert (cin, h, w) == (1, 14, 14), "DigitNet expects (N, 1, 14, 14) inputs"
    n_pad = ((n + bt - 1) // bt) * bt
    if n_pad != n:
        x_nchw = jnp.pad(x_nchw, ((0, n_pad - n), (0, 0), (0, 0), (0, 0)))
    g = n_pad // bt

    xq = _prep_input(x_nchw, bt)
    w1, b1, w2, b2, wf1, bf1, wf2, bf2 = _prep_params(params)
    nh = bf1.shape[1]

    flops_per_sample = (2 * 12 * 12 * 9 * 1 * 32 +     # conv1
                        2 * 4 * 4 * 9 * 32 * 64 +      # conv2
                        2 * 256 * nh +                 # fc1
                        2 * nh * NB_CLASSES)           # fc2
    param_bytes = sum(int(a.size) * 4 for a in (w1, b1, w2, b2, wf1, bf1, wf2, bf2))
    cost = pl.CostEstimate(
        flops=flops_per_sample * n_pad,
        transcendentals=0,
        bytes_accessed=int(xq.size) * 4 + param_bytes + n_pad * PAD_CLASSES * 4,
    )

    out = pl.pallas_call(
        _digitnet_kernel,
        out_shape=jax.ShapeDtypeStruct((n_pad, PAD_CLASSES), jnp.float32),
        grid_spec=pltpu.PrefetchScalarGridSpec(
            num_scalar_prefetch=0,
            grid=(g,),
            in_specs=[
                pl.BlockSpec((1, 16, 4, 4, bt, 1), lambda i: (i, 0, 0, 0, 0, 0)),
                pl.BlockSpec((3, 3, 1, 32), lambda i: (0, 0, 0, 0)),
                pl.BlockSpec((1, 32), lambda i: (0, 0)),
                pl.BlockSpec((9, 32, 64), lambda i: (0, 0, 0)),
                pl.BlockSpec((1, 64), lambda i: (0, 0)),
                pl.BlockSpec((4, 64, nh), lambda i: (0, 0, 0)),
                pl.BlockSpec((1, nh), lambda i: (0, 0)),
                pl.BlockSpec((nh, PAD_CLASSES), lambda i: (0, 0)),
                pl.BlockSpec((1, PAD_CLASSES), lambda i: (0, 0)),
            ],
            out_specs=pl.BlockSpec((bt, PAD_CLASSES), lambda i: (i, 0)),
        ),
        compiler_params=pltpu.CompilerParams(
            dimension_semantics=("parallel",),
            vmem_limit_bytes=32 * 1024 * 1024,
        ),
        cost_estimate=cost,
    )(xq, w1, b1, w2, b2, wf1, bf1, wf2, bf2)

    return out[:n, :NB_CLASSES]


def digitnet_reference(x_nchw, params):
    """Pure-JAX reference (lax conv / reduce_window) for validation."""
    x = jnp.transpose(x_nchw, (0, 2, 3, 1)).astype(jnp.float32)   # NHWC

    def conv_block(h, w, b):
        y = lax.conv_general_dilated(
            h, w, window_strides=(1, 1), padding="VALID",
            dimension_numbers=("NHWC", "HWIO", "NHWC")) + b
        y = lax.reduce_window(y, -jnp.inf, lax.max,
                              (1, 2, 2, 1), (1, 2, 2, 1), "VALID")
        return jnp.maximum(y, 0.0)

    y = conv_block(x, params["w1"], params["b1"])
    y = conv_block(y, params["w2"], params["b2"])
    flat = jnp.transpose(y, (0, 3, 1, 2)).reshape(x.shape[0], -1)  # torch view(-1, 256)
    h = jnp.maximum(flat @ params["wf1"] + params["bf1"], 0.0)
    return h @ params["wf2"] + params["bf2"]


if __name__ == "__main__":
    nb_hidden = 32
    key = jax.random.PRNGKey(0)
    ks = jax.random.split(key, 9)

    # Deterministic synthetic parameters (DigitNet(nb_hidden=32) shapes, HWIO convs).
    params = {
        "w1": jax.random.normal(ks[0], (3, 3, 1, 32), jnp.float32) * 0.1,
        "b1": jax.random.normal(ks[1], (32,), jnp.float32) * 0.1,
        "w2": jax.random.normal(ks[2], (3, 3, 32, 64), jnp.float32) * 0.05,
        "b2": jax.random.normal(ks[3], (64,), jnp.float32) * 0.05,
        "wf1": jax.random.normal(ks[4], (256, nb_hidden), jnp.float32) * 0.05,
        "bf1": jax.random.normal(ks[5], (nb_hidden,), jnp.float32) * 0.05,
        "wf2": jax.random.normal(ks[6], (nb_hidden, 10), jnp.float32) * 0.05,
        "bf2": jax.random.normal(ks[7], (10,), jnp.float32) * 0.05,
    }

    # 14x14 single-channel digits: fc1 expects 256 = 64 * 2 * 2 features.
    x = jax.random.normal(ks[8], (16, 1, 14, 14), jnp.float32)

    out = jax.block_until_ready(digitnet_forward(x, params))
    ref = jax.block_until_ready(digitnet_reference(x, params))

    assert out.shape == (16, 10), out.shape
    assert jnp.allclose(out, ref, rtol=1e-3, atol=1e-3), (out, ref)
    print("KERNEL_OK")
</pallas_src>

<mosaic_0001>
module attributes {stable_mosaic.version = 11 : i64} {
  func.func @_digitnet_kernel(%arg0: i32, %arg1: memref<1x16x4x4x8x1xf32, #tpu.memory_space<vmem>>, %arg2: memref<3x3x1x32xf32, #tpu.memory_space<vmem>>, %arg3: memref<1x32xf32, #tpu.memory_space<vmem>>, %arg4: memref<9x32x64xf32, #tpu.memory_space<vmem>>, %arg5: memref<1x64xf32, #tpu.memory_space<vmem>>, %arg6: memref<4x64x32xf32, #tpu.memory_space<vmem>>, %arg7: memref<1x32xf32, #tpu.memory_space<vmem>>, %arg8: memref<32x128xf32, #tpu.memory_space<vmem>>, %arg9: memref<1x128xf32, #tpu.memory_space<vmem>>, %arg10: memref<8x128xf32, #tpu.memory_space<vmem>>) attributes {dimension_semantics = [#tpu.dimension_semantics<parallel>], iteration_bounds = array<i64: 2>, scalar_prefetch = 0 : i64, scratch_operands = 0 : i64, tpu.core_type = #tpu.core_type<tc>, window_params = [{transform_indices = @transform_0, window_bounds = array<i64: 1, 16, 4, 4, 8, 1>}, {pipeline_mode = #tpu.pipeline_mode<synchronous>, transform_indices = @transform_1, window_bounds = array<i64: 3, 3, 1, 32>}, {pipeline_mode = #tpu.pipeline_mode<synchronous>, transform_indices = @transform_2, window_bounds = array<i64: 1, 32>}, {pipeline_mode = #tpu.pipeline_mode<synchronous>, transform_indices = @transform_3, window_bounds = array<i64: 9, 32, 64>}, {pipeline_mode = #tpu.pipeline_mode<synchronous>, transform_indices = @transform_4, window_bounds = array<i64: 1, 64>}, {pipeline_mode = #tpu.pipeline_mode<synchronous>, transform_indices = @transform_5, window_bounds = array<i64: 4, 64, 32>}, {pipeline_mode = #tpu.pipeline_mode<synchronous>, transform_indices = @transform_6, window_bounds = array<i64: 1, 32>}, {pipeline_mode = #tpu.pipeline_mode<synchronous>, transform_indices = @transform_7, window_bounds = array<i64: 32, 128>}, {pipeline_mode = #tpu.pipeline_mode<synchronous>, transform_indices = @transform_8, window_bounds = array<i64: 1, 128>}, {transform_indices = @transform_9, window_bounds = array<i64: 8, 128>}]} {
    %c0 = arith.constant 0 : index
    %c0_0 = arith.constant 0 : index
    %c0_1 = arith.constant 0 : index
    %c0_2 = arith.constant 0 : index
    %0 = vector.load %arg2[%c0, %c0_0, %c0_1, %c0_2] : memref<3x3x1x32xf32, #tpu.memory_space<vmem>>, vector<3x3x1x32xf32>
    %c0_3 = arith.constant 0 : index
    %c0_4 = arith.constant 0 : index
    %1 = vector.load %arg3[%c0_3, %c0_4] : memref<1x32xf32, #tpu.memory_space<vmem>>, vector<1x32xf32>
    %c0_5 = arith.constant 0 : index
    %c0_6 = arith.constant 0 : index
    %c0_7 = arith.constant 0 : index
    %c0_8 = arith.constant 0 : index
    %c0_9 = arith.constant 0 : index
    %c0_10 = arith.constant 0 : index
    %2 = vector.load %arg1[%c0_5, %c0_6, %c0_7, %c0_8, %c0_9, %c0_10] : memref<1x16x4x4x8x1xf32, #tpu.memory_space<vmem>>, vector<1x1x3x3x8x1xf32>
    %3 = vector.shape_cast %2 : vector<1x1x3x3x8x1xf32> to vector<3x3x8x1xf32>
    %4 = vector.extract_strided_slice %0 {offsets = [0, 0, 0, 0], sizes = [1, 1, 1, 32], strides = [1, 1, 1, 1]} : vector<3x3x1x32xf32> to vector<1x1x1x32xf32>
    %5 = vector.shape_cast %4 : vector<1x1x1x32xf32> to vector<1x32xf32>
    %6 = vector.shape_cast %5 : vector<1x32xf32> to vector<1x1x1x32xf32>
    %7 = vector.broadcast %3 : vector<3x3x8x1xf32> to vector<3x3x8x32xf32>
    %8 = vector.broadcast %6 : vector<1x1x1x32xf32> to vector<3x3x8x32xf32>
    %9 = arith.mulf %7, %8 : vector<3x3x8x32xf32>
    %c0_11 = arith.constant 0 : index
    %c1 = arith.constant 1 : index
    %c0_12 = arith.constant 0 : index
    %c0_13 = arith.constant 0 : index
    %c0_14 = arith.constant 0 : index
    %c0_15 = arith.constant 0 : index
    %10 = vector.load %arg1[%c0_11, %c1, %c0_12, %c0_13, %c0_14, %c0_15] : memref<1x16x4x4x8x1xf32, #tpu.memory_space<vmem>>, vector<1x1x3x3x8x1xf32>
    %11 = vector.shape_cast %10 : vector<1x1x3x3x8x1xf32> to vector<3x3x8x1xf32>
    %12 = vector.extract_strided_slice %0 {offsets = [0, 1, 0, 0], sizes = [1, 1, 1, 32], strides = [1, 1, 1, 1]} : vector<3x3x1x32xf32> to vector<1x1x1x32xf32>
    %13 = vector.shape_cast %12 : vector<1x1x1x32xf32> to vector<1x32xf32>
    %14 = vector.shape_cast %13 : vector<1x32xf32> to vector<1x1x1x32xf32>
    %15 = vector.broadcast %11 : vector<3x3x8x1xf32> to vector<3x3x8x32xf32>
    %16 = vector.broadcast %14 : vector<1x1x1x32xf32> to vector<3x3x8x32xf32>
    %17 = arith.mulf %15, %16 : vector<3x3x8x32xf32>
    %18 = arith.addf %9, %17 : vector<3x3x8x32xf32>
    %c0_16 = arith.constant 0 : index
    %c2 = arith.constant 2 : index
    %c0_17 = arith.constant 0 : index
    %c0_18 = arith.constant 0 : index
    %c0_19 = arith.constant 0 : index
    %c0_20 = arith.constant 0 : index
    %19 = vector.load %arg1[%c0_16, %c2, %c0_17, %c0_18, %c0_19, %c0_20] : memref<1x16x4x4x8x1xf32, #tpu.memory_space<vmem>>, vector<1x1x3x3x8x1xf32>
    %20 = vector.shape_cast %19 : vector<1x1x3x3x8x1xf32> to vector<3x3x8x1xf32>
    %21 = vector.extract_strided_slice %0 {offsets = [0, 2, 0, 0], sizes = [1, 1, 1, 32], strides = [1, 1, 1, 1]} : vector<3x3x1x32xf32> to vector<1x1x1x32xf32>
    %22 = vector.shape_cast %21 : vector<1x1x1x32xf32> to vector<1x32xf32>
    %23 = vector.shape_cast %22 : vector<1x32xf32> to vector<1x1x1x32xf32>
    %24 = vector.broadcast %20 : vector<3x3x8x1xf32> to vector<3x3x8x32xf32>
    %25 = vector.broadcast %23 : vector<1x1x1x32xf32> to vector<3x3x8x32xf32>
    %26 = arith.mulf %24, %25 : vector<3x3x8x32xf32>
    %27 = arith.addf %18, %26 : vector<3x3x8x32xf32>
    %c0_21 = arith.constant 0 : index
    %c4 = arith.constant 4 : index
    %c0_22 = arith.constant 0 : index
    %c0_23 = arith.constant 0 : index
    %c0_24 = arith.constant 0 : index
    %c0_25 = arith.constant 0 : index
    %28 = vector.load %arg1[%c0_21, %c4, %c0_22, %c0_23, %c0_24, %c0_25] : memref<1x16x4x4x8x1xf32, #tpu.memory_space<vmem>>, vector<1x1x3x3x8x1xf32>
    %29 = vector.shape_cast %28 : vector<1x1x3x3x8x1xf32> to vector<3x3x8x1xf32>
    %30 = vector.extract_strided_slice %0 {offsets = [1, 0, 0, 0], sizes = [1, 1, 1, 32], strides = [1, 1, 1, 1]} : vector<3x3x1x32xf32> to vector<1x1x1x32xf32>
    %31 = vector.shape_cast %30 : vector<1x1x1x32xf32> to vector<1x32xf32>
    %32 = vector.shape_cast %31 : vector<1x32xf32> to vector<1x1x1x32xf32>
    %33 = vector.broadcast %29 : vector<3x3x8x1xf32> to vector<3x3x8x32xf32>
    %34 = vector.broadcast %32 : vector<1x1x1x32xf32> to vector<3x3x8x32xf32>
    %35 = arith.mulf %33, %34 : vector<3x3x8x32xf32>
    %36 = arith.addf %27, %35 : vector<3x3x8x32xf32>
    %c0_26 = arith.constant 0 : index
    %c5 = arith.constant 5 : index
    %c0_27 = arith.constant 0 : index
    %c0_28 = arith.constant 0 : index
    %c0_29 = arith.constant 0 : index
    %c0_30 = arith.constant 0 : index
    %37 = vector.load %arg1[%c0_26, %c5, %c0_27, %c0_28, %c0_29, %c0_30] : memref<1x16x4x4x8x1xf32, #tpu.memory_space<vmem>>, vector<1x1x3x3x8x1xf32>
    %38 = vector.shape_cast %37 : vector<1x1x3x3x8x1xf32> to vector<3x3x8x1xf32>
    %39 = vector.extract_strided_slice %0 {offsets = [1, 1, 0, 0], sizes = [1, 1, 1, 32], strides = [1, 1, 1, 1]} : vector<3x3x1x32xf32> to vector<1x1x1x32xf32>
    %40 = vector.shape_cast %39 : vector<1x1x1x32xf32> to vector<1x32xf32>
    %41 = vector.shape_cast %40 : vector<1x32xf32> to vector<1x1x1x32xf32>
    %42 = vector.broadcast %38 : vector<3x3x8x1xf32> to vector<3x3x8x32xf32>
    %43 = vector.broadcast %41 : vector<1x1x1x32xf32> to vector<3x3x8x32xf32>
    %44 = arith.mulf %42, %43 : vector<3x3x8x32xf32>
    %45 = arith.addf %36, %44 : vector<3x3x8x32xf32>
    %c0_31 = arith.constant 0 : index
    %c6 = arith.constant 6 : index
    %c0_32 = arith.constant 0 : index
    %c0_33 = arith.constant 0 : index
    %c0_34 = arith.constant 0 : index
    %c0_35 = arith.constant 0 : index
    %46 = vector.load %arg1[%c0_31, %c6, %c0_32, %c0_33, %c0_34, %c0_35] : memref<1x16x4x4x8x1xf32, #tpu.memory_space<vmem>>, vector<1x1x3x3x8x1xf32>
    %47 = vector.shape_cast %46 : vector<1x1x3x3x8x1xf32> to vector<3x3x8x1xf32>
    %48 = vector.extract_strided_slice %0 {offsets = [1, 2, 0, 0], sizes = [1, 1, 1, 32], strides = [1, 1, 1, 1]} : vector<3x3x1x32xf32> to vector<1x1x1x32xf32>
    %49 = vector.shape_cast %48 : vector<1x1x1x32xf32> to vector<1x32xf32>
    %50 = vector.shape_cast %49 : vector<1x32xf32> to vector<1x1x1x32xf32>
    %51 = vector.broadcast %47 : vector<3x3x8x1xf32> to vector<3x3x8x32xf32>
    %52 = vector.broadcast %50 : vector<1x1x1x32xf32> to vector<3x3x8x32xf32>
    %53 = arith.mulf %51, %52 : vector<3x3x8x32xf32>
    %54 = arith.addf %45, %53 : vector<3x3x8x32xf32>
    %c0_36 = arith.constant 0 : index
    %c8 = arith.constant 8 : index
    %c0_37 = arith.constant 0 : index
    %c0_38 = arith.constant 0 : index
    %c0_39 = arith.constant 0 : index
    %c0_40 = arith.constant 0 : index
    %55 = vector.load %arg1[%c0_36, %c8, %c0_37, %c0_38, %c0_39, %c0_40] : memref<1x16x4x4x8x1xf32, #tpu.memory_space<vmem>>, vector<1x1x3x3x8x1xf32>
    %56 = vector.shape_cast %55 : vector<1x1x3x3x8x1xf32> to vector<3x3x8x1xf32>
    %57 = vector.extract_strided_slice %0 {offsets = [2, 0, 0, 0], sizes = [1, 1, 1, 32], strides = [1, 1, 1, 1]} : vector<3x3x1x32xf32> to vector<1x1x1x32xf32>
    %58 = vector.shape_cast %57 : vector<1x1x1x32xf32> to vector<1x32xf32>
    %59 = vector.shape_cast %58 : vector<1x32xf32> to vector<1x1x1x32xf32>
    %60 = vector.broadcast %56 : vector<3x3x8x1xf32> to vector<3x3x8x32xf32>
    %61 = vector.broadcast %59 : vector<1x1x1x32xf32> to vector<3x3x8x32xf32>
    %62 = arith.mulf %60, %61 : vector<3x3x8x32xf32>
    %63 = arith.addf %54, %62 : vector<3x3x8x32xf32>
    %c0_41 = arith.constant 0 : index
    %c9 = arith.constant 9 : index
    %c0_42 = arith.constant 0 : index
    %c0_43 = arith.constant 0 : index
    %c0_44 = arith.constant 0 : index
    %c0_45 = arith.constant 0 : index
    %64 = vector.load %arg1[%c0_41, %c9, %c0_42, %c0_43, %c0_44, %c0_45] : memref<1x16x4x4x8x1xf32, #tpu.memory_space<vmem>>, vector<1x1x3x3x8x1xf32>
    %65 = vector.shape_cast %64 : vector<1x1x3x3x8x1xf32> to vector<3x3x8x1xf32>
    %66 = vector.extract_strided_slice %0 {offsets = [2, 1, 0, 0], sizes = [1, 1, 1, 32], strides = [1, 1, 1, 1]} : vector<3x3x1x32xf32> to vector<1x1x1x32xf32>
    %67 = vector.shape_cast %66 : vector<1x1x1x32xf32> to vector<1x32xf32>
    %68 = vector.shape_cast %67 : vector<1x32xf32> to vector<1x1x1x32xf32>
    %69 = vector.broadcast %65 : vector<3x3x8x1xf32> to vector<3x3x8x32xf32>
    %70 = vector.broadcast %68 : vector<1x1x1x32xf32> to vector<3x3x8x32xf32>
    %71 = arith.mulf %69, %70 : vector<3x3x8x32xf32>
    %72 = arith.addf %63, %71 : vector<3x3x8x32xf32>
    %c0_46 = arith.constant 0 : index
    %c10 = arith.constant 10 : index
    %c0_47 = arith.constant 0 : index
    %c0_48 = arith.constant 0 : index
    %c0_49 = arith.constant 0 : index
    %c0_50 = arith.constant 0 : index
    %73 = vector.load %arg1[%c0_46, %c10, %c0_47, %c0_48, %c0_49, %c0_50] : memref<1x16x4x4x8x1xf32, #tpu.memory_space<vmem>>, vector<1x1x3x3x8x1xf32>
    %74 = vector.shape_cast %73 : vector<1x1x3x3x8x1xf32> to vector<3x3x8x1xf32>
    %75 = vector.extract_strided_slice %0 {offsets = [2, 2, 0, 0], sizes = [1, 1, 1, 32], strides = [1, 1, 1, 1]} : vector<3x3x1x32xf32> to vector<1x1x1x32xf32>
    %76 = vector.shape_cast %75 : vector<1x1x1x32xf32> to vector<1x32xf32>
    %77 = vector.shape_cast %76 : vector<1x32xf32> to vector<1x1x1x32xf32>
    %78 = vector.broadcast %74 : vector<3x3x8x1xf32> to vector<3x3x8x32xf32>
    %79 = vector.broadcast %77 : vector<1x1x1x32xf32> to vector<3x3x8x32xf32>
    %80 = arith.mulf %78, %79 : vector<3x3x8x32xf32>
    %81 = arith.addf %72, %80 : vector<3x3x8x32xf32>
    %82 = vector.extract_strided_slice %0 {offsets = [0, 0, 0, 0], sizes = [1, 1, 1, 32], strides = [1, 1, 1, 1]} : vector<3x3x1x32xf32> to vector<1x1x1x32xf32>
    %83 = vector.shape_cast %82 : vector<1x1x1x32xf32> to vector<1x32xf32>
    %84 = vector.shape_cast %83 : vector<1x32xf32> to vector<1x1x1x32xf32>
    %85 = vector.broadcast %11 : vector<3x3x8x1xf32> to vector<3x3x8x32xf32>
    %86 = vector.broadcast %84 : vector<1x1x1x32xf32> to vector<3x3x8x32xf32>
    %87 = arith.mulf %85, %86 : vector<3x3x8x32xf32>
    %88 = vector.extract_strided_slice %0 {offsets = [0, 1, 0, 0], sizes = [1, 1, 1, 32], strides = [1, 1, 1, 1]} : vector<3x3x1x32xf32> to vector<1x1x1x32xf32>
    %89 = vector.shape_cast %88 : vector<1x1x1x32xf32> to vector<1x32xf32>
    %90 = vector.shape_cast %89 : vector<1x32xf32> to vector<1x1x1x32xf32>
    %91 = vector.broadcast %20 : vector<3x3x8x1xf32> to vector<3x3x8x32xf32>
    %92 = vector.broadcast %90 : vector<1x1x1x32xf32> to vector<3x3x8x32xf32>
    %93 = arith.mulf %91, %92 : vector<3x3x8x32xf32>
    %94 = arith.addf %87, %93 : vector<3x3x8x32xf32>
    %c0_51 = arith.constant 0 : index
    %c3 = arith.constant 3 : index
    %c0_52 = arith.constant 0 : index
    %c0_53 = arith.constant 0 : index
    %c0_54 = arith.constant 0 : index
    %c0_55 = arith.constant 0 : index
    %95 = vector.load %arg1[%c0_51, %c3, %c0_52, %c0_53, %c0_54, %c0_55] : memref<1x16x4x4x8x1xf32, #tpu.memory_space<vmem>>, vector<1x1x3x3x8x1xf32>
    %96 = vector.shape_cast %95 : vector<1x1x3x3x8x1xf32> to vector<3x3x8x1xf32>
    %97 = vector.extract_strided_slice %0 {offsets = [0, 2, 0, 0], sizes = [1, 1, 1, 32], strides = [1, 1, 1, 1]} : vector<3x3x1x32xf32> to vector<1x1x1x32xf32>
    %98 = vector.shape_cast %97 : vector<1x1x1x32xf32> to vector<1x32xf32>
    %99 = vector.shape_cast %98 : vector<1x32xf32> to vector<1x1x1x32xf32>
    %100 = vector.broadcast %96 : vector<3x3x8x1xf32> to vector<3x3x8x32xf32>
    %101 = vector.broadcast %99 : vector<1x1x1x32xf32> to vector<3x3x8x32xf32>
    %102 = arith.mulf %100, %101 : vector<3x3x8x32xf32>
    %103 = arith.addf %94, %102 : vector<3x3x8x32xf32>
    %104 = vector.extract_strided_slice %0 {offsets = [1, 0, 0, 0], sizes = [1, 1, 1, 32], strides = [1, 1, 1, 1]} : vector<3x3x1x32xf32> to vector<1x1x1x32xf32>
    %105 = vector.shape_cast %104 : vector<1x1x1x32xf32> to vector<1x32xf32>
    %106 = vector.shape_cast %105 : vector<1x32xf32> to vector<1x1x1x32xf32>
    %107 = vector.broadcast %38 : vector<3x3x8x1xf32> to vector<3x3x8x32xf32>
    %108 = vector.broadcast %106 : vector<1x1x1x32xf32> to vector<3x3x8x32xf32>
    %109 = arith.mulf %107, %108 : vector<3x3x8x32xf32>
    %110 = arith.addf %103, %109 : vector<3x3x8x32xf32>
    %111 = vector.extract_strided_slice %0 {offsets = [1, 1, 0, 0], sizes = [1, 1, 1, 32], strides = [1, 1, 1, 1]} : vector<3x3x1x32xf32> to vector<1x1x1x32xf32>
    %112 = vector.shape_cast %111 : vector<1x1x1x32xf32> to vector<1x32xf32>
    %113 = vector.shape_cast %112 : vector<1x32xf32> to vector<1x1x1x32xf32>
    %114 = vector.broadcast %47 : vector<3x3x8x1xf32> to vector<3x3x8x32xf32>
    %115 = vector.broadcast %113 : vector<1x1x1x32xf32> to vector<3x3x8x32xf32>
    %116 = arith.mulf %114, %115 : vector<3x3x8x32xf32>
    %117 = arith.addf %110, %116 : vector<3x3x8x32xf32>
    %c0_56 = arith.constant 0 : index
    %c7 = arith.constant 7 : index
    %c0_57 = arith.constant 0 : index
    %c0_58 = arith.constant 0 : index
    %c0_59 = arith.constant 0 : index
    %c0_60 = arith.constant 0 : index
    %118 = vector.load %arg1[%c0_56, %c7, %c0_57, %c0_58, %c0_59, %c0_60] : memref<1x16x4x4x8x1xf32, #tpu.memory_space<vmem>>, vector<1x1x3x3x8x1xf32>
    %119 = vector.shape_cast %118 : vector<1x1x3x3x8x1xf32> to vector<3x3x8x1xf32>
    %120 = vector.extract_strided_slice %0 {offsets = [1, 2, 0, 0], sizes = [1, 1, 1, 32], strides = [1, 1, 1, 1]} : vector<3x3x1x32xf32> to vector<1x1x1x32xf32>
    %121 = vector.shape_cast %120 : vector<1x1x1x32xf32> to vector<1x32xf32>
    %122 = vector.shape_cast %121 : vector<1x32xf32> to vector<1x1x1x32xf32>
    %123 = vector.broadcast %119 : vector<3x3x8x1xf32> to vector<3x3x8x32xf32>
    %124 = vector.broadcast %122 : vector<1x1x1x32xf32> to vector<3x3x8x32xf32>
    %125 = arith.mulf %123, %124 : vector<3x3x8x32xf32>
    %126 = arith.addf %117, %125 : vector<3x3x8x32xf32>
    %127 = vector.extract_strided_slice %0 {offsets = [2, 0, 0, 0], sizes = [1, 1, 1, 32], strides = [1, 1, 1, 1]} : vector<3x3x1x32xf32> to vector<1x1x1x32xf32>
    %128 = vector.shape_cast %127 : vector<1x1x1x32xf32> to vector<1x32xf32>
    %129 = vector.shape_cast %128 : vector<1x32xf32> to vector<1x1x1x32xf32>
    %130 = vector.broadcast %65 : vector<3x3x8x1xf32> to vector<3x3x8x32xf32>
    %131 = vector.broadcast %129 : vector<1x1x1x32xf32> to vector<3x3x8x32xf32>
    %132 = arith.mulf %130, %131 : vector<3x3x8x32xf32>
    %133 = arith.addf %126, %132 : vector<3x3x8x32xf32>
    %134 = vector.extract_strided_slice %0 {offsets = [2, 1, 0, 0], sizes = [1, 1, 1, 32], strides = [1, 1, 1, 1]} : vector<3x3x1x32xf32> to vector<1x1x1x32xf32>
    %135 = vector.shape_cast %134 : vector<1x1x1x32xf32> to vector<1x32xf32>
    %136 = vector.shape_cast %135 : vector<1x32xf32> to vector<1x1x1x32xf32>
    %137 = vector.broadcast %74 : vector<3x3x8x1xf32> to vector<3x3x8x32xf32>
    %138 = vector.broadcast %136 : vector<1x1x1x32xf32> to vector<3x3x8x32xf32>
    %139 = arith.mulf %137, %138 : vector<3x3x8x32xf32>
    %140 = arith.addf %133, %139 : vector<3x3x8x32xf32>
    %c0_61 = arith.constant 0 : index
    %c11 = arith.constant 11 : index
    %c0_62 = arith.constant 0 : index
    %c0_63 = arith.constant 0 : index
    %c0_64 = arith.constant 0 : index
    %c0_65 = arith.constant 0 : index
    %141 = vector.load %arg1[%c0_61, %c11, %c0_62, %c0_63, %c0_64, %c0_65] : memref<1x16x4x4x8x1xf32, #tpu.memory_space<vmem>>, vector<1x1x3x3x8x1xf32>
    %142 = vector.shape_cast %141 : vector<1x1x3x3x8x1xf32> to vector<3x3x8x1xf32>
    %143 = vector.extract_strided_slice %0 {offsets = [2, 2, 0, 0], sizes = [1, 1, 1, 32], strides = [1, 1, 1, 1]} : vector<3x3x1x32xf32> to vector<1x1x1x32xf32>
    %144 = vector.shape_cast %143 : vector<1x1x1x32xf32> to vector<1x32xf32>
    %145 = vector.shape_cast %144 : vector<1x32xf32> to vector<1x1x1x32xf32>
    %146 = vector.broadcast %142 : vector<3x3x8x1xf32> to vector<3x3x8x32xf32>
    %147 = vector.broadcast %145 : vector<1x1x1x32xf32> to vector<3x3x8x32xf32>
    %148 = arith.mulf %146, %147 : vector<3x3x8x32xf32>
    %149 = arith.addf %140, %148 : vector<3x3x8x32xf32>
    %150 = arith.maximumf %81, %149 : vector<3x3x8x32xf32>
    %151 = vector.extract_strided_slice %0 {offsets = [0, 0, 0, 0], sizes = [1, 1, 1, 32], strides = [1, 1, 1, 1]} : vector<3x3x1x32xf32> to vector<1x1x1x32xf32>
    %152 = vector.shape_cast %151 : vector<1x1x1x32xf32> to vector<1x32xf32>
    %153 = vector.shape_cast %152 : vector<1x32xf32> to vector<1x1x1x32xf32>
    %154 = vector.broadcast %29 : vector<3x3x8x1xf32> to vector<3x3x8x32xf32>
    %155 = vector.broadcast %153 : vector<1x1x1x32xf32> to vector<3x3x8x32xf32>
    %156 = arith.mulf %154, %155 : vector<3x3x8x32xf32>
    %157 = vector.extract_strided_slice %0 {offsets = [0, 1, 0, 0], sizes = [1, 1, 1, 32], strides = [1, 1, 1, 1]} : vector<3x3x1x32xf32> to vector<1x1x1x32xf32>
    %158 = vector.shape_cast %157 : vector<1x1x1x32xf32> to vector<1x32xf32>
    %159 = vector.shape_cast %158 : vector<1x32xf32> to vector<1x1x1x32xf32>
    %160 = vector.broadcast %38 : vector<3x3x8x1xf32> to vector<3x3x8x32xf32>
    %161 = vector.broadcast %159 : vector<1x1x1x32xf32> to vector<3x3x8x32xf32>
    %162 = arith.mulf %160, %161 : vector<3x3x8x32xf32>
    %163 = arith.addf %156, %162 : vector<3x3x8x32xf32>
    %164 = vector.extract_strided_slice %0 {offsets = [0, 2, 0, 0], sizes = [1, 1, 1, 32], strides = [1, 1, 1, 1]} : vector<3x3x1x32xf32> to vector<1x1x1x32xf32>
    %165 = vector.shape_cast %164 : vector<1x1x1x32xf32> to vector<1x32xf32>
    %166 = vector.shape_cast %165 : vector<1x32xf32> to vector<1x1x1x32xf32>
    %167 = vector.broadcast %47 : vector<3x3x8x1xf32> to vector<3x3x8x32xf32>
    %168 = vector.broadcast %166 : vector<1x1x1x32xf32> to vector<3x3x8x32xf32>
    %169 = arith.mulf %167, %168 : vector<3x3x8x32xf32>
    %170 = arith.addf %163, %169 : vector<3x3x8x32xf32>
    %171 = vector.extract_strided_slice %0 {offsets = [1, 0, 0, 0], sizes = [1, 1, 1, 32], strides = [1, 1, 1, 1]} : vector<3x3x1x32xf32> to vector<1x1x1x32xf32>
    %172 = vector.shape_cast %171 : vector<1x1x1x32xf32> to vector<1x32xf32>
    %173 = vector.shape_cast %172 : vector<1x32xf32> to vector<1x1x1x32xf32>
    %174 = vector.broadcast %56 : vector<3x3x8x1xf32> to vector<3x3x8x32xf32>
    %175 = vector.broadcast %173 : vector<1x1x1x32xf32> to vector<3x3x8x32xf32>
    %176 = arith.mulf %174, %175 : vector<3x3x8x32xf32>
    %177 = arith.addf %170, %176 : vector<3x3x8x32xf32>
    %178 = vector.extract_strided_slice %0 {offsets = [1, 1, 0, 0], sizes = [1, 1, 1, 32], strides = [1, 1, 1, 1]} : vector<3x3x1x32xf32> to vector<1x1x1x32xf32>
    %179 = vector.shape_cast %178 : vector<1x1x1x32xf32> to vector<1x32xf32>
    %180 = vector.shape_cast %179 : vector<1x32xf32> to vector<1x1x1x32xf32>
    %181 = vector.broadcast %65 : vector<3x3x8x1xf32> to vector<3x3x8x32xf32>
    %182 = vector.broadcast %180 : vector<1x1x1x32xf32> to vector<3x3x8x32xf32>
    %183 = arith.mulf %181, %182 : vector<3x3x8x32xf32>
    %184 = arith.addf %177, %183 : vector<3x3x8x32xf32>
    %185 = vector.extract_strided_slice %0 {offsets = [1, 2, 0, 0], sizes = [1, 1, 1, 32], strides = [1, 1, 1, 1]} : vector<3x3x1x32xf32> to vector<1x1x1x32xf32>
    %186 = vector.shape_cast %185 : vector<1x1x1x32xf32> to vector<1x32xf32>
    %187 = vector.shape_cast %186 : vector<1x32xf32> to vector<1x1x1x32xf32>
    %188 = vector.broadcast %74 : vector<3x3x8x1xf32> to vector<3x3x8x32xf32>
    %189 = vector.broadcast %187 : vector<1x1x1x32xf32> to vector<3x3x8x32xf32>
    %190 = arith.mulf %188, %189 : vector<3x3x8x32xf32>
    %191 = arith.addf %184, %190 : vector<3x3x8x32xf32>
    %c0_66 = arith.constant 0 : index
    %c12 = arith.constant 12 : index
    %c0_67 = arith.constant 0 : index
    %c0_68 = arith.constant 0 : index
    %c0_69 = arith.constant 0 : index
    %c0_70 = arith.constant 0 : index
    %192 = vector.load %arg1[%c0_66, %c12, %c0_67, %c0_68, %c0_69, %c0_70] : memref<1x16x4x4x8x1xf32, #tpu.memory_space<vmem>>, vector<1x1x3x3x8x1xf32>
    %193 = vector.shape_cast %192 : vector<1x1x3x3x8x1xf32> to vector<3x3x8x1xf32>
    %194 = vector.extract_strided_slice %0 {offsets = [2, 0, 0, 0], sizes = [1, 1, 1, 32], strides = [1, 1, 1, 1]} : vector<3x3x1x32xf32> to vector<1x1x1x32xf32>
    %195 = vector.shape_cast %194 : vector<1x1x1x32xf32> to vector<1x32xf32>
    %196 = vector.shape_cast %195 : vector<1x32xf32> to vector<1x1x1x32xf32>
    %197 = vector.broadcast %193 : vector<3x3x8x1xf32> to vector<3x3x8x32xf32>
    %198 = vector.broadcast %196 : vector<1x1x1x32xf32> to vector<3x3x8x32xf32>
    %199 = arith.mulf %197, %198 : vector<3x3x8x32xf32>
    %200 = arith.addf %191, %199 : vector<3x3x8x32xf32>
    %c0_71 = arith.constant 0 : index
    %c13 = arith.constant 13 : index
    %c0_72 = arith.constant 0 : index
    %c0_73 = arith.constant 0 : index
    %c0_74 = arith.constant 0 : index
    %c0_75 = arith.constant 0 : index
    %201 = vector.load %arg1[%c0_71, %c13, %c0_72, %c0_73, %c0_74, %c0_75] : memref<1x16x4x4x8x1xf32, #tpu.memory_space<vmem>>, vector<1x1x3x3x8x1xf32>
    %202 = vector.shape_cast %201 : vector<1x1x3x3x8x1xf32> to vector<3x3x8x1xf32>
    %203 = vector.extract_strided_slice %0 {offsets = [2, 1, 0, 0], sizes = [1, 1, 1, 32], strides = [1, 1, 1, 1]} : vector<3x3x1x32xf32> to vector<1x1x1x32xf32>
    %204 = vector.shape_cast %203 : vector<1x1x1x32xf32> to vector<1x32xf32>
    %205 = vector.shape_cast %204 : vector<1x32xf32> to vector<1x1x1x32xf32>
    %206 = vector.broadcast %202 : vector<3x3x8x1xf32> to vector<3x3x8x32xf32>
    %207 = vector.broadcast %205 : vector<1x1x1x32xf32> to vector<3x3x8x32xf32>
    %208 = arith.mulf %206, %207 : vector<3x3x8x32xf32>
    %209 = arith.addf %200, %208 : vector<3x3x8x32xf32>
    %c0_76 = arith.constant 0 : index
    %c14 = arith.constant 14 : index
    %c0_77 = arith.constant 0 : index
    %c0_78 = arith.constant 0 : index
    %c0_79 = arith.constant 0 : index
    %c0_80 = arith.constant 0 : index
    %210 = vector.load %arg1[%c0_76, %c14, %c0_77, %c0_78, %c0_79, %c0_80] : memref<1x16x4x4x8x1xf32, #tpu.memory_space<vmem>>, vector<1x1x3x3x8x1xf32>
    %211 = vector.shape_cast %210 : vector<1x1x3x3x8x1xf32> to vector<3x3x8x1xf32>
    %212 = vector.extract_strided_slice %0 {offsets = [2, 2, 0, 0], sizes = [1, 1, 1, 32], strides = [1, 1, 1, 1]} : vector<3x3x1x32xf32> to vector<1x1x1x32xf32>
    %213 = vector.shape_cast %212 : vector<1x1x1x32xf32> to vector<1x32xf32>
    %214 = vector.shape_cast %213 : vector<1x32xf32> to vector<1x1x1x32xf32>
    %215 = vector.broadcast %211 : vector<3x3x8x1xf32> to vector<3x3x8x32xf32>
    %216 = vector.broadcast %214 : vector<1x1x1x32xf32> to vector<3x3x8x32xf32>
    %217 = arith.mulf %215, %216 : vector<3x3x8x32xf32>
    %218 = arith.addf %209, %217 : vector<3x3x8x32xf32>
    %219 = arith.maximumf %150, %218 : vector<3x3x8x32xf32>
    %220 = vector.extract_strided_slice %0 {offsets = [0, 0, 0, 0], sizes = [1, 1, 1, 32], strides = [1, 1, 1, 1]} : vector<3x3x1x32xf32> to vector<1x1x1x32xf32>
    %221 = vector.shape_cast %220 : vector<1x1x1x32xf32> to vector<1x32xf32>
    %222 = vector.shape_cast %221 : vector<1x32xf32> to vector<1x1x1x32xf32>
    %223 = vector.broadcast %38 : vector<3x3x8x1xf32> to vector<3x3x8x32xf32>
    %224 = vector.broadcast %222 : vector<1x1x1x32xf32> to vector<3x3x8x32xf32>
    %225 = arith.mulf %223, %224 : vector<3x3x8x32xf32>
    %226 = vector.extract_strided_slice %0 {offsets = [0, 1, 0, 0], sizes = [1, 1, 1, 32], strides = [1, 1, 1, 1]} : vector<3x3x1x32xf32> to vector<1x1x1x32xf32>
    %227 = vector.shape_cast %226 : vector<1x1x1x32xf32> to vector<1x32xf32>
    %228 = vector.shape_cast %227 : vector<1x32xf32> to vector<1x1x1x32xf32>
    %229 = vector.broadcast %47 : vector<3x3x8x1xf32> to vector<3x3x8x32xf32>
    %230 = vector.broadcast %228 : vector<1x1x1x32xf32> to vector<3x3x8x32xf32>
    %231 = arith.mulf %229, %230 : vector<3x3x8x32xf32>
    %232 = arith.addf %225, %231 : vector<3x3x8x32xf32>
    %233 = vector.extract_strided_slice %0 {offsets = [0, 2, 0, 0], sizes = [1, 1, 1, 32], strides = [1, 1, 1, 1]} : vector<3x3x1x32xf32> to vector<1x1x1x32xf32>
    %234 = vector.shape_cast %233 : vector<1x1x1x32xf32> to vector<1x32xf32>
    %235 = vector.shape_cast %234 : vector<1x32xf32> to vector<1x1x1x32xf32>
    %236 = vector.broadcast %119 : vector<3x3x8x1xf32> to vector<3x3x8x32xf32>
    %237 = vector.broadcast %235 : vector<1x1x1x32xf32> to vector<3x3x8x32xf32>
    %238 = arith.mulf %236, %237 : vector<3x3x8x32xf32>
    %239 = arith.addf %232, %238 : vector<3x3x8x32xf32>
    %240 = vector.extract_strided_slice %0 {offsets = [1, 0, 0, 0], sizes = [1, 1, 1, 32], strides = [1, 1, 1, 1]} : vector<3x3x1x32xf32> to vector<1x1x1x32xf32>
    %241 = vector.shape_cast %240 : vector<1x1x1x32xf32> to vector<1x32xf32>
    %242 = vector.shape_cast %241 : vector<1x32xf32> to vector<1x1x1x32xf32>
    %243 = vector.broadcast %65 : vector<3x3x8x1xf32> to vector<3x3x8x32xf32>
    %244 = vector.broadcast %242 : vector<1x1x1x32xf32> to vector<3x3x8x32xf32>
    %245 = arith.mulf %243, %244 : vector<3x3x8x32xf32>
    %246 = arith.addf %239, %245 : vector<3x3x8x32xf32>
    %247 = vector.extract_strided_slice %0 {offsets = [1, 1, 0, 0], sizes = [1, 1, 1, 32], strides = [1, 1, 1, 1]} : vector<3x3x1x32xf32> to vector<1x1x1x32xf32>
    %248 = vector.shape_cast %247 : vector<1x1x1x32xf32> to vector<1x32xf32>
    %249 = vector.shape_cast %248 : vector<1x32xf32> to vector<1x1x1x32xf32>
    %250 = vector.broadcast %74 : vector<3x3x8x1xf32> to vector<3x3x8x32xf32>
    %251 = vector.broadcast %249 : vector<1x1x1x32xf32> to vector<3x3x8x32xf32>
    %252 = arith.mulf %250, %251 : vector<3x3x8x32xf32>
    %253 = arith.addf %246, %252 : vector<3x3x8x32xf32>
    %254 = vector.extract_strided_slice %0 {offsets = [1, 2, 0, 0], sizes = [1, 1, 1, 32], strides = [1, 1, 1, 1]} : vector<3x3x1x32xf32> to vector<1x1x1x32xf32>
    %255 = vector.shape_cast %254 : vector<1x1x1x32xf32> to vector<1x32xf32>
    %256 = vector.shape_cast %255 : vector<1x32xf32> to vector<1x1x1x32xf32>
    %257 = vector.broadcast %142 : vector<3x3x8x1xf32> to vector<3x3x8x32xf32>
    %258 = vector.broadcast %256 : vector<1x1x1x32xf32> to vector<3x3x8x32xf32>
    %259 = arith.mulf %257, %258 : vector<3x3x8x32xf32>
    %260 = arith.addf %253, %259 : vector<3x3x8x32xf32>
    %261 = vector.extract_strided_slice %0 {offsets = [2, 0, 0, 0], sizes = [1, 1, 1, 32], strides = [1, 1, 1, 1]} : vector<3x3x1x32xf32> to vector<1x1x1x32xf32>
    %262 = vector.shape_cast %261 : vector<1x1x1x32xf32> to vector<1x32xf32>
    %263 = vector.shape_cast %262 : vector<1x32xf32> to vector<1x1x1x32xf32>
    %264 = vector.broadcast %202 : vector<3x3x8x1xf32> to vector<3x3x8x32xf32>
    %265 = vector.broadcast %263 : vector<1x1x1x32xf32> to vector<3x3x8x32xf32>
    %266 = arith.mulf %264, %265 : vector<3x3x8x32xf32>
    %267 = arith.addf %260, %266 : vector<3x3x8x32xf32>
    %268 = vector.extract_strided_slice %0 {offsets = [2, 1, 0, 0], sizes = [1, 1, 1, 32], strides = [1, 1, 1, 1]} : vector<3x3x1x32xf32> to vector<1x1x1x32xf32>
    %269 = vector.shape_cast %268 : vector<1x1x1x32xf32> to vector<1x32xf32>
    %270 = vector.shape_cast %269 : vector<1x32xf32> to vector<1x1x1x32xf32>
    %271 = vector.broadcast %211 : vector<3x3x8x1xf32> to vector<3x3x8x32xf32>
    %272 = vector.broadcast %270 : vector<1x1x1x32xf32> to vector<3x3x8x32xf32>
    %273 = arith.mulf %271, %272 : vector<3x3x8x32xf32>
    %274 = arith.addf %267, %273 : vector<3x3x8x32xf32>
    %c0_81 = arith.constant 0 : index
    %c15 = arith.constant 15 : index
    %c0_82 = arith.constant 0 : index
    %c0_83 = arith.constant 0 : index
    %c0_84 = arith.constant 0 : index
    %c0_85 = arith.constant 0 : index
    %275 = vector.load %arg1[%c0_81, %c15, %c0_82, %c0_83, %c0_84, %c0_85] : memref<1x16x4x4x8x1xf32, #tpu.memory_space<vmem>>, vector<1x1x3x3x8x1xf32>
    %276 = vector.shape_cast %275 : vector<1x1x3x3x8x1xf32> to vector<3x3x8x1xf32>
    %277 = vector.extract_strided_slice %0 {offsets = [2, 2, 0, 0], sizes = [1, 1, 1, 32], strides = [1, 1, 1, 1]} : vector<3x3x1x32xf32> to vector<1x1x1x32xf32>
    %278 = vector.shape_cast %277 : vector<1x1x1x32xf32> to vector<1x32xf32>
    %279 = vector.shape_cast %278 : vector<1x32xf32> to vector<1x1x1x32xf32>
    %280 = vector.broadcast %276 : vector<3x3x8x1xf32> to vector<3x3x8x32xf32>
    %281 = vector.broadcast %279 : vector<1x1x1x32xf32> to vector<3x3x8x32xf32>
    %282 = arith.mulf %280, %281 : vector<3x3x8x32xf32>
    %283 = arith.addf %274, %282 : vector<3x3x8x32xf32>
    %284 = arith.maximumf %219, %283 : vector<3x3x8x32xf32>
    %285 = vector.shape_cast %1 : vector<1x32xf32> to vector<1x1x1x32xf32>
    %286 = vector.broadcast %285 : vector<1x1x1x32xf32> to vector<3x3x8x32xf32>
    %287 = arith.addf %284, %286 : vector<3x3x8x32xf32>
    %cst = arith.constant 0.000000e+00 : f32
    %288 = vector.broadcast %cst : f32 to vector<3x3x8x32xf32>
    %289 = arith.maximumf %287, %288 : vector<3x3x8x32xf32>
    %290 = vector.extract_strided_slice %0 {offsets = [0, 0, 0, 0], sizes = [1, 1, 1, 32], strides = [1, 1, 1, 1]} : vector<3x3x1x32xf32> to vector<1x1x1x32xf32>
    %291 = vector.shape_cast %290 : vector<1x1x1x32xf32> to vector<1x32xf32>
    %292 = vector.shape_cast %291 : vector<1x32xf32> to vector<1x1x1x32xf32>
    %293 = vector.broadcast %20 : vector<3x3x8x1xf32> to vector<3x3x8x32xf32>
    %294 = vector.broadcast %292 : vector<1x1x1x32xf32> to vector<3x3x8x32xf32>
    %295 = arith.mulf %293, %294 : vector<3x3x8x32xf32>
    %296 = vector.extract_strided_slice %0 {offsets = [0, 1, 0, 0], sizes = [1, 1, 1, 32], strides = [1, 1, 1, 1]} : vector<3x3x1x32xf32> to vector<1x1x1x32xf32>
    %297 = vector.shape_cast %296 : vector<1x1x1x32xf32> to vector<1x32xf32>
    %298 = vector.shape_cast %297 : vector<1x32xf32> to vector<1x1x1x32xf32>
    %299 = vector.broadcast %96 : vector<3x3x8x1xf32> to vector<3x3x8x32xf32>
    %300 = vector.broadcast %298 : vector<1x1x1x32xf32> to vector<3x3x8x32xf32>
    %301 = arith.mulf %299, %300 : vector<3x3x8x32xf32>
    %302 = arith.addf %295, %301 : vector<3x3x8x32xf32>
    %c0_86 = arith.constant 0 : index
    %c0_87 = arith.constant 0 : index
    %c0_88 = arith.constant 0 : index
    %c1_89 = arith.constant 1 : index
    %c0_90 = arith.constant 0 : index
    %c0_91 = arith.constant 0 : index
    %303 = vector.load %arg1[%c0_86, %c0_87, %c0_88, %c1_89, %c0_90, %c0_91] : memref<1x16x4x4x8x1xf32, #tpu.memory_space<vmem>>, vector<1x1x3x3x8x1xf32>
    %304 = vector.shape_cast %303 : vector<1x1x3x3x8x1xf32> to vector<3x3x8x1xf32>
    %305 = vector.extract_strided_slice %0 {offsets = [0, 2, 0, 0], sizes = [1, 1, 1, 32], strides = [1, 1, 1, 1]} : vector<3x3x1x32xf32> to vector<1x1x1x32xf32>
    %306 = vector.shape_cast %305 : vector<1x1x1x32xf32> to vector<1x32xf32>
    %307 = vector.shape_cast %306 : vector<1x32xf32> to vector<1x1x1x32xf32>
    %308 = vector.broadcast %304 : vector<3x3x8x1xf32> to vector<3x3x8x32xf32>
    %309 = vector.broadcast %307 : vector<1x1x1x32xf32> to vector<3x3x8x32xf32>
    %310 = arith.mulf %308, %309 : vector<3x3x8x32xf32>
    %311 = arith.addf %302, %310 : vector<3x3x8x32xf32>
    %312 = vector.extract_strided_slice %0 {offsets = [1, 0, 0, 0], sizes = [1, 1, 1, 32], strides = [1, 1, 1, 1]} : vector<3x3x1x32xf32> to vector<1x1x1x32xf32>
    %313 = vector.shape_cast %312 : vector<1x1x1x32xf32> to vector<1x32xf32>
    %314 = vector.shape_cast %313 : vector<1x32xf32> to vector<1x1x1x32xf32>
    %315 = vector.broadcast %47 : vector<3x3x8x1xf32> to vector<3x3x8x32xf32>
    %316 = vector.broadcast %314 : vector<1x1x1x32xf32> to vector<3x3x8x32xf32>
    %317 = arith.mulf %315, %316 : vector<3x3x8x32xf32>
    %318 = arith.addf %311, %317 : vector<3x3x8x32xf32>
    %319 = vector.extract_strided_slice %0 {offsets = [1, 1, 0, 0], sizes = [1, 1, 1, 32], strides = [1, 1, 1, 1]} : vector<3x3x1x32xf32> to vector<1x1x1x32xf32>
    %320 = vector.shape_cast %319 : vector<1x1x1x32xf32> to vector<1x32xf32>
    %321 = vector.shape_cast %320 : vector<1x32xf32> to vector<1x1x1x32xf32>
    %322 = vector.broadcast %119 : vector<3x3x8x1xf32> to vector<3x3x8x32xf32>
    %323 = vector.broadcast %321 : vector<1x1x1x32xf32> to vector<3x3x8x32xf32>
    %324 = arith.mulf %322, %323 : vector<3x3x8x32xf32>
    %325 = arith.addf %318, %324 : vector<3x3x8x32xf32>
    %c0_92 = arith.constant 0 : index
    %c4_93 = arith.constant 4 : index
    %c0_94 = arith.constant 0 : index
    %c1_95 = arith.constant 1 : index
    %c0_96 = arith.constant 0 : index
    %c0_97 = arith.constant 0 : index
    %326 = vector.load %arg1[%c0_92, %c4_93, %c0_94, %c1_95, %c0_96, %c0_97] : memref<1x16x4x4x8x1xf32, #tpu.memory_space<vmem>>, vector<1x1x3x3x8x1xf32>
    %327 = vector.shape_cast %326 : vector<1x1x3x3x8x1xf32> to vector<3x3x8x1xf32>
    %328 = vector.extract_strided_slice %0 {offsets = [1, 2, 0, 0], sizes = [1, 1, 1, 32], strides = [1, 1, 1, 1]} : vector<3x3x1x32xf32> to vector<1x1x1x32xf32>
    %329 = vector.shape_cast %328 : vector<1x1x1x32xf32> to vector<1x32xf32>
    %330 = vector.shape_cast %329 : vector<1x32xf32> to vector<1x1x1x32xf32>
    %331 = vector.broadcast %327 : vector<3x3x8x1xf32> to vector<3x3x8x32xf32>
    %332 = vector.broadcast %330 : vector<1x1x1x32xf32> to vector<3x3x8x32xf32>
    %333 = arith.mulf %331, %332 : vector<3x3x8x32xf32>
    %334 = arith.addf %325, %333 : vector<3x3x8x32xf32>
    %335 = vector.extract_strided_slice %0 {offsets = [2, 0, 0, 0], sizes = [1, 1, 1, 32], strides = [1, 1, 1, 1]} : vector<3x3x1x32xf32> to vector<1x1x1x32xf32>
    %336 = vector.shape_cast %335 : vector<1x1x1x32xf32> to vector<1x32xf32>
    %337 = vector.shape_cast %336 : vector<1x32xf32> to vector<1x1x1x32xf32>
    %338 = vector.broadcast %74 : vector<3x3x8x1xf32> to vector<3x3x8x32xf32>
    %339 = vector.broadcast %337 : vector<1x1x1x32xf32> to vector<3x3x8x32xf32>
    %340 = arith.mulf %338, %339 : vector<3x3x8x32xf32>
    %341 = arith.addf %334, %340 : vector<3x3x8x32xf32>
    %342 = vector.extract_strided_slice %0 {offsets = [2, 1, 0, 0], sizes = [1, 1, 1, 32], strides = [1, 1, 1, 1]} : vector<3x3x1x32xf32> to vector<1x1x1x32xf32>
    %343 = vector.shape_cast %342 : vector<1x1x1x32xf32> to vector<1x32xf32>
    %344 = vector.shape_cast %343 : vector<1x32xf32> to vector<1x1x1x32xf32>
    %345 = vector.broadcast %142 : vector<3x3x8x1xf32> to vector<3x3x8x32xf32>
    %346 = vector.broadcast %344 : vector<1x1x1x32xf32> to vector<3x3x8x32xf32>
    %347 = arith.mulf %345, %346 : vector<3x3x8x32xf32>
    %348 = arith.addf %341, %347 : vector<3x3x8x32xf32>
    %c0_98 = arith.constant 0 : index
    %c8_99 = arith.constant 8 : index
    %c0_100 = arith.constant 0 : index
    %c1_101 = arith.constant 1 : index
    %c0_102 = arith.constant 0 : index
    %c0_103 = arith.constant 0 : index
    %349 = vector.load %arg1[%c0_98, %c8_99, %c0_100, %c1_101, %c0_102, %c0_103] : memref<1x16x4x4x8x1xf32, #tpu.memory_space<vmem>>, vector<1x1x3x3x8x1xf32>
    %350 = vector.shape_cast %349 : vector<1x1x3x3x8x1xf32> to vector<3x3x8x1xf32>
    %351 = vector.extract_strided_slice %0 {offsets = [2, 2, 0, 0], sizes = [1, 1, 1, 32], strides = [1, 1, 1, 1]} : vector<3x3x1x32xf32> to vector<1x1x1x32xf32>
    %352 = vector.shape_cast %351 : vector<1x1x1x32xf32> to vector<1x32xf32>
    %353 = vector.shape_cast %352 : vector<1x32xf32> to vector<1x1x1x32xf32>
    %354 = vector.broadcast %350 : vector<3x3x8x1xf32> to vector<3x3x8x32xf32>
    %355 = vector.broadcast %353 : vector<1x1x1x32xf32> to vector<3x3x8x32xf32>
    %356 = arith.mulf %354, %355 : vector<3x3x8x32xf32>
    %357 = arith.addf %348, %356 : vector<3x3x8x32xf32>
    %358 = vector.extract_strided_slice %0 {offsets = [0, 0, 0, 0], sizes = [1, 1, 1, 32], strides = [1, 1, 1, 1]} : vector<3x3x1x32xf32> to vector<1x1x1x32xf32>
    %359 = vector.shape_cast %358 : vector<1x1x1x32xf32> to vector<1x32xf32>
    %360 = vector.shape_cast %359 : vector<1x32xf32> to vector<1x1x1x32xf32>
    %361 = vector.broadcast %96 : vector<3x3x8x1xf32> to vector<3x3x8x32xf32>
    %362 = vector.broadcast %360 : vector<1x1x1x32xf32> to vector<3x3x8x32xf32>
    %363 = arith.mulf %361, %362 : vector<3x3x8x32xf32>
    %364 = vector.extract_strided_slice %0 {offsets = [0, 1, 0, 0], sizes = [1, 1, 1, 32], strides = [1, 1, 1, 1]} : vector<3x3x1x32xf32> to vector<1x1x1x32xf32>
    %365 = vector.shape_cast %364 : vector<1x1x1x32xf32> to vector<1x32xf32>
    %366 = vector.shape_cast %365 : vector<1x32xf32> to vector<1x1x1x32xf32>
    %367 = vector.broadcast %304 : vector<3x3x8x1xf32> to vector<3x3x8x32xf32>
    %368 = vector.broadcast %366 : vector<1x1x1x32xf32> to vector<3x3x8x32xf32>
    %369 = arith.mulf %367, %368 : vector<3x3x8x32xf32>
    %370 = arith.addf %363, %369 : vector<3x3x8x32xf32>
    %c0_104 = arith.constant 0 : index
    %c1_105 = arith.constant 1 : index
    %c0_106 = arith.constant 0 : index
    %c1_107 = arith.constant 1 : index
    %c0_108 = arith.constant 0 : index
    %c0_109 = arith.constant 0 : index
    %371 = vector.load %arg1[%c0_104, %c1_105, %c0_106, %c1_107, %c0_108, %c0_109] : memref<1x16x4x4x8x1xf32, #tpu.memory_space<vmem>>, vector<1x1x3x3x8x1xf32>
    %372 = vector.shape_cast %371 : vector<1x1x3x3x8x1xf32> to vector<3x3x8x1xf32>
    %373 = vector.extract_strided_slice %0 {offsets = [0, 2, 0, 0], sizes = [1, 1, 1, 32], strides = [1, 1, 1, 1]} : vector<3x3x1x32xf32> to vector<1x1x1x32xf32>
    %374 = vector.shape_cast %373 : vector<1x1x1x32xf32> to vector<1x32xf32>
    %375 = vector.shape_cast %374 : vector<1x32xf32> to vector<1x1x1x32xf32>
    %376 = vector.broadcast %372 : vector<3x3x8x1xf32> to vector<3x3x8x32xf32>
    %377 = vector.broadcast %375 : vector<1x1x1x32xf32> to vector<3x3x8x32xf32>
    %378 = arith.mulf %376, %377 : vector<3x3x8x32xf32>
    %379 = arith.addf %370, %378 : vector<3x3x8x32xf32>
    %380 = vector.extract_strided_slice %0 {offsets = [1, 0, 0, 0], sizes = [1, 1, 1, 32], strides = [1, 1, 1, 1]} : vector<3x3x1x32xf32> to vector<1x1x1x32xf32>
    %381 = vector.shape_cast %380 : vector<1x1x1x32xf32> to vector<1x32xf32>
    %382 = vector.shape_cast %381 : vector<1x32xf32> to vector<1x1x1x32xf32>
    %383 = vector.broadcast %119 : vector<3x3x8x1xf32> to vector<3x3x8x32xf32>
    %384 = vector.broadcast %382 : vector<1x1x1x32xf32> to vector<3x3x8x32xf32>
    %385 = arith.mulf %383, %384 : vector<3x3x8x32xf32>
    %386 = arith.addf %379, %385 : vector<3x3x8x32xf32>
    %387 = vector.extract_strided_slice %0 {offsets = [1, 1, 0, 0], sizes = [1, 1, 1, 32], strides = [1, 1, 1, 1]} : vector<3x3x1x32xf32> to vector<1x1x1x32xf32>
    %388 = vector.shape_cast %387 : vector<1x1x1x32xf32> to vector<1x32xf32>
    %389 = vector.shape_cast %388 : vector<1x32xf32> to vector<1x1x1x32xf32>
    %390 = vector.broadcast %327 : vector<3x3x8x1xf32> to vector<3x3x8x32xf32>
    %391 = vector.broadcast %389 : vector<1x1x1x32xf32> to vector<3x3x8x32xf32>
    %392 = arith.mulf %390, %391 : vector<3x3x8x32xf32>
    %393 = arith.addf %386, %392 : vector<3x3x8x32xf32>
    %c0_110 = arith.constant 0 : index
    %c5_111 = arith.constant 5 : index
    %c0_112 = arith.constant 0 : index
    %c1_113 = arith.constant 1 : index
    %c0_114 = arith.constant 0 : index
    %c0_115 = arith.constant 0 : index
    %394 = vector.load %arg1[%c0_110, %c5_111, %c0_112, %c1_113, %c0_114, %c0_115] : memref<1x16x4x4x8x1xf32, #tpu.memory_space<vmem>>, vector<1x1x3x3x8x1xf32>
    %395 = vector.shape_cast %394 : vector<1x1x3x3x8x1xf32> to vector<3x3x8x1xf32>
    %396 = vector.extract_strided_slice %0 {offsets = [1, 2, 0, 0], sizes = [1, 1, 1, 32], strides = [1, 1, 1, 1]} : vector<3x3x1x32xf32> to vector<1x1x1x32xf32>
    %397 = vector.shape_cast %396 : vector<1x1x1x32xf32> to vector<1x32xf32>
    %398 = vector.shape_cast %397 : vector<1x32xf32> to vector<1x1x1x32xf32>
    %399 = vector.broadcast %395 : vector<3x3x8x1xf32> to vector<3x3x8x32xf32>
    %400 = vector.broadcast %398 : vector<1x1x1x32xf32> to vector<3x3x8x32xf32>
    %401 = arith.mulf %399, %400 : vector<3x3x8x32xf32>
    %402 = arith.addf %393, %401 : vector<3x3x8x32xf32>
    %403 = vector.extract_strided_slice %0 {offsets = [2, 0, 0, 0], sizes = [1, 1, 1, 32], strides = [1, 1, 1, 1]} : vector<3x3x1x32xf32> to vector<1x1x1x32xf32>
    %404 = vector.shape_cast %403 : vector<1x1x1x32xf32> to vector<1x32xf32>
    %405 = vector.shape_cast %404 : vector<1x32xf32> to vector<1x1x1x32xf32>
    %406 = vector.broadcast %142 : vector<3x3x8x1xf32> to vector<3x3x8x32xf32>
    %407 = vector.broadcast %405 : vector<1x1x1x32xf32> to vector<3x3x8x32xf32>
    %408 = arith.mulf %406, %407 : vector<3x3x8x32xf32>
    %409 = arith.addf %402, %408 : vector<3x3x8x32xf32>
    %410 = vector.extract_strided_slice %0 {offsets = [2, 1, 0, 0], sizes = [1, 1, 1, 32], strides = [1, 1, 1, 1]} : vector<3x3x1x32xf32> to vector<1x1x1x32xf32>
    %411 = vector.shape_cast %410 : vector<1x1x1x32xf32> to vector<1x32xf32>
    %412 = vector.shape_cast %411 : vector<1x32xf32> to vector<1x1x1x32xf32>
    %413 = vector.broadcast %350 : vector<3x3x8x1xf32> to vector<3x3x8x32xf32>
    %414 = vector.broadcast %412 : vector<1x1x1x32xf32> to vector<3x3x8x32xf32>
    %415 = arith.mulf %413, %414 : vector<3x3x8x32xf32>
    %416 = arith.addf %409, %415 : vector<3x3x8x32xf32>
    %c0_116 = arith.constant 0 : index
    %c9_117 = arith.constant 9 : index
    %c0_118 = arith.constant 0 : index
    %c1_119 = arith.constant 1 : index
    %c0_120 = arith.constant 0 : index
    %c0_121 = arith.constant 0 : index
    %417 = vector.load %arg1[%c0_116, %c9_117, %c0_118, %c1_119, %c0_120, %c0_121] : memref<1x16x4x4x8x1xf32, #tpu.memory_space<vmem>>, vector<1x1x3x3x8x1xf32>
    %418 = vector.shape_cast %417 : vector<1x1x3x3x8x1xf32> to vector<3x3x8x1xf32>
    %419 = vector.extract_strided_slice %0 {offsets = [2, 2, 0, 0], sizes = [1, 1, 1, 32], strides = [1, 1, 1, 1]} : vector<3x3x1x32xf32> to vector<1x1x1x32xf32>
    %420 = vector.shape_cast %419 : vector<1x1x1x32xf32> to vector<1x32xf32>
    %421 = vector.shape_cast %420 : vector<1x32xf32> to vector<1x1x1x32xf32>
    %422 = vector.broadcast %418 : vector<3x3x8x1xf32> to vector<3x3x8x32xf32>
    %423 = vector.broadcast %421 : vector<1x1x1x32xf32> to vector<3x3x8x32xf32>
    %424 = arith.mulf %422, %423 : vector<3x3x8x32xf32>
    %425 = arith.addf %416, %424 : vector<3x3x8x32xf32>
    %426 = arith.maximumf %357, %425 : vector<3x3x8x32xf32>
    %427 = vector.extract_strided_slice %0 {offsets = [0, 0, 0, 0], sizes = [1, 1, 1, 32], strides = [1, 1, 1, 1]} : vector<3x3x1x32xf32> to vector<1x1x1x32xf32>
    %428 = vector.shape_cast %427 : vector<1x1x1x32xf32> to vector<1x32xf32>
    %429 = vector.shape_cast %428 : vector<1x32xf32> to vector<1x1x1x32xf32>
    %430 = vector.broadcast %47 : vector<3x3x8x1xf32> to vector<3x3x8x32xf32>
    %431 = vector.broadcast %429 : vector<1x1x1x32xf32> to vector<3x3x8x32xf32>
    %432 = arith.mulf %430, %431 : vector<3x3x8x32xf32>
    %433 = vector.extract_strided_slice %0 {offsets = [0, 1, 0, 0], sizes = [1, 1, 1, 32], strides = [1, 1, 1, 1]} : vector<3x3x1x32xf32> to vector<1x1x1x32xf32>
    %434 = vector.shape_cast %433 : vector<1x1x1x32xf32> to vector<1x32xf32>
    %435 = vector.shape_cast %434 : vector<1x32xf32> to vector<1x1x1x32xf32>
    %436 = vector.broadcast %119 : vector<3x3x8x1xf32> to vector<3x3x8x32xf32>
    %437 = vector.broadcast %435 : vector<1x1x1x32xf32> to vector<3x3x8x32xf32>
    %438 = arith.mulf %436, %437 : vector<3x3x8x32xf32>
    %439 = arith.addf %432, %438 : vector<3x3x8x32xf32>
    %440 = vector.extract_strided_slice %0 {offsets = [0, 2, 0, 0], sizes = [1, 1, 1, 32], strides = [1, 1, 1, 1]} : vector<3x3x1x32xf32> to vector<1x1x1x32xf32>
    %441 = vector.shape_cast %440 : vector<1x1x1x32xf32> to vector<1x32xf32>
    %442 = vector.shape_cast %441 : vector<1x32xf32> to vector<1x1x1x32xf32>
    %443 = vector.broadcast %327 : vector<3x3x8x1xf32> to vector<3x3x8x32xf32>
    %444 = vector.broadcast %442 : vector<1x1x1x32xf32> to vector<3x3x8x32xf32>
    %445 = arith.mulf %443, %444 : vector<3x3x8x32xf32>
    %446 = arith.addf %439, %445 : vector<3x3x8x32xf32>
    %447 = vector.extract_strided_slice %0 {offsets = [1, 0, 0, 0], sizes = [1, 1, 1, 32], strides = [1, 1, 1, 1]} : vector<3x3x1x32xf32> to vector<1x1x1x32xf32>
    %448 = vector.shape_cast %447 : vector<1x1x1x32xf32> to vector<1x32xf32>
    %449 = vector.shape_cast %448 : vector<1x32xf32> to vector<1x1x1x32xf32>
    %450 = vector.broadcast %74 : vector<3x3x8x1xf32> to vector<3x3x8x32xf32>
    %451 = vector.broadcast %449 : vector<1x1x1x32xf32> to vector<3x3x8x32xf32>
    %452 = arith.mulf %450, %451 : vector<3x3x8x32xf32>
    %453 = arith.addf %446, %452 : vector<3x3x8x32xf32>
    %454 = vector.extract_strided_slice %0 {offsets = [1, 1, 0, 0], sizes = [1, 1, 1, 32], strides = [1, 1, 1, 1]} : vector<3x3x1x32xf32> to vector<1x1x1x32xf32>
    %455 = vector.shape_cast %454 : vector<1x1x1x32xf32> to vector<1x32xf32>
    %456 = vector.shape_cast %455 : vector<1x32xf32> to vector<1x1x1x32xf32>
    %457 = vector.broadcast %142 : vector<3x3x8x1xf32> to vector<3x3x8x32xf32>
    %458 = vector.broadcast %456 : vector<1x1x1x32xf32> to vector<3x3x8x32xf32>
    %459 = arith.mulf %457, %458 : vector<3x3x8x32xf32>
    %460 = arith.addf %453, %459 : vector<3x3x8x32xf32>
    %461 = vector.extract_strided_slice %0 {offsets = [1, 2, 0, 0], sizes = [1, 1, 1, 32], strides = [1, 1, 1, 1]} : vector<3x3x1x32xf32> to vector<1x1x1x32xf32>
    %462 = vector.shape_cast %461 : vector<1x1x1x32xf32> to vector<1x32xf32>
    %463 = vector.shape_cast %462 : vector<1x32xf32> to vector<1x1x1x32xf32>
    %464 = vector.broadcast %350 : vector<3x3x8x1xf32> to vector<3x3x8x32xf32>
    %465 = vector.broadcast %463 : vector<1x1x1x32xf32> to vector<3x3x8x32xf32>
    %466 = arith.mulf %464, %465 : vector<3x3x8x32xf32>
    %467 = arith.addf %460, %466 : vector<3x3x8x32xf32>
    %468 = vector.extract_strided_slice %0 {offsets = [2, 0, 0, 0], sizes = [1, 1, 1, 32], strides = [1, 1, 1, 1]} : vector<3x3x1x32xf32> to vector<1x1x1x32xf32>
    %469 = vector.shape_cast %468 : vector<1x1x1x32xf32> to vector<1x32xf32>
    %470 = vector.shape_cast %469 : vector<1x32xf32> to vector<1x1x1x32xf32>
    %471 = vector.broadcast %211 : vector<3x3x8x1xf32> to vector<3x3x8x32xf32>
    %472 = vector.broadcast %470 : vector<1x1x1x32xf32> to vector<3x3x8x32xf32>
    %473 = arith.mulf %471, %472 : vector<3x3x8x32xf32>
    %474 = arith.addf %467, %473 : vector<3x3x8x32xf32>
    %475 = vector.extract_strided_slice %0 {offsets = [2, 1, 0, 0], sizes = [1, 1, 1, 32], strides = [1, 1, 1, 1]} : vector<3x3x1x32xf32> to vector<1x1x1x32xf32>
    %476 = vector.shape_cast %475 : vector<1x1x1x32xf32> to vector<1x32xf32>
    %477 = vector.shape_cast %476 : vector<1x32xf32> to vector<1x1x1x32xf32>
    %478 = vector.broadcast %276 : vector<3x3x8x1xf32> to vector<3x3x8x32xf32>
    %479 = vector.broadcast %477 : vector<1x1x1x32xf32> to vector<3x3x8x32xf32>
    %480 = arith.mulf %478, %479 : vector<3x3x8x32xf32>
    %481 = arith.addf %474, %480 : vector<3x3x8x32xf32>
    %c0_122 = arith.constant 0 : index
    %c12_123 = arith.constant 12 : index
    %c0_124 = arith.constant 0 : index
    %c1_125 = arith.constant 1 : index
    %c0_126 = arith.constant 0 : index
    %c0_127 = arith.constant 0 : index
    %482 = vector.load %arg1[%c0_122, %c12_123, %c0_124, %c1_125, %c0_126, %c0_127] : memref<1x16x4x4x8x1xf32, #tpu.memory_space<vmem>>, vector<1x1x3x3x8x1xf32>
    %483 = vector.shape_cast %482 : vector<1x1x3x3x8x1xf32> to vector<3x3x8x1xf32>
    %484 = vector.extract_strided_slice %0 {offsets = [2, 2, 0, 0], sizes = [1, 1, 1, 32], strides = [1, 1, 1, 1]} : vector<3x3x1x32xf32> to vector<1x1x1x32xf32>
    %485 = vector.shape_cast %484 : vector<1x1x1x32xf32> to vector<1x32xf32>
    %486 = vector.shape_cast %485 : vector<1x32xf32> to vector<1x1x1x32xf32>
    %487 = vector.broadcast %483 : vector<3x3x8x1xf32> to vector<3x3x8x32xf32>
    %488 = vector.broadcast %486 : vector<1x1x1x32xf32> to vector<3x3x8x32xf32>
    %489 = arith.mulf %487, %488 : vector<3x3x8x32xf32>
    %490 = arith.addf %481, %489 : vector<3x3x8x32xf32>
    %491 = arith.maximumf %426, %490 : vector<3x3x8x32xf32>
    %492 = vector.extract_strided_slice %0 {offsets = [0, 0, 0, 0], sizes = [1, 1, 1, 32], strides = [1, 1, 1, 1]} : vector<3x3x1x32xf32> to vector<1x1x1x32xf32>
    %493 = vector.shape_cast %492 : vector<1x1x1x32xf32> to vector<1x32xf32>
    %494 = vector.shape_cast %493 : vector<1x32xf32> to vector<1x1x1x32xf32>
    %495 = vector.broadcast %119 : vector<3x3x8x1xf32> to vector<3x3x8x32xf32>
    %496 = vector.broadcast %494 : vector<1x1x1x32xf32> to vector<3x3x8x32xf32>
    %497 = arith.mulf %495, %496 : vector<3x3x8x32xf32>
    %498 = vector.extract_strided_slice %0 {offsets = [0, 1, 0, 0], sizes = [1, 1, 1, 32], strides = [1, 1, 1, 1]} : vector<3x3x1x32xf32> to vector<1x1x1x32xf32>
    %499 = vector.shape_cast %498 : vector<1x1x1x32xf32> to vector<1x32xf32>
    %500 = vector.shape_cast %499 : vector<1x32xf32> to vector<1x1x1x32xf32>
    %501 = vector.broadcast %327 : vector<3x3x8x1xf32> to vector<3x3x8x32xf32>
    %502 = vector.broadcast %500 : vector<1x1x1x32xf32> to vector<3x3x8x32xf32>
    %503 = arith.mulf %501, %502 : vector<3x3x8x32xf32>
    %504 = arith.addf %497, %503 : vector<3x3x8x32xf32>
    %505 = vector.extract_strided_slice %0 {offsets = [0, 2, 0, 0], sizes = [1, 1, 1, 32], strides = [1, 1, 1, 1]} : vector<3x3x1x32xf32> to vector<1x1x1x32xf32>
    %506 = vector.shape_cast %505 : vector<1x1x1x32xf32> to vector<1x32xf32>
    %507 = vector.shape_cast %506 : vector<1x32xf32> to vector<1x1x1x32xf32>
    %508 = vector.broadcast %395 : vector<3x3x8x1xf32> to vector<3x3x8x32xf32>
    %509 = vector.broadcast %507 : vector<1x1x1x32xf32> to vector<3x3x8x32xf32>
    %510 = arith.mulf %508, %509 : vector<3x3x8x32xf32>
    %511 = arith.addf %504, %510 : vector<3x3x8x32xf32>
    %512 = vector.extract_strided_slice %0 {offsets = [1, 0, 0, 0], sizes = [1, 1, 1, 32], strides = [1, 1, 1, 1]} : vector<3x3x1x32xf32> to vector<1x1x1x32xf32>
    %513 = vector.shape_cast %512 : vector<1x1x1x32xf32> to vector<1x32xf32>
    %514 = vector.shape_cast %513 : vector<1x32xf32> to vector<1x1x1x32xf32>
    %515 = vector.broadcast %142 : vector<3x3x8x1xf32> to vector<3x3x8x32xf32>
    %516 = vector.broadcast %514 : vector<1x1x1x32xf32> to vector<3x3x8x32xf32>
    %517 = arith.mulf %515, %516 : vector<3x3x8x32xf32>
    %518 = arith.addf %511, %517 : vector<3x3x8x32xf32>
    %519 = vector.extract_strided_slice %0 {offsets = [1, 1, 0, 0], sizes = [1, 1, 1, 32], strides = [1, 1, 1, 1]} : vector<3x3x1x32xf32> to vector<1x1x1x32xf32>
    %520 = vector.shape_cast %519 : vector<1x1x1x32xf32> to vector<1x32xf32>
    %521 = vector.shape_cast %520 : vector<1x32xf32> to vector<1x1x1x32xf32>
    %522 = vector.broadcast %350 : vector<3x3x8x1xf32> to vector<3x3x8x32xf32>
    %523 = vector.broadcast %521 : vector<1x1x1x32xf32> to vector<3x3x8x32xf32>
    %524 = arith.mulf %522, %523 : vector<3x3x8x32xf32>
    %525 = arith.addf %518, %524 : vector<3x3x8x32xf32>
    %526 = vector.extract_strided_slice %0 {offsets = [1, 2, 0, 0], sizes = [1, 1, 1, 32], strides = [1, 1, 1, 1]} : vector<3x3x1x32xf32> to vector<1x1x1x32xf32>
    %527 = vector.shape_cast %526 : vector<1x1x1x32xf32> to vector<1x32xf32>
    %528 = vector.shape_cast %527 : vector<1x32xf32> to vector<1x1x1x32xf32>
    %529 = vector.broadcast %418 : vector<3x3x8x1xf32> to vector<3x3x8x32xf32>
    %530 = vector.broadcast %528 : vector<1x1x1x32xf32> to vector<3x3x8x32xf32>
    %531 = arith.mulf %529, %530 : vector<3x3x8x32xf32>
    %532 = arith.addf %525, %531 : vector<3x3x8x32xf32>
    %533 = vector.extract_strided_slice %0 {offsets = [2, 0, 0, 0], sizes = [1, 1, 1, 32], strides = [1, 1, 1, 1]} : vector<3x3x1x32xf32> to vector<1x1x1x32xf32>
    %534 = vector.shape_cast %533 : vector<1x1x1x32xf32> to vector<1x32xf32>
    %535 = vector.shape_cast %534 : vector<1x32xf32> to vector<1x1x1x32xf32>
    %536 = vector.broadcast %276 : vector<3x3x8x1xf32> to vector<3x3x8x32xf32>
    %537 = vector.broadcast %535 : vector<1x1x1x32xf32> to vector<3x3x8x32xf32>
    %538 = arith.mulf %536, %537 : vector<3x3x8x32xf32>
    %539 = arith.addf %532, %538 : vector<3x3x8x32xf32>
    %540 = vector.extract_strided_slice %0 {offsets = [2, 1, 0, 0], sizes = [1, 1, 1, 32], strides = [1, 1, 1, 1]} : vector<3x3x1x32xf32> to vector<1x1x1x32xf32>
    %541 = vector.shape_cast %540 : vector<1x1x1x32xf32> to vector<1x32xf32>
    %542 = vector.shape_cast %541 : vector<1x32xf32> to vector<1x1x1x32xf32>
    %543 = vector.broadcast %483 : vector<3x3x8x1xf32> to vector<3x3x8x32xf32>
    %544 = vector.broadcast %542 : vector<1x1x1x32xf32> to vector<3x3x8x32xf32>
    %545 = arith.mulf %543, %544 : vector<3x3x8x32xf32>
    %546 = arith.addf %539, %545 : vector<3x3x8x32xf32>
    %c0_128 = arith.constant 0 : index
    %c13_129 = arith.constant 13 : index
    %c0_130 = arith.constant 0 : index
    %c1_131 = arith.constant 1 : index
    %c0_132 = arith.constant 0 : index
    %c0_133 = arith.constant 0 : index
    %547 = vector.load %arg1[%c0_128, %c13_129, %c0_130, %c1_131, %c0_132, %c0_133] : memref<1x16x4x4x8x1xf32, #tpu.memory_space<vmem>>, vector<1x1x3x3x8x1xf32>
    %548 = vector.shape_cast %547 : vector<1x1x3x3x8x1xf32> to vector<3x3x8x1xf32>
    %549 = vector.extract_strided_slice %0 {offsets = [2, 2, 0, 0], sizes = [1, 1, 1, 32], strides = [1, 1, 1, 1]} : vector<3x3x1x32xf32> to vector<1x1x1x32xf32>
    %550 = vector.shape_cast %549 : vector<1x1x1x32xf32> to vector<1x32xf32>
    %551 = vector.shape_cast %550 : vector<1x32xf32> to vector<1x1x1x32xf32>
    %552 = vector.broadcast %548 : vector<3x3x8x1xf32> to vector<3x3x8x32xf32>
    %553 = vector.broadcast %551 : vector<1x1x1x32xf32> to vector<3x3x8x32xf32>
    %554 = arith.mulf %552, %553 : vector<3x3x8x32xf32>
    %555 = arith.addf %546, %554 : vector<3x3x8x32xf32>
    %556 = arith.maximumf %491, %555 : vector<3x3x8x32xf32>
    %557 = vector.shape_cast %1 : vector<1x32xf32> to vector<1x1x1x32xf32>
    %558 = vector.broadcast %557 : vector<1x1x1x32xf32> to vector<3x3x8x32xf32>
    %559 = arith.addf %556, %558 : vector<3x3x8x32xf32>
    %cst_134 = arith.constant 0.000000e+00 : f32
    %560 = vector.broadcast %cst_134 : f32 to vector<3x3x8x32xf32>
    %561 = arith.maximumf %559, %560 : vector<3x3x8x32xf32>
    %562 = vector.extract_strided_slice %0 {offsets = [0, 0, 0, 0], sizes = [1, 1, 1, 32], strides = [1, 1, 1, 1]} : vector<3x3x1x32xf32> to vector<1x1x1x32xf32>
    %563 = vector.shape_cast %562 : vector<1x1x1x32xf32> to vector<1x32xf32>
    %564 = vector.shape_cast %563 : vector<1x32xf32> to vector<1x1x1x32xf32>
    %565 = vector.broadcast %56 : vector<3x3x8x1xf32> to vector<3x3x8x32xf32>
    %566 = vector.broadcast %564 : vector<1x1x1x32xf32> to vector<3x3x8x32xf32>
    %567 = arith.mulf %565, %566 : vector<3x3x8x32xf32>
    %568 = vector.extract_strided_slice %0 {offsets = [0, 1, 0, 0], sizes = [1, 1, 1, 32], strides = [1, 1, 1, 1]} : vector<3x3x1x32xf32> to vector<1x1x1x32xf32>
    %569 = vector.shape_cast %568 : vector<1x1x1x32xf32> to vector<1x32xf32>
    %570 = vector.shape_cast %569 : vector<1x32xf32> to vector<1x1x1x32xf32>
    %571 = vector.broadcast %65 : vector<3x3x8x1xf32> to vector<3x3x8x32xf32>
    %572 = vector.broadcast %570 : vector<1x1x1x32xf32> to vector<3x3x8x32xf32>
    %573 = arith.mulf %571, %572 : vector<3x3x8x32xf32>
    %574 = arith.addf %567, %573 : vector<3x3x8x32xf32>
    %575 = vector.extract_strided_slice %0 {offsets = [0, 2, 0, 0], sizes = [1, 1, 1, 32], strides = [1, 1, 1, 1]} : vector<3x3x1x32xf32> to vector<1x1x1x32xf32>
    %576 = vector.shape_cast %575 : vector<1x1x1x32xf32> to vector<1x32xf32>
    %577 = vector.shape_cast %576 : vector<1x32xf32> to vector<1x1x1x32xf32>
    %578 = vector.broadcast %74 : vector<3x3x8x1xf32> to vector<3x3x8x32xf32>
    %579 = vector.broadcast %577 : vector<1x1x1x32xf32> to vector<3x3x8x32xf32>
    %580 = arith.mulf %578, %579 : vector<3x3x8x32xf32>
    %581 = arith.addf %574, %580 : vector<3x3x8x32xf32>
    %582 = vector.extract_strided_slice %0 {offsets = [1, 0, 0, 0], sizes = [1, 1, 1, 32], strides = [1, 1, 1, 1]} : vector<3x3x1x32xf32> to vector<1x1x1x32xf32>
    %583 = vector.shape_cast %582 : vector<1x1x1x32xf32> to vector<1x32xf32>
    %584 = vector.shape_cast %583 : vector<1x32xf32> to vector<1x1x1x32xf32>
    %585 = vector.broadcast %193 : vector<3x3x8x1xf32> to vector<3x3x8x32xf32>
    %586 = vector.broadcast %584 : vector<1x1x1x32xf32> to vector<3x3x8x32xf32>
    %587 = arith.mulf %585, %586 : vector<3x3x8x32xf32>
    %588 = arith.addf %581, %587 : vector<3x3x8x32xf32>
    %589 = vector.extract_strided_slice %0 {offsets = [1, 1, 0, 0], sizes = [1, 1, 1, 32], strides = [1, 1, 1, 1]} : vector<3x3x1x32xf32> to vector<1x1x1x32xf32>
    %590 = vector.shape_cast %589 : vector<1x1x1x32xf32> to vector<1x32xf32>
    %591 = vector.shape_cast %590 : vector<1x32xf32> to vector<1x1x1x32xf32>
    %592 = vector.broadcast %202 : vector<3x3x8x1xf32> to vector<3x3x8x32xf32>
    %593 = vector.broadcast %591 : vector<1x1x1x32xf32> to vector<3x3x8x32xf32>
    %594 = arith.mulf %592, %593 : vector<3x3x8x32xf32>
    %595 = arith.addf %588, %594 : vector<3x3x8x32xf32>
    %596 = vector.extract_strided_slice %0 {offsets = [1, 2, 0, 0], sizes = [1, 1, 1, 32], strides = [1, 1, 1, 1]} : vector<3x3x1x32xf32> to vector<1x1x1x32xf32>
    %597 = vector.shape_cast %596 : vector<1x1x1x32xf32> to vector<1x32xf32>
    %598 = vector.shape_cast %597 : vector<1x32xf32> to vector<1x1x1x32xf32>
    %599 = vector.broadcast %211 : vector<3x3x8x1xf32> to vector<3x3x8x32xf32>
    %600 = vector.broadcast %598 : vector<1x1x1x32xf32> to vector<3x3x8x32xf32>
    %601 = arith.mulf %599, %600 : vector<3x3x8x32xf32>
    %602 = arith.addf %595, %601 : vector<3x3x8x32xf32>
    %c0_135 = arith.constant 0 : index
    %c0_136 = arith.constant 0 : index
    %c1_137 = arith.constant 1 : index
    %c0_138 = arith.constant 0 : index
    %c0_139 = arith.constant 0 : index
    %c0_140 = arith.constant 0 : index
    %603 = vector.load %arg1[%c0_135, %c0_136, %c1_137, %c0_138, %c0_139, %c0_140] : memref<1x16x4x4x8x1xf32, #tpu.memory_space<vmem>>, vector<1x1x3x3x8x1xf32>
    %604 = vector.shape_cast %603 : vector<1x1x3x3x8x1xf32> to vector<3x3x8x1xf32>
    %605 = vector.extract_strided_slice %0 {offsets = [2, 0, 0, 0], sizes = [1, 1, 1, 32], strides = [1, 1, 1, 1]} : vector<3x3x1x32xf32> to vector<1x1x1x32xf32>
    %606 = vector.shape_cast %605 : vector<1x1x1x32xf32> to vector<1x32xf32>
    %607 = vector.shape_cast %606 : vector<1x32xf32> to vector<1x1x1x32xf32>
    %608 = vector.broadcast %604 : vector<3x3x8x1xf32> to vector<3x3x8x32xf32>
    %609 = vector.broadcast %607 : vector<1x1x1x32xf32> to vector<3x3x8x32xf32>
    %610 = arith.mulf %608, %609 : vector<3x3x8x32xf32>
    %611 = arith.addf %602, %610 : vector<3x3x8x32xf32>
    %c0_141 = arith.constant 0 : index
    %c1_142 = arith.constant 1 : index
    %c1_143 = arith.constant 1 : index
    %c0_144 = arith.constant 0 : index
    %c0_145 = arith.constant 0 : index
    %c0_146 = arith.constant 0 : index
    %612 = vector.load %arg1[%c0_141, %c1_142, %c1_143, %c0_144, %c0_145, %c0_146] : memref<1x16x4x4x8x1xf32, #tpu.memory_space<vmem>>, vector<1x1x3x3x8x1xf32>
    %613 = vector.shape_cast %612 : vector<1x1x3x3x8x1xf32> to vector<3x3x8x1xf32>
    %614 = vector.extract_strided_slice %0 {offsets = [2, 1, 0, 0], sizes = [1, 1, 1, 32], strides = [1, 1, 1, 1]} : vector<3x3x1x32xf32> to vector<1x1x1x32xf32>
    %615 = vector.shape_cast %614 : vector<1x1x1x32xf32> to vector<1x32xf32>
    %616 = vector.shape_cast %615 : vector<1x32xf32> to vector<1x1x1x32xf32>
    %617 = vector.broadcast %613 : vector<3x3x8x1xf32> to vector<3x3x8x32xf32>
    %618 = vector.broadcast %616 : vector<1x1x1x32xf32> to vector<3x3x8x32xf32>
    %619 = arith.mulf %617, %618 : vector<3x3x8x32xf32>
    %620 = arith.addf %611, %619 : vector<3x3x8x32xf32>
    %c0_147 = arith.constant 0 : index
    %c2_148 = arith.constant 2 : index
    %c1_149 = arith.constant 1 : index
    %c0_150 = arith.constant 0 : index
    %c0_151 = arith.constant 0 : index
    %c0_152 = arith.constant 0 : index
    %621 = vector.load %arg1[%c0_147, %c2_148, %c1_149, %c0_150, %c0_151, %c0_152] : memref<1x16x4x4x8x1xf32, #tpu.memory_space<vmem>>, vector<1x1x3x3x8x1xf32>
    %622 = vector.shape_cast %621 : vector<1x1x3x3x8x1xf32> to vector<3x3x8x1xf32>
    %623 = vector.extract_strided_slice %0 {offsets = [2, 2, 0, 0], sizes = [1, 1, 1, 32], strides = [1, 1, 1, 1]} : vector<3x3x1x32xf32> to vector<1x1x1x32xf32>
    %624 = vector.shape_cast %623 : vector<1x1x1x32xf32> to vector<1x32xf32>
    %625 = vector.shape_cast %624 : vector<1x32xf32> to vector<1x1x1x32xf32>
    %626 = vector.broadcast %622 : vector<3x3x8x1xf32> to vector<3x3x8x32xf32>
    %627 = vector.broadcast %625 : vector<1x1x1x32xf32> to vector<3x3x8x32xf32>
    %628 = arith.mulf %626, %627 : vector<3x3x8x32xf32>
    %629 = arith.addf %620, %628 : vector<3x3x8x32xf32>
    %630 = vector.extract_strided_slice %0 {offsets = [0, 0, 0, 0], sizes = [1, 1, 1, 32], strides = [1, 1, 1, 1]} : vector<3x3x1x32xf32> to vector<1x1x1x32xf32>
    %631 = vector.shape_cast %630 : vector<1x1x1x32xf32> to vector<1x32xf32>
    %632 = vector.shape_cast %631 : vector<1x32xf32> to vector<1x1x1x32xf32>
    %633 = vector.broadcast %65 : vector<3x3x8x1xf32> to vector<3x3x8x32xf32>
    %634 = vector.broadcast %632 : vector<1x1x1x32xf32> to vector<3x3x8x32xf32>
    %635 = arith.mulf %633, %634 : vector<3x3x8x32xf32>
    %636 = vector.extract_strided_slice %0 {offsets = [0, 1, 0, 0], sizes = [1, 1, 1, 32], strides = [1, 1, 1, 1]} : vector<3x3x1x32xf32> to vector<1x1x1x32xf32>
    %637 = vector.shape_cast %636 : vector<1x1x1x32xf32> to vector<1x32xf32>
    %638 = vector.shape_cast %637 : vector<1x32xf32> to vector<1x1x1x32xf32>
    %639 = vector.broadcast %74 : vector<3x3x8x1xf32> to vector<3x3x8x32xf32>
    %640 = vector.broadcast %638 : vector<1x1x1x32xf32> to vector<3x3x8x32xf32>
    %641 = arith.mulf %639, %640 : vector<3x3x8x32xf32>
    %642 = arith.addf %635, %641 : vector<3x3x8x32xf32>
    %643 = vector.extract_strided_slice %0 {offsets = [0, 2, 0, 0], sizes = [1, 1, 1, 32], strides = [1, 1, 1, 1]} : vector<3x3x1x32xf32> to vector<1x1x1x32xf32>
    %644 = vector.shape_cast %643 : vector<1x1x1x32xf32> to vector<1x32xf32>
    %645 = vector.shape_cast %644 : vector<1x32xf32> to vector<1x1x1x32xf32>
    %646 = vector.broadcast %142 : vector<3x3x8x1xf32> to vector<3x3x8x32xf32>
    %647 = vector.broadcast %645 : vector<1x1x1x32xf32> to vector<3x3x8x32xf32>
    %648 = arith.mulf %646, %647 : vector<3x3x8x32xf32>
    %649 = arith.addf %642, %648 : vector<3x3x8x32xf32>
    %650 = vector.extract_strided_slice %0 {offsets = [1, 0, 0, 0], sizes = [1, 1, 1, 32], strides = [1, 1, 1, 1]} : vector<3x3x1x32xf32> to vector<1x1x1x32xf32>
    %651 = vector.shape_cast %650 : vector<1x1x1x32xf32> to vector<1x32xf32>
    %652 = vector.shape_cast %651 : vector<1x32xf32> to vector<1x1x1x32xf32>
    %653 = vector.broadcast %202 : vector<3x3x8x1xf32> to vector<3x3x8x32xf32>
    %654 = vector.broadcast %652 : vector<1x1x1x32xf32> to vector<3x3x8x32xf32>
    %655 = arith.mulf %653, %654 : vector<3x3x8x32xf32>
    %656 = arith.addf %649, %655 : vector<3x3x8x32xf32>
    %657 = vector.extract_strided_slice %0 {offsets = [1, 1, 0, 0], sizes = [1, 1, 1, 32], strides = [1, 1, 1, 1]} : vector<3x3x1x32xf32> to vector<1x1x1x32xf32>
    %658 = vector.shape_cast %657 : vector<1x1x1x32xf32> to vector<1x32xf32>
    %659 = vector.shape_cast %658 : vector<1x32xf32> to vector<1x1x1x32xf32>
    %660 = vector.broadcast %211 : vector<3x3x8x1xf32> to vector<3x3x8x32xf32>
    %661 = vector.broadcast %659 : vector<1x1x1x32xf32> to vector<3x3x8x32xf32>
    %662 = arith.mulf %660, %661 : vector<3x3x8x32xf32>
    %663 = arith.addf %656, %662 : vector<3x3x8x32xf32>
    %664 = vector.extract_strided_slice %0 {offsets = [1, 2, 0, 0], sizes = [1, 1, 1, 32], strides = [1, 1, 1, 1]} : vector<3x3x1x32xf32> to vector<1x1x1x32xf32>
    %665 = vector.shape_cast %664 : vector<1x1x1x32xf32> to vector<1x32xf32>
    %666 = vector.shape_cast %665 : vector<1x32xf32> to vector<1x1x1x32xf32>
    %667 = vector.broadcast %276 : vector<3x3x8x1xf32> to vector<3x3x8x32xf32>
    %668 = vector.broadcast %666 : vector<1x1x1x32xf32> to vector<3x3x8x32xf32>
    %669 = arith.mulf %667, %668 : vector<3x3x8x32xf32>
    %670 = arith.addf %663, %669 : vector<3x3x8x32xf32>
    %671 = vector.extract_strided_slice %0 {offsets = [2, 0, 0, 0], sizes = [1, 1, 1, 32], strides = [1, 1, 1, 1]} : vector<3x3x1x32xf32> to vector<1x1x1x32xf32>
    %672 = vector.shape_cast %671 : vector<1x1x1x32xf32> to vector<1x32xf32>
    %673 = vector.shape_cast %672 : vector<1x32xf32> to vector<1x1x1x32xf32>
    %674 = vector.broadcast %613 : vector<3x3x8x1xf32> to vector<3x3x8x32xf32>
    %675 = vector.broadcast %673 : vector<1x1x1x32xf32> to vector<3x3x8x32xf32>
    %676 = arith.mulf %674, %675 : vector<3x3x8x32xf32>
    %677 = arith.addf %670, %676 : vector<3x3x8x32xf32>
    %678 = vector.extract_strided_slice %0 {offsets = [2, 1, 0, 0], sizes = [1, 1, 1, 32], strides = [1, 1, 1, 1]} : vector<3x3x1x32xf32> to vector<1x1x1x32xf32>
    %679 = vector.shape_cast %678 : vector<1x1x1x32xf32> to vector<1x32xf32>
    %680 = vector.shape_cast %679 : vector<1x32xf32> to vector<1x1x1x32xf32>
    %681 = vector.broadcast %622 : vector<3x3x8x1xf32> to vector<3x3x8x32xf32>
    %682 = vector.broadcast %680 : vector<1x1x1x32xf32> to vector<3x3x8x32xf32>
    %683 = arith.mulf %681, %682 : vector<3x3x8x32xf32>
    %684 = arith.addf %677, %683 : vector<3x3x8x32xf32>
    %c0_153 = arith.constant 0 : index
    %c3_154 = arith.constant 3 : index
    %c1_155 = arith.constant 1 : index
    %c0_156 = arith.constant 0 : index
    %c0_157 = arith.constant 0 : index
    %c0_158 = arith.constant 0 : index
    %685 = vector.load %arg1[%c0_153, %c3_154, %c1_155, %c0_156, %c0_157, %c0_158] : memref<1x16x4x4x8x1xf32, #tpu.memory_space<vmem>>, vector<1x1x3x3x8x1xf32>
    %686 = vector.shape_cast %685 : vector<1x1x3x3x8x1xf32> to vector<3x3x8x1xf32>
    %687 = vector.extract_strided_slice %0 {offsets = [2, 2, 0, 0], sizes = [1, 1, 1, 32], strides = [1, 1, 1, 1]} : vector<3x3x1x32xf32> to vector<1x1x1x32xf32>
    %688 = vector.shape_cast %687 : vector<1x1x1x32xf32> to vector<1x32xf32>
    %689 = vector.shape_cast %688 : vector<1x32xf32> to vector<1x1x1x32xf32>
    %690 = vector.broadcast %686 : vector<3x3x8x1xf32> to vector<3x3x8x32xf32>
    %691 = vector.broadcast %689 : vector<1x1x1x32xf32> to vector<3x3x8x32xf32>
    %692 = arith.mulf %690, %691 : vector<3x3x8x32xf32>
    %693 = arith.addf %684, %692 : vector<3x3x8x32xf32>
    %694 = arith.maximumf %629, %693 : vector<3x3x8x32xf32>
    %695 = vector.extract_strided_slice %0 {offsets = [0, 0, 0, 0], sizes = [1, 1, 1, 32], strides = [1, 1, 1, 1]} : vector<3x3x1x32xf32> to vector<1x1x1x32xf32>
    %696 = vector.shape_cast %695 : vector<1x1x1x32xf32> to vector<1x32xf32>
    %697 = vector.shape_cast %696 : vector<1x32xf32> to vector<1x1x1x32xf32>
    %698 = vector.broadcast %193 : vector<3x3x8x1xf32> to vector<3x3x8x32xf32>
    %699 = vector.broadcast %697 : vector<1x1x1x32xf32> to vector<3x3x8x32xf32>
    %700 = arith.mulf %698, %699 : vector<3x3x8x32xf32>
    %701 = vector.extract_strided_slice %0 {offsets = [0, 1, 0, 0], sizes = [1, 1, 1, 32], strides = [1, 1, 1, 1]} : vector<3x3x1x32xf32> to vector<1x1x1x32xf32>
    %702 = vector.shape_cast %701 : vector<1x1x1x32xf32> to vector<1x32xf32>
    %703 = vector.shape_cast %702 : vector<1x32xf32> to vector<1x1x1x32xf32>
    %704 = vector.broadcast %202 : vector<3x3x8x1xf32> to vector<3x3x8x32xf32>
    %705 = vector.broadcast %703 : vector<1x1x1x32xf32> to vector<3x3x8x32xf32>
    %706 = arith.mulf %704, %705 : vector<3x3x8x32xf32>
    %707 = arith.addf %700, %706 : vector<3x3x8x32xf32>
    %708 = vector.extract_strided_slice %0 {offsets = [0, 2, 0, 0], sizes = [1, 1, 1, 32], strides = [1, 1, 1, 1]} : vector<3x3x1x32xf32> to vector<1x1x1x32xf32>
    %709 = vector.shape_cast %708 : vector<1x1x1x32xf32> to vector<1x32xf32>
    %710 = vector.shape_cast %709 : vector<1x32xf32> to vector<1x1x1x32xf32>
    %711 = vector.broadcast %211 : vector<3x3x8x1xf32> to vector<3x3x8x32xf32>
    %712 = vector.broadcast %710 : vector<1x1x1x32xf32> to vector<3x3x8x32xf32>
    %713 = arith.mulf %711, %712 : vector<3x3x8x32xf32>
    %714 = arith.addf %707, %713 : vector<3x3x8x32xf32>
    %715 = vector.extract_strided_slice %0 {offsets = [1, 0, 0, 0], sizes = [1, 1, 1, 32], strides = [1, 1, 1, 1]} : vector<3x3x1x32xf32> to vector<1x1x1x32xf32>
    %716 = vector.shape_cast %715 : vector<1x1x1x32xf32> to vector<1x32xf32>
    %717 = vector.shape_cast %716 : vector<1x32xf32> to vector<1x1x1x32xf32>
    %718 = vector.broadcast %604 : vector<3x3x8x1xf32> to vector<3x3x8x32xf32>
    %719 = vector.broadcast %717 : vector<1x1x1x32xf32> to vector<3x3x8x32xf32>
    %720 = arith.mulf %718, %719 : vector<3x3x8x32xf32>
    %721 = arith.addf %714, %720 : vector<3x3x8x32xf32>
    %722 = vector.extract_strided_slice %0 {offsets = [1, 1, 0, 0], sizes = [1, 1, 1, 32], strides = [1, 1, 1, 1]} : vector<3x3x1x32xf32> to vector<1x1x1x32xf32>
    %723 = vector.shape_cast %722 : vector<1x1x1x32xf32> to vector<1x32xf32>
    %724 = vector.shape_cast %723 : vector<1x32xf32> to vector<1x1x1x32xf32>
    %725 = vector.broadcast %613 : vector<3x3x8x1xf32> to vector<3x3x8x32xf32>
    %726 = vector.broadcast %724 : vector<1x1x1x32xf32> to vector<3x3x8x32xf32>
    %727 = arith.mulf %725, %726 : vector<3x3x8x32xf32>
    %728 = arith.addf %721, %727 : vector<3x3x8x32xf32>
    %729 = vector.extract_strided_slice %0 {offsets = [1, 2, 0, 0], sizes = [1, 1, 1, 32], strides = [1, 1, 1, 1]} : vector<3x3x1x32xf32> to vector<1x1x1x32xf32>
    %730 = vector.shape_cast %729 : vector<1x1x1x32xf32> to vector<1x32xf32>
    %731 = vector.shape_cast %730 : vector<1x32xf32> to vector<1x1x1x32xf32>
    %732 = vector.broadcast %622 : vector<3x3x8x1xf32> to vector<3x3x8x32xf32>
    %733 = vector.broadcast %731 : vector<1x1x1x32xf32> to vector<3x3x8x32xf32>
    %734 = arith.mulf %732, %733 : vector<3x3x8x32xf32>
    %735 = arith.addf %728, %734 : vector<3x3x8x32xf32>
    %c0_159 = arith.constant 0 : index
    %c4_160 = arith.constant 4 : index
    %c1_161 = arith.constant 1 : index
    %c0_162 = arith.constant 0 : index
    %c0_163 = arith.constant 0 : index
    %c0_164 = arith.constant 0 : index
    %736 = vector.load %arg1[%c0_159, %c4_160, %c1_161, %c0_162, %c0_163, %c0_164] : memref<1x16x4x4x8x1xf32, #tpu.memory_space<vmem>>, vector<1x1x3x3x8x1xf32>
    %737 = vector.shape_cast %736 : vector<1x1x3x3x8x1xf32> to vector<3x3x8x1xf32>
    %738 = vector.extract_strided_slice %0 {offsets = [2, 0, 0, 0], sizes = [1, 1, 1, 32], strides = [1, 1, 1, 1]} : vector<3x3x1x32xf32> to vector<1x1x1x32xf32>
    %739 = vector.shape_cast %738 : vector<1x1x1x32xf32> to vector<1x32xf32>
    %740 = vector.shape_cast %739 : vector<1x32xf32> to vector<1x1x1x32xf32>
    %741 = vector.broadcast %737 : vector<3x3x8x1xf32> to vector<3x3x8x32xf32>
    %742 = vector.broadcast %740 : vector<1x1x1x32xf32> to vector<3x3x8x32xf32>
    %743 = arith.mulf %741, %742 : vector<3x3x8x32xf32>
    %744 = arith.addf %735, %743 : vector<3x3x8x32xf32>
    %c0_165 = arith.constant 0 : index
    %c5_166 = arith.constant 5 : index
    %c1_167 = arith.constant 1 : index
    %c0_168 = arith.constant 0 : index
    %c0_169 = arith.constant 0 : index
    %c0_170 = arith.constant 0 : index
    %745 = vector.load %arg1[%c0_165, %c5_166, %c1_167, %c0_168, %c0_169, %c0_170] : memref<1x16x4x4x8x1xf32, #tpu.memory_space<vmem>>, vector<1x1x3x3x8x1xf32>
    %746 = vector.shape_cast %745 : vector<1x1x3x3x8x1xf32> to vector<3x3x8x1xf32>
    %747 = vector.extract_strided_slice %0 {offsets = [2, 1, 0, 0], sizes = [1, 1, 1, 32], strides = [1, 1, 1, 1]} : vector<3x3x1x32xf32> to vector<1x1x1x32xf32>
    %748 = vector.shape_cast %747 : vector<1x1x1x32xf32> to vector<1x32xf32>
    %749 = vector.shape_cast %748 : vector<1x32xf32> to vector<1x1x1x32xf32>
    %750 = vector.broadcast %746 : vector<3x3x8x1xf32> to vector<3x3x8x32xf32>
    %751 = vector.broadcast %749 : vector<1x1x1x32xf32> to vector<3x3x8x32xf32>
    %752 = arith.mulf %750, %751 : vector<3x3x8x32xf32>
    %753 = arith.addf %744, %752 : vector<3x3x8x32xf32>
    %c0_171 = arith.constant 0 : index
    %c6_172 = arith.constant 6 : index
    %c1_173 = arith.constant 1 : index
    %c0_174 = arith.constant 0 : index
    %c0_175 = arith.constant 0 : index
    %c0_176 = arith.constant 0 : index
    %754 = vector.load %arg1[%c0_171, %c6_172, %c1_173, %c0_174, %c0_175, %c0_176] : memref<1x16x4x4x8x1xf32, #tpu.memory_space<vmem>>, vector<1x1x3x3x8x1xf32>
    %755 = vector.shape_cast %754 : vector<1x1x3x3x8x1xf32> to vector<3x3x8x1xf32>
    %756 = vector.extract_strided_slice %0 {offsets = [2, 2, 0, 0], sizes = [1, 1, 1, 32], strides = [1, 1, 1, 1]} : vector<3x3x1x32xf32> to vector<1x1x1x32xf32>
    %757 = vector.shape_cast %756 : vector<1x1x1x32xf32> to vector<1x32xf32>
    %758 = vector.shape_cast %757 : vector<1x32xf32> to vector<1x1x1x32xf32>
    %759 = vector.broadcast %755 : vector<3x3x8x1xf32> to vector<3x3x8x32xf32>
    %760 = vector.broadcast %758 : vector<1x1x1x32xf32> to vector<3x3x8x32xf32>
    %761 = arith.mulf %759, %760 : vector<3x3x8x32xf32>
    %762 = arith.addf %753, %761 : vector<3x3x8x32xf32>
    %763 = arith.maximumf %694, %762 : vector<3x3x8x32xf32>
    %764 = vector.extract_strided_slice %0 {offsets = [0, 0, 0, 0], sizes = [1, 1, 1, 32], strides = [1, 1, 1, 1]} : vector<3x3x1x32xf32> to vector<1x1x1x32xf32>
    %765 = vector.shape_cast %764 : vector<1x1x1x32xf32> to vector<1x32xf32>
    %766 = vector.shape_cast %765 : vector<1x32xf32> to vector<1x1x1x32xf32>
    %767 = vector.broadcast %202 : vector<3x3x8x1xf32> to vector<3x3x8x32xf32>
    %768 = vector.broadcast %766 : vector<1x1x1x32xf32> to vector<3x3x8x32xf32>
    %769 = arith.mulf %767, %768 : vector<3x3x8x32xf32>
    %770 = vector.extract_strided_slice %0 {offsets = [0, 1, 0, 0], sizes = [1, 1, 1, 32], strides = [1, 1, 1, 1]} : vector<3x3x1x32xf32> to vector<1x1x1x32xf32>
    %771 = vector.shape_cast %770 : vector<1x1x1x32xf32> to vector<1x32xf32>
    %772 = vector.shape_cast %771 : vector<1x32xf32> to vector<1x1x1x32xf32>
    %773 = vector.broadcast %211 : vector<3x3x8x1xf32> to vector<3x3x8x32xf32>
    %774 = vector.broadcast %772 : vector<1x1x1x32xf32> to vector<3x3x8x32xf32>
    %775 = arith.mulf %773, %774 : vector<3x3x8x32xf32>
    %776 = arith.addf %769, %775 : vector<3x3x8x32xf32>
    %777 = vector.extract_strided_slice %0 {offsets = [0, 2, 0, 0], sizes = [1, 1, 1, 32], strides = [1, 1, 1, 1]} : vector<3x3x1x32xf32> to vector<1x1x1x32xf32>
    %778 = vector.shape_cast %777 : vector<1x1x1x32xf32> to vector<1x32xf32>
    %779 = vector.shape_cast %778 : vector<1x32xf32> to vector<1x1x1x32xf32>
    %780 = vector.broadcast %276 : vector<3x3x8x1xf32> to vector<3x3x8x32xf32>
    %781 = vector.broadcast %779 : vector<1x1x1x32xf32> to vector<3x3x8x32xf32>
    %782 = arith.mulf %780, %781 : vector<3x3x8x32xf32>
    %783 = arith.addf %776, %782 : vector<3x3x8x32xf32>
    %784 = vector.extract_strided_slice %0 {offsets = [1, 0, 0, 0], sizes = [1, 1, 1, 32], strides = [1, 1, 1, 1]} : vector<3x3x1x32xf32> to vector<1x1x1x32xf32>
    %785 = vector.shape_cast %784 : vector<1x1x1x32xf32> to vector<1x32xf32>
    %786 = vector.shape_cast %785 : vector<1x32xf32> to vector<1x1x1x32xf32>
    %787 = vector.broadcast %613 : vector<3x3x8x1xf32> to vector<3x3x8x32xf32>
    %788 = vector.broadcast %786 : vector<1x1x1x32xf32> to vector<3x3x8x32xf32>
    %789 = arith.mulf %787, %788 : vector<3x3x8x32xf32>
    %790 = arith.addf %783, %789 : vector<3x3x8x32xf32>
    %791 = vector.extract_strided_slice %0 {offsets = [1, 1, 0, 0], sizes = [1, 1, 1, 32], strides = [1, 1, 1, 1]} : vector<3x3x1x32xf32> to vector<1x1x1x32xf32>
    %792 = vector.shape_cast %791 : vector<1x1x1x32xf32> to vector<1x32xf32>
    %793 = vector.shape_cast %792 : vector<1x32xf32> to vector<1x1x1x32xf32>
    %794 = vector.broadcast %622 : vector<3x3x8x1xf32> to vector<3x3x8x32xf32>
    %795 = vector.broadcast %793 : vector<1x1x1x32xf32> to vector<3x3x8x32xf32>
    %796 = arith.mulf %794, %795 : vector<3x3x8x32xf32>
    %797 = arith.addf %790, %796 : vector<3x3x8x32xf32>
    %798 = vector.extract_strided_slice %0 {offsets = [1, 2, 0, 0], sizes = [1, 1, 1, 32], strides = [1, 1, 1, 1]} : vector<3x3x1x32xf32> to vector<1x1x1x32xf32>
    %799 = vector.shape_cast %798 : vector<1x1x1x32xf32> to vector<1x32xf32>
    %800 = vector.shape_cast %799 : vector<1x32xf32> to vector<1x1x1x32xf32>
    %801 = vector.broadcast %686 : vector<3x3x8x1xf32> to vector<3x3x8x32xf32>
    %802 = vector.broadcast %800 : vector<1x1x1x32xf32> to vector<3x3x8x32xf32>
    %803 = arith.mulf %801, %802 : vector<3x3x8x32xf32>
    %804 = arith.addf %797, %803 : vector<3x3x8x32xf32>
    %805 = vector.extract_strided_slice %0 {offsets = [2, 0, 0, 0], sizes = [1, 1, 1, 32], strides = [1, 1, 1, 1]} : vector<3x3x1x32xf32> to vector<1x1x1x32xf32>
    %806 = vector.shape_cast %805 : vector<1x1x1x32xf32> to vector<1x32xf32>
    %807 = vector.shape_cast %806 : vector<1x32xf32> to vector<1x1x1x32xf32>
    %808 = vector.broadcast %746 : vector<3x3x8x1xf32> to vector<3x3x8x32xf32>
    %809 = vector.broadcast %807 : vector<1x1x1x32xf32> to vector<3x3x8x32xf32>
    %810 = arith.mulf %808, %809 : vector<3x3x8x32xf32>
    %811 = arith.addf %804, %810 : vector<3x3x8x32xf32>
    %812 = vector.extract_strided_slice %0 {offsets = [2, 1, 0, 0], sizes = [1, 1, 1, 32], strides = [1, 1, 1, 1]} : vector<3x3x1x32xf32> to vector<1x1x1x32xf32>
    %813 = vector.shape_cast %812 : vector<1x1x1x32xf32> to vector<1x32xf32>
    %814 = vector.shape_cast %813 : vector<1x32xf32> to vector<1x1x1x32xf32>
    %815 = vector.broadcast %755 : vector<3x3x8x1xf32> to vector<3x3x8x32xf32>
    %816 = vector.broadcast %814 : vector<1x1x1x32xf32> to vector<3x3x8x32xf32>
    %817 = arith.mulf %815, %816 : vector<3x3x8x32xf32>
    %818 = arith.addf %811, %817 : vector<3x3x8x32xf32>
    %c0_177 = arith.constant 0 : index
    %c7_178 = arith.constant 7 : index
    %c1_179 = arith.constant 1 : index
    %c0_180 = arith.constant 0 : index
    %c0_181 = arith.constant 0 : index
    %c0_182 = arith.constant 0 : index
    %819 = vector.load %arg1[%c0_177, %c7_178, %c1_179, %c0_180, %c0_181, %c0_182] : memref<1x16x4x4x8x1xf32, #tpu.memory_space<vmem>>, vector<1x1x3x3x8x1xf32>
    %820 = vector.shape_cast %819 : vector<1x1x3x3x8x1xf32> to vector<3x3x8x1xf32>
    %821 = vector.extract_strided_slice %0 {offsets = [2, 2, 0, 0], sizes = [1, 1, 1, 32], strides = [1, 1, 1, 1]} : vector<3x3x1x32xf32> to vector<1x1x1x32xf32>
    %822 = vector.shape_cast %821 : vector<1x1x1x32xf32> to vector<1x32xf32>
    %823 = vector.shape_cast %822 : vector<1x32xf32> to vector<1x1x1x32xf32>
    %824 = vector.broadcast %820 : vector<3x3x8x1xf32> to vector<3x3x8x32xf32>
    %825 = vector.broadcast %823 : vector<1x1x1x32xf32> to vector<3x3x8x32xf32>
    %826 = arith.mulf %824, %825 : vector<3x3x8x32xf32>
    %827 = arith.addf %818, %826 : vector<3x3x8x32xf32>
    %828 = arith.maximumf %763, %827 : vector<3x3x8x32xf32>
    %829 = vector.shape_cast %1 : vector<1x32xf32> to vector<1x1x1x32xf32>
    %830 = vector.broadcast %829 : vector<1x1x1x32xf32> to vector<3x3x8x32xf32>
    %831 = arith.addf %828, %830 : vector<3x3x8x32xf32>
    %cst_183 = arith.constant 0.000000e+00 : f32
    %832 = vector.broadcast %cst_183 : f32 to vector<3x3x8x32xf32>
    %833 = arith.maximumf %831, %832 : vector<3x3x8x32xf32>
    %834 = vector.extract_strided_slice %0 {offsets = [0, 0, 0, 0], sizes = [1, 1, 1, 32], strides = [1, 1, 1, 1]} : vector<3x3x1x32xf32> to vector<1x1x1x32xf32>
    %835 = vector.shape_cast %834 : vector<1x1x1x32xf32> to vector<1x32xf32>
    %836 = vector.shape_cast %835 : vector<1x32xf32> to vector<1x1x1x32xf32>
    %837 = vector.broadcast %74 : vector<3x3x8x1xf32> to vector<3x3x8x32xf32>
    %838 = vector.broadcast %836 : vector<1x1x1x32xf32> to vector<3x3x8x32xf32>
    %839 = arith.mulf %837, %838 : vector<3x3x8x32xf32>
    %840 = vector.extract_strided_slice %0 {offsets = [0, 1, 0, 0], sizes = [1, 1, 1, 32], strides = [1, 1, 1, 1]} : vector<3x3x1x32xf32> to vector<1x1x1x32xf32>
    %841 = vector.shape_cast %840 : vector<1x1x1x32xf32> to vector<1x32xf32>
    %842 = vector.shape_cast %841 : vector<1x32xf32> to vector<1x1x1x32xf32>
    %843 = vector.broadcast %142 : vector<3x3x8x1xf32> to vector<3x3x8x32xf32>
    %844 = vector.broadcast %842 : vector<1x1x1x32xf32> to vector<3x3x8x32xf32>
    %845 = arith.mulf %843, %844 : vector<3x3x8x32xf32>
    %846 = arith.addf %839, %845 : vector<3x3x8x32xf32>
    %847 = vector.extract_strided_slice %0 {offsets = [0, 2, 0, 0], sizes = [1, 1, 1, 32], strides = [1, 1, 1, 1]} : vector<3x3x1x32xf32> to vector<1x1x1x32xf32>
    %848 = vector.shape_cast %847 : vector<1x1x1x32xf32> to vector<1x32xf32>
    %849 = vector.shape_cast %848 : vector<1x32xf32> to vector<1x1x1x32xf32>
    %850 = vector.broadcast %350 : vector<3x3x8x1xf32> to vector<3x3x8x32xf32>
    %851 = vector.broadcast %849 : vector<1x1x1x32xf32> to vector<3x3x8x32xf32>
    %852 = arith.mulf %850, %851 : vector<3x3x8x32xf32>
    %853 = arith.addf %846, %852 : vector<3x3x8x32xf32>
    %854 = vector.extract_strided_slice %0 {offsets = [1, 0, 0, 0], sizes = [1, 1, 1, 32], strides = [1, 1, 1, 1]} : vector<3x3x1x32xf32> to vector<1x1x1x32xf32>
    %855 = vector.shape_cast %854 : vector<1x1x1x32xf32> to vector<1x32xf32>
    %856 = vector.shape_cast %855 : vector<1x32xf32> to vector<1x1x1x32xf32>
    %857 = vector.broadcast %211 : vector<3x3x8x1xf32> to vector<3x3x8x32xf32>
    %858 = vector.broadcast %856 : vector<1x1x1x32xf32> to vector<3x3x8x32xf32>
    %859 = arith.mulf %857, %858 : vector<3x3x8x32xf32>
    %860 = arith.addf %853, %859 : vector<3x3x8x32xf32>
    %861 = vector.extract_strided_slice %0 {offsets = [1, 1, 0, 0], sizes = [1, 1, 1, 32], strides = [1, 1, 1, 1]} : vector<3x3x1x32xf32> to vector<1x1x1x32xf32>
    %862 = vector.shape_cast %861 : vector<1x1x1x32xf32> to vector<1x32xf32>
    %863 = vector.shape_cast %862 : vector<1x32xf32> to vector<1x1x1x32xf32>
    %864 = vector.broadcast %276 : vector<3x3x8x1xf32> to vector<3x3x8x32xf32>
    %865 = vector.broadcast %863 : vector<1x1x1x32xf32> to vector<3x3x8x32xf32>
    %866 = arith.mulf %864, %865 : vector<3x3x8x32xf32>
    %867 = arith.addf %860, %866 : vector<3x3x8x32xf32>
    %868 = vector.extract_strided_slice %0 {offsets = [1, 2, 0, 0], sizes = [1, 1, 1, 32], strides = [1, 1, 1, 1]} : vector<3x3x1x32xf32> to vector<1x1x1x32xf32>
    %869 = vector.shape_cast %868 : vector<1x1x1x32xf32> to vector<1x32xf32>
    %870 = vector.shape_cast %869 : vector<1x32xf32> to vector<1x1x1x32xf32>
    %871 = vector.broadcast %483 : vector<3x3x8x1xf32> to vector<3x3x8x32xf32>
    %872 = vector.broadcast %870 : vector<1x1x1x32xf32> to vector<3x3x8x32xf32>
    %873 = arith.mulf %871, %872 : vector<3x3x8x32xf32>
    %874 = arith.addf %867, %873 : vector<3x3x8x32xf32>
    %875 = vector.extract_strided_slice %0 {offsets = [2, 0, 0, 0], sizes = [1, 1, 1, 32], strides = [1, 1, 1, 1]} : vector<3x3x1x32xf32> to vector<1x1x1x32xf32>
    %876 = vector.shape_cast %875 : vector<1x1x1x32xf32> to vector<1x32xf32>
    %877 = vector.shape_cast %876 : vector<1x32xf32> to vector<1x1x1x32xf32>
    %878 = vector.broadcast %622 : vector<3x3x8x1xf32> to vector<3x3x8x32xf32>
    %879 = vector.broadcast %877 : vector<1x1x1x32xf32> to vector<3x3x8x32xf32>
    %880 = arith.mulf %878, %879 : vector<3x3x8x32xf32>
    %881 = arith.addf %874, %880 : vector<3x3x8x32xf32>
    %882 = vector.extract_strided_slice %0 {offsets = [2, 1, 0, 0], sizes = [1, 1, 1, 32], strides = [1, 1, 1, 1]} : vector<3x3x1x32xf32> to vector<1x1x1x32xf32>
    %883 = vector.shape_cast %882 : vector<1x1x1x32xf32> to vector<1x32xf32>
    %884 = vector.shape_cast %883 : vector<1x32xf32> to vector<1x1x1x32xf32>
    %885 = vector.broadcast %686 : vector<3x3x8x1xf32> to vector<3x3x8x32xf32>
    %886 = vector.broadcast %884 : vector<1x1x1x32xf32> to vector<3x3x8x32xf32>
    %887 = arith.mulf %885, %886 : vector<3x3x8x32xf32>
    %888 = arith.addf %881, %887 : vector<3x3x8x32xf32>
    %c0_184 = arith.constant 0 : index
    %c0_185 = arith.constant 0 : index
    %c1_186 = arith.constant 1 : index
    %c1_187 = arith.constant 1 : index
    %c0_188 = arith.constant 0 : index
    %c0_189 = arith.constant 0 : index
    %889 = vector.load %arg1[%c0_184, %c0_185, %c1_186, %c1_187, %c0_188, %c0_189] : memref<1x16x4x4x8x1xf32, #tpu.memory_space<vmem>>, vector<1x1x3x3x8x1xf32>
    %890 = vector.shape_cast %889 : vector<1x1x3x3x8x1xf32> to vector<3x3x8x1xf32>
    %891 = vector.extract_strided_slice %0 {offsets = [2, 2, 0, 0], sizes = [1, 1, 1, 32], strides = [1, 1, 1, 1]} : vector<3x3x1x32xf32> to vector<1x1x1x32xf32>
    %892 = vector.shape_cast %891 : vector<1x1x1x32xf32> to vector<1x32xf32>
    %893 = vector.shape_cast %892 : vector<1x32xf32> to vector<1x1x1x32xf32>
    %894 = vector.broadcast %890 : vector<3x3x8x1xf32> to vector<3x3x8x32xf32>
    %895 = vector.broadcast %893 : vector<1x1x1x32xf32> to vector<3x3x8x32xf32>
    %896 = arith.mulf %894, %895 : vector<3x3x8x32xf32>
    %897 = arith.addf %888, %896 : vector<3x3x8x32xf32>
    %898 = vector.extract_strided_slice %0 {offsets = [0, 0, 0, 0], sizes = [1, 1, 1, 32], strides = [1, 1, 1, 1]} : vector<3x3x1x32xf32> to vector<1x1x1x32xf32>
    %899 = vector.shape_cast %898 : vector<1x1x1x32xf32> to vector<1x32xf32>
    %900 = vector.shape_cast %899 : vector<1x32xf32> to vector<1x1x1x32xf32>
    %901 = vector.broadcast %142 : vector<3x3x8x1xf32> to vector<3x3x8x32xf32>
    %902 = vector.broadcast %900 : vector<1x1x1x32xf32> to vector<3x3x8x32xf32>
    %903 = arith.mulf %901, %902 : vector<3x3x8x32xf32>
    %904 = vector.extract_strided_slice %0 {offsets = [0, 1, 0, 0], sizes = [1, 1, 1, 32], strides = [1, 1, 1, 1]} : vector<3x3x1x32xf32> to vector<1x1x1x32xf32>
    %905 = vector.shape_cast %904 : vector<1x1x1x32xf32> to vector<1x32xf32>
    %906 = vector.shape_cast %905 : vector<1x32xf32> to vector<1x1x1x32xf32>
    %907 = vector.broadcast %350 : vector<3x3x8x1xf32> to vector<3x3x8x32xf32>
    %908 = vector.broadcast %906 : vector<1x1x1x32xf32> to vector<3x3x8x32xf32>
    %909 = arith.mulf %907, %908 : vector<3x3x8x32xf32>
    %910 = arith.addf %903, %909 : vector<3x3x8x32xf32>
    %911 = vector.extract_strided_slice %0 {offsets = [0, 2, 0, 0], sizes = [1, 1, 1, 32], strides = [1, 1, 1, 1]} : vector<3x3x1x32xf32> to vector<1x1x1x32xf32>
    %912 = vector.shape_cast %911 : vector<1x1x1x32xf32> to vector<1x32xf32>
    %913 = vector.shape_cast %912 : vector<1x32xf32> to vector<1x1x1x32xf32>
    %914 = vector.broadcast %418 : vector<3x3x8x1xf32> to vector<3x3x8x32xf32>
    %915 = vector.broadcast %913 : vector<1x1x1x32xf32> to vector<3x3x8x32xf32>
    %916 = arith.mulf %914, %915 : vector<3x3x8x32xf32>
    %917 = arith.addf %910, %916 : vector<3x3x8x32xf32>
    %918 = vector.extract_strided_slice %0 {offsets = [1, 0, 0, 0], sizes = [1, 1, 1, 32], strides = [1, 1, 1, 1]} : vector<3x3x1x32xf32> to vector<1x1x1x32xf32>
    %919 = vector.shape_cast %918 : vector<1x1x1x32xf32> to vector<1x32xf32>
    %920 = vector.shape_cast %919 : vector<1x32xf32> to vector<1x1x1x32xf32>
    %921 = vector.broadcast %276 : vector<3x3x8x1xf32> to vector<3x3x8x32xf32>
    %922 = vector.broadcast %920 : vector<1x1x1x32xf32> to vector<3x3x8x32xf32>
    %923 = arith.mulf %921, %922 : vector<3x3x8x32xf32>
    %924 = arith.addf %917, %923 : vector<3x3x8x32xf32>
    %925 = vector.extract_strided_slice %0 {offsets = [1, 1, 0, 0], sizes = [1, 1, 1, 32], strides = [1, 1, 1, 1]} : vector<3x3x1x32xf32> to vector<1x1x1x32xf32>
    %926 = vector.shape_cast %925 : vector<1x1x1x32xf32> to vector<1x32xf32>
    %927 = vector.shape_cast %926 : vector<1x32xf32> to vector<1x1x1x32xf32>
    %928 = vector.broadcast %483 : vector<3x3x8x1xf32> to vector<3x3x8x32xf32>
    %929 = vector.broadcast %927 : vector<1x1x1x32xf32> to vector<3x3x8x32xf32>
    %930 = arith.mulf %928, %929 : vector<3x3x8x32xf32>
    %931 = arith.addf %924, %930 : vector<3x3x8x32xf32>
    %932 = vector.extract_strided_slice %0 {offsets = [1, 2, 0, 0], sizes = [1, 1, 1, 32], strides = [1, 1, 1, 1]} : vector<3x3x1x32xf32> to vector<1x1x1x32xf32>
    %933 = vector.shape_cast %932 : vector<1x1x1x32xf32> to vector<1x32xf32>
    %934 = vector.shape_cast %933 : vector<1x32xf32> to vector<1x1x1x32xf32>
    %935 = vector.broadcast %548 : vector<3x3x8x1xf32> to vector<3x3x8x32xf32>
    %936 = vector.broadcast %934 : vector<1x1x1x32xf32> to vector<3x3x8x32xf32>
    %937 = arith.mulf %935, %936 : vector<3x3x8x32xf32>
    %938 = arith.addf %931, %937 : vector<3x3x8x32xf32>
    %939 = vector.extract_strided_slice %0 {offsets = [2, 0, 0, 0], sizes = [1, 1, 1, 32], strides = [1, 1, 1, 1]} : vector<3x3x1x32xf32> to vector<1x1x1x32xf32>
    %940 = vector.shape_cast %939 : vector<1x1x1x32xf32> to vector<1x32xf32>
    %941 = vector.shape_cast %940 : vector<1x32xf32> to vector<1x1x1x32xf32>
    %942 = vector.broadcast %686 : vector<3x3x8x1xf32> to vector<3x3x8x32xf32>
    %943 = vector.broadcast %941 : vector<1x1x1x32xf32> to vector<3x3x8x32xf32>
    %944 = arith.mulf %942, %943 : vector<3x3x8x32xf32>
    %945 = arith.addf %938, %944 : vector<3x3x8x32xf32>
    %946 = vector.extract_strided_slice %0 {offsets = [2, 1, 0, 0], sizes = [1, 1, 1, 32], strides = [1, 1, 1, 1]} : vector<3x3x1x32xf32> to vector<1x1x1x32xf32>
    %947 = vector.shape_cast %946 : vector<1x1x1x32xf32> to vector<1x32xf32>
    %948 = vector.shape_cast %947 : vector<1x32xf32> to vector<1x1x1x32xf32>
    %949 = vector.broadcast %890 : vector<3x3x8x1xf32> to vector<3x3x8x32xf32>
    %950 = vector.broadcast %948 : vector<1x1x1x32xf32> to vector<3x3x8x32xf32>
    %951 = arith.mulf %949, %950 : vector<3x3x8x32xf32>
    %952 = arith.addf %945, %951 : vector<3x3x8x32xf32>
    %c0_190 = arith.constant 0 : index
    %c1_191 = arith.constant 1 : index
    %c1_192 = arith.constant 1 : index
    %c1_193 = arith.constant 1 : index
    %c0_194 = arith.constant 0 : index
    %c0_195 = arith.constant 0 : index
    %953 = vector.load %arg1[%c0_190, %c1_191, %c1_192, %c1_193, %c0_194, %c0_195] : memref<1x16x4x4x8x1xf32, #tpu.memory_space<vmem>>, vector<1x1x3x3x8x1xf32>
    %954 = vector.shape_cast %953 : vector<1x1x3x3x8x1xf32> to vector<3x3x8x1xf32>
    %955 = vector.extract_strided_slice %0 {offsets = [2, 2, 0, 0], sizes = [1, 1, 1, 32], strides = [1, 1, 1, 1]} : vector<3x3x1x32xf32> to vector<1x1x1x32xf32>
    %956 = vector.shape_cast %955 : vector<1x1x1x32xf32> to vector<1x32xf32>
    %957 = vector.shape_cast %956 : vector<1x32xf32> to vector<1x1x1x32xf32>
    %958 = vector.broadcast %954 : vector<3x3x8x1xf32> to vector<3x3x8x32xf32>
    %959 = vector.broadcast %957 : vector<1x1x1x32xf32> to vector<3x3x8x32xf32>
    %960 = arith.mulf %958, %959 : vector<3x3x8x32xf32>
    %961 = arith.addf %952, %960 : vector<3x3x8x32xf32>
    %962 = arith.maximumf %897, %961 : vector<3x3x8x32xf32>
    %963 = vector.extract_strided_slice %0 {offsets = [0, 0, 0, 0], sizes = [1, 1, 1, 32], strides = [1, 1, 1, 1]} : vector<3x3x1x32xf32> to vector<1x1x1x32xf32>
    %964 = vector.shape_cast %963 : vector<1x1x1x32xf32> to vector<1x32xf32>
    %965 = vector.shape_cast %964 : vector<1x32xf32> to vector<1x1x1x32xf32>
    %966 = vector.broadcast %211 : vector<3x3x8x1xf32> to vector<3x3x8x32xf32>
    %967 = vector.broadcast %965 : vector<1x1x1x32xf32> to vector<3x3x8x32xf32>
    %968 = arith.mulf %966, %967 : vector<3x3x8x32xf32>
    %969 = vector.extract_strided_slice %0 {offsets = [0, 1, 0, 0], sizes = [1, 1, 1, 32], strides = [1, 1, 1, 1]} : vector<3x3x1x32xf32> to vector<1x1x1x32xf32>
    %970 = vector.shape_cast %969 : vector<1x1x1x32xf32> to vector<1x32xf32>
    %971 = vector.shape_cast %970 : vector<1x32xf32> to vector<1x1x1x32xf32>
    %972 = vector.broadcast %276 : vector<3x3x8x1xf32> to vector<3x3x8x32xf32>
    %973 = vector.broadcast %971 : vector<1x1x1x32xf32> to vector<3x3x8x32xf32>
    %974 = arith.mulf %972, %973 : vector<3x3x8x32xf32>
    %975 = arith.addf %968, %974 : vector<3x3x8x32xf32>
    %976 = vector.extract_strided_slice %0 {offsets = [0, 2, 0, 0], sizes = [1, 1, 1, 32], strides = [1, 1, 1, 1]} : vector<3x3x1x32xf32> to vector<1x1x1x32xf32>
    %977 = vector.shape_cast %976 : vector<1x1x1x32xf32> to vector<1x32xf32>
    %978 = vector.shape_cast %977 : vector<1x32xf32> to vector<1x1x1x32xf32>
    %979 = vector.broadcast %483 : vector<3x3x8x1xf32> to vector<3x3x8x32xf32>
    %980 = vector.broadcast %978 : vector<1x1x1x32xf32> to vector<3x3x8x32xf32>
    %981 = arith.mulf %979, %980 : vector<3x3x8x32xf32>
    %982 = arith.addf %975, %981 : vector<3x3x8x32xf32>
    %983 = vector.extract_strided_slice %0 {offsets = [1, 0, 0, 0], sizes = [1, 1, 1, 32], strides = [1, 1, 1, 1]} : vector<3x3x1x32xf32> to vector<1x1x1x32xf32>
    %984 = vector.shape_cast %983 : vector<1x1x1x32xf32> to vector<1x32xf32>
    %985 = vector.shape_cast %984 : vector<1x32xf32> to vector<1x1x1x32xf32>
    %986 = vector.broadcast %622 : vector<3x3x8x1xf32> to vector<3x3x8x32xf32>
    %987 = vector.broadcast %985 : vector<1x1x1x32xf32> to vector<3x3x8x32xf32>
    %988 = arith.mulf %986, %987 : vector<3x3x8x32xf32>
    %989 = arith.addf %982, %988 : vector<3x3x8x32xf32>
    %990 = vector.extract_strided_slice %0 {offsets = [1, 1, 0, 0], sizes = [1, 1, 1, 32], strides = [1, 1, 1, 1]} : vector<3x3x1x32xf32> to vector<1x1x1x32xf32>
    %991 = vector.shape_cast %990 : vector<1x1x1x32xf32> to vector<1x32xf32>
    %992 = vector.shape_cast %991 : vector<1x32xf32> to vector<1x1x1x32xf32>
    %993 = vector.broadcast %686 : vector<3x3x8x1xf32> to vector<3x3x8x32xf32>
    %994 = vector.broadcast %992 : vector<1x1x1x32xf32> to vector<3x3x8x32xf32>
    %995 = arith.mulf %993, %994 : vector<3x3x8x32xf32>
    %996 = arith.addf %989, %995 : vector<3x3x8x32xf32>
    %997 = vector.extract_strided_slice %0 {offsets = [1, 2, 0, 0], sizes = [1, 1, 1, 32], strides = [1, 1, 1, 1]} : vector<3x3x1x32xf32> to vector<1x1x1x32xf32>
    %998 = vector.shape_cast %997 : vector<1x1x1x32xf32> to vector<1x32xf32>
    %999 = vector.shape_cast %998 : vector<1x32xf32> to vector<1x1x1x32xf32>
    %1000 = vector.broadcast %890 : vector<3x3x8x1xf32> to vector<3x3x8x32xf32>
    %1001 = vector.broadcast %999 : vector<1x1x1x32xf32> to vector<3x3x8x32xf32>
    %1002 = arith.mulf %1000, %1001 : vector<3x3x8x32xf32>
    %1003 = arith.addf %996, %1002 : vector<3x3x8x32xf32>
    %1004 = vector.extract_strided_slice %0 {offsets = [2, 0, 0, 0], sizes = [1, 1, 1, 32], strides = [1, 1, 1, 1]} : vector<3x3x1x32xf32> to vector<1x1x1x32xf32>
    %1005 = vector.shape_cast %1004 : vector<1x1x1x32xf32> to vector<1x32xf32>
    %1006 = vector.shape_cast %1005 : vector<1x32xf32> to vector<1x1x1x32xf32>
    %1007 = vector.broadcast %755 : vector<3x3x8x1xf32> to vector<3x3x8x32xf32>
    %1008 = vector.broadcast %1006 : vector<1x1x1x32xf32> to vector<3x3x8x32xf32>
    %1009 = arith.mulf %1007, %1008 : vector<3x3x8x32xf32>
    %1010 = arith.addf %1003, %1009 : vector<3x3x8x32xf32>
    %1011 = vector.extract_strided_slice %0 {offsets = [2, 1, 0, 0], sizes = [1, 1, 1, 32], strides = [1, 1, 1, 1]} : vector<3x3x1x32xf32> to vector<1x1x1x32xf32>
    %1012 = vector.shape_cast %1011 : vector<1x1x1x32xf32> to vector<1x32xf32>
    %1013 = vector.shape_cast %1012 : vector<1x32xf32> to vector<1x1x1x32xf32>
    %1014 = vector.broadcast %820 : vector<3x3x8x1xf32> to vector<3x3x8x32xf32>
    %1015 = vector.broadcast %1013 : vector<1x1x1x32xf32> to vector<3x3x8x32xf32>
    %1016 = arith.mulf %1014, %1015 : vector<3x3x8x32xf32>
    %1017 = arith.addf %1010, %1016 : vector<3x3x8x32xf32>
    %c0_196 = arith.constant 0 : index
    %c4_197 = arith.constant 4 : index
    %c1_198 = arith.constant 1 : index
    %c1_199 = arith.constant 1 : index
    %c0_200 = arith.constant 0 : index
    %c0_201 = arith.constant 0 : index
    %1018 = vector.load %arg1[%c0_196, %c4_197, %c1_198, %c1_199, %c0_200, %c0_201] : memref<1x16x4x4x8x1xf32, #tpu.memory_space<vmem>>, vector<1x1x3x3x8x1xf32>
    %1019 = vector.shape_cast %1018 : vector<1x1x3x3x8x1xf32> to vector<3x3x8x1xf32>
    %1020 = vector.extract_strided_slice %0 {offsets = [2, 2, 0, 0], sizes = [1, 1, 1, 32], strides = [1, 1, 1, 1]} : vector<3x3x1x32xf32> to vector<1x1x1x32xf32>
    %1021 = vector.shape_cast %1020 : vector<1x1x1x32xf32> to vector<1x32xf32>
    %1022 = vector.shape_cast %1021 : vector<1x32xf32> to vector<1x1x1x32xf32>
    %1023 = vector.broadcast %1019 : vector<3x3x8x1xf32> to vector<3x3x8x32xf32>
    %1024 = vector.broadcast %1022 : vector<1x1x1x32xf32> to vector<3x3x8x32xf32>
    %1025 = arith.mulf %1023, %1024 : vector<3x3x8x32xf32>
    %1026 = arith.addf %1017, %1025 : vector<3x3x8x32xf32>
    %1027 = arith.maximumf %962, %1026 : vector<3x3x8x32xf32>
    %1028 = vector.extract_strided_slice %0 {offsets = [0, 0, 0, 0], sizes = [1, 1, 1, 32], strides = [1, 1, 1, 1]} : vector<3x3x1x32xf32> to vector<1x1x1x32xf32>
    %1029 = vector.shape_cast %1028 : vector<1x1x1x32xf32> to vector<1x32xf32>
    %1030 = vector.shape_cast %1029 : vector<1x32xf32> to vector<1x1x1x32xf32>
    %1031 = vector.broadcast %276 : vector<3x3x8x1xf32> to vector<3x3x8x32xf32>
    %1032 = vector.broadcast %1030 : vector<1x1x1x32xf32> to vector<3x3x8x32xf32>
    %1033 = arith.mulf %1031, %1032 : vector<3x3x8x32xf32>
    %1034 = vector.extract_strided_slice %0 {offsets = [0, 1, 0, 0], sizes = [1, 1, 1, 32], strides = [1, 1, 1, 1]} : vector<3x3x1x32xf32> to vector<1x1x1x32xf32>
    %1035 = vector.shape_cast %1034 : vector<1x1x1x32xf32> to vector<1x32xf32>
    %1036 = vector.shape_cast %1035 : vector<1x32xf32> to vector<1x1x1x32xf32>
    %1037 = vector.broadcast %483 : vector<3x3x8x1xf32> to vector<3x3x8x32xf32>
    %1038 = vector.broadcast %1036 : vector<1x1x1x32xf32> to vector<3x3x8x32xf32>
    %1039 = arith.mulf %1037, %1038 : vector<3x3x8x32xf32>
    %1040 = arith.addf %1033, %1039 : vector<3x3x8x32xf32>
    %1041 = vector.extract_strided_slice %0 {offsets = [0, 2, 0, 0], sizes = [1, 1, 1, 32], strides = [1, 1, 1, 1]} : vector<3x3x1x32xf32> to vector<1x1x1x32xf32>
    %1042 = vector.shape_cast %1041 : vector<1x1x1x32xf32> to vector<1x32xf32>
    %1043 = vector.shape_cast %1042 : vector<1x32xf32> to vector<1x1x1x32xf32>
    %1044 = vector.broadcast %548 : vector<3x3x8x1xf32> to vector<3x3x8x32xf32>
    %1045 = vector.broadcast %1043 : vector<1x1x1x32xf32> to vector<3x3x8x32xf32>
    %1046 = arith.mulf %1044, %1045 : vector<3x3x8x32xf32>
    %1047 = arith.addf %1040, %1046 : vector<3x3x8x32xf32>
    %1048 = vector.extract_strided_slice %0 {offsets = [1, 0, 0, 0], sizes = [1, 1, 1, 32], strides = [1, 1, 1, 1]} : vector<3x3x1x32xf32> to vector<1x1x1x32xf32>
    %1049 = vector.shape_cast %1048 : vector<1x1x1x32xf32> to vector<1x32xf32>
    %1050 = vector.shape_cast %1049 : vector<1x32xf32> to vector<1x1x1x32xf32>
    %1051 = vector.broadcast %686 : vector<3x3x8x1xf32> to vector<3x3x8x32xf32>
    %1052 = vector.broadcast %1050 : vector<1x1x1x32xf32> to vector<3x3x8x32xf32>
    %1053 = arith.mulf %1051, %1052 : vector<3x3x8x32xf32>
    %1054 = arith.addf %1047, %1053 : vector<3x3x8x32xf32>
    %1055 = vector.extract_strided_slice %0 {offsets = [1, 1, 0, 0], sizes = [1, 1, 1, 32], strides = [1, 1, 1, 1]} : vector<3x3x1x32xf32> to vector<1x1x1x32xf32>
    %1056 = vector.shape_cast %1055 : vector<1x1x1x32xf32> to vector<1x32xf32>
    %1057 = vector.shape_cast %1056 : vector<1x32xf32> to vector<1x1x1x32xf32>
    %1058 = vector.broadcast %890 : vector<3x3x8x1xf32> to vector<3x3x8x32xf32>
    %1059 = vector.broadcast %1057 : vector<1x1x1x32xf32> to vector<3x3x8x32xf32>
    %1060 = arith.mulf %1058, %1059 : vector<3x3x8x32xf32>
    %1061 = arith.addf %1054, %1060 : vector<3x3x8x32xf32>
    %1062 = vector.extract_strided_slice %0 {offsets = [1, 2, 0, 0], sizes = [1, 1, 1, 32], strides = [1, 1, 1, 1]} : vector<3x3x1x32xf32> to vector<1x1x1x32xf32>
    %1063 = vector.shape_cast %1062 : vector<1x1x1x32xf32> to vector<1x32xf32>
    %1064 = vector.shape_cast %1063 : vector<1x32xf32> to vector<1x1x1x32xf32>
    %1065 = vector.broadcast %954 : vector<3x3x8x1xf32> to vector<3x3x8x32xf32>
    %1066 = vector.broadcast %1064 : vector<1x1x1x32xf32> to vector<3x3x8x32xf32>
    %1067 = arith.mulf %1065, %1066 : vector<3x3x8x32xf32>
    %1068 = arith.addf %1061, %1067 : vector<3x3x8x32xf32>
    %1069 = vector.extract_strided_slice %0 {offsets = [2, 0, 0, 0], sizes = [1, 1, 1, 32], strides = [1, 1, 1, 1]} : vector<3x3x1x32xf32> to vector<1x1x1x32xf32>
    %1070 = vector.shape_cast %1069 : vector<1x1x1x32xf32> to vector<1x32xf32>
    %1071 = vector.shape_cast %1070 : vector<1x32xf32> to vector<1x1x1x32xf32>
    %1072 = vector.broadcast %820 : vector<3x3x8x1xf32> to vector<3x3x8x32xf32>
    %1073 = vector.broadcast %1071 : vector<1x1x1x32xf32> to vector<3x3x8x32xf32>
    %1074 = arith.mulf %1072, %1073 : vector<3x3x8x32xf32>
    %1075 = arith.addf %1068, %1074 : vector<3x3x8x32xf32>
    %1076 = vector.extract_strided_slice %0 {offsets = [2, 1, 0, 0], sizes = [1, 1, 1, 32], strides = [1, 1, 1, 1]} : vector<3x3x1x32xf32> to vector<1x1x1x32xf32>
    %1077 = vector.shape_cast %1076 : vector<1x1x1x32xf32> to vector<1x32xf32>
    %1078 = vector.shape_cast %1077 : vector<1x32xf32> to vector<1x1x1x32xf32>
    %1079 = vector.broadcast %1019 : vector<3x3x8x1xf32> to vector<3x3x8x32xf32>
    %1080 = vector.broadcast %1078 : vector<1x1x1x32xf32> to vector<3x3x8x32xf32>
    %1081 = arith.mulf %1079, %1080 : vector<3x3x8x32xf32>
    %1082 = arith.addf %1075, %1081 : vector<3x3x8x32xf32>
    %c0_202 = arith.constant 0 : index
    %c5_203 = arith.constant 5 : index
    %c1_204 = arith.constant 1 : index
    %c1_205 = arith.constant 1 : index
    %c0_206 = arith.constant 0 : index
    %c0_207 = arith.constant 0 : index
    %1083 = vector.load %arg1[%c0_202, %c5_203, %c1_204, %c1_205, %c0_206, %c0_207] : memref<1x16x4x4x8x1xf32, #tpu.memory_space<vmem>>, vector<1x1x3x3x8x1xf32>
    %1084 = vector.shape_cast %1083 : vector<1x1x3x3x8x1xf32> to vector<3x3x8x1xf32>
    %1085 = vector.extract_strided_slice %0 {offsets = [2, 2, 0, 0], sizes = [1, 1, 1, 32], strides = [1, 1, 1, 1]} : vector<3x3x1x32xf32> to vector<1x1x1x32xf32>
    %1086 = vector.shape_cast %1085 : vector<1x1x1x32xf32> to vector<1x32xf32>
    %1087 = vector.shape_cast %1086 : vector<1x32xf32> to vector<1x1x1x32xf32>
    %1088 = vector.broadcast %1084 : vector<3x3x8x1xf32> to vector<3x3x8x32xf32>
    %1089 = vector.broadcast %1087 : vector<1x1x1x32xf32> to vector<3x3x8x32xf32>
    %1090 = arith.mulf %1088, %1089 : vector<3x3x8x32xf32>
    %1091 = arith.addf %1082, %1090 : vector<3x3x8x32xf32>
    %1092 = arith.maximumf %1027, %1091 : vector<3x3x8x32xf32>
    %1093 = vector.shape_cast %1 : vector<1x32xf32> to vector<1x1x1x32xf32>
    %1094 = vector.broadcast %1093 : vector<1x1x1x32xf32> to vector<3x3x8x32xf32>
    %1095 = arith.addf %1092, %1094 : vector<3x3x8x32xf32>
    %cst_208 = arith.constant 0.000000e+00 : f32
    %1096 = vector.broadcast %cst_208 : f32 to vector<3x3x8x32xf32>
    %1097 = arith.maximumf %1095, %1096 : vector<3x3x8x32xf32>
    %c0_209 = arith.constant 0 : index
    %c0_210 = arith.constant 0 : index
    %c0_211 = arith.constant 0 : index
    %1098 = vector.load %arg4[%c0_209, %c0_210, %c0_211] : memref<9x32x64xf32, #tpu.memory_space<vmem>>, vector<9x32x64xf32>
    %1099 = vector.extract_strided_slice %289 {offsets = [0, 0, 0, 0], sizes = [1, 1, 8, 32], strides = [1, 1, 1, 1]} : vector<3x3x8x32xf32> to vector<1x1x8x32xf32>
    %1100 = vector.shape_cast %1099 : vector<1x1x8x32xf32> to vector<8x32xf32>
    %1101 = vector.extract_strided_slice %289 {offsets = [0, 1, 0, 0], sizes = [1, 1, 8, 32], strides = [1, 1, 1, 1]} : vector<3x3x8x32xf32> to vector<1x1x8x32xf32>
    %1102 = vector.shape_cast %1101 : vector<1x1x8x32xf32> to vector<8x32xf32>
    %1103 = vector.extract_strided_slice %289 {offsets = [1, 0, 0, 0], sizes = [1, 1, 8, 32], strides = [1, 1, 1, 1]} : vector<3x3x8x32xf32> to vector<1x1x8x32xf32>
    %1104 = vector.shape_cast %1103 : vector<1x1x8x32xf32> to vector<8x32xf32>
    %1105 = vector.extract_strided_slice %289 {offsets = [1, 1, 0, 0], sizes = [1, 1, 8, 32], strides = [1, 1, 1, 1]} : vector<3x3x8x32xf32> to vector<1x1x8x32xf32>
    %1106 = vector.shape_cast %1105 : vector<1x1x8x32xf32> to vector<8x32xf32>
    %1107 = vector.extract_strided_slice %561 {offsets = [0, 0, 0, 0], sizes = [1, 1, 8, 32], strides = [1, 1, 1, 1]} : vector<3x3x8x32xf32> to vector<1x1x8x32xf32>
    %1108 = vector.shape_cast %1107 : vector<1x1x8x32xf32> to vector<8x32xf32>
    %1109 = vector.extract_strided_slice %561 {offsets = [0, 1, 0, 0], sizes = [1, 1, 8, 32], strides = [1, 1, 1, 1]} : vector<3x3x8x32xf32> to vector<1x1x8x32xf32>
    %1110 = vector.shape_cast %1109 : vector<1x1x8x32xf32> to vector<8x32xf32>
    %1111 = vector.extract_strided_slice %561 {offsets = [1, 0, 0, 0], sizes = [1, 1, 8, 32], strides = [1, 1, 1, 1]} : vector<3x3x8x32xf32> to vector<1x1x8x32xf32>
    %1112 = vector.shape_cast %1111 : vector<1x1x8x32xf32> to vector<8x32xf32>
    %1113 = vector.extract_strided_slice %561 {offsets = [1, 1, 0, 0], sizes = [1, 1, 8, 32], strides = [1, 1, 1, 1]} : vector<3x3x8x32xf32> to vector<1x1x8x32xf32>
    %1114 = vector.shape_cast %1113 : vector<1x1x8x32xf32> to vector<8x32xf32>
    %1115 = vector.extract_strided_slice %833 {offsets = [0, 0, 0, 0], sizes = [1, 1, 8, 32], strides = [1, 1, 1, 1]} : vector<3x3x8x32xf32> to vector<1x1x8x32xf32>
    %1116 = vector.shape_cast %1115 : vector<1x1x8x32xf32> to vector<8x32xf32>
    %1117 = vector.extract_strided_slice %833 {offsets = [0, 1, 0, 0], sizes = [1, 1, 8, 32], strides = [1, 1, 1, 1]} : vector<3x3x8x32xf32> to vector<1x1x8x32xf32>
    %1118 = vector.shape_cast %1117 : vector<1x1x8x32xf32> to vector<8x32xf32>
    %1119 = vector.extract_strided_slice %833 {offsets = [1, 0, 0, 0], sizes = [1, 1, 8, 32], strides = [1, 1, 1, 1]} : vector<3x3x8x32xf32> to vector<1x1x8x32xf32>
    %1120 = vector.shape_cast %1119 : vector<1x1x8x32xf32> to vector<8x32xf32>
    %1121 = vector.extract_strided_slice %833 {offsets = [1, 1, 0, 0], sizes = [1, 1, 8, 32], strides = [1, 1, 1, 1]} : vector<3x3x8x32xf32> to vector<1x1x8x32xf32>
    %1122 = vector.shape_cast %1121 : vector<1x1x8x32xf32> to vector<8x32xf32>
    %1123 = vector.extract_strided_slice %1097 {offsets = [0, 0, 0, 0], sizes = [1, 1, 8, 32], strides = [1, 1, 1, 1]} : vector<3x3x8x32xf32> to vector<1x1x8x32xf32>
    %1124 = vector.shape_cast %1123 : vector<1x1x8x32xf32> to vector<8x32xf32>
    %1125 = vector.extract_strided_slice %1097 {offsets = [0, 1, 0, 0], sizes = [1, 1, 8, 32], strides = [1, 1, 1, 1]} : vector<3x3x8x32xf32> to vector<1x1x8x32xf32>
    %1126 = vector.shape_cast %1125 : vector<1x1x8x32xf32> to vector<8x32xf32>
    %1127 = vector.extract_strided_slice %1097 {offsets = [1, 0, 0, 0], sizes = [1, 1, 8, 32], strides = [1, 1, 1, 1]} : vector<3x3x8x32xf32> to vector<1x1x8x32xf32>
    %1128 = vector.shape_cast %1127 : vector<1x1x8x32xf32> to vector<8x32xf32>
    %1129 = vector.extract_strided_slice %1097 {offsets = [1, 1, 0, 0], sizes = [1, 1, 8, 32], strides = [1, 1, 1, 1]} : vector<3x3x8x32xf32> to vector<1x1x8x32xf32>
    %1130 = vector.shape_cast %1129 : vector<1x1x8x32xf32> to vector<8x32xf32>
    %1131 = tpu.concatenate %1100, %1102, %1104, %1106, %1108, %1110, %1112, %1114, %1116, %1118, %1120, %1122, %1124, %1126, %1128, %1130 in 0 : vector<8x32xf32>, vector<8x32xf32>, vector<8x32xf32>, vector<8x32xf32>, vector<8x32xf32>, vector<8x32xf32>, vector<8x32xf32>, vector<8x32xf32>, vector<8x32xf32>, vector<8x32xf32>, vector<8x32xf32>, vector<8x32xf32>, vector<8x32xf32>, vector<8x32xf32>, vector<8x32xf32>, vector<8x32xf32> -> vector<128x32xf32>
    %1132 = vector.extract_strided_slice %1098 {offsets = [0, 0, 0], sizes = [1, 32, 64], strides = [1, 1, 1]} : vector<9x32x64xf32> to vector<1x32x64xf32>
    %1133 = vector.shape_cast %1132 : vector<1x32x64xf32> to vector<32x64xf32>
    %cst_212 = arith.constant dense<0.000000e+00> : vector<128x64xf32>
    %1134 = tpu.matmul %1131, %1133, %cst_212 {dimension_numbers = #tpu.dot_dimension_numbers<[1], [0], [0], [1], [0, 0, 1, 1], [], []>} : vector<128x32xf32>, vector<32x64xf32>, vector<128x64xf32> -> vector<128x64xf32>
    %1135 = vector.extract_strided_slice %561 {offsets = [0, 0, 0, 0], sizes = [1, 1, 8, 32], strides = [1, 1, 1, 1]} : vector<3x3x8x32xf32> to vector<1x1x8x32xf32>
    %1136 = vector.shape_cast %1135 : vector<1x1x8x32xf32> to vector<8x32xf32>
    %1137 = vector.extract_strided_slice %561 {offsets = [0, 1, 0, 0], sizes = [1, 1, 8, 32], strides = [1, 1, 1, 1]} : vector<3x3x8x32xf32> to vector<1x1x8x32xf32>
    %1138 = vector.shape_cast %1137 : vector<1x1x8x32xf32> to vector<8x32xf32>
    %1139 = vector.extract_strided_slice %561 {offsets = [1, 0, 0, 0], sizes = [1, 1, 8, 32], strides = [1, 1, 1, 1]} : vector<3x3x8x32xf32> to vector<1x1x8x32xf32>
    %1140 = vector.shape_cast %1139 : vector<1x1x8x32xf32> to vector<8x32xf32>
    %1141 = vector.extract_strided_slice %561 {offsets = [1, 1, 0, 0], sizes = [1, 1, 8, 32], strides = [1, 1, 1, 1]} : vector<3x3x8x32xf32> to vector<1x1x8x32xf32>
    %1142 = vector.shape_cast %1141 : vector<1x1x8x32xf32> to vector<8x32xf32>
    %1143 = vector.extract_strided_slice %289 {offsets = [0, 1, 0, 0], sizes = [1, 1, 8, 32], strides = [1, 1, 1, 1]} : vector<3x3x8x32xf32> to vector<1x1x8x32xf32>
    %1144 = vector.shape_cast %1143 : vector<1x1x8x32xf32> to vector<8x32xf32>
    %1145 = vector.extract_strided_slice %289 {offsets = [0, 2, 0, 0], sizes = [1, 1, 8, 32], strides = [1, 1, 1, 1]} : vector<3x3x8x32xf32> to vector<1x1x8x32xf32>
    %1146 = vector.shape_cast %1145 : vector<1x1x8x32xf32> to vector<8x32xf32>
    %1147 = vector.extract_strided_slice %289 {offsets = [1, 1, 0, 0], sizes = [1, 1, 8, 32], strides = [1, 1, 1, 1]} : vector<3x3x8x32xf32> to vector<1x1x8x32xf32>
    %1148 = vector.shape_cast %1147 : vector<1x1x8x32xf32> to vector<8x32xf32>
    %1149 = vector.extract_strided_slice %289 {offsets = [1, 2, 0, 0], sizes = [1, 1, 8, 32], strides = [1, 1, 1, 1]} : vector<3x3x8x32xf32> to vector<1x1x8x32xf32>
    %1150 = vector.shape_cast %1149 : vector<1x1x8x32xf32> to vector<8x32xf32>
    %1151 = vector.extract_strided_slice %1097 {offsets = [0, 0, 0, 0], sizes = [1, 1, 8, 32], strides = [1, 1, 1, 1]} : vector<3x3x8x32xf32> to vector<1x1x8x32xf32>
    %1152 = vector.shape_cast %1151 : vector<1x1x8x32xf32> to vector<8x32xf32>
    %1153 = vector.extract_strided_slice %1097 {offsets = [0, 1, 0, 0], sizes = [1, 1, 8, 32], strides = [1, 1, 1, 1]} : vector<3x3x8x32xf32> to vector<1x1x8x32xf32>
    %1154 = vector.shape_cast %1153 : vector<1x1x8x32xf32> to vector<8x32xf32>
    %1155 = vector.extract_strided_slice %1097 {offsets = [1, 0, 0, 0], sizes = [1, 1, 8, 32], strides = [1, 1, 1, 1]} : vector<3x3x8x32xf32> to vector<1x1x8x32xf32>
    %1156 = vector.shape_cast %1155 : vector<1x1x8x32xf32> to vector<8x32xf32>
    %1157 = vector.extract_strided_slice %1097 {offsets = [1, 1, 0, 0], sizes = [1, 1, 8, 32], strides = [1, 1, 1, 1]} : vector<3x3x8x32xf32> to vector<1x1x8x32xf32>
    %1158 = vector.shape_cast %1157 : vector<1x1x8x32xf32> to vector<8x32xf32>
    %1159 = vector.extract_strided_slice %833 {offsets = [0, 1, 0, 0], sizes = [1, 1, 8, 32], strides = [1, 1, 1, 1]} : vector<3x3x8x32xf32> to vector<1x1x8x32xf32>
    %1160 = vector.shape_cast %1159 : vector<1x1x8x32xf32> to vector<8x32xf32>
    %1161 = vector.extract_strided_slice %833 {offsets = [0, 2, 0, 0], sizes = [1, 1, 8, 32], strides = [1, 1, 1, 1]} : vector<3x3x8x32xf32> to vector<1x1x8x32xf32>
    %1162 = vector.shape_cast %1161 : vector<1x1x8x32xf32> to vector<8x32xf32>
    %1163 = vector.extract_strided_slice %833 {offsets = [1, 1, 0, 0], sizes = [1, 1, 8, 32], strides = [1, 1, 1, 1]} : vector<3x3x8x32xf32> to vector<1x1x8x32xf32>
    %1164 = vector.shape_cast %1163 : vector<1x1x8x32xf32> to vector<8x32xf32>
    %1165 = vector.extract_strided_slice %833 {offsets = [1, 2, 0, 0], sizes = [1, 1, 8, 32], strides = [1, 1, 1, 1]} : vector<3x3x8x32xf32> to vector<1x1x8x32xf32>
    %1166 = vector.shape_cast %1165 : vector<1x1x8x32xf32> to vector<8x32xf32>
    %1167 = tpu.concatenate %1136, %1138, %1140, %1142, %1144, %1146, %1148, %1150, %1152, %1154, %1156, %1158, %1160, %1162, %1164, %1166 in 0 : vector<8x32xf32>, vector<8x32xf32>, vector<8x32xf32>, vector<8x32xf32>, vector<8x32xf32>, vector<8x32xf32>, vector<8x32xf32>, vector<8x32xf32>, vector<8x32xf32>, vector<8x32xf32>, vector<8x32xf32>, vector<8x32xf32>, vector<8x32xf32>, vector<8x32xf32>, vector<8x32xf32>, vector<8x32xf32> -> vector<128x32xf32>
    %1168 = vector.extract_strided_slice %1098 {offsets = [1, 0, 0], sizes = [1, 32, 64], strides = [1, 1, 1]} : vector<9x32x64xf32> to vector<1x32x64xf32>
    %1169 = vector.shape_cast %1168 : vector<1x32x64xf32> to vector<32x64xf32>
    %cst_213 = arith.constant dense<0.000000e+00> : vector<128x64xf32>
    %1170 = tpu.matmul %1167, %1169, %cst_213 {dimension_numbers = #tpu.dot_dimension_numbers<[1], [0], [0], [1], [0, 0, 1, 1], [], []>} : vector<128x32xf32>, vector<32x64xf32>, vector<128x64xf32> -> vector<128x64xf32>
    %1171 = arith.addf %1134, %1170 : vector<128x64xf32>
    %1172 = vector.extract_strided_slice %289 {offsets = [0, 1, 0, 0], sizes = [1, 1, 8, 32], strides = [1, 1, 1, 1]} : vector<3x3x8x32xf32> to vector<1x1x8x32xf32>
    %1173 = vector.shape_cast %1172 : vector<1x1x8x32xf32> to vector<8x32xf32>
    %1174 = vector.extract_strided_slice %289 {offsets = [0, 2, 0, 0], sizes = [1, 1, 8, 32], strides = [1, 1, 1, 1]} : vector<3x3x8x32xf32> to vector<1x1x8x32xf32>
    %1175 = vector.shape_cast %1174 : vector<1x1x8x32xf32> to vector<8x32xf32>
    %1176 = vector.extract_strided_slice %289 {offsets = [1, 1, 0, 0], sizes = [1, 1, 8, 32], strides = [1, 1, 1, 1]} : vector<3x3x8x32xf32> to vector<1x1x8x32xf32>
    %1177 = vector.shape_cast %1176 : vector<1x1x8x32xf32> to vector<8x32xf32>
    %1178 = vector.extract_strided_slice %289 {offsets = [1, 2, 0, 0], sizes = [1, 1, 8, 32], strides = [1, 1, 1, 1]} : vector<3x3x8x32xf32> to vector<1x1x8x32xf32>
    %1179 = vector.shape_cast %1178 : vector<1x1x8x32xf32> to vector<8x32xf32>
    %1180 = vector.extract_strided_slice %561 {offsets = [0, 1, 0, 0], sizes = [1, 1, 8, 32], strides = [1, 1, 1, 1]} : vector<3x3x8x32xf32> to vector<1x1x8x32xf32>
    %1181 = vector.shape_cast %1180 : vector<1x1x8x32xf32> to vector<8x32xf32>
    %1182 = vector.extract_strided_slice %561 {offsets = [0, 2, 0, 0], sizes = [1, 1, 8, 32], strides = [1, 1, 1, 1]} : vector<3x3x8x32xf32> to vector<1x1x8x32xf32>
    %1183 = vector.shape_cast %1182 : vector<1x1x8x32xf32> to vector<8x32xf32>
    %1184 = vector.extract_strided_slice %561 {offsets = [1, 1, 0, 0], sizes = [1, 1, 8, 32], strides = [1, 1, 1, 1]} : vector<3x3x8x32xf32> to vector<1x1x8x32xf32>
    %1185 = vector.shape_cast %1184 : vector<1x1x8x32xf32> to vector<8x32xf32>
    %1186 = vector.extract_strided_slice %561 {offsets = [1, 2, 0, 0], sizes = [1, 1, 8, 32], strides = [1, 1, 1, 1]} : vector<3x3x8x32xf32> to vector<1x1x8x32xf32>
    %1187 = vector.shape_cast %1186 : vector<1x1x8x32xf32> to vector<8x32xf32>
    %1188 = vector.extract_strided_slice %833 {offsets = [0, 1, 0, 0], sizes = [1, 1, 8, 32], strides = [1, 1, 1, 1]} : vector<3x3x8x32xf32> to vector<1x1x8x32xf32>
    %1189 = vector.shape_cast %1188 : vector<1x1x8x32xf32> to vector<8x32xf32>
    %1190 = vector.extract_strided_slice %833 {offsets = [0, 2, 0, 0], sizes = [1, 1, 8, 32], strides = [1, 1, 1, 1]} : vector<3x3x8x32xf32> to vector<1x1x8x32xf32>
    %1191 = vector.shape_cast %1190 : vector<1x1x8x32xf32> to vector<8x32xf32>
    %1192 = vector.extract_strided_slice %833 {offsets = [1, 1, 0, 0], sizes = [1, 1, 8, 32], strides = [1, 1, 1, 1]} : vector<3x3x8x32xf32> to vector<1x1x8x32xf32>
    %1193 = vector.shape_cast %1192 : vector<1x1x8x32xf32> to vector<8x32xf32>
    %1194 = vector.extract_strided_slice %833 {offsets = [1, 2, 0, 0], sizes = [1, 1, 8, 32], strides = [1, 1, 1, 1]} : vector<3x3x8x32xf32> to vector<1x1x8x32xf32>
    %1195 = vector.shape_cast %1194 : vector<1x1x8x32xf32> to vector<8x32xf32>
    %1196 = vector.extract_strided_slice %1097 {offsets = [0, 1, 0, 0], sizes = [1, 1, 8, 32], strides = [1, 1, 1, 1]} : vector<3x3x8x32xf32> to vector<1x1x8x32xf32>
    %1197 = vector.shape_cast %1196 : vector<1x1x8x32xf32> to vector<8x32xf32>
    %1198 = vector.extract_strided_slice %1097 {offsets = [0, 2, 0, 0], sizes = [1, 1, 8, 32], strides = [1, 1, 1, 1]} : vector<3x3x8x32xf32> to vector<1x1x8x32xf32>
    %1199 = vector.shape_cast %1198 : vector<1x1x8x32xf32> to vector<8x32xf32>
    %1200 = vector.extract_strided_slice %1097 {offsets = [1, 1, 0, 0], sizes = [1, 1, 8, 32], strides = [1, 1, 1, 1]} : vector<3x3x8x32xf32> to vector<1x1x8x32xf32>
    %1201 = vector.shape_cast %1200 : vector<1x1x8x32xf32> to vector<8x32xf32>
    %1202 = vector.extract_strided_slice %1097 {offsets = [1, 2, 0, 0], sizes = [1, 1, 8, 32], strides = [1, 1, 1, 1]} : vector<3x3x8x32xf32> to vector<1x1x8x32xf32>
    %1203 = vector.shape_cast %1202 : vector<1x1x8x32xf32> to vector<8x32xf32>
    %1204 = tpu.concatenate %1173, %1175, %1177, %1179, %1181, %1183, %1185, %1187, %1189, %1191, %1193, %1195, %1197, %1199, %1201, %1203 in 0 : vector<8x32xf32>, vector<8x32xf32>, vector<8x32xf32>, vector<8x32xf32>, vector<8x32xf32>, vector<8x32xf32>, vector<8x32xf32>, vector<8x32xf32>, vector<8x32xf32>, vector<8x32xf32>, vector<8x32xf32>, vector<8x32xf32>, vector<8x32xf32>, vector<8x32xf32>, vector<8x32xf32>, vector<8x32xf32> -> vector<128x32xf32>
    %1205 = vector.extract_strided_slice %1098 {offsets = [2, 0, 0], sizes = [1, 32, 64], strides = [1, 1, 1]} : vector<9x32x64xf32> to vector<1x32x64xf32>
    %1206 = vector.shape_cast %1205 : vector<1x32x64xf32> to vector<32x64xf32>
    %cst_214 = arith.constant dense<0.000000e+00> : vector<128x64xf32>
    %1207 = tpu.matmul %1204, %1206, %cst_214 {dimension_numbers = #tpu.dot_dimension_numbers<[1], [0], [0], [1], [0, 0, 1, 1], [], []>} : vector<128x32xf32>, vector<32x64xf32>, vector<128x64xf32> -> vector<128x64xf32>
    %1208 = arith.addf %1171, %1207 : vector<128x64xf32>
    %1209 = vector.extract_strided_slice %833 {offsets = [0, 0, 0, 0], sizes = [1, 1, 8, 32], strides = [1, 1, 1, 1]} : vector<3x3x8x32xf32> to vector<1x1x8x32xf32>
    %1210 = vector.shape_cast %1209 : vector<1x1x8x32xf32> to vector<8x32xf32>
    %1211 = vector.extract_strided_slice %833 {offsets = [0, 1, 0, 0], sizes = [1, 1, 8, 32], strides = [1, 1, 1, 1]} : vector<3x3x8x32xf32> to vector<1x1x8x32xf32>
    %1212 = vector.shape_cast %1211 : vector<1x1x8x32xf32> to vector<8x32xf32>
    %1213 = vector.extract_strided_slice %833 {offsets = [1, 0, 0, 0], sizes = [1, 1, 8, 32], strides = [1, 1, 1, 1]} : vector<3x3x8x32xf32> to vector<1x1x8x32xf32>
    %1214 = vector.shape_cast %1213 : vector<1x1x8x32xf32> to vector<8x32xf32>
    %1215 = vector.extract_strided_slice %833 {offsets = [1, 1, 0, 0], sizes = [1, 1, 8, 32], strides = [1, 1, 1, 1]} : vector<3x3x8x32xf32> to vector<1x1x8x32xf32>
    %1216 = vector.shape_cast %1215 : vector<1x1x8x32xf32> to vector<8x32xf32>
    %1217 = vector.extract_strided_slice %1097 {offsets = [0, 0, 0, 0], sizes = [1, 1, 8, 32], strides = [1, 1, 1, 1]} : vector<3x3x8x32xf32> to vector<1x1x8x32xf32>
    %1218 = vector.shape_cast %1217 : vector<1x1x8x32xf32> to vector<8x32xf32>
    %1219 = vector.extract_strided_slice %1097 {offsets = [0, 1, 0, 0], sizes = [1, 1, 8, 32], strides = [1, 1, 1, 1]} : vector<3x3x8x32xf32> to vector<1x1x8x32xf32>
    %1220 = vector.shape_cast %1219 : vector<1x1x8x32xf32> to vector<8x32xf32>
    %1221 = vector.extract_strided_slice %1097 {offsets = [1, 0, 0, 0], sizes = [1, 1, 8, 32], strides = [1, 1, 1, 1]} : vector<3x3x8x32xf32> to vector<1x1x8x32xf32>
    %1222 = vector.shape_cast %1221 : vector<1x1x8x32xf32> to vector<8x32xf32>
    %1223 = vector.extract_strided_slice %1097 {offsets = [1, 1, 0, 0], sizes = [1, 1, 8, 32], strides = [1, 1, 1, 1]} : vector<3x3x8x32xf32> to vector<1x1x8x32xf32>
    %1224 = vector.shape_cast %1223 : vector<1x1x8x32xf32> to vector<8x32xf32>
    %1225 = vector.extract_strided_slice %289 {offsets = [1, 0, 0, 0], sizes = [1, 1, 8, 32], strides = [1, 1, 1, 1]} : vector<3x3x8x32xf32> to vector<1x1x8x32xf32>
    %1226 = vector.shape_cast %1225 : vector<1x1x8x32xf32> to vector<8x32xf32>
    %1227 = vector.extract_strided_slice %289 {offsets = [1, 1, 0, 0], sizes = [1, 1, 8, 32], strides = [1, 1, 1, 1]} : vector<3x3x8x32xf32> to vector<1x1x8x32xf32>
    %1228 = vector.shape_cast %1227 : vector<1x1x8x32xf32> to vector<8x32xf32>
    %1229 = vector.extract_strided_slice %289 {offsets = [2, 0, 0, 0], sizes = [1, 1, 8, 32], strides = [1, 1, 1, 1]} : vector<3x3x8x32xf32> to vector<1x1x8x32xf32>
    %1230 = vector.shape_cast %1229 : vector<1x1x8x32xf32> to vector<8x32xf32>
    %1231 = vector.extract_strided_slice %289 {offsets = [2, 1, 0, 0], sizes = [1, 1, 8, 32], strides = [1, 1, 1, 1]} : vector<3x3x8x32xf32> to vector<1x1x8x32xf32>
    %1232 = vector.shape_cast %1231 : vector<1x1x8x32xf32> to vector<8x32xf32>
    %1233 = vector.extract_strided_slice %561 {offsets = [1, 0, 0, 0], sizes = [1, 1, 8, 32], strides = [1, 1, 1, 1]} : vector<3x3x8x32xf32> to vector<1x1x8x32xf32>
    %1234 = vector.shape_cast %1233 : vector<1x1x8x32xf32> to vector<8x32xf32>
    %1235 = vector.extract_strided_slice %561 {offsets = [1, 1, 0, 0], sizes = [1, 1, 8, 32], strides = [1, 1, 1, 1]} : vector<3x3x8x32xf32> to vector<1x1x8x32xf32>
    %1236 = vector.shape_cast %1235 : vector<1x1x8x32xf32> to vector<8x32xf32>
    %1237 = vector.extract_strided_slice %561 {offsets = [2, 0, 0, 0], sizes = [1, 1, 8, 32], strides = [1, 1, 1, 1]} : vector<3x3x8x32xf32> to vector<1x1x8x32xf32>
    %1238 = vector.shape_cast %1237 : vector<1x1x8x32xf32> to vector<8x32xf32>
    %1239 = vector.extract_strided_slice %561 {offsets = [2, 1, 0, 0], sizes = [1, 1, 8, 32], strides = [1, 1, 1, 1]} : vector<3x3x8x32xf32> to vector<1x1x8x32xf32>
    %1240 = vector.shape_cast %1239 : vector<1x1x8x32xf32> to vector<8x32xf32>
    %1241 = tpu.concatenate %1210, %1212, %1214, %1216, %1218, %1220, %1222, %1224, %1226, %1228, %1230, %1232, %1234, %1236, %1238, %1240 in 0 : vector<8x32xf32>, vector<8x32xf32>, vector<8x32xf32>, vector<8x32xf32>, vector<8x32xf32>, vector<8x32xf32>, vector<8x32xf32>, vector<8x32xf32>, vector<8x32xf32>, vector<8x32xf32>, vector<8x32xf32>, vector<8x32xf32>, vector<8x32xf32>, vector<8x32xf32>, vector<8x32xf32>, vector<8x32xf32> -> vector<128x32xf32>
    %1242 = vector.extract_strided_slice %1098 {offsets = [3, 0, 0], sizes = [1, 32, 64], strides = [1, 1, 1]} : vector<9x32x64xf32> to vector<1x32x64xf32>
    %1243 = vector.shape_cast %1242 : vector<1x32x64xf32> to vector<32x64xf32>
    %cst_215 = arith.constant dense<0.000000e+00> : vector<128x64xf32>
    %1244 = tpu.matmul %1241, %1243, %cst_215 {dimension_numbers = #tpu.dot_dimension_numbers<[1], [0], [0], [1], [0, 0, 1, 1], [], []>} : vector<128x32xf32>, vector<32x64xf32>, vector<128x64xf32> -> vector<128x64xf32>
    %1245 = arith.addf %1208, %1244 : vector<128x64xf32>
    %1246 = vector.extract_strided_slice %1097 {offsets = [0, 0, 0, 0], sizes = [1, 1, 8, 32], strides = [1, 1, 1, 1]} : vector<3x3x8x32xf32> to vector<1x1x8x32xf32>
    %1247 = vector.shape_cast %1246 : vector<1x1x8x32xf32> to vector<8x32xf32>
    %1248 = vector.extract_strided_slice %1097 {offsets = [0, 1, 0, 0], sizes = [1, 1, 8, 32], strides = [1, 1, 1, 1]} : vector<3x3x8x32xf32> to vector<1x1x8x32xf32>
    %1249 = vector.shape_cast %1248 : vector<1x1x8x32xf32> to vector<8x32xf32>
    %1250 = vector.extract_strided_slice %1097 {offsets = [1, 0, 0, 0], sizes = [1, 1, 8, 32], strides = [1, 1, 1, 1]} : vector<3x3x8x32xf32> to vector<1x1x8x32xf32>
    %1251 = vector.shape_cast %1250 : vector<1x1x8x32xf32> to vector<8x32xf32>
    %1252 = vector.extract_strided_slice %1097 {offsets = [1, 1, 0, 0], sizes = [1, 1, 8, 32], strides = [1, 1, 1, 1]} : vector<3x3x8x32xf32> to vector<1x1x8x32xf32>
    %1253 = vector.shape_cast %1252 : vector<1x1x8x32xf32> to vector<8x32xf32>
    %1254 = vector.extract_strided_slice %833 {offsets = [0, 1, 0, 0], sizes = [1, 1, 8, 32], strides = [1, 1, 1, 1]} : vector<3x3x8x32xf32> to vector<1x1x8x32xf32>
    %1255 = vector.shape_cast %1254 : vector<1x1x8x32xf32> to vector<8x32xf32>
    %1256 = vector.extract_strided_slice %833 {offsets = [0, 2, 0, 0], sizes = [1, 1, 8, 32], strides = [1, 1, 1, 1]} : vector<3x3x8x32xf32> to vector<1x1x8x32xf32>
    %1257 = vector.shape_cast %1256 : vector<1x1x8x32xf32> to vector<8x32xf32>
    %1258 = vector.extract_strided_slice %833 {offsets = [1, 1, 0, 0], sizes = [1, 1, 8, 32], strides = [1, 1, 1, 1]} : vector<3x3x8x32xf32> to vector<1x1x8x32xf32>
    %1259 = vector.shape_cast %1258 : vector<1x1x8x32xf32> to vector<8x32xf32>
    %1260 = vector.extract_strided_slice %833 {offsets = [1, 2, 0, 0], sizes = [1, 1, 8, 32], strides = [1, 1, 1, 1]} : vector<3x3x8x32xf32> to vector<1x1x8x32xf32>
    %1261 = vector.shape_cast %1260 : vector<1x1x8x32xf32> to vector<8x32xf32>
    %1262 = vector.extract_strided_slice %561 {offsets = [1, 0, 0, 0], sizes = [1, 1, 8, 32], strides = [1, 1, 1, 1]} : vector<3x3x8x32xf32> to vector<1x1x8x32xf32>
    %1263 = vector.shape_cast %1262 : vector<1x1x8x32xf32> to vector<8x32xf32>
    %1264 = vector.extract_strided_slice %561 {offsets = [1, 1, 0, 0], sizes = [1, 1, 8, 32], strides = [1, 1, 1, 1]} : vector<3x3x8x32xf32> to vector<1x1x8x32xf32>
    %1265 = vector.shape_cast %1264 : vector<1x1x8x32xf32> to vector<8x32xf32>
    %1266 = vector.extract_strided_slice %561 {offsets = [2, 0, 0, 0], sizes = [1, 1, 8, 32], strides = [1, 1, 1, 1]} : vector<3x3x8x32xf32> to vector<1x1x8x32xf32>
    %1267 = vector.shape_cast %1266 : vector<1x1x8x32xf32> to vector<8x32xf32>
    %1268 = vector.extract_strided_slice %561 {offsets = [2, 1, 0, 0], sizes = [1, 1, 8, 32], strides = [1, 1, 1, 1]} : vector<3x3x8x32xf32> to vector<1x1x8x32xf32>
    %1269 = vector.shape_cast %1268 : vector<1x1x8x32xf32> to vector<8x32xf32>
    %1270 = vector.extract_strided_slice %289 {offsets = [1, 1, 0, 0], sizes = [1, 1, 8, 32], strides = [1, 1, 1, 1]} : vector<3x3x8x32xf32> to vector<1x1x8x32xf32>
    %1271 = vector.shape_cast %1270 : vector<1x1x8x32xf32> to vector<8x32xf32>
    %1272 = vector.extract_strided_slice %289 {offsets = [1, 2, 0, 0], sizes = [1, 1, 8, 32], strides = [1, 1, 1, 1]} : vector<3x3x8x32xf32> to vector<1x1x8x32xf32>
    %1273 = vector.shape_cast %1272 : vector<1x1x8x32xf32> to vector<8x32xf32>
    %1274 = vector.extract_strided_slice %289 {offsets = [2, 1, 0, 0], sizes = [1, 1, 8, 32], strides = [1, 1, 1, 1]} : vector<3x3x8x32xf32> to vector<1x1x8x32xf32>
    %1275 = vector.shape_cast %1274 : vector<1x1x8x32xf32> to vector<8x32xf32>
    %1276 = vector.extract_strided_slice %289 {offsets = [2, 2, 0, 0], sizes = [1, 1, 8, 32], strides = [1, 1, 1, 1]} : vector<3x3x8x32xf32> to vector<1x1x8x32xf32>
    %1277 = vector.shape_cast %1276 : vector<1x1x8x32xf32> to vector<8x32xf32>
    %1278 = tpu.concatenate %1247, %1249, %1251, %1253, %1255, %1257, %1259, %1261, %1263, %1265, %1267, %1269, %1271, %1273, %1275, %1277 in 0 : vector<8x32xf32>, vector<8x32xf32>, vector<8x32xf32>, vector<8x32xf32>, vector<8x32xf32>, vector<8x32xf32>, vector<8x32xf32>, vector<8x32xf32>, vector<8x32xf32>, vector<8x32xf32>, vector<8x32xf32>, vector<8x32xf32>, vector<8x32xf32>, vector<8x32xf32>, vector<8x32xf32>, vector<8x32xf32> -> vector<128x32xf32>
    %1279 = vector.extract_strided_slice %1098 {offsets = [4, 0, 0], sizes = [1, 32, 64], strides = [1, 1, 1]} : vector<9x32x64xf32> to vector<1x32x64xf32>
    %1280 = vector.shape_cast %1279 : vector<1x32x64xf32> to vector<32x64xf32>
    %cst_216 = arith.constant dense<0.000000e+00> : vector<128x64xf32>
    %1281 = tpu.matmul %1278, %1280, %cst_216 {dimension_numbers = #tpu.dot_dimension_numbers<[1], [0], [0], [1], [0, 0, 1, 1], [], []>} : vector<128x32xf32>, vector<32x64xf32>, vector<128x64xf32> -> vector<128x64xf32>
    %1282 = arith.addf %1245, %1281 : vector<128x64xf32>
    %1283 = vector.extract_strided_slice %833 {offsets = [0, 1, 0, 0], sizes = [1, 1, 8, 32], strides = [1, 1, 1, 1]} : vector<3x3x8x32xf32> to vector<1x1x8x32xf32>
    %1284 = vector.shape_cast %1283 : vector<1x1x8x32xf32> to vector<8x32xf32>
    %1285 = vector.extract_strided_slice %833 {offsets = [0, 2, 0, 0], sizes = [1, 1, 8, 32], strides = [1, 1, 1, 1]} : vector<3x3x8x32xf32> to vector<1x1x8x32xf32>
    %1286 = vector.shape_cast %1285 : vector<1x1x8x32xf32> to vector<8x32xf32>
    %1287 = vector.extract_strided_slice %833 {offsets = [1, 1, 0, 0], sizes = [1, 1, 8, 32], strides = [1, 1, 1, 1]} : vector<3x3x8x32xf32> to vector<1x1x8x32xf32>
    %1288 = vector.shape_cast %1287 : vector<1x1x8x32xf32> to vector<8x32xf32>
    %1289 = vector.extract_strided_slice %833 {offsets = [1, 2, 0, 0], sizes = [1, 1, 8, 32], strides = [1, 1, 1, 1]} : vector<3x3x8x32xf32> to vector<1x1x8x32xf32>
    %1290 = vector.shape_cast %1289 : vector<1x1x8x32xf32> to vector<8x32xf32>
    %1291 = vector.extract_strided_slice %1097 {offsets = [0, 1, 0, 0], sizes = [1, 1, 8, 32], strides = [1, 1, 1, 1]} : vector<3x3x8x32xf32> to vector<1x1x8x32xf32>
    %1292 = vector.shape_cast %1291 : vector<1x1x8x32xf32> to vector<8x32xf32>
    %1293 = vector.extract_strided_slice %1097 {offsets = [0, 2, 0, 0], sizes = [1, 1, 8, 32], strides = [1, 1, 1, 1]} : vector<3x3x8x32xf32> to vector<1x1x8x32xf32>
    %1294 = vector.shape_cast %1293 : vector<1x1x8x32xf32> to vector<8x32xf32>
    %1295 = vector.extract_strided_slice %1097 {offsets = [1, 1, 0, 0], sizes = [1, 1, 8, 32], strides = [1, 1, 1, 1]} : vector<3x3x8x32xf32> to vector<1x1x8x32xf32>
    %1296 = vector.shape_cast %1295 : vector<1x1x8x32xf32> to vector<8x32xf32>
    %1297 = vector.extract_strided_slice %1097 {offsets = [1, 2, 0, 0], sizes = [1, 1, 8, 32], strides = [1, 1, 1, 1]} : vector<3x3x8x32xf32> to vector<1x1x8x32xf32>
    %1298 = vector.shape_cast %1297 : vector<1x1x8x32xf32> to vector<8x32xf32>
    %1299 = vector.extract_strided_slice %289 {offsets = [1, 1, 0, 0], sizes = [1, 1, 8, 32], strides = [1, 1, 1, 1]} : vector<3x3x8x32xf32> to vector<1x1x8x32xf32>
    %1300 = vector.shape_cast %1299 : vector<1x1x8x32xf32> to vector<8x32xf32>
    %1301 = vector.extract_strided_slice %289 {offsets = [1, 2, 0, 0], sizes = [1, 1, 8, 32], strides = [1, 1, 1, 1]} : vector<3x3x8x32xf32> to vector<1x1x8x32xf32>
    %1302 = vector.shape_cast %1301 : vector<1x1x8x32xf32> to vector<8x32xf32>
    %1303 = vector.extract_strided_slice %289 {offsets = [2, 1, 0, 0], sizes = [1, 1, 8, 32], strides = [1, 1, 1, 1]} : vector<3x3x8x32xf32> to vector<1x1x8x32xf32>
    %1304 = vector.shape_cast %1303 : vector<1x1x8x32xf32> to vector<8x32xf32>
    %1305 = vector.extract_strided_slice %289 {offsets = [2, 2, 0, 0], sizes = [1, 1, 8, 32], strides = [1, 1, 1, 1]} : vector<3x3x8x32xf32> to vector<1x1x8x32xf32>
    %1306 = vector.shape_cast %1305 : vector<1x1x8x32xf32> to vector<8x32xf32>
    %1307 = vector.extract_strided_slice %561 {offsets = [1, 1, 0, 0], sizes = [1, 1, 8, 32], strides = [1, 1, 1, 1]} : vector<3x3x8x32xf32> to vector<1x1x8x32xf32>
    %1308 = vector.shape_cast %1307 : vector<1x1x8x32xf32> to vector<8x32xf32>
    %1309 = vector.extract_strided_slice %561 {offsets = [1, 2, 0, 0], sizes = [1, 1, 8, 32], strides = [1, 1, 1, 1]} : vector<3x3x8x32xf32> to vector<1x1x8x32xf32>
    %1310 = vector.shape_cast %1309 : vector<1x1x8x32xf32> to vector<8x32xf32>
    %1311 = vector.extract_strided_slice %561 {offsets = [2, 1, 0, 0], sizes = [1, 1, 8, 32], strides = [1, 1, 1, 1]} : vector<3x3x8x32xf32> to vector<1x1x8x32xf32>
    %1312 = vector.shape_cast %1311 : vector<1x1x8x32xf32> to vector<8x32xf32>
    %1313 = vector.extract_strided_slice %561 {offsets = [2, 2, 0, 0], sizes = [1, 1, 8, 32], strides = [1, 1, 1, 1]} : vector<3x3x8x32xf32> to vector<1x1x8x32xf32>
    %1314 = vector.shape_cast %1313 : vector<1x1x8x32xf32> to vector<8x32xf32>
    %1315 = tpu.concatenate %1284, %1286, %1288, %1290, %1292, %1294, %1296, %1298, %1300, %1302, %1304, %1306, %1308, %1310, %1312, %1314 in 0 : vector<8x32xf32>, vector<8x32xf32>, vector<8x32xf32>, vector<8x32xf32>, vector<8x32xf32>, vector<8x32xf32>, vector<8x32xf32>, vector<8x32xf32>, vector<8x32xf32>, vector<8x32xf32>, vector<8x32xf32>, vector<8x32xf32>, vector<8x32xf32>, vector<8x32xf32>, vector<8x32xf32>, vector<8x32xf32> -> vector<128x32xf32>
    %1316 = vector.extract_strided_slice %1098 {offsets = [5, 0, 0], sizes = [1, 32, 64], strides = [1, 1, 1]} : vector<9x32x64xf32> to vector<1x32x64xf32>
    %1317 = vector.shape_cast %1316 : vector<1x32x64xf32> to vector<32x64xf32>
    %cst_217 = arith.constant dense<0.000000e+00> : vector<128x64xf32>
    %1318 = tpu.matmul %1315, %1317, %cst_217 {dimension_numbers = #tpu.dot_dimension_numbers<[1], [0], [0], [1], [0, 0, 1, 1], [], []>} : vector<128x32xf32>, vector<32x64xf32>, vector<128x64xf32> -> vector<128x64xf32>
    %1319 = arith.addf %1282, %1318 : vector<128x64xf32>
    %1320 = vector.extract_strided_slice %289 {offsets = [1, 0, 0, 0], sizes = [1, 1, 8, 32], strides = [1, 1, 1, 1]} : vector<3x3x8x32xf32> to vector<1x1x8x32xf32>
    %1321 = vector.shape_cast %1320 : vector<1x1x8x32xf32> to vector<8x32xf32>
    %1322 = vector.extract_strided_slice %289 {offsets = [1, 1, 0, 0], sizes = [1, 1, 8, 32], strides = [1, 1, 1, 1]} : vector<3x3x8x32xf32> to vector<1x1x8x32xf32>
    %1323 = vector.shape_cast %1322 : vector<1x1x8x32xf32> to vector<8x32xf32>
    %1324 = vector.extract_strided_slice %289 {offsets = [2, 0, 0, 0], sizes = [1, 1, 8, 32], strides = [1, 1, 1, 1]} : vector<3x3x8x32xf32> to vector<1x1x8x32xf32>
    %1325 = vector.shape_cast %1324 : vector<1x1x8x32xf32> to vector<8x32xf32>
    %1326 = vector.extract_strided_slice %289 {offsets = [2, 1, 0, 0], sizes = [1, 1, 8, 32], strides = [1, 1, 1, 1]} : vector<3x3x8x32xf32> to vector<1x1x8x32xf32>
    %1327 = vector.shape_cast %1326 : vector<1x1x8x32xf32> to vector<8x32xf32>
    %1328 = vector.extract_strided_slice %561 {offsets = [1, 0, 0, 0], sizes = [1, 1, 8, 32], strides = [1, 1, 1, 1]} : vector<3x3x8x32xf32> to vector<1x1x8x32xf32>
    %1329 = vector.shape_cast %1328 : vector<1x1x8x32xf32> to vector<8x32xf32>
    %1330 = vector.extract_strided_slice %561 {offsets = [1, 1, 0, 0], sizes = [1, 1, 8, 32], strides = [1, 1, 1, 1]} : vector<3x3x8x32xf32> to vector<1x1x8x32xf32>
    %1331 = vector.shape_cast %1330 : vector<1x1x8x32xf32> to vector<8x32xf32>
    %1332 = vector.extract_strided_slice %561 {offsets = [2, 0, 0, 0], sizes = [1, 1, 8, 32], strides = [1, 1, 1, 1]} : vector<3x3x8x32xf32> to vector<1x1x8x32xf32>
    %1333 = vector.shape_cast %1332 : vector<1x1x8x32xf32> to vector<8x32xf32>
    %1334 = vector.extract_strided_slice %561 {offsets = [2, 1, 0, 0], sizes = [1, 1, 8, 32], strides = [1, 1, 1, 1]} : vector<3x3x8x32xf32> to vector<1x1x8x32xf32>
    %1335 = vector.shape_cast %1334 : vector<1x1x8x32xf32> to vector<8x32xf32>
    %1336 = vector.extract_strided_slice %833 {offsets = [1, 0, 0, 0], sizes = [1, 1, 8, 32], strides = [1, 1, 1, 1]} : vector<3x3x8x32xf32> to vector<1x1x8x32xf32>
    %1337 = vector.shape_cast %1336 : vector<1x1x8x32xf32> to vector<8x32xf32>
    %1338 = vector.extract_strided_slice %833 {offsets = [1, 1, 0, 0], sizes = [1, 1, 8, 32], strides = [1, 1, 1, 1]} : vector<3x3x8x32xf32> to vector<1x1x8x32xf32>
    %1339 = vector.shape_cast %1338 : vector<1x1x8x32xf32> to vector<8x32xf32>
    %1340 = vector.extract_strided_slice %833 {offsets = [2, 0, 0, 0], sizes = [1, 1, 8, 32], strides = [1, 1, 1, 1]} : vector<3x3x8x32xf32> to vector<1x1x8x32xf32>
    %1341 = vector.shape_cast %1340 : vector<1x1x8x32xf32> to vector<8x32xf32>
    %1342 = vector.extract_strided_slice %833 {offsets = [2, 1, 0, 0], sizes = [1, 1, 8, 32], strides = [1, 1, 1, 1]} : vector<3x3x8x32xf32> to vector<1x1x8x32xf32>
    %1343 = vector.shape_cast %1342 : vector<1x1x8x32xf32> to vector<8x32xf32>
    %1344 = vector.extract_strided_slice %1097 {offsets = [1, 0, 0, 0], sizes = [1, 1, 8, 32], strides = [1, 1, 1, 1]} : vector<3x3x8x32xf32> to vector<1x1x8x32xf32>
    %1345 = vector.shape_cast %1344 : vector<1x1x8x32xf32> to vector<8x32xf32>
    %1346 = vector.extract_strided_slice %1097 {offsets = [1, 1, 0, 0], sizes = [1, 1, 8, 32], strides = [1, 1, 1, 1]} : vector<3x3x8x32xf32> to vector<1x1x8x32xf32>
    %1347 = vector.shape_cast %1346 : vector<1x1x8x32xf32> to vector<8x32xf32>
    %1348 = vector.extract_strided_slice %1097 {offsets = [2, 0, 0, 0], sizes = [1, 1, 8, 32], strides = [1, 1, 1, 1]} : vector<3x3x8x32xf32> to vector<1x1x8x32xf32>
    %1349 = vector.shape_cast %1348 : vector<1x1x8x32xf32> to vector<8x32xf32>
    %1350 = vector.extract_strided_slice %1097 {offsets = [2, 1, 0, 0], sizes = [1, 1, 8, 32], strides = [1, 1, 1, 1]} : vector<3x3x8x32xf32> to vector<1x1x8x32xf32>
    %1351 = vector.shape_cast %1350 : vector<1x1x8x32xf32> to vector<8x32xf32>
    %1352 = tpu.concatenate %1321, %1323, %1325, %1327, %1329, %1331, %1333, %1335, %1337, %1339, %1341, %1343, %1345, %1347, %1349, %1351 in 0 : vector<8x32xf32>, vector<8x32xf32>, vector<8x32xf32>, vector<8x32xf32>, vector<8x32xf32>, vector<8x32xf32>, vector<8x32xf32>, vector<8x32xf32>, vector<8x32xf32>, vector<8x32xf32>, vector<8x32xf32>, vector<8x32xf32>, vector<8x32xf32>, vector<8x32xf32>, vector<8x32xf32>, vector<8x32xf32> -> vector<128x32xf32>
    %1353 = vector.extract_strided_slice %1098 {offsets = [6, 0, 0], sizes = [1, 32, 64], strides = [1, 1, 1]} : vector<9x32x64xf32> to vector<1x32x64xf32>
    %1354 = vector.shape_cast %1353 : vector<1x32x64xf32> to vector<32x64xf32>
    %cst_218 = arith.constant dense<0.000000e+00> : vector<128x64xf32>
    %1355 = tpu.matmul %1352, %1354, %cst_218 {dimension_numbers = #tpu.dot_dimension_numbers<[1], [0], [0], [1], [0, 0, 1, 1], [], []>} : vector<128x32xf32>, vector<32x64xf32>, vector<128x64xf32> -> vector<128x64xf32>
    %1356 = arith.addf %1319, %1355 : vector<128x64xf32>
    %1357 = vector.extract_strided_slice %561 {offsets = [1, 0, 0, 0], sizes = [1, 1, 8, 32], strides = [1, 1, 1, 1]} : vector<3x3x8x32xf32> to vector<1x1x8x32xf32>
    %1358 = vector.shape_cast %1357 : vector<1x1x8x32xf32> to vector<8x32xf32>
    %1359 = vector.extract_strided_slice %561 {offsets = [1, 1, 0, 0], sizes = [1, 1, 8, 32], strides = [1, 1, 1, 1]} : vector<3x3x8x32xf32> to vector<1x1x8x32xf32>
    %1360 = vector.shape_cast %1359 : vector<1x1x8x32xf32> to vector<8x32xf32>
    %1361 = vector.extract_strided_slice %561 {offsets = [2, 0, 0, 0], sizes = [1, 1, 8, 32], strides = [1, 1, 1, 1]} : vector<3x3x8x32xf32> to vector<1x1x8x32xf32>
    %1362 = vector.shape_cast %1361 : vector<1x1x8x32xf32> to vector<8x32xf32>
    %1363 = vector.extract_strided_slice %561 {offsets = [2, 1, 0, 0], sizes = [1, 1, 8, 32], strides = [1, 1, 1, 1]} : vector<3x3x8x32xf32> to vector<1x1x8x32xf32>
    %1364 = vector.shape_cast %1363 : vector<1x1x8x32xf32> to vector<8x32xf32>
    %1365 = vector.extract_strided_slice %289 {offsets = [1, 1, 0, 0], sizes = [1, 1, 8, 32], strides = [1, 1, 1, 1]} : vector<3x3x8x32xf32> to vector<1x1x8x32xf32>
    %1366 = vector.shape_cast %1365 : vector<1x1x8x32xf32> to vector<8x32xf32>
    %1367 = vector.extract_strided_slice %289 {offsets = [1, 2, 0, 0], sizes = [1, 1, 8, 32], strides = [1, 1, 1, 1]} : vector<3x3x8x32xf32> to vector<1x1x8x32xf32>
    %1368 = vector.shape_cast %1367 : vector<1x1x8x32xf32> to vector<8x32xf32>
    %1369 = vector.extract_strided_slice %289 {offsets = [2, 1, 0, 0], sizes = [1, 1, 8, 32], strides = [1, 1, 1, 1]} : vector<3x3x8x32xf32> to vector<1x1x8x32xf32>
    %1370 = vector.shape_cast %1369 : vector<1x1x8x32xf32> to vector<8x32xf32>
    %1371 = vector.extract_strided_slice %289 {offsets = [2, 2, 0, 0], sizes = [1, 1, 8, 32], strides = [1, 1, 1, 1]} : vector<3x3x8x32xf32> to vector<1x1x8x32xf32>
    %1372 = vector.shape_cast %1371 : vector<1x1x8x32xf32> to vector<8x32xf32>
    %1373 = vector.extract_strided_slice %1097 {offsets = [1, 0, 0, 0], sizes = [1, 1, 8, 32], strides = [1, 1, 1, 1]} : vector<3x3x8x32xf32> to vector<1x1x8x32xf32>
    %1374 = vector.shape_cast %1373 : vector<1x1x8x32xf32> to vector<8x32xf32>
    %1375 = vector.extract_strided_slice %1097 {offsets = [1, 1, 0, 0], sizes = [1, 1, 8, 32], strides = [1, 1, 1, 1]} : vector<3x3x8x32xf32> to vector<1x1x8x32xf32>
    %1376 = vector.shape_cast %1375 : vector<1x1x8x32xf32> to vector<8x32xf32>
    %1377 = vector.extract_strided_slice %1097 {offsets = [2, 0, 0, 0], sizes = [1, 1, 8, 32], strides = [1, 1, 1, 1]} : vector<3x3x8x32xf32> to vector<1x1x8x32xf32>
    %1378 = vector.shape_cast %1377 : vector<1x1x8x32xf32> to vector<8x32xf32>
    %1379 = vector.extract_strided_slice %1097 {offsets = [2, 1, 0, 0], sizes = [1, 1, 8, 32], strides = [1, 1, 1, 1]} : vector<3x3x8x32xf32> to vector<1x1x8x32xf32>
    %1380 = vector.shape_cast %1379 : vector<1x1x8x32xf32> to vector<8x32xf32>
    %1381 = vector.extract_strided_slice %833 {offsets = [1, 1, 0, 0], sizes = [1, 1, 8, 32], strides = [1, 1, 1, 1]} : vector<3x3x8x32xf32> to vector<1x1x8x32xf32>
    %1382 = vector.shape_cast %1381 : vector<1x1x8x32xf32> to vector<8x32xf32>
    %1383 = vector.extract_strided_slice %833 {offsets = [1, 2, 0, 0], sizes = [1, 1, 8, 32], strides = [1, 1, 1, 1]} : vector<3x3x8x32xf32> to vector<1x1x8x32xf32>
    %1384 = vector.shape_cast %1383 : vector<1x1x8x32xf32> to vector<8x32xf32>
    %1385 = vector.extract_strided_slice %833 {offsets = [2, 1, 0, 0], sizes = [1, 1, 8, 32], strides = [1, 1, 1, 1]} : vector<3x3x8x32xf32> to vector<1x1x8x32xf32>
    %1386 = vector.shape_cast %1385 : vector<1x1x8x32xf32> to vector<8x32xf32>
    %1387 = vector.extract_strided_slice %833 {offsets = [2, 2, 0, 0], sizes = [1, 1, 8, 32], strides = [1, 1, 1, 1]} : vector<3x3x8x32xf32> to vector<1x1x8x32xf32>
    %1388 = vector.shape_cast %1387 : vector<1x1x8x32xf32> to vector<8x32xf32>
    %1389 = tpu.concatenate %1358, %1360, %1362, %1364, %1366, %1368, %1370, %1372, %1374, %1376, %1378, %1380, %1382, %1384, %1386, %1388 in 0 : vector<8x32xf32>, vector<8x32xf32>, vector<8x32xf32>, vector<8x32xf32>, vector<8x32xf32>, vector<8x32xf32>, vector<8x32xf32>, vector<8x32xf32>, vector<8x32xf32>, vector<8x32xf32>, vector<8x32xf32>, vector<8x32xf32>, vector<8x32xf32>, vector<8x32xf32>, vector<8x32xf32>, vector<8x32xf32> -> vector<128x32xf32>
    %1390 = vector.extract_strided_slice %1098 {offsets = [7, 0, 0], sizes = [1, 32, 64], strides = [1, 1, 1]} : vector<9x32x64xf32> to vector<1x32x64xf32>
    %1391 = vector.shape_cast %1390 : vector<1x32x64xf32> to vector<32x64xf32>
    %cst_219 = arith.constant dense<0.000000e+00> : vector<128x64xf32>
    %1392 = tpu.matmul %1389, %1391, %cst_219 {dimension_numbers = #tpu.dot_dimension_numbers<[1], [0], [0], [1], [0, 0, 1, 1], [], []>} : vector<128x32xf32>, vector<32x64xf32>, vector<128x64xf32> -> vector<128x64xf32>
    %1393 = arith.addf %1356, %1392 : vector<128x64xf32>
    %1394 = vector.extract_strided_slice %289 {offsets = [1, 1, 0, 0], sizes = [1, 1, 8, 32], strides = [1, 1, 1, 1]} : vector<3x3x8x32xf32> to vector<1x1x8x32xf32>
    %1395 = vector.shape_cast %1394 : vector<1x1x8x32xf32> to vector<8x32xf32>
    %1396 = vector.extract_strided_slice %289 {offsets = [1, 2, 0, 0], sizes = [1, 1, 8, 32], strides = [1, 1, 1, 1]} : vector<3x3x8x32xf32> to vector<1x1x8x32xf32>
    %1397 = vector.shape_cast %1396 : vector<1x1x8x32xf32> to vector<8x32xf32>
    %1398 = vector.extract_strided_slice %289 {offsets = [2, 1, 0, 0], sizes = [1, 1, 8, 32], strides = [1, 1, 1, 1]} : vector<3x3x8x32xf32> to vector<1x1x8x32xf32>
    %1399 = vector.shape_cast %1398 : vector<1x1x8x32xf32> to vector<8x32xf32>
    %1400 = vector.extract_strided_slice %289 {offsets = [2, 2, 0, 0], sizes = [1, 1, 8, 32], strides = [1, 1, 1, 1]} : vector<3x3x8x32xf32> to vector<1x1x8x32xf32>
    %1401 = vector.shape_cast %1400 : vector<1x1x8x32xf32> to vector<8x32xf32>
    %1402 = vector.extract_strided_slice %561 {offsets = [1, 1, 0, 0], sizes = [1, 1, 8, 32], strides = [1, 1, 1, 1]} : vector<3x3x8x32xf32> to vector<1x1x8x32xf32>
    %1403 = vector.shape_cast %1402 : vector<1x1x8x32xf32> to vector<8x32xf32>
    %1404 = vector.extract_strided_slice %561 {offsets = [1, 2, 0, 0], sizes = [1, 1, 8, 32], strides = [1, 1, 1, 1]} : vector<3x3x8x32xf32> to vector<1x1x8x32xf32>
    %1405 = vector.shape_cast %1404 : vector<1x1x8x32xf32> to vector<8x32xf32>
    %1406 = vector.extract_strided_slice %561 {offsets = [2, 1, 0, 0], sizes = [1, 1, 8, 32], strides = [1, 1, 1, 1]} : vector<3x3x8x32xf32> to vector<1x1x8x32xf32>
    %1407 = vector.shape_cast %1406 : vector<1x1x8x32xf32> to vector<8x32xf32>
    %1408 = vector.extract_strided_slice %561 {offsets = [2, 2, 0, 0], sizes = [1, 1, 8, 32], strides = [1, 1, 1, 1]} : vector<3x3x8x32xf32> to vector<1x1x8x32xf32>
    %1409 = vector.shape_cast %1408 : vector<1x1x8x32xf32> to vector<8x32xf32>
    %1410 = vector.extract_strided_slice %833 {offsets = [1, 1, 0, 0], sizes = [1, 1, 8, 32], strides = [1, 1, 1, 1]} : vector<3x3x8x32xf32> to vector<1x1x8x32xf32>
    %1411 = vector.shape_cast %1410 : vector<1x1x8x32xf32> to vector<8x32xf32>
    %1412 = vector.extract_strided_slice %833 {offsets = [1, 2, 0, 0], sizes = [1, 1, 8, 32], strides = [1, 1, 1, 1]} : vector<3x3x8x32xf32> to vector<1x1x8x32xf32>
    %1413 = vector.shape_cast %1412 : vector<1x1x8x32xf32> to vector<8x32xf32>
    %1414 = vector.extract_strided_slice %833 {offsets = [2, 1, 0, 0], sizes = [1, 1, 8, 32], strides = [1, 1, 1, 1]} : vector<3x3x8x32xf32> to vector<1x1x8x32xf32>
    %1415 = vector.shape_cast %1414 : vector<1x1x8x32xf32> to vector<8x32xf32>
    %1416 = vector.extract_strided_slice %833 {offsets = [2, 2, 0, 0], sizes = [1, 1, 8, 32], strides = [1, 1, 1, 1]} : vector<3x3x8x32xf32> to vector<1x1x8x32xf32>
    %1417 = vector.shape_cast %1416 : vector<1x1x8x32xf32> to vector<8x32xf32>
    %1418 = vector.extract_strided_slice %1097 {offsets = [1, 1, 0, 0], sizes = [1, 1, 8, 32], strides = [1, 1, 1, 1]} : vector<3x3x8x32xf32> to vector<1x1x8x32xf32>
    %1419 = vector.shape_cast %1418 : vector<1x1x8x32xf32> to vector<8x32xf32>
    %1420 = vector.extract_strided_slice %1097 {offsets = [1, 2, 0, 0], sizes = [1, 1, 8, 32], strides = [1, 1, 1, 1]} : vector<3x3x8x32xf32> to vector<1x1x8x32xf32>
    %1421 = vector.shape_cast %1420 : vector<1x1x8x32xf32> to vector<8x32xf32>
    %1422 = vector.extract_strided_slice %1097 {offsets = [2, 1, 0, 0], sizes = [1, 1, 8, 32], strides = [1, 1, 1, 1]} : vector<3x3x8x32xf32> to vector<1x1x8x32xf32>
    %1423 = vector.shape_cast %1422 : vector<1x1x8x32xf32> to vector<8x32xf32>
    %1424 = vector.extract_strided_slice %1097 {offsets = [2, 2, 0, 0], sizes = [1, 1, 8, 32], strides = [1, 1, 1, 1]} : vector<3x3x8x32xf32> to vector<1x1x8x32xf32>
    %1425 = vector.shape_cast %1424 : vector<1x1x8x32xf32> to vector<8x32xf32>
    %1426 = tpu.concatenate %1395, %1397, %1399, %1401, %1403, %1405, %1407, %1409, %1411, %1413, %1415, %1417, %1419, %1421, %1423, %1425 in 0 : vector<8x32xf32>, vector<8x32xf32>, vector<8x32xf32>, vector<8x32xf32>, vector<8x32xf32>, vector<8x32xf32>, vector<8x32xf32>, vector<8x32xf32>, vector<8x32xf32>, vector<8x32xf32>, vector<8x32xf32>, vector<8x32xf32>, vector<8x32xf32>, vector<8x32xf32>, vector<8x32xf32>, vector<8x32xf32> -> vector<128x32xf32>
    %1427 = vector.extract_strided_slice %1098 {offsets = [8, 0, 0], sizes = [1, 32, 64], strides = [1, 1, 1]} : vector<9x32x64xf32> to vector<1x32x64xf32>
    %1428 = vector.shape_cast %1427 : vector<1x32x64xf32> to vector<32x64xf32>
    %cst_220 = arith.constant dense<0.000000e+00> : vector<128x64xf32>
    %1429 = tpu.matmul %1426, %1428, %cst_220 {dimension_numbers = #tpu.dot_dimension_numbers<[1], [0], [0], [1], [0, 0, 1, 1], [], []>} : vector<128x32xf32>, vector<32x64xf32>, vector<128x64xf32> -> vector<128x64xf32>
    %1430 = arith.addf %1393, %1429 : vector<128x64xf32>
    %1431 = vector.extract_strided_slice %1430 {offsets = [0, 0], sizes = [32, 64], strides = [1, 1]} : vector<128x64xf32> to vector<32x64xf32>
    %1432 = vector.extract_strided_slice %1430 {offsets = [32, 0], sizes = [32, 64], strides = [1, 1]} : vector<128x64xf32> to vector<32x64xf32>
    %1433 = arith.maximumf %1431, %1432 : vector<32x64xf32>
    %1434 = vector.extract_strided_slice %1430 {offsets = [64, 0], sizes = [32, 64], strides = [1, 1]} : vector<128x64xf32> to vector<32x64xf32>
    %1435 = vector.extract_strided_slice %1430 {offsets = [96, 0], sizes = [32, 64], strides = [1, 1]} : vector<128x64xf32> to vector<32x64xf32>
    %1436 = arith.maximumf %1434, %1435 : vector<32x64xf32>
    %1437 = arith.maximumf %1433, %1436 : vector<32x64xf32>
    %c0_221 = arith.constant 0 : index
    %c0_222 = arith.constant 0 : index
    %1438 = vector.load %arg5[%c0_221, %c0_222] : memref<1x64xf32, #tpu.memory_space<vmem>>, vector<1x64xf32>
    %1439 = vector.broadcast %1438 : vector<1x64xf32> to vector<32x64xf32>
    %1440 = arith.addf %1437, %1439 : vector<32x64xf32>
    %cst_223 = arith.constant 0.000000e+00 : f32
    %1441 = vector.broadcast %cst_223 : f32 to vector<32x64xf32>
    %1442 = arith.maximumf %1440, %1441 : vector<32x64xf32>
    %c0_224 = arith.constant 0 : index
    %c0_225 = arith.constant 0 : index
    %c0_226 = arith.constant 0 : index
    %1443 = vector.load %arg6[%c0_224, %c0_225, %c0_226] : memref<4x64x32xf32, #tpu.memory_space<vmem>>, vector<4x64x32xf32>
    %1444 = vector.extract_strided_slice %1442 {offsets = [0, 0], sizes = [8, 64], strides = [1, 1]} : vector<32x64xf32> to vector<8x64xf32>
    %1445 = vector.extract_strided_slice %1443 {offsets = [0, 0, 0], sizes = [1, 64, 32], strides = [1, 1, 1]} : vector<4x64x32xf32> to vector<1x64x32xf32>
    %1446 = vector.shape_cast %1445 : vector<1x64x32xf32> to vector<64x32xf32>
    %cst_227 = arith.constant dense<0.000000e+00> : vector<8x32xf32>
    %1447 = tpu.matmul %1444, %1446, %cst_227 {dimension_numbers = #tpu.dot_dimension_numbers<[1], [0], [0], [1], [0, 0, 1, 1], [], []>} : vector<8x64xf32>, vector<64x32xf32>, vector<8x32xf32> -> vector<8x32xf32>
    %1448 = vector.extract_strided_slice %1442 {offsets = [8, 0], sizes = [8, 64], strides = [1, 1]} : vector<32x64xf32> to vector<8x64xf32>
    %1449 = vector.extract_strided_slice %1443 {offsets = [1, 0, 0], sizes = [1, 64, 32], strides = [1, 1, 1]} : vector<4x64x32xf32> to vector<1x64x32xf32>
    %1450 = vector.shape_cast %1449 : vector<1x64x32xf32> to vector<64x32xf32>
    %cst_228 = arith.constant dense<0.000000e+00> : vector<8x32xf32>
    %1451 = tpu.matmul %1448, %1450, %cst_228 {dimension_numbers = #tpu.dot_dimension_numbers<[1], [0], [0], [1], [0, 0, 1, 1], [], []>} : vector<8x64xf32>, vector<64x32xf32>, vector<8x32xf32> -> vector<8x32xf32>
    %1452 = arith.addf %1447, %1451 : vector<8x32xf32>
    %1453 = vector.extract_strided_slice %1442 {offsets = [16, 0], sizes = [8, 64], strides = [1, 1]} : vector<32x64xf32> to vector<8x64xf32>
    %1454 = vector.extract_strided_slice %1443 {offsets = [2, 0, 0], sizes = [1, 64, 32], strides = [1, 1, 1]} : vector<4x64x32xf32> to vector<1x64x32xf32>
    %1455 = vector.shape_cast %1454 : vector<1x64x32xf32> to vector<64x32xf32>
    %cst_229 = arith.constant dense<0.000000e+00> : vector<8x32xf32>
    %1456 = tpu.matmul %1453, %1455, %cst_229 {dimension_numbers = #tpu.dot_dimension_numbers<[1], [0], [0], [1], [0, 0, 1, 1], [], []>} : vector<8x64xf32>, vector<64x32xf32>, vector<8x32xf32> -> vector<8x32xf32>
    %1457 = arith.addf %1452, %1456 : vector<8x32xf32>
    %1458 = vector.extract_strided_slice %1442 {offsets = [24, 0], sizes = [8, 64], strides = [1, 1]} : vector<32x64xf32> to vector<8x64xf32>
    %1459 = vector.extract_strided_slice %1443 {offsets = [3, 0, 0], sizes = [1, 64, 32], strides = [1, 1, 1]} : vector<4x64x32xf32> to vector<1x64x32xf32>
    %1460 = vector.shape_cast %1459 : vector<1x64x32xf32> to vector<64x32xf32>
    %cst_230 = arith.constant dense<0.000000e+00> : vector<8x32xf32>
    %1461 = tpu.matmul %1458, %1460, %cst_230 {dimension_numbers = #tpu.dot_dimension_numbers<[1], [0], [0], [1], [0, 0, 1, 1], [], []>} : vector<8x64xf32>, vector<64x32xf32>, vector<8x32xf32> -> vector<8x32xf32>
    %1462 = arith.addf %1457, %1461 : vector<8x32xf32>
    %c0_231 = arith.constant 0 : index
    %c0_232 = arith.constant 0 : index
    %1463 = vector.load %arg7[%c0_231, %c0_232] : memref<1x32xf32, #tpu.memory_space<vmem>>, vector<1x32xf32>
    %1464 = vector.broadcast %1463 : vector<1x32xf32> to vector<8x32xf32>
    %1465 = arith.addf %1462, %1464 : vector<8x32xf32>
    %cst_233 = arith.constant 0.000000e+00 : f32
    %1466 = vector.broadcast %cst_233 : f32 to vector<8x32xf32>
    %1467 = arith.maximumf %1465, %1466 : vector<8x32xf32>
    %c0_234 = arith.constant 0 : index
    %c0_235 = arith.constant 0 : index
    %1468 = vector.load %arg8[%c0_234, %c0_235] : memref<32x128xf32, #tpu.memory_space<vmem>>, vector<32x128xf32>
    %cst_236 = arith.constant dense<0.000000e+00> : vector<8x128xf32>
    %1469 = tpu.matmul %1467, %1468, %cst_236 {dimension_numbers = #tpu.dot_dimension_numbers<[1], [0], [0], [1], [0, 0, 1, 1], [], []>} : vector<8x32xf32>, vector<32x128xf32>, vector<8x128xf32> -> vector<8x128xf32>
    %c0_237 = arith.constant 0 : index
    %c0_238 = arith.constant 0 : index
    %1470 = vector.load %arg9[%c0_237, %c0_238] : memref<1x128xf32, #tpu.memory_space<vmem>>, vector<1x128xf32>
    %1471 = vector.broadcast %1470 : vector<1x128xf32> to vector<8x128xf32>
    %1472 = arith.addf %1469, %1471 : vector<8x128xf32>
    %c0_239 = arith.constant 0 : index
    %c0_240 = arith.constant 0 : index
    %1473 = vector.load %arg10[%c0_239, %c0_240] : memref<8x128xf32, #tpu.memory_space<vmem>>, vector<8x128xf32>
    tpu.vector_store %arg10[%c0_239, %c0_240], %1472 {strides = array<i32>} : memref<8x128xf32, #tpu.memory_space<vmem>>, vector<8x128xf32>,
    return
  }
  func.func @transform_0(%arg0: i32) -> (i32, i32, i32, i32, i32, i32) {
    %c0_i32 = arith.constant 0 : i32
    %c0_i32_0 = arith.constant 0 : i32
    %c0_i32_1 = arith.constant 0 : i32
    %c0_i32_2 = arith.constant 0 : i32
    %c0_i32_3 = arith.constant 0 : i32
    %c0_i32_4 = arith.constant 0 : i32
    return %arg0, %c0_i32, %c0_i32_0, %c0_i32_1, %c0_i32_2, %c0_i32_3 : i32, i32, i32, i32, i32, i32
  }
  func.func @transform_1(%arg0: i32) -> (i32, i32, i32, i32) {
    %c0_i32 = arith.constant 0 : i32
    %c0_i32_0 = arith.constant 0 : i32
    %c0_i32_1 = arith.constant 0 : i32
    %c0_i32_2 = arith.constant 0 : i32
    %c0_i32_3 = arith.constant 0 : i32
    return %c0_i32, %c0_i32_0, %c0_i32_1, %c0_i32_2 : i32, i32, i32, i32
  }
  func.func @transform_2(%arg0: i32) -> (i32, i32) {
    %c0_i32 = arith.constant 0 : i32
    %c0_i32_0 = arith.constant 0 : i32
    %c0_i32_1 = arith.constant 0 : i32
    return %c0_i32, %c0_i32_0 : i32, i32
  }
  func.func @transform_3(%arg0: i32) -> (i32, i32, i32) {
    %c0_i32 = arith.constant 0 : i32
    %c0_i32_0 = arith.constant 0 : i32
    %c0_i32_1 = arith.constant 0 : i32
    %c0_i32_2 = arith.constant 0 : i32
    return %c0_i32, %c0_i32_0, %c0_i32_1 : i32, i32, i32
  }
  func.func @transform_4(%arg0: i32) -> (i32, i32) {
    %c0_i32 = arith.constant 0 : i32
    %c0_i32_0 = arith.constant 0 : i32
    %c0_i32_1 = arith.constant 0 : i32
    return %c0_i32, %c0_i32_0 : i32, i32
  }
  func.func @transform_5(%arg0: i32) -> (i32, i32, i32) {
    %c0_i32 = arith.constant 0 : i32
    %c0_i32_0 = arith.constant 0 : i32
    %c0_i32_1 = arith.constant 0 : i32
    %c0_i32_2 = arith.constant 0 : i32
    return %c0_i32, %c0_i32_0, %c0_i32_1 : i32, i32, i32
  }
  func.func @transform_6(%arg0: i32) -> (i32, i32) {
    %c0_i32 = arith.constant 0 : i32
    %c0_i32_0 = arith.constant 0 : i32
    %c0_i32_1 = arith.constant 0 : i32
    return %c0_i32, %c0_i32_0 : i32, i32
  }
  func.func @transform_7(%arg0: i32) -> (i32, i32) {
    %c0_i32 = arith.constant 0 : i32
    %c0_i32_0 = arith.constant 0 : i32
    %c0_i32_1 = arith.constant 0 : i32
    return %c0_i32, %c0_i32_0 : i32, i32
  }
  func.func @transform_8(%arg0: i32) -> (i32, i32) {
    %c0_i32 = arith.constant 0 : i32
    %c0_i32_0 = arith.constant 0 : i32
    %c0_i32_1 = arith.constant 0 : i32
    return %c0_i32, %c0_i32_0 : i32, i32
  }
  func.func @transform_9(%arg0: i32) -> (i32, i32) {
    %c0_i32 = arith.constant 0 : i32
    %c0_i32_0 = arith.constant 0 : i32
    return %arg0, %c0_i32 : i32, i32
  }
}

</mosaic_0001>

<llo_original>
// kernel: digitnet_forward.1
$region0: #{digitnet_forward.1}
  #allocation0 [shape = 'u32[]', space=smem, size = 0x4, offset = 0x4, fixed_abs, tag = 'smem constant byte address 0x4 - core index']
  #allocation1 [shape = 'u32[144,128]{1,0:T(1,128)}', space=vmem, size = 0x12000, scoped, tag = 'internal scratch']
  %s0 = inlined_call_operand.vmem [shape: f32[2,16,4,4,8,1], index: 0, kind: input, shape index: {}]
  %s1 = inlined_call_operand.vmem [shape: f32[3,3,1,32], index: 1, kind: input, shape index: {}]
  %s2 = inlined_call_operand.vmem [shape: f32[1,32], index: 2, kind: input, shape index: {}]
  %s3 = inlined_call_operand.vmem [shape: f32[9,32,64], index: 3, kind: input, shape index: {}]
  %s4 = inlined_call_operand.vmem [shape: f32[1,64], index: 4, kind: input, shape index: {}]
  %s5 = inlined_call_operand.vmem [shape: f32[4,64,32], index: 5, kind: input, shape index: {}]
  %s6 = inlined_call_operand.vmem [shape: f32[1,32], index: 6, kind: input, shape index: {}]
  %s7 = inlined_call_operand.vmem [shape: f32[32,128], index: 7, kind: input, shape index: {}]
  %s8 = inlined_call_operand.vmem [shape: f32[1,128], index: 8, kind: input, shape index: {}]
  %s9 = inlined_call_operand.hbm [shape: f32[16,128], index: 9, kind: output, shape index: {}]
  %s10 = sld [smem:[#allocation0]]
  $region69: #{digitnet_forward.1} parent=0
    _
  %s12 = ssub.s32 1, %s10
  %s13 = scalar_select 0, %s12, %s10
  $region1: #{digitnet_forward.1} parent=0
    #allocation2 [shape = 'u8[8192]{0}', space=vmem, size = 0x2000, scoped, tag = 'output window, operand 0']
    #allocation3 [shape = 's32[2]{0}', space=sflag, size = 0x8, scoped, tag = 'scoped memory for digitnet_forward.1']
    %14 = vsyncpa [#allocation3], 0
    %s15 = scalar_lea.sflag [#allocation3], 1
    %16 = vsyncpa %s15, 0
    loop: start=0, step=1, limit=4
    $region2: #{digitnet_forward.1} parent=1 // loop_pre_header
      _
    $region3: #{digitnet_forward.1} parent=1 // loop_header
      %s18 = sphi 0, %s22
      %p19 = scmp.ge.s32.totalorder %s18, 4
      %s28 = sphi 0, %s30
      %s31 = sphi 0, %s28
      %s32 = sphi 0, %s31
      %s48 = sphi 0, %s32
      %s52 = sphi 0, %s52
      %s54 = sphi 0, %s52
      %s55 = sphi 0, %s54
      %s69 = sphi 0, %s55
      %s73 = sphi 0, %s73
      %s75 = sphi 0, %s73
      %s76 = sphi 0, %s75
      %s90 = sphi 0, %s76
      %s94 = sphi 0, %s94
      %s96 = sphi 0, %s94
      %s97 = sphi 0, %s96
      %s111 = sphi 0, %s97
      %s115 = sphi 0, %s115
      %s117 = sphi 0, %s115
      %s118 = sphi 0, %s117
      %s132 = sphi 0, %s118
      %s136 = sphi 0, %s136
      %s138 = sphi 0, %s136
      %s139 = sphi 0, %s138
      %s153 = sphi 0, %s139
      %s157 = sphi 0, %s157
      %s159 = sphi 0, %s157
      %s160 = sphi 0, %s159
      %s174 = sphi 0, %s160
      %s178 = sphi 0, %s178
      %s180 = sphi 0, %s178
      %s181 = sphi 0, %s180
      %s195 = sphi 0, %s181
      %s199 = sphi 0, %s199
      %s201 = sphi 0, %s199
      %s202 = sphi 0, %s201
      %s216 = sphi 0, %s202
      %s222 = sphi 0, %s224
      %s225 = sphi 0, %s222
      %s226 = sphi 0, %s225
      %s242 = sphi 0, %s226
    $region4: #{digitnet_forward.1} parent=1 // loop_header_branch
      %21 = sbr.rel (%p19) target = $region8
    $region5: #{digitnet_forward.1} parent=1 // loop_body
      %s23 = ssub.s32 %s18, 1
      %s24 = ssub.s32 %s18, 2
      %s25 = sadd.s32 %s18, 1
      %s26 = ssub.s32 %s18, %s25
      %p27 = scmp.eq.s32.totalorder %s26, 0
      %s29 = sadd.s32 %s28, 1
      %s30 = scalar_select %p27, %s28, %s29
      %p33 = pneg %p27
      %p34 = scmp.eq.s32.totalorder %s18, 1
      %p35 = por %p33, %p34
      %p36 = scmp.ne.s32.totalorder %s28, %s31
      %p37 = scmp.eq.s32.totalorder %s18, 0
      %p38 = por %p36, %p37
      %p39 = scmp.ne.s32.totalorder %s28, %s31
      %p40 = scmp.eq.s32.totalorder %s23, 1
      %p41 = por %p39, %p40
      %p42 = scmp.ne.s32.totalorder %s31, %s32
      %p43 = scmp.eq.s32.totalorder %s23, 0
      %p44 = por %p42, %p43
      %p45 = scmp.ne.s32.totalorder %s31, %s32
      %p46 = scmp.eq.s32.totalorder %s24, 1
      %p47 = por %p45, %p46
      %p49 = scmp.ne.s32.totalorder %s32, %s48
      %p50 = scmp.eq.s32.totalorder %s24, 0
      %p51 = por %p49, %p50
      %s53 = sadd.s32 %s52, 1
      %p56 = scmp.eq.s32.totalorder %s18, 1
      %p57 = scmp.ne.s32.totalorder %s52, %s54
      %p58 = scmp.eq.s32.totalorder %s18, 0
      %p59 = por %p57, %p58
      %p60 = scmp.ne.s32.totalorder %s52, %s54
      %p61 = scmp.eq.s32.totalorder %s23, 1
      %p62 = por %p60, %p61
      %p63 = scmp.ne.s32.totalorder %s54, %s55
      %p64 = scmp.eq.s32.totalorder %s23, 0
      %p65 = por %p63, %p64
      %p66 = scmp.ne.s32.totalorder %s54, %s55
      %p67 = scmp.eq.s32.totalorder %s24, 1
      %p68 = por %p66, %p67
      %p70 = scmp.ne.s32.totalorder %s55, %s69
      %p71 = scmp.eq.s32.totalorder %s24, 0
      %p72 = por %p70, %p71
      %s74 = sadd.s32 %s73, 1
      %p77 = scmp.eq.s32.totalorder %s18, 1
      %p78 = scmp.ne.s32.totalorder %s73, %s75
      %p79 = scmp.eq.s32.totalorder %s18, 0
      %p80 = por %p78, %p79
      %p81 = scmp.ne.s32.totalorder %s73, %s75
      %p82 = scmp.eq.s32.totalorder %s23, 1
      %p83 = por %p81, %p82
      %p84 = scmp.ne.s32.totalorder %s75, %s76
      %p85 = scmp.eq.s32.totalorder %s23, 0
      %p86 = por %p84, %p85
      %p87 = scmp.ne.s32.totalorder %s75, %s76
      %p88 = scmp.eq.s32.totalorder %s24, 1
      %p89 = por %p87, %p88
      %p91 = scmp.ne.s32.totalorder %s76, %s90
      %p92 = scmp.eq.s32.totalorder %s24, 0
      %p93 = por %p91, %p92
      %s95 = sadd.s32 %s94, 1
      %p98 = scmp.eq.s32.totalorder %s18, 1
      %p99 = scmp.ne.s32.totalorder %s94, %s96
      %p100 = scmp.eq.s32.totalorder %s18, 0
      %p101 = por %p99, %p100
      %p102 = scmp.ne.s32.totalorder %s94, %s96
      %p103 = scmp.eq.s32.totalorder %s23, 1
      %p104 = por %p102, %p103
      %p105 = scmp.ne.s32.totalorder %s96, %s97
      %p106 = scmp.eq.s32.totalorder %s23, 0
      %p107 = por %p105, %p106
      %p108 = scmp.ne.s32.totalorder %s96, %s97
      %p109 = scmp.eq.s32.totalorder %s24, 1
      %p110 = por %p108, %p109
      %p112 = scmp.ne.s32.totalorder %s97, %s111
      %p113 = scmp.eq.s32.totalorder %s24, 0
      %p114 = por %p112, %p113
      %s116 = sadd.s32 %s115, 1
      %p119 = scmp.eq.s32.totalorder %s18, 1
      %p120 = scmp.ne.s32.totalorder %s115, %s117
      %p121 = scmp.eq.s32.totalorder %s18, 0
      %p122 = por %p120, %p121
      %p123 = scmp.ne.s32.totalorder %s115, %s117
      %p124 = scmp.eq.s32.totalorder %s23, 1
      %p125 = por %p123, %p124
      %p126 = scmp.ne.s32.totalorder %s117, %s118
      %p127 = scmp.eq.s32.totalorder %s23, 0
      %p128 = por %p126, %p127
      %p129 = scmp.ne.s32.totalorder %s117, %s118
      %p130 = scmp.eq.s32.totalorder %s24, 1
      %p131 = por %p129, %p130
      %p133 = scmp.ne.s32.totalorder %s118, %s132
      %p134 = scmp.eq.s32.totalorder %s24, 0
      %p135 = por %p133, %p134
      %s137 = sadd.s32 %s136, 1
      %p140 = scmp.eq.s32.totalorder %s18, 1
      %p141 = scmp.ne.s32.totalorder %s136, %s138
      %p142 = scmp.eq.s32.totalorder %s18, 0
      %p143 = por %p141, %p142
      %p144 = scmp.ne.s32.totalorder %s136, %s138
      %p145 = scmp.eq.s32.totalorder %s23, 1
      %p146 = por %p144, %p145
      %p147 = scmp.ne.s32.totalorder %s138, %s139
      %p148 = scmp.eq.s32.totalorder %s23, 0
      %p149 = por %p147, %p148
      %p150 = scmp.ne.s32.totalorder %s138, %s139
      %p151 = scmp.eq.s32.totalorder %s24, 1
      %p152 = por %p150, %p151
      %p154 = scmp.ne.s32.totalorder %s139, %s153
      %p155 = scmp.eq.s32.totalorder %s24, 0
      %p156 = por %p154, %p155
      %s158 = sadd.s32 %s157, 1
      %p161 = scmp.eq.s32.totalorder %s18, 1
      %p162 = scmp.ne.s32.totalorder %s157, %s159
      %p163 = scmp.eq.s32.totalorder %s18, 0
      %p164 = por %p162, %p163
      %p165 = scmp.ne.s32.totalorder %s157, %s159
      %p166 = scmp.eq.s32.totalorder %s23, 1
      %p167 = por %p165, %p166
      %p168 = scmp.ne.s32.totalorder %s159, %s160
      %p169 = scmp.eq.s32.totalorder %s23, 0
      %p170 = por %p168, %p169
      %p171 = scmp.ne.s32.totalorder %s159, %s160
      %p172 = scmp.eq.s32.totalorder %s24, 1
      %p173 = por %p171, %p172
      %p175 = scmp.ne.s32.totalorder %s160, %s174
      %p176 = scmp.eq.s32.totalorder %s24, 0
      %p177 = por %p175, %p176
      %s179 = sadd.s32 %s178, 1
      %p182 = scmp.eq.s32.totalorder %s18, 1
      %p183 = scmp.ne.s32.totalorder %s178, %s180
      %p184 = scmp.eq.s32.totalorder %s18, 0
      %p185 = por %p183, %p184
      %p186 = scmp.ne.s32.totalorder %s178, %s180
      %p187 = scmp.eq.s32.totalorder %s23, 1
      %p188 = por %p186, %p187
      %p189 = scmp.ne.s32.totalorder %s180, %s181
      %p190 = scmp.eq.s32.totalorder %s23, 0
      %p191 = por %p189, %p190
      %p192 = scmp.ne.s32.totalorder %s180, %s181
      %p193 = scmp.eq.s32.totalorder %s24, 1
      %p194 = por %p192, %p193
      %p196 = scmp.ne.s32.totalorder %s181, %s195
      %p197 = scmp.eq.s32.totalorder %s24, 0
      %p198 = por %p196, %p197
      %s200 = sadd.s32 %s199, 1
      %p203 = scmp.eq.s32.totalorder %s18, 1
      %p204 = scmp.ne.s32.totalorder %s199, %s201
      %p205 = scmp.eq.s32.totalorder %s18, 0
      %p206 = por %p204, %p205
      %p207 = scmp.ne.s32.totalorder %s199, %s201
      %p208 = scmp.eq.s32.totalorder %s23, 1
      %p209 = por %p207, %p208
      %p210 = scmp.ne.s32.totalorder %s201, %s202
      %p211 = scmp.eq.s32.totalorder %s23, 0
      %p212 = por %p210, %p211
      %p213 = scmp.ne.s32.totalorder %s201, %s202
      %p214 = scmp.eq.s32.totalorder %s24, 1
      %p215 = por %p213, %p214
      %p217 = scmp.ne.s32.totalorder %s202, %s216
      %p218 = scmp.eq.s32.totalorder %s24, 0
      %p219 = por %p217, %p218
      %s220 = ssub.s32 %s18, %s25
      %p221 = scmp.eq.s32.totalorder %s220, 0
      %s223 = sadd.s32 %s222, 1
      %s224 = scalar_select %p221, %s222, %s223
      %p227 = pneg %p221
      %p228 = scmp.eq.s32.totalorder %s18, 1
      %p229 = por %p227, %p228
      %p230 = scmp.ne.s32.totalorder %s222, %s225
      %p231 = scmp.eq.s32.totalorder %s18, 0
      %p232 = por %p230, %p231
      %p233 = scmp.ne.s32.totalorder %s222, %s225
      %p234 = scmp.eq.s32.totalorder %s23, 1
      %p235 = por %p233, %p234
      %p236 = scmp.ne.s32.totalorder %s225, %s226
      %p237 = scmp.eq.s32.totalorder %s23, 0
      %p238 = por %p236, %p237
      %p239 = scmp.ne.s32.totalorder %s225, %s226
      %p240 = scmp.eq.s32.totalorder %s24, 1
      %p241 = por %p239, %p240
      %p243 = scmp.ne.s32.totalorder %s226, %s242
      %p244 = scmp.eq.s32.totalorder %s24, 0
      %p245 = por %p243, %p244
      %p246 = scmp.le.s32.totalorder 1, %s18
      %p247 = scmp.lt.s32.totalorder %s18, 3
      %p248 = pnand %p246, %p247
      %p249 = pneg %p248
      // Predicated region
      $region9: #{digitnet_forward.1} parent=5 // pred_check
        _
      $region10: #{digitnet_forward.1} parent=5 // pred_check_branch
        %251 = sbr.rel (%p248) target = $region12
      $region11: #{digitnet_forward.1} parent=5 // pred_region
        %s252 = ssub.s32 %s18, 1
        // Predicated region
        $region13: #{digitnet_forward.1} parent=11 // pred_check
          %p253 = pneg %p65
        $region14: #{digitnet_forward.1} parent=11 // pred_check_branch
          %255 = sbr.rel (%p253) target = $region16
        $region15: #{digitnet_forward.1} parent=11 // pred_region
          _
        $region16: #{digitnet_forward.1} parent=11 // pred_fallthru
          _
        // Predicated region
        $region17: #{digitnet_forward.1} parent=11 // pred_check
          %p256 = pneg %p86
        $region18: #{digitnet_forward.1} parent=11 // pred_check_branch
          %258 = sbr.rel (%p256) target = $region20
        $region19: #{digitnet_forward.1} parent=11 // pred_region
          _
        $region20: #{digitnet_forward.1} parent=11 // pred_fallthru
          _
        // Predicated region
        $region21: #{digitnet_forward.1} parent=11 // pred_check
          %p259 = pneg %p107
        $region22: #{digitnet_forward.1} parent=11 // pred_check_branch
          %261 = sbr.rel (%p259) target = $region24
        $region23: #{digitnet_forward.1} parent=11 // pred_region
          _
        $region24: #{digitnet_forward.1} parent=11 // pred_fallthru
          _
        // Predicated region
        $region25: #{digitnet_forward.1} parent=11 // pred_check
          %p262 = pneg %p128
        $region26: #{digitnet_forward.1} parent=11 // pred_check_branch
          %264 = sbr.rel (%p262) target = $region28
        $region27: #{digitnet_forward.1} parent=11 // pred_region
          _
        $region28: #{digitnet_forward.1} parent=11 // pred_fallthru
          _
        // Predicated region
        $region29: #{digitnet_forward.1} parent=11 // pred_check
          %p265 = pneg %p149
        $region30: #{digitnet_forward.1} parent=11 // pred_check_branch
          %267 = sbr.rel (%p265) target = $region32
        $region31: #{digitnet_forward.1} parent=11 // pred_region
          _
        $region32: #{digitnet_forward.1} parent=11 // pred_fallthru
          _
        // Predicated region
        $region33: #{digitnet_forward.1} parent=11 // pred_check
          %p268 = pneg %p170
        $region34: #{digitnet_forward.1} parent=11 // pred_check_branch
          %270 = sbr.rel (%p268) target = $region36
        $region35: #{digitnet_forward.1} parent=11 // pred_region
          _
        $region36: #{digitnet_forward.1} parent=11 // pred_fallthru
          _
        // Predicated region
        $region37: #{digitnet_forward.1} parent=11 // pred_check
          %p271 = pneg %p191
        $region38: #{digitnet_forward.1} parent=11 // pred_check_branch
          %273 = sbr.rel (%p271) target = $region40
        $region39: #{digitnet_forward.1} parent=11 // pred_region
          _
        $region40: #{digitnet_forward.1} parent=11 // pred_fallthru
          _
        // Predicated region
        $region41: #{digitnet_forward.1} parent=11 // pred_check
          %p274 = pneg %p212
        $region42: #{digitnet_forward.1} parent=11 // pred_check_branch
          %276 = sbr.rel (%p274) target = $region44
        $region43: #{digitnet_forward.1} parent=11 // pred_region
          _
        $region44: #{digitnet_forward.1} parent=11 // pred_fallthru
          _
      $region12: #{digitnet_forward.1} parent=5 // pred_fallthru
        _
      %p277 = scmp.lt.s32.totalorder %s18, 2
      // Predicated region
      $region45: #{digitnet_forward.1} parent=5 // pred_check
        %p278 = pneg %p277
      $region46: #{digitnet_forward.1} parent=5 // pred_check_branch
        %280 = sbr.rel (%p278) target = $region48
      $region47: #{digitnet_forward.1} parent=5 // pred_region
        // Predicated region
        $region49: #{digitnet_forward.1} parent=47 // pred_check
          %p281 = pneg %p38
        $region50: #{digitnet_forward.1} parent=47 // pred_check_branch
          %283 = sbr.rel (%p281) target = $region52
        $region51: #{digitnet_forward.1} parent=47 // pred_region
          %p284 = scmp.lt.s32.totalorder %s18, 1
          %s285 = scalar_select %p284, %s18, 1
          %s286 = smul.addr %s285, 256
          %s287 = smul.addr %s286, 8
          %s288 = scalar_lea.vmem %s0, %s287
        $region52: #{digitnet_forward.1} parent=47 // pred_fallthru
          _
      $region48: #{digitnet_forward.1} parent=5 // pred_fallthru
        _
      %p289 = scmp.le.s32.totalorder 1, %s18
      %p290 = scmp.lt.s32.totalorder %s18, 3
      %p291 = pnand %p289, %p290
      %p292 = pneg %p291
      // Predicated region
      $region53: #{digitnet_forward.1} parent=5 // pred_check
        _
      $region54: #{digitnet_forward.1} parent=5 // pred_check_branch
        %294 = sbr.rel (%p291) target = $region56
      $region55: #{digitnet_forward.1} parent=5 // pred_region
        %s295 = ssub.s32 %s18, 1
        %p296 = scmp.lt.s32.totalorder %s23, 1
        %s297 = scalar_select %p296, %s23, 1
        %s298 = smul.addr %s297, 256
        %s299 = smul.addr %s298, 8
        %s300 = scalar_lea.vmem %s0, %s299
        %p301 = pneg %p44
        %p302 = pneg %p41
        %p303 = pneg %p65
        %p304 = pneg %p62
        %p305 = pneg %p86
        %p306 = pneg %p83
        %p307 = pneg %p107
        %p308 = pneg %p104
        %p309 = pneg %p128
        %p310 = pneg %p125
        %p311 = pneg %p149
        %p312 = pneg %p146
        %p313 = pneg %p170
        %p314 = pneg %p167
        %p315 = pneg %p191
        %p316 = pneg %p188
        %p317 = pneg %p212
        %p318 = pneg %p209
        %p319 = pneg %p238
        %p320 = pneg %p235
        %s321 = sand.u32 %s225, 1
        %s322 = scalar_lea.sflag [#allocation3], %s321
        %s323 = sand.u32 %s225, 1
        %s324 = smul.addr %s323, 8
        %s325 = scalar_lea.vmem [#allocation2], %s324
        %p326 = scmp.lt.s32.totalorder %s23, 1
        %s327 = scalar_select %p326, %s23, 1
        %s328 = smul.addr %s327, 256
        %s329 = smul.addr %s328, 8
        %s330 = scalar_lea.vmem %s0, %s329
        %v331 = vld [vmem:[%s1] sm:$0x1]
        %v332 = vld [vmem:[%s1 + $0x1] sm:$0x1]
        %v333 = vld [vmem:[%s1 + $0x2] sm:$0x1]
        %v334 = vld [vmem:[%s1 + $0x3] sm:$0x1]
        %v335 = vld [vmem:[%s1 + $0x4] sm:$0x1]
        %v336 = vld [vmem:[%s1 + $0x5] sm:$0x1]
        %v337 = vld [vmem:[%s1 + $0x6] sm:$0x1]
        %v338 = vld [vmem:[%s1 + $0x7] sm:$0x1]
        %v339 = vld [vmem:[%s1 + $0x8] sm:$0x1]
        %v340 = vld [vmem:[%s2] sm:$0x1]
        %v341 = vld [vmem:[%s330] sm:$0xff]
        %v342 = vld [vmem:[%s330 + $0x8] sm:$0xff]
        %v343 = vld [vmem:[%s330 + $0x10] sm:$0xff]
        %v344 = vld [vmem:[%s330 + $0x20] sm:$0xff]
        %v345 = vld [vmem:[%s330 + $0x28] sm:$0xff]
        %v346 = vld [vmem:[%s330 + $0x30] sm:$0xff]
        %v347 = vld [vmem:[%s330 + $0x40] sm:$0xff]
        %v348 = vld [vmem:[%s330 + $0x48] sm:$0xff]
        %v349 = vld [vmem:[%s330 + $0x50] sm:$0xff]
        %351 = vset.pattern.permute.xlu0 0
        %352 = vperm.xlu0 %351, %v341
        %v353 = vpop.permute.xlu0 %352
        %356 = vset.pattern.permute.xlu0 0
        %357 = vperm.xlu0 %356, %v342
        %v358 = vpop.permute.xlu0 %357
        %361 = vset.pattern.permute.xlu0 0
        %362 = vperm.xlu0 %361, %v343
        %v363 = vpop.permute.xlu0 %362
        %366 = vset.pattern.permute.xlu0 0
        %367 = vperm.xlu0 %366, %v344
        %v368 = vpop.permute.xlu0 %367
        %371 = vset.pattern.permute.xlu0 0
        %372 = vperm.xlu0 %371, %v345
        %v373 = vpop.permute.xlu0 %372
        %376 = vset.pattern.permute.xlu0 0
        %377 = vperm.xlu0 %376, %v346
        %v378 = vpop.permute.xlu0 %377
        %381 = vset.pattern.permute.xlu0 0
        %382 = vperm.xlu0 %381, %v347
        %v383 = vpop.permute.xlu0 %382
        %386 = vset.pattern.permute.xlu0 0
        %387 = vperm.xlu0 %386, %v348
        %v388 = vpop.permute.xlu0 %387
        %391 = vset.pattern.permute.xlu0 0
        %392 = vperm.xlu0 %391, %v349
        %v393 = vpop.permute.xlu0 %392
        %v396 = vlaneseq
        %v397 = vshrl.u32 %v396, 7
        %v398 = vsub.s32 0, %v397
        %v399 = vrot.slane %v331, %v398
        %v401 = vmul.f32 %v353, %v399
        %v402 = vmul.f32 %v358, %v399
        %v403 = vmul.f32 %v363, %v399
        %v404 = vmul.f32 %v368, %v399
        %v405 = vmul.f32 %v373, %v399
        %v406 = vmul.f32 %v378, %v399
        %v407 = vmul.f32 %v383, %v399
        %v408 = vmul.f32 %v388, %v399
        %v409 = vmul.f32 %v393, %v399
        %s410 = scalar_lea.vmem %s330, 128
        %v411 = vld [vmem:[%s410] sm:$0xff]
        %v412 = vld [vmem:[%s410 + $0x8] sm:$0xff]
        %v413 = vld [vmem:[%s410 + $0x10] sm:$0xff]
        %v414 = vld [vmem:[%s410 + $0x20] sm:$0xff]
        %v415 = vld [vmem:[%s410 + $0x28] sm:$0xff]
        %v416 = vld [vmem:[%s410 + $0x30] sm:$0xff]
        %v417 = vld [vmem:[%s410 + $0x40] sm:$0xff]
        %v418 = vld [vmem:[%s410 + $0x48] sm:$0xff]
        %v419 = vld [vmem:[%s410 + $0x50] sm:$0xff]
        %421 = vset.pattern.permute.xlu0 0
        %422 = vperm.xlu0 %421, %v411
        %v423 = vpop.permute.xlu0 %422
        %426 = vset.pattern.permute.xlu0 0
        %427 = vperm.xlu0 %426, %v412
        %v428 = vpop.permute.xlu0 %427
        %431 = vset.pattern.permute.xlu0 0
        %432 = vperm.xlu0 %431, %v413
        %v433 = vpop.permute.xlu0 %432
        %436 = vset.pattern.permute.xlu0 0
        %437 = vperm.xlu0 %436, %v414
        %v438 = vpop.permute.xlu0 %437
        %441 = vset.pattern.permute.xlu0 0
        %442 = vperm.xlu0 %441, %v415
        %v443 = vpop.permute.xlu0 %442
        %446 = vset.pattern.permute.xlu0 0
        %447 = vperm.xlu0 %446, %v416
        %v448 = vpop.permute.xlu0 %447
        %451 = vset.pattern.permute.xlu0 0
        %452 = vperm.xlu0 %451, %v417
        %v453 = vpop.permute.xlu0 %452
        %456 = vset.pattern.permute.xlu0 0
        %457 = vperm.xlu0 %456, %v418
        %v458 = vpop.permute.xlu0 %457
        %461 = vset.pattern.permute.xlu0 0
        %462 = vperm.xlu0 %461, %v419
        %v463 = vpop.permute.xlu0 %462
        %v466 = vlaneseq
        %v467 = vshrl.u32 %v466, 7
        %v468 = vsub.s32 0, %v467
        %v469 = vrot.slane %v332, %v468
        %v471 = vmul.f32 %v423, %v469
        %v472 = vmul.f32 %v428, %v469
        %v473 = vmul.f32 %v433, %v469
        %v474 = vmul.f32 %v438, %v469
        %v475 = vmul.f32 %v443, %v469
        %v476 = vmul.f32 %v448, %v469
        %v477 = vmul.f32 %v453, %v469
        %v478 = vmul.f32 %v458, %v469
        %v479 = vmul.f32 %v463, %v469
        %v480 = vadd.f32 %v401, %v471
        %v481 = vadd.f32 %v402, %v472
        %v482 = vadd.f32 %v403, %v473
        %v483 = vadd.f32 %v404, %v474
        %v484 = vadd.f32 %v405, %v475
        %v485 = vadd.f32 %v406, %v476
        %v486 = vadd.f32 %v407, %v477
        %v487 = vadd.f32 %v408, %v478
        %v488 = vadd.f32 %v409, %v479
        %s489 = scalar_lea.vmem %s330, 256
        %v490 = vld [vmem:[%s489] sm:$0xff]
        %v491 = vld [vmem:[%s489 + $0x8] sm:$0xff]
        %v492 = vld [vmem:[%s489 + $0x10] sm:$0xff]
        %v493 = vld [vmem:[%s489 + $0x20] sm:$0xff]
        %v494 = vld [vmem:[%s489 + $0x28] sm:$0xff]
        %v495 = vld [vmem:[%s489 + $0x30] sm:$0xff]
        %v496 = vld [vmem:[%s489 + $0x40] sm:$0xff]
        %v497 = vld [vmem:[%s489 + $0x48] sm:$0xff]
        %v498 = vld [vmem:[%s489 + $0x50] sm:$0xff]
        %500 = vset.pattern.permute.xlu0 0
        %501 = vperm.xlu0 %500, %v490
        %v502 = vpop.permute.xlu0 %501
        %505 = vset.pattern.permute.xlu0 0
        %506 = vperm.xlu0 %505, %v491
        %v507 = vpop.permute.xlu0 %506
        %510 = vset.pattern.permute.xlu0 0
        %511 = vperm.xlu0 %510, %v492
        %v512 = vpop.permute.xlu0 %511
        %515 = vset.pattern.permute.xlu0 0
        %516 = vperm.xlu0 %515, %v493
        %v517 = vpop.permute.xlu0 %516
        %520 = vset.pattern.permute.xlu0 0
        %521 = vperm.xlu0 %520, %v494
        %v522 = vpop.permute.xlu0 %521
        %525 = vset.pattern.permute.xlu0 0
        %526 = vperm.xlu0 %525, %v495
        %v527 = vpop.permute.xlu0 %526
        %530 = vset.pattern.permute.xlu0 0
        %531 = vperm.xlu0 %530, %v496
        %v532 = vpop.permute.xlu0 %531
        %535 = vset.pattern.permute.xlu0 0
        %536 = vperm.xlu0 %535, %v497
        %v537 = vpop.permute.xlu0 %536
        %540 = vset.pattern.permute.xlu0 0
        %541 = vperm.xlu0 %540, %v498
        %v542 = vpop.permute.xlu0 %541
        %v545 = vlaneseq
        %v546 = vshrl.u32 %v545, 7
        %v547 = vsub.s32 0, %v546
        %v548 = vrot.slane %v333, %v547
        %v550 = vmul.f32 %v502, %v548
        %v551 = vmul.f32 %v507, %v548
        %v552 = vmul.f32 %v512, %v548
        %v553 = vmul.f32 %v517, %v548
        %v554 = vmul.f32 %v522, %v548
        %v555 = vmul.f32 %v527, %v548
        %v556 = vmul.f32 %v532, %v548
        %v557 = vmul.f32 %v537, %v548
        %v558 = vmul.f32 %v542, %v548
        %v559 = vadd.f32 %v480, %v550
        %v560 = vadd.f32 %v481, %v551
        %v561 = vadd.f32 %v482, %v552
        %v562 = vadd.f32 %v483, %v553
        %v563 = vadd.f32 %v484, %v554
        %v564 = vadd.f32 %v485, %v555
        %v565 = vadd.f32 %v486, %v556
        %v566 = vadd.f32 %v487, %v557
        %v567 = vadd.f32 %v488, %v558
        %s568 = scalar_lea.vmem %s330, 512
        %v569 = vld [vmem:[%s568] sm:$0xff]
        %v570 = vld [vmem:[%s568 + $0x8] sm:$0xff]
        %v571 = vld [vmem:[%s568 + $0x10] sm:$0xff]
        %v572 = vld [vmem:[%s568 + $0x20] sm:$0xff]
        %v573 = vld [vmem:[%s568 + $0x28] sm:$0xff]
        %v574 = vld [vmem:[%s568 + $0x30] sm:$0xff]
        %v575 = vld [vmem:[%s568 + $0x40] sm:$0xff]
        %v576 = vld [vmem:[%s568 + $0x48] sm:$0xff]
        %v577 = vld [vmem:[%s568 + $0x50] sm:$0xff]
        %579 = vset.pattern.permute.xlu0 0
        %580 = vperm.xlu0 %579, %v569
        %v581 = vpop.permute.xlu0 %580
        %584 = vset.pattern.permute.xlu0 0
        %585 = vperm.xlu0 %584, %v570
        %v586 = vpop.permute.xlu0 %585
        %589 = vset.pattern.permute.xlu0 0
        %590 = vperm.xlu0 %589, %v571
        %v591 = vpop.permute.xlu0 %590
        %594 = vset.pattern.permute.xlu0 0
        %595 = vperm.xlu0 %594, %v572
        %v596 = vpop.permute.xlu0 %595
        %599 = vset.pattern.permute.xlu0 0
        %600 = vperm.xlu0 %599, %v573
        %v601 = vpop.permute.xlu0 %600
        %604 = vset.pattern.permute.xlu0 0
        %605 = vperm.xlu0 %604, %v574
        %v606 = vpop.permute.xlu0 %605
        %609 = vset.pattern.permute.xlu0 0
        %610 = vperm.xlu0 %609, %v575
        %v611 = vpop.permute.xlu0 %610
        %614 = vset.pattern.permute.xlu0 0
        %615 = vperm.xlu0 %614, %v576
        %v616 = vpop.permute.xlu0 %615
        %619 = vset.pattern.permute.xlu0 0
        %620 = vperm.xlu0 %619, %v577
        %v621 = vpop.permute.xlu0 %620
        %v624 = vlaneseq
        %v625 = vshrl.u32 %v624, 7
        %v626 = vsub.s32 0, %v625
        %v627 = vrot.slane %v334, %v626
        %v629 = vmul.f32 %v581, %v627
        %v630 = vmul.f32 %v586, %v627
        %v631 = vmul.f32 %v591, %v627
        %v632 = vmul.f32 %v596, %v627
        %v633 = vmul.f32 %v601, %v627
        %v634 = vmul.f32 %v606, %v627
        %v635 = vmul.f32 %v611, %v627
        %v636 = vmul.f32 %v616, %v627
        %v637 = vmul.f32 %v621, %v627
        %v638 = vadd.f32 %v559, %v629
        %v639 = vadd.f32 %v560, %v630
        %v640 = vadd.f32 %v561, %v631
        %v641 = vadd.f32 %v562, %v632
        %v642 = vadd.f32 %v563, %v633
        %v643 = vadd.f32 %v564, %v634
        %v644 = vadd.f32 %v565, %v635
        %v645 = vadd.f32 %v566, %v636
        %v646 = vadd.f32 %v567, %v637
        %s647 = scalar_lea.vmem %s330, 640
        %v648 = vld [vmem:[%s647] sm:$0xff]
        %v649 = vld [vmem:[%s647 + $0x8] sm:$0xff]
        %v650 = vld [vmem:[%s647 + $0x10] sm:$0xff]
        %v651 = vld [vmem:[%s647 + $0x20] sm:$0xff]
        %v652 = vld [vmem:[%s647 + $0x28] sm:$0xff]
        %v653 = vld [vmem:[%s647 + $0x30] sm:$0xff]
        %v654 = vld [vmem:[%s647 + $0x40] sm:$0xff]
        %v655 = vld [vmem:[%s647 + $0x48] sm:$0xff]
        %v656 = vld [vmem:[%s647 + $0x50] sm:$0xff]
        %658 = vset.pattern.permute.xlu0 0
        %659 = vperm.xlu0 %658, %v648
        %v660 = vpop.permute.xlu0 %659
        %663 = vset.pattern.permute.xlu0 0
        %664 = vperm.xlu0 %663, %v649
        %v665 = vpop.permute.xlu0 %664
        %668 = vset.pattern.permute.xlu0 0
        %669 = vperm.xlu0 %668, %v650
        %v670 = vpop.permute.xlu0 %669
        %673 = vset.pattern.permute.xlu0 0
        %674 = vperm.xlu0 %673, %v651
        %v675 = vpop.permute.xlu0 %674
        %678 = vset.pattern.permute.xlu0 0
        %679 = vperm.xlu0 %678, %v652
        %v680 = vpop.permute.xlu0 %679
        %683 = vset.pattern.permute.xlu0 0
        %684 = vperm.xlu0 %683, %v653
        %v685 = vpop.permute.xlu0 %684
        %688 = vset.pattern.permute.xlu0 0
        %689 = vperm.xlu0 %688, %v654
        %v690 = vpop.permute.xlu0 %689
        %693 = vset.pattern.permute.xlu0 0
        %694 = vperm.xlu0 %693, %v655
        %v695 = vpop.permute.xlu0 %694
        %698 = vset.pattern.permute.xlu0 0
        %699 = vperm.xlu0 %698, %v656
        %v700 = vpop.permute.xlu0 %699
        %v703 = vlaneseq
        %v704 = vshrl.u32 %v703, 7
        %v705 = vsub.s32 0, %v704
        %v706 = vrot.slane %v335, %v705
        %v708 = vmul.f32 %v660, %v706
        %v709 = vmul.f32 %v665, %v706
        %v710 = vmul.f32 %v670, %v706
        %v711 = vmul.f32 %v675, %v706
        %v712 = vmul.f32 %v680, %v706
        %v713 = vmul.f32 %v685, %v706
        %v714 = vmul.f32 %v690, %v706
        %v715 = vmul.f32 %v695, %v706
        %v716 = vmul.f32 %v700, %v706
        %v717 = vadd.f32 %v638, %v708
        %v718 = vadd.f32 %v639, %v709
        %v719 = vadd.f32 %v640, %v710
        %v720 = vadd.f32 %v641, %v711
        %v721 = vadd.f32 %v642, %v712
        %v722 = vadd.f32 %v643, %v713
        %v723 = vadd.f32 %v644, %v714
        %v724 = vadd.f32 %v645, %v715
        %v725 = vadd.f32 %v646, %v716
        %s726 = scalar_lea.vmem %s330, 768
        %v727 = vld [vmem:[%s726] sm:$0xff]
        %v728 = vld [vmem:[%s726 + $0x8] sm:$0xff]
        %v729 = vld [vmem:[%s726 + $0x10] sm:$0xff]
        %v730 = vld [vmem:[%s726 + $0x20] sm:$0xff]
        %v731 = vld [vmem:[%s726 + $0x28] sm:$0xff]
        %v732 = vld [vmem:[%s726 + $0x30] sm:$0xff]
        %v733 = vld [vmem:[%s726 + $0x40] sm:$0xff]
        %v734 = vld [vmem:[%s726 + $0x48] sm:$0xff]
        %v735 = vld [vmem:[%s726 + $0x50] sm:$0xff]
        %737 = vset.pattern.permute.xlu0 0
        %738 = vperm.xlu0 %737, %v727
        %v739 = vpop.permute.xlu0 %738
        %742 = vset.pattern.permute.xlu0 0
        %743 = vperm.xlu0 %742, %v728
        %v744 = vpop.permute.xlu0 %743
        %747 = vset.pattern.permute.xlu0 0
        %748 = vperm.xlu0 %747, %v729
        %v749 = vpop.permute.xlu0 %748
        %752 = vset.pattern.permute.xlu0 0
        %753 = vperm.xlu0 %752, %v730
        %v754 = vpop.permute.xlu0 %753
        %757 = vset.pattern.permute.xlu0 0
        %758 = vperm.xlu0 %757, %v731
        %v759 = vpop.permute.xlu0 %758
        %762 = vset.pattern.permute.xlu0 0
        %763 = vperm.xlu0 %762, %v732
        %v764 = vpop.permute.xlu0 %763
        %767 = vset.pattern.permute.xlu0 0
        %768 = vperm.xlu0 %767, %v733
        %v769 = vpop.permute.xlu0 %768
        %772 = vset.pattern.permute.xlu0 0
        %773 = vperm.xlu0 %772, %v734
        %v774 = vpop.permute.xlu0 %773
        %777 = vset.pattern.permute.xlu0 0
        %778 = vperm.xlu0 %777, %v735
        %v779 = vpop.permute.xlu0 %778
        %v782 = vlaneseq
        %v783 = vshrl.u32 %v782, 7
        %v784 = vsub.s32 0, %v783
        %v785 = vrot.slane %v336, %v784
        %v787 = vmul.f32 %v739, %v785
        %v788 = vmul.f32 %v744, %v785
        %v789 = vmul.f32 %v749, %v785
        %v790 = vmul.f32 %v754, %v785
        %v791 = vmul.f32 %v759, %v785
        %v792 = vmul.f32 %v764, %v785
        %v793 = vmul.f32 %v769, %v785
        %v794 = vmul.f32 %v774, %v785
        %v795 = vmul.f32 %v779, %v785
        %v796 = vadd.f32 %v717, %v787
        %v797 = vadd.f32 %v718, %v788
        %v798 = vadd.f32 %v719, %v789
        %v799 = vadd.f32 %v720, %v790
        %v800 = vadd.f32 %v721, %v791
        %v801 = vadd.f32 %v722, %v792
        %v802 = vadd.f32 %v723, %v793
        %v803 = vadd.f32 %v724, %v794
        %v804 = vadd.f32 %v725, %v795
        %s805 = scalar_lea.vmem %s330, 1024
        %v806 = vld [vmem:[%s805] sm:$0xff]
        %v807 = vld [vmem:[%s805 + $0x8] sm:$0xff]
        %v808 = vld [vmem:[%s805 + $0x10] sm:$0xff]
        %v809 = vld [vmem:[%s805 + $0x20] sm:$0xff]
        %v810 = vld [vmem:[%s805 + $0x28] sm:$0xff]
        %v811 = vld [vmem:[%s805 + $0x30] sm:$0xff]
        %v812 = vld [vmem:[%s805 + $0x40] sm:$0xff]
        %v813 = vld [vmem:[%s805 + $0x48] sm:$0xff]
        %v814 = vld [vmem:[%s805 + $0x50] sm:$0xff]
        %816 = vset.pattern.permute.xlu0 0
        %817 = vperm.xlu0 %816, %v806
        %v818 = vpop.permute.xlu0 %817
        %821 = vset.pattern.permute.xlu0 0
        %822 = vperm.xlu0 %821, %v807
        %v823 = vpop.permute.xlu0 %822
        %826 = vset.pattern.permute.xlu0 0
        %827 = vperm.xlu0 %826, %v808
        %v828 = vpop.permute.xlu0 %827
        %831 = vset.pattern.permute.xlu0 0
        %832 = vperm.xlu0 %831, %v809
        %v833 = vpop.permute.xlu0 %832
        %836 = vset.pattern.permute.xlu0 0
        %837 = vperm.xlu0 %836, %v810
        %v838 = vpop.permute.xlu0 %837
        %841 = vset.pattern.permute.xlu0 0
        %842 = vperm.xlu0 %841, %v811
        %v843 = vpop.permute.xlu0 %842
        %846 = vset.pattern.permute.xlu0 0
        %847 = vperm.xlu0 %846, %v812
        %v848 = vpop.permute.xlu0 %847
        %851 = vset.pattern.permute.xlu0 0
        %852 = vperm.xlu0 %851, %v813
        %v853 = vpop.permute.xlu0 %852
        %856 = vset.pattern.permute.xlu0 0
        %857 = vperm.xlu0 %856, %v814
        %v858 = vpop.permute.xlu0 %857
        %v861 = vlaneseq
        %v862 = vshrl.u32 %v861, 7
        %v863 = vsub.s32 0, %v862
        %v864 = vrot.slane %v337, %v863
        %v866 = vmul.f32 %v818, %v864
        %v867 = vmul.f32 %v823, %v864
        %v868 = vmul.f32 %v828, %v864
        %v869 = vmul.f32 %v833, %v864
        %v870 = vmul.f32 %v838, %v864
        %v871 = vmul.f32 %v843, %v864
        %v872 = vmul.f32 %v848, %v864
        %v873 = vmul.f32 %v853, %v864
        %v874 = vmul.f32 %v858, %v864
        %v875 = vadd.f32 %v796, %v866
        %v876 = vadd.f32 %v797, %v867
        %v877 = vadd.f32 %v798, %v868
        %v878 = vadd.f32 %v799, %v869
        %v879 = vadd.f32 %v800, %v870
        %v880 = vadd.f32 %v801, %v871
        %v881 = vadd.f32 %v802, %v872
        %v882 = vadd.f32 %v803, %v873
        %v883 = vadd.f32 %v804, %v874
        %s884 = scalar_lea.vmem %s330, 1152
        %v885 = vld [vmem:[%s884] sm:$0xff]
        %v886 = vld [vmem:[%s884 + $0x8] sm:$0xff]
        %v887 = vld [vmem:[%s884 + $0x10] sm:$0xff]
        %v888 = vld [vmem:[%s884 + $0x20] sm:$0xff]
        %v889 = vld [vmem:[%s884 + $0x28] sm:$0xff]
        %v890 = vld [vmem:[%s884 + $0x30] sm:$0xff]
        %v891 = vld [vmem:[%s884 + $0x40] sm:$0xff]
        %v892 = vld [vmem:[%s884 + $0x48] sm:$0xff]
        %v893 = vld [vmem:[%s884 + $0x50] sm:$0xff]
        %895 = vset.pattern.permute.xlu0 0
        %896 = vperm.xlu0 %895, %v885
        %v897 = vpop.permute.xlu0 %896
        %900 = vset.pattern.permute.xlu0 0
        %901 = vperm.xlu0 %900, %v886
        %v902 = vpop.permute.xlu0 %901
        %905 = vset.pattern.permute.xlu0 0
        %906 = vperm.xlu0 %905, %v887
        %v907 = vpop.permute.xlu0 %906
        %910 = vset.pattern.permute.xlu0 0
        %911 = vperm.xlu0 %910, %v888
        %v912 = vpop.permute.xlu0 %911
        %915 = vset.pattern.permute.xlu0 0
        %916 = vperm.xlu0 %915, %v889
        %v917 = vpop.permute.xlu0 %916
        %920 = vset.pattern.permute.xlu0 0
        %921 = vperm.xlu0 %920, %v890
        %v922 = vpop.permute.xlu0 %921
        %925 = vset.pattern.permute.xlu0 0
        %926 = vperm.xlu0 %925, %v891
        %v927 = vpop.permute.xlu0 %926
        %930 = vset.pattern.permute.xlu0 0
        %931 = vperm.xlu0 %930, %v892
        %v932 = vpop.permute.xlu0 %931
        %935 = vset.pattern.permute.xlu0 0
        %936 = vperm.xlu0 %935, %v893
        %v937 = vpop.permute.xlu0 %936
        %v940 = vlaneseq
        %v941 = vshrl.u32 %v940, 7
        %v942 = vsub.s32 0, %v941
        %v943 = vrot.slane %v338, %v942
        %v945 = vmul.f32 %v897, %v943
        %v946 = vmul.f32 %v902, %v943
        %v947 = vmul.f32 %v907, %v943
        %v948 = vmul.f32 %v912, %v943
        %v949 = vmul.f32 %v917, %v943
        %v950 = vmul.f32 %v922, %v943
        %v951 = vmul.f32 %v927, %v943
        %v952 = vmul.f32 %v932, %v943
        %v953 = vmul.f32 %v937, %v943
        %v954 = vadd.f32 %v875, %v945
        %v955 = vadd.f32 %v876, %v946
        %v956 = vadd.f32 %v877, %v947
        %v957 = vadd.f32 %v878, %v948
        %v958 = vadd.f32 %v879, %v949
        %v959 = vadd.f32 %v880, %v950
        %v960 = vadd.f32 %v881, %v951
        %v961 = vadd.f32 %v882, %v952
        %v962 = vadd.f32 %v883, %v953
        %s963 = scalar_lea.vmem %s330, 1280
        %v964 = vld [vmem:[%s963] sm:$0xff]
        %v965 = vld [vmem:[%s963 + $0x8] sm:$0xff]
        %v966 = vld [vmem:[%s963 + $0x10] sm:$0xff]
        %v967 = vld [vmem:[%s963 + $0x20] sm:$0xff]
        %v968 = vld [vmem:[%s963 + $0x28] sm:$0xff]
        %v969 = vld [vmem:[%s963 + $0x30] sm:$0xff]
        %v970 = vld [vmem:[%s963 + $0x40] sm:$0xff]
        %v971 = vld [vmem:[%s963 + $0x48] sm:$0xff]
        %v972 = vld [vmem:[%s963 + $0x50] sm:$0xff]
        %974 = vset.pattern.permute.xlu0 0
        %975 = vperm.xlu0 %974, %v964
        %v976 = vpop.permute.xlu0 %975
        %979 = vset.pattern.permute.xlu0 0
        %980 = vperm.xlu0 %979, %v965
        %v981 = vpop.permute.xlu0 %980
        %984 = vset.pattern.permute.xlu0 0
        %985 = vperm.xlu0 %984, %v966
        %v986 = vpop.permute.xlu0 %985
        %989 = vset.pattern.permute.xlu0 0
        %990 = vperm.xlu0 %989, %v967
        %v991 = vpop.permute.xlu0 %990
        %994 = vset.pattern.permute.xlu0 0
        %995 = vperm.xlu0 %994, %v968
        %v996 = vpop.permute.xlu0 %995
        %999 = vset.pattern.permute.xlu0 0
        %1000 = vperm.xlu0 %999, %v969
        %v1001 = vpop.permute.xlu0 %1000
        %1004 = vset.pattern.permute.xlu0 0
        %1005 = vperm.xlu0 %1004, %v970
        %v1006 = vpop.permute.xlu0 %1005
        %1009 = vset.pattern.permute.xlu0 0
        %1010 = vperm.xlu0 %1009, %v971
        %v1011 = vpop.permute.xlu0 %1010
        %1014 = vset.pattern.permute.xlu0 0
        %1015 = vperm.xlu0 %1014, %v972
        %v1016 = vpop.permute.xlu0 %1015
        %v1019 = vlaneseq
        %v1020 = vshrl.u32 %v1019, 7
        %v1021 = vsub.s32 0, %v1020
        %v1022 = vrot.slane %v339, %v1021
        %v1024 = vmul.f32 %v976, %v1022
        %v1025 = vmul.f32 %v981, %v1022
        %v1026 = vmul.f32 %v986, %v1022
        %v1027 = vmul.f32 %v991, %v1022
        %v1028 = vmul.f32 %v996, %v1022
        %v1029 = vmul.f32 %v1001, %v1022
        %v1030 = vmul.f32 %v1006, %v1022
        %v1031 = vmul.f32 %v1011, %v1022
        %v1032 = vmul.f32 %v1016, %v1022
        %v1033 = vadd.f32 %v954, %v1024
        %v1034 = vadd.f32 %v955, %v1025
        %v1035 = vadd.f32 %v956, %v1026
        %v1036 = vadd.f32 %v957, %v1027
        %v1037 = vadd.f32 %v958, %v1028
        %v1038 = vadd.f32 %v959, %v1029
        %v1039 = vadd.f32 %v960, %v1030
        %v1040 = vadd.f32 %v961, %v1031
        %v1041 = vadd.f32 %v962, %v1032
        %v1042 = vmul.f32 %v423, %v399
        %v1043 = vmul.f32 %v428, %v399
        %v1044 = vmul.f32 %v433, %v399
        %v1045 = vmul.f32 %v438, %v399
        %v1046 = vmul.f32 %v443, %v399
        %v1047 = vmul.f32 %v448, %v399
        %v1048 = vmul.f32 %v453, %v399
        %v1049 = vmul.f32 %v458, %v399
        %v1050 = vmul.f32 %v463, %v399
        %v1051 = vmul.f32 %v502, %v469
        %v1052 = vmul.f32 %v507, %v469
        %v1053 = vmul.f32 %v512, %v469
        %v1054 = vmul.f32 %v517, %v469
        %v1055 = vmul.f32 %v522, %v469
        %v1056 = vmul.f32 %v527, %v469
        %v1057 = vmul.f32 %v532, %v469
        %v1058 = vmul.f32 %v537, %v469
        %v1059 = vmul.f32 %v542, %v469
        %v1060 = vadd.f32 %v1042, %v1051
        %v1061 = vadd.f32 %v1043, %v1052
        %v1062 = vadd.f32 %v1044, %v1053
        %v1063 = vadd.f32 %v1045, %v1054
        %v1064 = vadd.f32 %v1046, %v1055
        %v1065 = vadd.f32 %v1047, %v1056
        %v1066 = vadd.f32 %v1048, %v1057
        %v1067 = vadd.f32 %v1049, %v1058
        %v1068 = vadd.f32 %v1050, %v1059
        %s1069 = scalar_lea.vmem %s330, 384
        %v1070 = vld [vmem:[%s1069] sm:$0xff]
        %v1071 = vld [vmem:[%s1069 + $0x8] sm:$0xff]
        %v1072 = vld [vmem:[%s1069 + $0x10] sm:$0xff]
        %v1073 = vld [vmem:[%s1069 + $0x20] sm:$0xff]
        %v1074 = vld [vmem:[%s1069 + $0x28] sm:$0xff]
        %v1075 = vld [vmem:[%s1069 + $0x30] sm:$0xff]
        %v1076 = vld [vmem:[%s1069 + $0x40] sm:$0xff]
        %v1077 = vld [vmem:[%s1069 + $0x48] sm:$0xff]
        %v1078 = vld [vmem:[%s1069 + $0x50] sm:$0xff]
        %1080 = vset.pattern.permute.xlu0 0
        %1081 = vperm.xlu0 %1080, %v1070
        %v1082 = vpop.permute.xlu0 %1081
        %1085 = vset.pattern.permute.xlu0 0
        %1086 = vperm.xlu0 %1085, %v1071
        %v1087 = vpop.permute.xlu0 %1086
        %1090 = vset.pattern.permute.xlu0 0
        %1091 = vperm.xlu0 %1090, %v1072
        %v1092 = vpop.permute.xlu0 %1091
        %1095 = vset.pattern.permute.xlu0 0
        %1096 = vperm.xlu0 %1095, %v1073
        %v1097 = vpop.permute.xlu0 %1096
        %1100 = vset.pattern.permute.xlu0 0
        %1101 = vperm.xlu0 %1100, %v1074
        %v1102 = vpop.permute.xlu0 %1101
        %1105 = vset.pattern.permute.xlu0 0
        %1106 = vperm.xlu0 %1105, %v1075
        %v1107 = vpop.permute.xlu0 %1106
        %1110 = vset.pattern.permute.xlu0 0
        %1111 = vperm.xlu0 %1110, %v1076
        %v1112 = vpop.permute.xlu0 %1111
        %1115 = vset.pattern.permute.xlu0 0
        %1116 = vperm.xlu0 %1115, %v1077
        %v1117 = vpop.permute.xlu0 %1116
        %1120 = vset.pattern.permute.xlu0 0
        %1121 = vperm.xlu0 %1120, %v1078
        %v1122 = vpop.permute.xlu0 %1121
        %v1124 = vmul.f32 %v1082, %v548
        %v1125 = vmul.f32 %v1087, %v548
        %v1126 = vmul.f32 %v1092, %v548
        %v1127 = vmul.f32 %v1097, %v548
        %v1128 = vmul.f32 %v1102, %v548
        %v1129 = vmul.f32 %v1107, %v548
        %v1130 = vmul.f32 %v1112, %v548
        %v1131 = vmul.f32 %v1117, %v548
        %v1132 = vmul.f32 %v1122, %v548
        %v1133 = vadd.f32 %v1060, %v1124
        %v1134 = vadd.f32 %v1061, %v1125
        %v1135 = vadd.f32 %v1062, %v1126
        %v1136 = vadd.f32 %v1063, %v1127
        %v1137 = vadd.f32 %v1064, %v1128
        %v1138 = vadd.f32 %v1065, %v1129
        %v1139 = vadd.f32 %v1066, %v1130
        %v1140 = vadd.f32 %v1067, %v1131
        %v1141 = vadd.f32 %v1068, %v1132
        %v1142 = vmul.f32 %v660, %v627
        %v1143 = vmul.f32 %v665, %v627
        %v1144 = vmul.f32 %v670, %v627
        %v1145 = vmul.f32 %v675, %v627
        %v1146 = vmul.f32 %v680, %v627
        %v1147 = vmul.f32 %v685, %v627
        %v1148 = vmul.f32 %v690, %v627
        %v1149 = vmul.f32 %v695, %v627
        %v1150 = vmul.f32 %v700, %v627
        %v1151 = vadd.f32 %v1133, %v1142
        %v1152 = vadd.f32 %v1134, %v1143
        %v1153 = vadd.f32 %v1135, %v1144
        %v1154 = vadd.f32 %v1136, %v1145
        %v1155 = vadd.f32 %v1137, %v1146
        %v1156 = vadd.f32 %v1138, %v1147
        %v1157 = vadd.f32 %v1139, %v1148
        %v1158 = vadd.f32 %v1140, %v1149
        %v1159 = vadd.f32 %v1141, %v1150
        %v1160 = vmul.f32 %v739, %v706
        %v1161 = vmul.f32 %v744, %v706
        %v1162 = vmul.f32 %v749, %v706
        %v1163 = vmul.f32 %v754, %v706
        %v1164 = vmul.f32 %v759, %v706
        %v1165 = vmul.f32 %v764, %v706
        %v1166 = vmul.f32 %v769, %v706
        %v1167 = vmul.f32 %v774, %v706
        %v1168 = vmul.f32 %v779, %v706
        %v1169 = vadd.f32 %v1151, %v1160
        %v1170 = vadd.f32 %v1152, %v1161
        %v1171 = vadd.f32 %v1153, %v1162
        %v1172 = vadd.f32 %v1154, %v1163
        %v1173 = vadd.f32 %v1155, %v1164
        %v1174 = vadd.f32 %v1156, %v1165
        %v1175 = vadd.f32 %v1157, %v1166
        %v1176 = vadd.f32 %v1158, %v1167
        %v1177 = vadd.f32 %v1159, %v1168
        %s1178 = scalar_lea.vmem %s330, 896
        %v1179 = vld [vmem:[%s1178] sm:$0xff]
        %v1180 = vld [vmem:[%s1178 + $0x8] sm:$0xff]
        %v1181 = vld [vmem:[%s1178 + $0x10] sm:$0xff]
        %v1182 = vld [vmem:[%s1178 + $0x20] sm:$0xff]
        %v1183 = vld [vmem:[%s1178 + $0x28] sm:$0xff]
        %v1184 = vld [vmem:[%s1178 + $0x30] sm:$0xff]
        %v1185 = vld [vmem:[%s1178 + $0x40] sm:$0xff]
        %v1186 = vld [vmem:[%s1178 + $0x48] sm:$0xff]
        %v1187 = vld [vmem:[%s1178 + $0x50] sm:$0xff]
        %1189 = vset.pattern.permute.xlu0 0
        %1190 = vperm.xlu0 %1189, %v1179
        %v1191 = vpop.permute.xlu0 %1190
        %1194 = vset.pattern.permute.xlu0 0
        %1195 = vperm.xlu0 %1194, %v1180
        %v1196 = vpop.permute.xlu0 %1195
        %1199 = vset.pattern.permute.xlu0 0
        %1200 = vperm.xlu0 %1199, %v1181
        %v1201 = vpop.permute.xlu0 %1200
        %1204 = vset.pattern.permute.xlu0 0
        %1205 = vperm.xlu0 %1204, %v1182
        %v1206 = vpop.permute.xlu0 %1205
        %1209 = vset.pattern.permute.xlu0 0
        %1210 = vperm.xlu0 %1209, %v1183
        %v1211 = vpop.permute.xlu0 %1210
        %1214 = vset.pattern.permute.xlu0 0
        %1215 = vperm.xlu0 %1214, %v1184
        %v1216 = vpop.permute.xlu0 %1215
        %1219 = vset.pattern.permute.xlu0 0
        %1220 = vperm.xlu0 %1219, %v1185
        %v1221 = vpop.permute.xlu0 %1220
        %1224 = vset.pattern.permute.xlu0 0
        %1225 = vperm.xlu0 %1224, %v1186
        %v1226 = vpop.permute.xlu0 %1225
        %1229 = vset.pattern.permute.xlu0 0
        %1230 = vperm.xlu0 %1229, %v1187
        %v1231 = vpop.permute.xlu0 %1230
        %v1233 = vmul.f32 %v1191, %v785
        %v1234 = vmul.f32 %v1196, %v785
        %v1235 = vmul.f32 %v1201, %v785
        %v1236 = vmul.f32 %v1206, %v785
        %v1237 = vmul.f32 %v1211, %v785
        %v1238 = vmul.f32 %v1216, %v785
        %v1239 = vmul.f32 %v1221, %v785
        %v1240 = vmul.f32 %v1226, %v785
        %v1241 = vmul.f32 %v1231, %v785
        %v1242 = vadd.f32 %v1169, %v1233
        %v1243 = vadd.f32 %v1170, %v1234
        %v1244 = vadd.f32 %v1171, %v1235
        %v1245 = vadd.f32 %v1172, %v1236
        %v1246 = vadd.f32 %v1173, %v1237
        %v1247 = vadd.f32 %v1174, %v1238
        %v1248 = vadd.f32 %v1175, %v1239
        %v1249 = vadd.f32 %v1176, %v1240
        %v1250 = vadd.f32 %v1177, %v1241
        %v1251 = vmul.f32 %v897, %v864
        %v1252 = vmul.f32 %v902, %v864
        %v1253 = vmul.f32 %v907, %v864
        %v1254 = vmul.f32 %v912, %v864
        %v1255 = vmul.f32 %v917, %v864
        %v1256 = vmul.f32 %v922, %v864
        %v1257 = vmul.f32 %v927, %v864
        %v1258 = vmul.f32 %v932, %v864
        %v1259 = vmul.f32 %v937, %v864
        %v1260 = vadd.f32 %v1242, %v1251
        %v1261 = vadd.f32 %v1243, %v1252
        %v1262 = vadd.f32 %v1244, %v1253
        %v1263 = vadd.f32 %v1245, %v1254
        %v1264 = vadd.f32 %v1246, %v1255
        %v1265 = vadd.f32 %v1247, %v1256
        %v1266 = vadd.f32 %v1248, %v1257
        %v1267 = vadd.f32 %v1249, %v1258
        %v1268 = vadd.f32 %v1250, %v1259
        %v1269 = vmul.f32 %v976, %v943
        %v1270 = vmul.f32 %v981, %v943
        %v1271 = vmul.f32 %v986, %v943
        %v1272 = vmul.f32 %v991, %v943
        %v1273 = vmul.f32 %v996, %v943
        %v1274 = vmul.f32 %v1001, %v943
        %v1275 = vmul.f32 %v1006, %v943
        %v1276 = vmul.f32 %v1011, %v943
        %v1277 = vmul.f32 %v1016, %v943
        %v1278 = vadd.f32 %v1260, %v1269
        %v1279 = vadd.f32 %v1261, %v1270
        %v1280 = vadd.f32 %v1262, %v1271
        %v1281 = vadd.f32 %v1263, %v1272
        %v1282 = vadd.f32 %v1264, %v1273
        %v1283 = vadd.f32 %v1265, %v1274
        %v1284 = vadd.f32 %v1266, %v1275
        %v1285 = vadd.f32 %v1267, %v1276
        %v1286 = vadd.f32 %v1268, %v1277
        %s1287 = scalar_lea.vmem %s330, 1408
        %v1288 = vld [vmem:[%s1287] sm:$0xff]
        %v1289 = vld [vmem:[%s1287 + $0x8] sm:$0xff]
        %v1290 = vld [vmem:[%s1287 + $0x10] sm:$0xff]
        %v1291 = vld [vmem:[%s1287 + $0x20] sm:$0xff]
        %v1292 = vld [vmem:[%s1287 + $0x28] sm:$0xff]
        %v1293 = vld [vmem:[%s1287 + $0x30] sm:$0xff]
        %v1294 = vld [vmem:[%s1287 + $0x40] sm:$0xff]
        %v1295 = vld [vmem:[%s1287 + $0x48] sm:$0xff]
        %v1296 = vld [vmem:[%s1287 + $0x50] sm:$0xff]
        %1298 = vset.pattern.permute.xlu0 0
        %1299 = vperm.xlu0 %1298, %v1288
        %v1300 = vpop.permute.xlu0 %1299
        %1303 = vset.pattern.permute.xlu0 0
        %1304 = vperm.xlu0 %1303, %v1289
        %v1305 = vpop.permute.xlu0 %1304
        %1308 = vset.pattern.permute.xlu0 0
        %1309 = vperm.xlu0 %1308, %v1290
        %v1310 = vpop.permute.xlu0 %1309
        %1313 = vset.pattern.permute.xlu0 0
        %1314 = vperm.xlu0 %1313, %v1291
        %v1315 = vpop.permute.xlu0 %1314
        %1318 = vset.pattern.permute.xlu0 0
        %1319 = vperm.xlu0 %1318, %v1292
        %v1320 = vpop.permute.xlu0 %1319
        %1323 = vset.pattern.permute.xlu0 0
        %1324 = vperm.xlu0 %1323, %v1293
        %v1325 = vpop.permute.xlu0 %1324
        %1328 = vset.pattern.permute.xlu0 0
        %1329 = vperm.xlu0 %1328, %v1294
        %v1330 = vpop.permute.xlu0 %1329
        %1333 = vset.pattern.permute.xlu0 0
        %1334 = vperm.xlu0 %1333, %v1295
        %v1335 = vpop.permute.xlu0 %1334
        %1338 = vset.pattern.permute.xlu0 0
        %1339 = vperm.xlu0 %1338, %v1296
        %v1340 = vpop.permute.xlu0 %1339
        %v1342 = vmul.f32 %v1300, %v1022
        %v1343 = vmul.f32 %v1305, %v1022
        %v1344 = vmul.f32 %v1310, %v1022
        %v1345 = vmul.f32 %v1315, %v1022
        %v1346 = vmul.f32 %v1320, %v1022
        %v1347 = vmul.f32 %v1325, %v1022
        %v1348 = vmul.f32 %v1330, %v1022
        %v1349 = vmul.f32 %v1335, %v1022
        %v1350 = vmul.f32 %v1340, %v1022
        %v1351 = vadd.f32 %v1278, %v1342
        %v1352 = vadd.f32 %v1279, %v1343
        %v1353 = vadd.f32 %v1280, %v1344
        %v1354 = vadd.f32 %v1281, %v1345
        %v1355 = vadd.f32 %v1282, %v1346
        %v1356 = vadd.f32 %v1283, %v1347
        %v1357 = vadd.f32 %v1284, %v1348
        %v1358 = vadd.f32 %v1285, %v1349
        %v1359 = vadd.f32 %v1286, %v1350
        %v1360 = vmax.f32 %v1033, %v1351
        %v1361 = vmax.f32 %v1034, %v1352
        %v1362 = vmax.f32 %v1035, %v1353
        %v1363 = vmax.f32 %v1036, %v1354
        %v1364 = vmax.f32 %v1037, %v1355
        %v1365 = vmax.f32 %v1038, %v1356
        %v1366 = vmax.f32 %v1039, %v1357
        %v1367 = vmax.f32 %v1040, %v1358
        %v1368 = vmax.f32 %v1041, %v1359
        %v1369 = vmul.f32 %v581, %v399
        %v1370 = vmul.f32 %v586, %v399
        %v1371 = vmul.f32 %v591, %v399
        %v1372 = vmul.f32 %v596, %v399
        %v1373 = vmul.f32 %v601, %v399
        %v1374 = vmul.f32 %v606, %v399
        %v1375 = vmul.f32 %v611, %v399
        %v1376 = vmul.f32 %v616, %v399
        %v1377 = vmul.f32 %v621, %v399
        %v1378 = vmul.f32 %v660, %v469
        %v1379 = vmul.f32 %v665, %v469
        %v1380 = vmul.f32 %v670, %v469
        %v1381 = vmul.f32 %v675, %v469
        %v1382 = vmul.f32 %v680, %v469
        %v1383 = vmul.f32 %v685, %v469
        %v1384 = vmul.f32 %v690, %v469
        %v1385 = vmul.f32 %v695, %v469
        %v1386 = vmul.f32 %v700, %v469
        %v1387 = vadd.f32 %v1369, %v1378
        %v1388 = vadd.f32 %v1370, %v1379
        %v1389 = vadd.f32 %v1371, %v1380
        %v1390 = vadd.f32 %v1372, %v1381
        %v1391 = vadd.f32 %v1373, %v1382
        %v1392 = vadd.f32 %v1374, %v1383
        %v1393 = vadd.f32 %v1375, %v1384
        %v1394 = vadd.f32 %v1376, %v1385
        %v1395 = vadd.f32 %v1377, %v1386
        %v1396 = vmul.f32 %v739, %v548
        %v1397 = vmul.f32 %v744, %v548
        %v1398 = vmul.f32 %v749, %v548
        %v1399 = vmul.f32 %v754, %v548
        %v1400 = vmul.f32 %v759, %v548
        %v1401 = vmul.f32 %v764, %v548
        %v1402 = vmul.f32 %v769, %v548
        %v1403 = vmul.f32 %v774, %v548
        %v1404 = vmul.f32 %v779, %v548
        %v1405 = vadd.f32 %v1387, %v1396
        %v1406 = vadd.f32 %v1388, %v1397
        %v1407 = vadd.f32 %v1389, %v1398
        %v1408 = vadd.f32 %v1390, %v1399
        %v1409 = vadd.f32 %v1391, %v1400
        %v1410 = vadd.f32 %v1392, %v1401
        %v1411 = vadd.f32 %v1393, %v1402
        %v1412 = vadd.f32 %v1394, %v1403
        %v1413 = vadd.f32 %v1395, %v1404
        %v1414 = vmul.f32 %v818, %v627
        %v1415 = vmul.f32 %v823, %v627
        %v1416 = vmul.f32 %v828, %v627
        %v1417 = vmul.f32 %v833, %v627
        %v1418 = vmul.f32 %v838, %v627
        %v1419 = vmul.f32 %v843, %v627
        %v1420 = vmul.f32 %v848, %v627
        %v1421 = vmul.f32 %v853, %v627
        %v1422 = vmul.f32 %v858, %v627
        %v1423 = vadd.f32 %v1405, %v1414
        %v1424 = vadd.f32 %v1406, %v1415
        %v1425 = vadd.f32 %v1407, %v1416
        %v1426 = vadd.f32 %v1408, %v1417
        %v1427 = vadd.f32 %v1409, %v1418
        %v1428 = vadd.f32 %v1410, %v1419
        %v1429 = vadd.f32 %v1411, %v1420
        %v1430 = vadd.f32 %v1412, %v1421
        %v1431 = vadd.f32 %v1413, %v1422
        %v1432 = vmul.f32 %v897, %v706
        %v1433 = vmul.f32 %v902, %v706
        %v1434 = vmul.f32 %v907, %v706
        %v1435 = vmul.f32 %v912, %v706
        %v1436 = vmul.f32 %v917, %v706
        %v1437 = vmul.f32 %v922, %v706
        %v1438 = vmul.f32 %v927, %v706
        %v1439 = vmul.f32 %v932, %v706
        %v1440 = vmul.f32 %v937, %v706
        %v1441 = vadd.f32 %v1423, %v1432
        %v1442 = vadd.f32 %v1424, %v1433
        %v1443 = vadd.f32 %v1425, %v1434
        %v1444 = vadd.f32 %v1426, %v1435
        %v1445 = vadd.f32 %v1427, %v1436
        %v1446 = vadd.f32 %v1428, %v1437
        %v1447 = vadd.f32 %v1429, %v1438
        %v1448 = vadd.f32 %v1430, %v1439
        %v1449 = vadd.f32 %v1431, %v1440
        %v1450 = vmul.f32 %v976, %v785
        %v1451 = vmul.f32 %v981, %v785
        %v1452 = vmul.f32 %v986, %v785
        %v1453 = vmul.f32 %v991, %v785
        %v1454 = vmul.f32 %v996, %v785
        %v1455 = vmul.f32 %v1001, %v785
        %v1456 = vmul.f32 %v1006, %v785
        %v1457 = vmul.f32 %v1011, %v785
        %v1458 = vmul.f32 %v1016, %v785
        %v1459 = vadd.f32 %v1441, %v1450
        %v1460 = vadd.f32 %v1442, %v1451
        %v1461 = vadd.f32 %v1443, %v1452
        %v1462 = vadd.f32 %v1444, %v1453
        %v1463 = vadd.f32 %v1445, %v1454
        %v1464 = vadd.f32 %v1446, %v1455
        %v1465 = vadd.f32 %v1447, %v1456
        %v1466 = vadd.f32 %v1448, %v1457
        %v1467 = vadd.f32 %v1449, %v1458
        %s1468 = scalar_lea.vmem %s330, 1536
        %v1469 = vld [vmem:[%s1468] sm:$0xff]
        %v1470 = vld [vmem:[%s1468 + $0x8] sm:$0xff]
        %v1471 = vld [vmem:[%s1468 + $0x10] sm:$0xff]
        %v1472 = vld [vmem:[%s1468 + $0x20] sm:$0xff]
        %v1473 = vld [vmem:[%s1468 + $0x28] sm:$0xff]
        %v1474 = vld [vmem:[%s1468 + $0x30] sm:$0xff]
        %v1475 = vld [vmem:[%s1468 + $0x40] sm:$0xff]
        %v1476 = vld [vmem:[%s1468 + $0x48] sm:$0xff]
        %v1477 = vld [vmem:[%s1468 + $0x50] sm:$0xff]
        %1479 = vset.pattern.permute.xlu0 0
        %1480 = vperm.xlu0 %1479, %v1469
        %v1481 = vpop.permute.xlu0 %1480
        %1484 = vset.pattern.permute.xlu0 0
        %1485 = vperm.xlu0 %1484, %v1470
        %v1486 = vpop.permute.xlu0 %1485
        %1489 = vset.pattern.permute.xlu0 0
        %1490 = vperm.xlu0 %1489, %v1471
        %v1491 = vpop.permute.xlu0 %1490
        %1494 = vset.pattern.permute.xlu0 0
        %1495 = vperm.xlu0 %1494, %v1472
        %v1496 = vpop.permute.xlu0 %1495
        %1499 = vset.pattern.permute.xlu0 0
        %1500 = vperm.xlu0 %1499, %v1473
        %v1501 = vpop.permute.xlu0 %1500
        %1504 = vset.pattern.permute.xlu0 0
        %1505 = vperm.xlu0 %1504, %v1474
        %v1506 = vpop.permute.xlu0 %1505
        %1509 = vset.pattern.permute.xlu0 0
        %1510 = vperm.xlu0 %1509, %v1475
        %v1511 = vpop.permute.xlu0 %1510
        %1514 = vset.pattern.permute.xlu0 0
        %1515 = vperm.xlu0 %1514, %v1476
        %v1516 = vpop.permute.xlu0 %1515
        %1519 = vset.pattern.permute.xlu0 0
        %1520 = vperm.xlu0 %1519, %v1477
        %v1521 = vpop.permute.xlu0 %1520
        %v1523 = vmul.f32 %v1481, %v864
        %v1524 = vmul.f32 %v1486, %v864
        %v1525 = vmul.f32 %v1491, %v864
        %v1526 = vmul.f32 %v1496, %v864
        %v1527 = vmul.f32 %v1501, %v864
        %v1528 = vmul.f32 %v1506, %v864
        %v1529 = vmul.f32 %v1511, %v864
        %v1530 = vmul.f32 %v1516, %v864
        %v1531 = vmul.f32 %v1521, %v864
        %v1532 = vadd.f32 %v1459, %v1523
        %v1533 = vadd.f32 %v1460, %v1524
        %v1534 = vadd.f32 %v1461, %v1525
        %v1535 = vadd.f32 %v1462, %v1526
        %v1536 = vadd.f32 %v1463, %v1527
        %v1537 = vadd.f32 %v1464, %v1528
        %v1538 = vadd.f32 %v1465, %v1529
        %v1539 = vadd.f32 %v1466, %v1530
        %v1540 = vadd.f32 %v1467, %v1531
        %s1541 = scalar_lea.vmem %s330, 1664
        %v1542 = vld [vmem:[%s1541] sm:$0xff]
        %v1543 = vld [vmem:[%s1541 + $0x8] sm:$0xff]
        %v1544 = vld [vmem:[%s1541 + $0x10] sm:$0xff]
        %v1545 = vld [vmem:[%s1541 + $0x20] sm:$0xff]
        %v1546 = vld [vmem:[%s1541 + $0x28] sm:$0xff]
        %v1547 = vld [vmem:[%s1541 + $0x30] sm:$0xff]
        %v1548 = vld [vmem:[%s1541 + $0x40] sm:$0xff]
        %v1549 = vld [vmem:[%s1541 + $0x48] sm:$0xff]
        %v1550 = vld [vmem:[%s1541 + $0x50] sm:$0xff]
        %1552 = vset.pattern.permute.xlu0 0
        %1553 = vperm.xlu0 %1552, %v1542
        %v1554 = vpop.permute.xlu0 %1553
        %1557 = vset.pattern.permute.xlu0 0
        %1558 = vperm.xlu0 %1557, %v1543
        %v1559 = vpop.permute.xlu0 %1558
        %1562 = vset.pattern.permute.xlu0 0
        %1563 = vperm.xlu0 %1562, %v1544
        %v1564 = vpop.permute.xlu0 %1563
        %1567 = vset.pattern.permute.xlu0 0
        %1568 = vperm.xlu0 %1567, %v1545
        %v1569 = vpop.permute.xlu0 %1568
        %1572 = vset.pattern.permute.xlu0 0
        %1573 = vperm.xlu0 %1572, %v1546
        %v1574 = vpop.permute.xlu0 %1573
        %1577 = vset.pattern.permute.xlu0 0
        %1578 = vperm.xlu0 %1577, %v1547
        %v1579 = vpop.permute.xlu0 %1578
        %1582 = vset.pattern.permute.xlu0 0
        %1583 = vperm.xlu0 %1582, %v1548
        %v1584 = vpop.permute.xlu0 %1583
        %1587 = vset.pattern.permute.xlu0 0
        %1588 = vperm.xlu0 %1587, %v1549
        %v1589 = vpop.permute.xlu0 %1588
        %1592 = vset.pattern.permute.xlu0 0
        %1593 = vperm.xlu0 %1592, %v1550
        %v1594 = vpop.permute.xlu0 %1593
        %v1596 = vmul.f32 %v1554, %v943
        %v1597 = vmul.f32 %v1559, %v943
        %v1598 = vmul.f32 %v1564, %v943
        %v1599 = vmul.f32 %v1569, %v943
        %v1600 = vmul.f32 %v1574, %v943
        %v1601 = vmul.f32 %v1579, %v943
        %v1602 = vmul.f32 %v1584, %v943
        %v1603 = vmul.f32 %v1589, %v943
        %v1604 = vmul.f32 %v1594, %v943
        %v1605 = vadd.f32 %v1532, %v1596
        %v1606 = vadd.f32 %v1533, %v1597
        %v1607 = vadd.f32 %v1534, %v1598
        %v1608 = vadd.f32 %v1535, %v1599
        %v1609 = vadd.f32 %v1536, %v1600
        %v1610 = vadd.f32 %v1537, %v1601
        %v1611 = vadd.f32 %v1538, %v1602
        %v1612 = vadd.f32 %v1539, %v1603
        %v1613 = vadd.f32 %v1540, %v1604
        %s1614 = scalar_lea.vmem %s330, 1792
        %v1615 = vld [vmem:[%s1614] sm:$0xff]
        %v1616 = vld [vmem:[%s1614 + $0x8] sm:$0xff]
        %v1617 = vld [vmem:[%s1614 + $0x10] sm:$0xff]
        %v1618 = vld [vmem:[%s1614 + $0x20] sm:$0xff]
        %v1619 = vld [vmem:[%s1614 + $0x28] sm:$0xff]
        %v1620 = vld [vmem:[%s1614 + $0x30] sm:$0xff]
        %v1621 = vld [vmem:[%s1614 + $0x40] sm:$0xff]
        %v1622 = vld [vmem:[%s1614 + $0x48] sm:$0xff]
        %v1623 = vld [vmem:[%s1614 + $0x50] sm:$0xff]
        %1625 = vset.pattern.permute.xlu0 0
        %1626 = vperm.xlu0 %1625, %v1615
        %v1627 = vpop.permute.xlu0 %1626
        %1630 = vset.pattern.permute.xlu0 0
        %1631 = vperm.xlu0 %1630, %v1616
        %v1632 = vpop.permute.xlu0 %1631
        %1635 = vset.pattern.permute.xlu0 0
        %1636 = vperm.xlu0 %1635, %v1617
        %v1637 = vpop.permute.xlu0 %1636
        %1640 = vset.pattern.permute.xlu0 0
        %1641 = vperm.xlu0 %1640, %v1618
        %v1642 = vpop.permute.xlu0 %1641
        %1645 = vset.pattern.permute.xlu0 0
        %1646 = vperm.xlu0 %1645, %v1619
        %v1647 = vpop.permute.xlu0 %1646
        %1650 = vset.pattern.permute.xlu0 0
        %1651 = vperm.xlu0 %1650, %v1620
        %v1652 = vpop.permute.xlu0 %1651
        %1655 = vset.pattern.permute.xlu0 0
        %1656 = vperm.xlu0 %1655, %v1621
        %v1657 = vpop.permute.xlu0 %1656
        %1660 = vset.pattern.permute.xlu0 0
        %1661 = vperm.xlu0 %1660, %v1622
        %v1662 = vpop.permute.xlu0 %1661
        %1665 = vset.pattern.permute.xlu0 0
        %1666 = vperm.xlu0 %1665, %v1623
        %v1667 = vpop.permute.xlu0 %1666
        %v1669 = vmul.f32 %v1627, %v1022
        %v1670 = vmul.f32 %v1632, %v1022
        %v1671 = vmul.f32 %v1637, %v1022
        %v1672 = vmul.f32 %v1642, %v1022
        %v1673 = vmul.f32 %v1647, %v1022
        %v1674 = vmul.f32 %v1652, %v1022
        %v1675 = vmul.f32 %v1657, %v1022
        %v1676 = vmul.f32 %v1662, %v1022
        %v1677 = vmul.f32 %v1667, %v1022
        %v1678 = vadd.f32 %v1605, %v1669
        %v1679 = vadd.f32 %v1606, %v1670
        %v1680 = vadd.f32 %v1607, %v1671
        %v1681 = vadd.f32 %v1608, %v1672
        %v1682 = vadd.f32 %v1609, %v1673
        %v1683 = vadd.f32 %v1610, %v1674
        %v1684 = vadd.f32 %v1611, %v1675
        %v1685 = vadd.f32 %v1612, %v1676
        %v1686 = vadd.f32 %v1613, %v1677
        %v1687 = vmax.f32 %v1360, %v1678
        %v1688 = vmax.f32 %v1361, %v1679
        %v1689 = vmax.f32 %v1362, %v1680
        %v1690 = vmax.f32 %v1363, %v1681
        %v1691 = vmax.f32 %v1364, %v1682
        %v1692 = vmax.f32 %v1365, %v1683
        %v1693 = vmax.f32 %v1366, %v1684
        %v1694 = vmax.f32 %v1367, %v1685
        %v1695 = vmax.f32 %v1368, %v1686
        %v1696 = vmul.f32 %v660, %v399
        %v1697 = vmul.f32 %v665, %v399
        %v1698 = vmul.f32 %v670, %v399
        %v1699 = vmul.f32 %v675, %v399
        %v1700 = vmul.f32 %v680, %v399
        %v1701 = vmul.f32 %v685, %v399
        %v1702 = vmul.f32 %v690, %v399
        %v1703 = vmul.f32 %v695, %v399
        %v1704 = vmul.f32 %v700, %v399
        %v1705 = vmul.f32 %v739, %v469
        %v1706 = vmul.f32 %v744, %v469
        %v1707 = vmul.f32 %v749, %v469
        %v1708 = vmul.f32 %v754, %v469
        %v1709 = vmul.f32 %v759, %v469
        %v1710 = vmul.f32 %v764, %v469
        %v1711 = vmul.f32 %v769, %v469
        %v1712 = vmul.f32 %v774, %v469
        %v1713 = vmul.f32 %v779, %v469
        %v1714 = vadd.f32 %v1696, %v1705
        %v1715 = vadd.f32 %v1697, %v1706
        %v1716 = vadd.f32 %v1698, %v1707
        %v1717 = vadd.f32 %v1699, %v1708
        %v1718 = vadd.f32 %v1700, %v1709
        %v1719 = vadd.f32 %v1701, %v1710
        %v1720 = vadd.f32 %v1702, %v1711
        %v1721 = vadd.f32 %v1703, %v1712
        %v1722 = vadd.f32 %v1704, %v1713
        %v1723 = vmul.f32 %v1191, %v548
        %v1724 = vmul.f32 %v1196, %v548
        %v1725 = vmul.f32 %v1201, %v548
        %v1726 = vmul.f32 %v1206, %v548
        %v1727 = vmul.f32 %v1211, %v548
        %v1728 = vmul.f32 %v1216, %v548
        %v1729 = vmul.f32 %v1221, %v548
        %v1730 = vmul.f32 %v1226, %v548
        %v1731 = vmul.f32 %v1231, %v548
        %v1732 = vadd.f32 %v1714, %v1723
        %v1733 = vadd.f32 %v1715, %v1724
        %v1734 = vadd.f32 %v1716, %v1725
        %v1735 = vadd.f32 %v1717, %v1726
        %v1736 = vadd.f32 %v1718, %v1727
        %v1737 = vadd.f32 %v1719, %v1728
        %v1738 = vadd.f32 %v1720, %v1729
        %v1739 = vadd.f32 %v1721, %v1730
        %v1740 = vadd.f32 %v1722, %v1731
        %v1741 = vmul.f32 %v897, %v627
        %v1742 = vmul.f32 %v902, %v627
        %v1743 = vmul.f32 %v907, %v627
        %v1744 = vmul.f32 %v912, %v627
        %v1745 = vmul.f32 %v917, %v627
        %v1746 = vmul.f32 %v922, %v627
        %v1747 = vmul.f32 %v927, %v627
        %v1748 = vmul.f32 %v932, %v627
        %v1749 = vmul.f32 %v937, %v627
        %v1750 = vadd.f32 %v1732, %v1741
        %v1751 = vadd.f32 %v1733, %v1742
        %v1752 = vadd.f32 %v1734, %v1743
        %v1753 = vadd.f32 %v1735, %v1744
        %v1754 = vadd.f32 %v1736, %v1745
        %v1755 = vadd.f32 %v1737, %v1746
        %v1756 = vadd.f32 %v1738, %v1747
        %v1757 = vadd.f32 %v1739, %v1748
        %v1758 = vadd.f32 %v1740, %v1749
        %v1759 = vmul.f32 %v976, %v706
        %v1760 = vmul.f32 %v981, %v706
        %v1761 = vmul.f32 %v986, %v706
        %v1762 = vmul.f32 %v991, %v706
        %v1763 = vmul.f32 %v996, %v706
        %v1764 = vmul.f32 %v1001, %v706
        %v1765 = vmul.f32 %v1006, %v706
        %v1766 = vmul.f32 %v1011, %v706
        %v1767 = vmul.f32 %v1016, %v706
        %v1768 = vadd.f32 %v1750, %v1759
        %v1769 = vadd.f32 %v1751, %v1760
        %v1770 = vadd.f32 %v1752, %v1761
        %v1771 = vadd.f32 %v1753, %v1762
        %v1772 = vadd.f32 %v1754, %v1763
        %v1773 = vadd.f32 %v1755, %v1764
        %v1774 = vadd.f32 %v1756, %v1765
        %v1775 = vadd.f32 %v1757, %v1766
        %v1776 = vadd.f32 %v1758, %v1767
        %v1777 = vmul.f32 %v1300, %v785
        %v1778 = vmul.f32 %v1305, %v785
        %v1779 = vmul.f32 %v1310, %v785
        %v1780 = vmul.f32 %v1315, %v785
        %v1781 = vmul.f32 %v1320, %v785
        %v1782 = vmul.f32 %v1325, %v785
        %v1783 = vmul.f32 %v1330, %v785
        %v1784 = vmul.f32 %v1335, %v785
        %v1785 = vmul.f32 %v1340, %v785
        %v1786 = vadd.f32 %v1768, %v1777
        %v1787 = vadd.f32 %v1769, %v1778
        %v1788 = vadd.f32 %v1770, %v1779
        %v1789 = vadd.f32 %v1771, %v1780
        %v1790 = vadd.f32 %v1772, %v1781
        %v1791 = vadd.f32 %v1773, %v1782
        %v1792 = vadd.f32 %v1774, %v1783
        %v1793 = vadd.f32 %v1775, %v1784
        %v1794 = vadd.f32 %v1776, %v1785
        %v1795 = vmul.f32 %v1554, %v864
        %v1796 = vmul.f32 %v1559, %v864
        %v1797 = vmul.f32 %v1564, %v864
        %v1798 = vmul.f32 %v1569, %v864
        %v1799 = vmul.f32 %v1574, %v864
        %v1800 = vmul.f32 %v1579, %v864
        %v1801 = vmul.f32 %v1584, %v864
        %v1802 = vmul.f32 %v1589, %v864
        %v1803 = vmul.f32 %v1594, %v864
        %v1804 = vadd.f32 %v1786, %v1795
        %v1805 = vadd.f32 %v1787, %v1796
        %v1806 = vadd.f32 %v1788, %v1797
        %v1807 = vadd.f32 %v1789, %v1798
        %v1808 = vadd.f32 %v1790, %v1799
        %v1809 = vadd.f32 %v1791, %v1800
        %v1810 = vadd.f32 %v1792, %v1801
        %v1811 = vadd.f32 %v1793, %v1802
        %v1812 = vadd.f32 %v1794, %v1803
        %v1813 = vmul.f32 %v1627, %v943
        %v1814 = vmul.f32 %v1632, %v943
        %v1815 = vmul.f32 %v1637, %v943
        %v1816 = vmul.f32 %v1642, %v943
        %v1817 = vmul.f32 %v1647, %v943
        %v1818 = vmul.f32 %v1652, %v943
        %v1819 = vmul.f32 %v1657, %v943
        %v1820 = vmul.f32 %v1662, %v943
        %v1821 = vmul.f32 %v1667, %v943
        %v1822 = vadd.f32 %v1804, %v1813
        %v1823 = vadd.f32 %v1805, %v1814
        %v1824 = vadd.f32 %v1806, %v1815
        %v1825 = vadd.f32 %v1807, %v1816
        %v1826 = vadd.f32 %v1808, %v1817
        %v1827 = vadd.f32 %v1809, %v1818
        %v1828 = vadd.f32 %v1810, %v1819
        %v1829 = vadd.f32 %v1811, %v1820
        %v1830 = vadd.f32 %v1812, %v1821
        %s1831 = scalar_lea.vmem %s330, 1920
        %v1832 = vld [vmem:[%s1831] sm:$0xff]
        %v1833 = vld [vmem:[%s1831 + $0x8] sm:$0xff]
        %v1834 = vld [vmem:[%s1831 + $0x10] sm:$0xff]
        %v1835 = vld [vmem:[%s1831 + $0x20] sm:$0xff]
        %v1836 = vld [vmem:[%s1831 + $0x28] sm:$0xff]
        %v1837 = vld [vmem:[%s1831 + $0x30] sm:$0xff]
        %v1838 = vld [vmem:[%s1831 + $0x40] sm:$0xff]
        %v1839 = vld [vmem:[%s1831 + $0x48] sm:$0xff]
        %v1840 = vld [vmem:[%s1831 + $0x50] sm:$0xff]
        %1842 = vset.pattern.permute.xlu0 0
        %1843 = vperm.xlu0 %1842, %v1832
        %v1844 = vpop.permute.xlu0 %1843
        %1847 = vset.pattern.permute.xlu0 0
        %1848 = vperm.xlu0 %1847, %v1833
        %v1849 = vpop.permute.xlu0 %1848
        %1852 = vset.pattern.permute.xlu0 0
        %1853 = vperm.xlu0 %1852, %v1834
        %v1854 = vpop.permute.xlu0 %1853
        %1857 = vset.pattern.permute.xlu0 0
        %1858 = vperm.xlu0 %1857, %v1835
        %v1859 = vpop.permute.xlu0 %1858
        %1862 = vset.pattern.permute.xlu0 0
        %1863 = vperm.xlu0 %1862, %v1836
        %v1864 = vpop.permute.xlu0 %1863
        %1867 = vset.pattern.permute.xlu0 0
        %1868 = vperm.xlu0 %1867, %v1837
        %v1869 = vpop.permute.xlu0 %1868
        %1872 = vset.pattern.permute.xlu0 0
        %1873 = vperm.xlu0 %1872, %v1838
        %v1874 = vpop.permute.xlu0 %1873
        %1877 = vset.pattern.permute.xlu0 0
        %1878 = vperm.xlu0 %1877, %v1839
        %v1879 = vpop.permute.xlu0 %1878
        %1882 = vset.pattern.permute.xlu0 0
        %1883 = vperm.xlu0 %1882, %v1840
        %v1884 = vpop.permute.xlu0 %1883
        %v1886 = vmul.f32 %v1844, %v1022
        %v1887 = vmul.f32 %v1849, %v1022
        %v1888 = vmul.f32 %v1854, %v1022
        %v1889 = vmul.f32 %v1859, %v1022
        %v1890 = vmul.f32 %v1864, %v1022
        %v1891 = vmul.f32 %v1869, %v1022
        %v1892 = vmul.f32 %v1874, %v1022
        %v1893 = vmul.f32 %v1879, %v1022
        %v1894 = vmul.f32 %v1884, %v1022
        %v1895 = vadd.f32 %v1822, %v1886
        %v1896 = vadd.f32 %v1823, %v1887
        %v1897 = vadd.f32 %v1824, %v1888
        %v1898 = vadd.f32 %v1825, %v1889
        %v1899 = vadd.f32 %v1826, %v1890
        %v1900 = vadd.f32 %v1827, %v1891
        %v1901 = vadd.f32 %v1828, %v1892
        %v1902 = vadd.f32 %v1829, %v1893
        %v1903 = vadd.f32 %v1830, %v1894
        %v1904 = vmax.f32 %v1687, %v1895
        %v1905 = vmax.f32 %v1688, %v1896
        %v1906 = vmax.f32 %v1689, %v1897
        %v1907 = vmax.f32 %v1690, %v1898
        %v1908 = vmax.f32 %v1691, %v1899
        %v1909 = vmax.f32 %v1692, %v1900
        %v1910 = vmax.f32 %v1693, %v1901
        %v1911 = vmax.f32 %v1694, %v1902
        %v1912 = vmax.f32 %v1695, %v1903
        %v1914 = vlaneseq
        %v1915 = vshrl.u32 %v1914, 7
        %v1916 = vsub.s32 0, %v1915
        %v1917 = vrot.slane %v340, %v1916
        %v1919 = vadd.f32 %v1904, %v1917
        %v1920 = vadd.f32 %v1905, %v1917
        %v1921 = vadd.f32 %v1906, %v1917
        %v1922 = vadd.f32 %v1907, %v1917
        %v1923 = vadd.f32 %v1908, %v1917
        %v1924 = vadd.f32 %v1909, %v1917
        %v1925 = vadd.f32 %v1910, %v1917
        %v1926 = vadd.f32 %v1911, %v1917
        %v1927 = vadd.f32 %v1912, %v1917
        %v1928 = vmax.f32 %v1919, 0.0
        %v1929 = vmax.f32 %v1920, 0.0
        %v1930 = vmax.f32 %v1921, 0.0
        %v1931 = vmax.f32 %v1922, 0.0
        %v1932 = vmax.f32 %v1923, 0.0
        %v1933 = vmax.f32 %v1924, 0.0
        %v1934 = vmax.f32 %v1925, 0.0
        %v1935 = vmax.f32 %v1926, 0.0
        %v1936 = vmax.f32 %v1927, 0.0
        %v1937 = vmul.f32 %v502, %v399
        %v1938 = vmul.f32 %v507, %v399
        %v1939 = vmul.f32 %v512, %v399
        %v1940 = vmul.f32 %v517, %v399
        %v1941 = vmul.f32 %v522, %v399
        %v1942 = vmul.f32 %v527, %v399
        %v1943 = vmul.f32 %v532, %v399
        %v1944 = vmul.f32 %v537, %v399
        %v1945 = vmul.f32 %v542, %v399
        %v1946 = vmul.f32 %v1082, %v469
        %v1947 = vmul.f32 %v1087, %v469
        %v1948 = vmul.f32 %v1092, %v469
        %v1949 = vmul.f32 %v1097, %v469
        %v1950 = vmul.f32 %v1102, %v469
        %v1951 = vmul.f32 %v1107, %v469
        %v1952 = vmul.f32 %v1112, %v469
        %v1953 = vmul.f32 %v1117, %v469
        %v1954 = vmul.f32 %v1122, %v469
        %v1955 = vadd.f32 %v1937, %v1946
        %v1956 = vadd.f32 %v1938, %v1947
        %v1957 = vadd.f32 %v1939, %v1948
        %v1958 = vadd.f32 %v1940, %v1949
        %v1959 = vadd.f32 %v1941, %v1950
        %v1960 = vadd.f32 %v1942, %v1951
        %v1961 = vadd.f32 %v1943, %v1952
        %v1962 = vadd.f32 %v1944, %v1953
        %v1963 = vadd.f32 %v1945, %v1954
        %s1964 = scalar_lea.vmem %s330, 8
        %v1965 = vld [vmem:[%s1964] sm:$0xff]
        %v1966 = vld [vmem:[%s1964 + $0x8] sm:$0xff]
        %v1967 = vld [vmem:[%s1964 + $0x10] sm:$0xff]
        %v1968 = vld [vmem:[%s1964 + $0x20] sm:$0xff]
        %v1969 = vld [vmem:[%s1964 + $0x28] sm:$0xff]
        %v1970 = vld [vmem:[%s1964 + $0x30] sm:$0xff]
        %v1971 = vld [vmem:[%s1964 + $0x40] sm:$0xff]
        %v1972 = vld [vmem:[%s1964 + $0x48] sm:$0xff]
        %v1973 = vld [vmem:[%s1964 + $0x50] sm:$0xff]
        %1975 = vset.pattern.permute.xlu0 0
        %1976 = vperm.xlu0 %1975, %v1965
        %v1977 = vpop.permute.xlu0 %1976
        %1980 = vset.pattern.permute.xlu0 0
        %1981 = vperm.xlu0 %1980, %v1966
        %v1982 = vpop.permute.xlu0 %1981
        %1985 = vset.pattern.permute.xlu0 0
        %1986 = vperm.xlu0 %1985, %v1967
        %v1987 = vpop.permute.xlu0 %1986
        %1990 = vset.pattern.permute.xlu0 0
        %1991 = vperm.xlu0 %1990, %v1968
        %v1992 = vpop.permute.xlu0 %1991
        %1995 = vset.pattern.permute.xlu0 0
        %1996 = vperm.xlu0 %1995, %v1969
        %v1997 = vpop.permute.xlu0 %1996
        %2000 = vset.pattern.permute.xlu0 0
        %2001 = vperm.xlu0 %2000, %v1970
        %v2002 = vpop.permute.xlu0 %2001
        %2005 = vset.pattern.permute.xlu0 0
        %2006 = vperm.xlu0 %2005, %v1971
        %v2007 = vpop.permute.xlu0 %2006
        %2010 = vset.pattern.permute.xlu0 0
        %2011 = vperm.xlu0 %2010, %v1972
        %v2012 = vpop.permute.xlu0 %2011
        %2015 = vset.pattern.permute.xlu0 0
        %2016 = vperm.xlu0 %2015, %v1973
        %v2017 = vpop.permute.xlu0 %2016
        %v2019 = vmul.f32 %v1977, %v548
        %v2020 = vmul.f32 %v1982, %v548
        %v2021 = vmul.f32 %v1987, %v548
        %v2022 = vmul.f32 %v1992, %v548
        %v2023 = vmul.f32 %v1997, %v548
        %v2024 = vmul.f32 %v2002, %v548
        %v2025 = vmul.f32 %v2007, %v548
        %v2026 = vmul.f32 %v2012, %v548
        %v2027 = vmul.f32 %v2017, %v548
        %v2028 = vadd.f32 %v1955, %v2019
        %v2029 = vadd.f32 %v1956, %v2020
        %v2030 = vadd.f32 %v1957, %v2021
        %v2031 = vadd.f32 %v1958, %v2022
        %v2032 = vadd.f32 %v1959, %v2023
        %v2033 = vadd.f32 %v1960, %v2024
        %v2034 = vadd.f32 %v1961, %v2025
        %v2035 = vadd.f32 %v1962, %v2026
        %v2036 = vadd.f32 %v1963, %v2027
        %v2037 = vmul.f32 %v739, %v627
        %v2038 = vmul.f32 %v744, %v627
        %v2039 = vmul.f32 %v749, %v627
        %v2040 = vmul.f32 %v754, %v627
        %v2041 = vmul.f32 %v759, %v627
        %v2042 = vmul.f32 %v764, %v627
        %v2043 = vmul.f32 %v769, %v627
        %v2044 = vmul.f32 %v774, %v627
        %v2045 = vmul.f32 %v779, %v627
        %v2046 = vadd.f32 %v2028, %v2037
        %v2047 = vadd.f32 %v2029, %v2038
        %v2048 = vadd.f32 %v2030, %v2039
        %v2049 = vadd.f32 %v2031, %v2040
        %v2050 = vadd.f32 %v2032, %v2041
        %v2051 = vadd.f32 %v2033, %v2042
        %v2052 = vadd.f32 %v2034, %v2043
        %v2053 = vadd.f32 %v2035, %v2044
        %v2054 = vadd.f32 %v2036, %v2045
        %v2055 = vmul.f32 %v1191, %v706
        %v2056 = vmul.f32 %v1196, %v706
        %v2057 = vmul.f32 %v1201, %v706
        %v2058 = vmul.f32 %v1206, %v706
        %v2059 = vmul.f32 %v1211, %v706
        %v2060 = vmul.f32 %v1216, %v706
        %v2061 = vmul.f32 %v1221, %v706
        %v2062 = vmul.f32 %v1226, %v706
        %v2063 = vmul.f32 %v1231, %v706
        %v2064 = vadd.f32 %v2046, %v2055
        %v2065 = vadd.f32 %v2047, %v2056
        %v2066 = vadd.f32 %v2048, %v2057
        %v2067 = vadd.f32 %v2049, %v2058
        %v2068 = vadd.f32 %v2050, %v2059
        %v2069 = vadd.f32 %v2051, %v2060
        %v2070 = vadd.f32 %v2052, %v2061
        %v2071 = vadd.f32 %v2053, %v2062
        %v2072 = vadd.f32 %v2054, %v2063
        %s2073 = scalar_lea.vmem %s330, 520
        %v2074 = vld [vmem:[%s2073] sm:$0xff]
        %v2075 = vld [vmem:[%s2073 + $0x8] sm:$0xff]
        %v2076 = vld [vmem:[%s2073 + $0x10] sm:$0xff]
        %v2077 = vld [vmem:[%s2073 + $0x20] sm:$0xff]
        %v2078 = vld [vmem:[%s2073 + $0x28] sm:$0xff]
        %v2079 = vld [vmem:[%s2073 + $0x30] sm:$0xff]
        %v2080 = vld [vmem:[%s2073 + $0x40] sm:$0xff]
        %v2081 = vld [vmem:[%s2073 + $0x48] sm:$0xff]
        %v2082 = vld [vmem:[%s2073 + $0x50] sm:$0xff]
        %2084 = vset.pattern.permute.xlu0 0
        %2085 = vperm.xlu0 %2084, %v2074
        %v2086 = vpop.permute.xlu0 %2085
        %2089 = vset.pattern.permute.xlu0 0
        %2090 = vperm.xlu0 %2089, %v2075
        %v2091 = vpop.permute.xlu0 %2090
        %2094 = vset.pattern.permute.xlu0 0
        %2095 = vperm.xlu0 %2094, %v2076
        %v2096 = vpop.permute.xlu0 %2095
        %2099 = vset.pattern.permute.xlu0 0
        %2100 = vperm.xlu0 %2099, %v2077
        %v2101 = vpop.permute.xlu0 %2100
        %2104 = vset.pattern.permute.xlu0 0
        %2105 = vperm.xlu0 %2104, %v2078
        %v2106 = vpop.permute.xlu0 %2105
        %2109 = vset.pattern.permute.xlu0 0
        %2110 = vperm.xlu0 %2109, %v2079
        %v2111 = vpop.permute.xlu0 %2110
        %2114 = vset.pattern.permute.xlu0 0
        %2115 = vperm.xlu0 %2114, %v2080
        %v2116 = vpop.permute.xlu0 %2115
        %2119 = vset.pattern.permute.xlu0 0
        %2120 = vperm.xlu0 %2119, %v2081
        %v2121 = vpop.permute.xlu0 %2120
        %2124 = vset.pattern.permute.xlu0 0
        %2125 = vperm.xlu0 %2124, %v2082
        %v2126 = vpop.permute.xlu0 %2125
        %v2128 = vmul.f32 %v2086, %v785
        %v2129 = vmul.f32 %v2091, %v785
        %v2130 = vmul.f32 %v2096, %v785
        %v2131 = vmul.f32 %v2101, %v785
        %v2132 = vmul.f32 %v2106, %v785
        %v2133 = vmul.f32 %v2111, %v785
        %v2134 = vmul.f32 %v2116, %v785
        %v2135 = vmul.f32 %v2121, %v785
        %v2136 = vmul.f32 %v2126, %v785
        %v2137 = vadd.f32 %v2064, %v2128
        %v2138 = vadd.f32 %v2065, %v2129
        %v2139 = vadd.f32 %v2066, %v2130
        %v2140 = vadd.f32 %v2067, %v2131
        %v2141 = vadd.f32 %v2068, %v2132
        %v2142 = vadd.f32 %v2069, %v2133
        %v2143 = vadd.f32 %v2070, %v2134
        %v2144 = vadd.f32 %v2071, %v2135
        %v2145 = vadd.f32 %v2072, %v2136
        %v2146 = vmul.f32 %v976, %v864
        %v2147 = vmul.f32 %v981, %v864
        %v2148 = vmul.f32 %v986, %v864
        %v2149 = vmul.f32 %v991, %v864
        %v2150 = vmul.f32 %v996, %v864
        %v2151 = vmul.f32 %v1001, %v864
        %v2152 = vmul.f32 %v1006, %v864
        %v2153 = vmul.f32 %v1011, %v864
        %v2154 = vmul.f32 %v1016, %v864
        %v2155 = vadd.f32 %v2137, %v2146
        %v2156 = vadd.f32 %v2138, %v2147
        %v2157 = vadd.f32 %v2139, %v2148
        %v2158 = vadd.f32 %v2140, %v2149
        %v2159 = vadd.f32 %v2141, %v2150
        %v2160 = vadd.f32 %v2142, %v2151
        %v2161 = vadd.f32 %v2143, %v2152
        %v2162 = vadd.f32 %v2144, %v2153
        %v2163 = vadd.f32 %v2145, %v2154
        %v2164 = vmul.f32 %v1300, %v943
        %v2165 = vmul.f32 %v1305, %v943
        %v2166 = vmul.f32 %v1310, %v943
        %v2167 = vmul.f32 %v1315, %v943
        %v2168 = vmul.f32 %v1320, %v943
        %v2169 = vmul.f32 %v1325, %v943
        %v2170 = vmul.f32 %v1330, %v943
        %v2171 = vmul.f32 %v1335, %v943
        %v2172 = vmul.f32 %v1340, %v943
        %v2173 = vadd.f32 %v2155, %v2164
        %v2174 = vadd.f32 %v2156, %v2165
        %v2175 = vadd.f32 %v2157, %v2166
        %v2176 = vadd.f32 %v2158, %v2167
        %v2177 = vadd.f32 %v2159, %v2168
        %v2178 = vadd.f32 %v2160, %v2169
        %v2179 = vadd.f32 %v2161, %v2170
        %v2180 = vadd.f32 %v2162, %v2171
        %v2181 = vadd.f32 %v2163, %v2172
        %s2182 = scalar_lea.vmem %s330, 1032
        %v2183 = vld [vmem:[%s2182] sm:$0xff]
        %v2184 = vld [vmem:[%s2182 + $0x8] sm:$0xff]
        %v2185 = vld [vmem:[%s2182 + $0x10] sm:$0xff]
        %v2186 = vld [vmem:[%s2182 + $0x20] sm:$0xff]
        %v2187 = vld [vmem:[%s2182 + $0x28] sm:$0xff]
        %v2188 = vld [vmem:[%s2182 + $0x30] sm:$0xff]
        %v2189 = vld [vmem:[%s2182 + $0x40] sm:$0xff]
        %v2190 = vld [vmem:[%s2182 + $0x48] sm:$0xff]
        %v2191 = vld [vmem:[%s2182 + $0x50] sm:$0xff]
        %2193 = vset.pattern.permute.xlu0 0
        %2194 = vperm.xlu0 %2193, %v2183
        %v2195 = vpop.permute.xlu0 %2194
        %2198 = vset.pattern.permute.xlu0 0
        %2199 = vperm.xlu0 %2198, %v2184
        %v2200 = vpop.permute.xlu0 %2199
        %2203 = vset.pattern.permute.xlu0 0
        %2204 = vperm.xlu0 %2203, %v2185
        %v2205 = vpop.permute.xlu0 %2204
        %2208 = vset.pattern.permute.xlu0 0
        %2209 = vperm.xlu0 %2208, %v2186
        %v2210 = vpop.permute.xlu0 %2209
        %2213 = vset.pattern.permute.xlu0 0
        %2214 = vperm.xlu0 %2213, %v2187
        %v2215 = vpop.permute.xlu0 %2214
        %2218 = vset.pattern.permute.xlu0 0
        %2219 = vperm.xlu0 %2218, %v2188
        %v2220 = vpop.permute.xlu0 %2219
        %2223 = vset.pattern.permute.xlu0 0
        %2224 = vperm.xlu0 %2223, %v2189
        %v2225 = vpop.permute.xlu0 %2224
        %2228 = vset.pattern.permute.xlu0 0
        %2229 = vperm.xlu0 %2228, %v2190
        %v2230 = vpop.permute.xlu0 %2229
        %2233 = vset.pattern.permute.xlu0 0
        %2234 = vperm.xlu0 %2233, %v2191
        %v2235 = vpop.permute.xlu0 %2234
        %v2237 = vmul.f32 %v2195, %v1022
        %v2238 = vmul.f32 %v2200, %v1022
        %v2239 = vmul.f32 %v2205, %v1022
        %v2240 = vmul.f32 %v2210, %v1022
        %v2241 = vmul.f32 %v2215, %v1022
        %v2242 = vmul.f32 %v2220, %v1022
        %v2243 = vmul.f32 %v2225, %v1022
        %v2244 = vmul.f32 %v2230, %v1022
        %v2245 = vmul.f32 %v2235, %v1022
        %v2246 = vadd.f32 %v2173, %v2237
        %v2247 = vadd.f32 %v2174, %v2238
        %v2248 = vadd.f32 %v2175, %v2239
        %v2249 = vadd.f32 %v2176, %v2240
        %v2250 = vadd.f32 %v2177, %v2241
        %v2251 = vadd.f32 %v2178, %v2242
        %v2252 = vadd.f32 %v2179, %v2243
        %v2253 = vadd.f32 %v2180, %v2244
        %v2254 = vadd.f32 %v2181, %v2245
        %v2255 = vmul.f32 %v1082, %v399
        %v2256 = vmul.f32 %v1087, %v399
        %v2257 = vmul.f32 %v1092, %v399
        %v2258 = vmul.f32 %v1097, %v399
        %v2259 = vmul.f32 %v1102, %v399
        %v2260 = vmul.f32 %v1107, %v399
        %v2261 = vmul.f32 %v1112, %v399
        %v2262 = vmul.f32 %v1117, %v399
        %v2263 = vmul.f32 %v1122, %v399
        %v2264 = vmul.f32 %v1977, %v469
        %v2265 = vmul.f32 %v1982, %v469
        %v2266 = vmul.f32 %v1987, %v469
        %v2267 = vmul.f32 %v1992, %v469
        %v2268 = vmul.f32 %v1997, %v469
        %v2269 = vmul.f32 %v2002, %v469
        %v2270 = vmul.f32 %v2007, %v469
        %v2271 = vmul.f32 %v2012, %v469
        %v2272 = vmul.f32 %v2017, %v469
        %v2273 = vadd.f32 %v2255, %v2264
        %v2274 = vadd.f32 %v2256, %v2265
        %v2275 = vadd.f32 %v2257, %v2266
        %v2276 = vadd.f32 %v2258, %v2267
        %v2277 = vadd.f32 %v2259, %v2268
        %v2278 = vadd.f32 %v2260, %v2269
        %v2279 = vadd.f32 %v2261, %v2270
        %v2280 = vadd.f32 %v2262, %v2271
        %v2281 = vadd.f32 %v2263, %v2272
        %s2282 = scalar_lea.vmem %s330, 136
        %v2283 = vld [vmem:[%s2282] sm:$0xff]
        %v2284 = vld [vmem:[%s2282 + $0x8] sm:$0xff]
        %v2285 = vld [vmem:[%s2282 + $0x10] sm:$0xff]
        %v2286 = vld [vmem:[%s2282 + $0x20] sm:$0xff]
        %v2287 = vld [vmem:[%s2282 + $0x28] sm:$0xff]
        %v2288 = vld [vmem:[%s2282 + $0x30] sm:$0xff]
        %v2289 = vld [vmem:[%s2282 + $0x40] sm:$0xff]
        %v2290 = vld [vmem:[%s2282 + $0x48] sm:$0xff]
        %v2291 = vld [vmem:[%s2282 + $0x50] sm:$0xff]
        %2293 = vset.pattern.permute.xlu0 0
        %2294 = vperm.xlu0 %2293, %v2283
        %v2295 = vpop.permute.xlu0 %2294
        %2298 = vset.pattern.permute.xlu0 0
        %2299 = vperm.xlu0 %2298, %v2284
        %v2300 = vpop.permute.xlu0 %2299
        %2303 = vset.pattern.permute.xlu0 0
        %2304 = vperm.xlu0 %2303, %v2285
        %v2305 = vpop.permute.xlu0 %2304
        %2308 = vset.pattern.permute.xlu0 0
        %2309 = vperm.xlu0 %2308, %v2286
        %v2310 = vpop.permute.xlu0 %2309
        %2313 = vset.pattern.permute.xlu0 0
        %2314 = vperm.xlu0 %2313, %v2287
        %v2315 = vpop.permute.xlu0 %2314
        %2318 = vset.pattern.permute.xlu0 0
        %2319 = vperm.xlu0 %2318, %v2288
        %v2320 = vpop.permute.xlu0 %2319
        %2323 = vset.pattern.permute.xlu0 0
        %2324 = vperm.xlu0 %2323, %v2289
        %v2325 = vpop.permute.xlu0 %2324
        %2328 = vset.pattern.permute.xlu0 0
        %2329 = vperm.xlu0 %2328, %v2290
        %v2330 = vpop.permute.xlu0 %2329
        %2333 = vset.pattern.permute.xlu0 0
        %2334 = vperm.xlu0 %2333, %v2291
        %v2335 = vpop.permute.xlu0 %2334
        %v2337 = vmul.f32 %v2295, %v548
        %v2338 = vmul.f32 %v2300, %v548
        %v2339 = vmul.f32 %v2305, %v548
        %v2340 = vmul.f32 %v2310, %v548
        %v2341 = vmul.f32 %v2315, %v548
        %v2342 = vmul.f32 %v2320, %v548
        %v2343 = vmul.f32 %v2325, %v548
        %v2344 = vmul.f32 %v2330, %v548
        %v2345 = vmul.f32 %v2335, %v548
        %v2346 = vadd.f32 %v2273, %v2337
        %v2347 = vadd.f32 %v2274, %v2338
        %v2348 = vadd.f32 %v2275, %v2339
        %v2349 = vadd.f32 %v2276, %v2340
        %v2350 = vadd.f32 %v2277, %v2341
        %v2351 = vadd.f32 %v2278, %v2342
        %v2352 = vadd.f32 %v2279, %v2343
        %v2353 = vadd.f32 %v2280, %v2344
        %v2354 = vadd.f32 %v2281, %v2345
        %v2355 = vmul.f32 %v1191, %v627
        %v2356 = vmul.f32 %v1196, %v627
        %v2357 = vmul.f32 %v1201, %v627
        %v2358 = vmul.f32 %v1206, %v627
        %v2359 = vmul.f32 %v1211, %v627
        %v2360 = vmul.f32 %v1216, %v627
        %v2361 = vmul.f32 %v1221, %v627
        %v2362 = vmul.f32 %v1226, %v627
        %v2363 = vmul.f32 %v1231, %v627
        %v2364 = vadd.f32 %v2346, %v2355
        %v2365 = vadd.f32 %v2347, %v2356
        %v2366 = vadd.f32 %v2348, %v2357
        %v2367 = vadd.f32 %v2349, %v2358
        %v2368 = vadd.f32 %v2350, %v2359
        %v2369 = vadd.f32 %v2351, %v2360
        %v2370 = vadd.f32 %v2352, %v2361
        %v2371 = vadd.f32 %v2353, %v2362
        %v2372 = vadd.f32 %v2354, %v2363
        %v2373 = vmul.f32 %v2086, %v706
        %v2374 = vmul.f32 %v2091, %v706
        %v2375 = vmul.f32 %v2096, %v706
        %v2376 = vmul.f32 %v2101, %v706
        %v2377 = vmul.f32 %v2106, %v706
        %v2378 = vmul.f32 %v2111, %v706
        %v2379 = vmul.f32 %v2116, %v706
        %v2380 = vmul.f32 %v2121, %v706
        %v2381 = vmul.f32 %v2126, %v706
        %v2382 = vadd.f32 %v2364, %v2373
        %v2383 = vadd.f32 %v2365, %v2374
        %v2384 = vadd.f32 %v2366, %v2375
        %v2385 = vadd.f32 %v2367, %v2376
        %v2386 = vadd.f32 %v2368, %v2377
        %v2387 = vadd.f32 %v2369, %v2378
        %v2388 = vadd.f32 %v2370, %v2379
        %v2389 = vadd.f32 %v2371, %v2380
        %v2390 = vadd.f32 %v2372, %v2381
        %s2391 = scalar_lea.vmem %s330, 648
        %v2392 = vld [vmem:[%s2391] sm:$0xff]
        %v2393 = vld [vmem:[%s2391 + $0x8] sm:$0xff]
        %v2394 = vld [vmem:[%s2391 + $0x10] sm:$0xff]
        %v2395 = vld [vmem:[%s2391 + $0x20] sm:$0xff]
        %v2396 = vld [vmem:[%s2391 + $0x28] sm:$0xff]
        %v2397 = vld [vmem:[%s2391 + $0x30] sm:$0xff]
        %v2398 = vld [vmem:[%s2391 + $0x40] sm:$0xff]
        %v2399 = vld [vmem:[%s2391 + $0x48] sm:$0xff]
        %v2400 = vld [vmem:[%s2391 + $0x50] sm:$0xff]
        %2402 = vset.pattern.permute.xlu0 0
        %2403 = vperm.xlu0 %2402, %v2392
        %v2404 = vpop.permute.xlu0 %2403
        %2407 = vset.pattern.permute.xlu0 0
        %2408 = vperm.xlu0 %2407, %v2393
        %v2409 = vpop.permute.xlu0 %2408
        %2412 = vset.pattern.permute.xlu0 0
        %2413 = vperm.xlu0 %2412, %v2394
        %v2414 = vpop.permute.xlu0 %2413
        %2417 = vset.pattern.permute.xlu0 0
        %2418 = vperm.xlu0 %2417, %v2395
        %v2419 = vpop.permute.xlu0 %2418
        %2422 = vset.pattern.permute.xlu0 0
        %2423 = vperm.xlu0 %2422, %v2396
        %v2424 = vpop.permute.xlu0 %2423
        %2427 = vset.pattern.permute.xlu0 0
        %2428 = vperm.xlu0 %2427, %v2397
        %v2429 = vpop.permute.xlu0 %2428
        %2432 = vset.pattern.permute.xlu0 0
        %2433 = vperm.xlu0 %2432, %v2398
        %v2434 = vpop.permute.xlu0 %2433
        %2437 = vset.pattern.permute.xlu0 0
        %2438 = vperm.xlu0 %2437, %v2399
        %v2439 = vpop.permute.xlu0 %2438
        %2442 = vset.pattern.permute.xlu0 0
        %2443 = vperm.xlu0 %2442, %v2400
        %v2444 = vpop.permute.xlu0 %2443
        %v2446 = vmul.f32 %v2404, %v785
        %v2447 = vmul.f32 %v2409, %v785
        %v2448 = vmul.f32 %v2414, %v785
        %v2449 = vmul.f32 %v2419, %v785
        %v2450 = vmul.f32 %v2424, %v785
        %v2451 = vmul.f32 %v2429, %v785
        %v2452 = vmul.f32 %v2434, %v785
        %v2453 = vmul.f32 %v2439, %v785
        %v2454 = vmul.f32 %v2444, %v785
        %v2455 = vadd.f32 %v2382, %v2446
        %v2456 = vadd.f32 %v2383, %v2447
        %v2457 = vadd.f32 %v2384, %v2448
        %v2458 = vadd.f32 %v2385, %v2449
        %v2459 = vadd.f32 %v2386, %v2450
        %v2460 = vadd.f32 %v2387, %v2451
        %v2461 = vadd.f32 %v2388, %v2452
        %v2462 = vadd.f32 %v2389, %v2453
        %v2463 = vadd.f32 %v2390, %v2454
        %v2464 = vmul.f32 %v1300, %v864
        %v2465 = vmul.f32 %v1305, %v864
        %v2466 = vmul.f32 %v1310, %v864
        %v2467 = vmul.f32 %v1315, %v864
        %v2468 = vmul.f32 %v1320, %v864
        %v2469 = vmul.f32 %v1325, %v864
        %v2470 = vmul.f32 %v1330, %v864
        %v2471 = vmul.f32 %v1335, %v864
        %v2472 = vmul.f32 %v1340, %v864
        %v2473 = vadd.f32 %v2455, %v2464
        %v2474 = vadd.f32 %v2456, %v2465
        %v2475 = vadd.f32 %v2457, %v2466
        %v2476 = vadd.f32 %v2458, %v2467
        %v2477 = vadd.f32 %v2459, %v2468
        %v2478 = vadd.f32 %v2460, %v2469
        %v2479 = vadd.f32 %v2461, %v2470
        %v2480 = vadd.f32 %v2462, %v2471
        %v2481 = vadd.f32 %v2463, %v2472
        %v2482 = vmul.f32 %v2195, %v943
        %v2483 = vmul.f32 %v2200, %v943
        %v2484 = vmul.f32 %v2205, %v943
        %v2485 = vmul.f32 %v2210, %v943
        %v2486 = vmul.f32 %v2215, %v943
        %v2487 = vmul.f32 %v2220, %v943
        %v2488 = vmul.f32 %v2225, %v943
        %v2489 = vmul.f32 %v2230, %v943
        %v2490 = vmul.f32 %v2235, %v943
        %v2491 = vadd.f32 %v2473, %v2482
        %v2492 = vadd.f32 %v2474, %v2483
        %v2493 = vadd.f32 %v2475, %v2484
        %v2494 = vadd.f32 %v2476, %v2485
        %v2495 = vadd.f32 %v2477, %v2486
        %v2496 = vadd.f32 %v2478, %v2487
        %v2497 = vadd.f32 %v2479, %v2488
        %v2498 = vadd.f32 %v2480, %v2489
        %v2499 = vadd.f32 %v2481, %v2490
        %s2500 = scalar_lea.vmem %s330, 1160
        %v2501 = vld [vmem:[%s2500] sm:$0xff]
        %v2502 = vld [vmem:[%s2500 + $0x8] sm:$0xff]
        %v2503 = vld [vmem:[%s2500 + $0x10] sm:$0xff]
        %v2504 = vld [vmem:[%s2500 + $0x20] sm:$0xff]
        %v2505 = vld [vmem:[%s2500 + $0x28] sm:$0xff]
        %v2506 = vld [vmem:[%s2500 + $0x30] sm:$0xff]
        %v2507 = vld [vmem:[%s2500 + $0x40] sm:$0xff]
        %v2508 = vld [vmem:[%s2500 + $0x48] sm:$0xff]
        %v2509 = vld [vmem:[%s2500 + $0x50] sm:$0xff]
        %2511 = vset.pattern.permute.xlu0 0
        %2512 = vperm.xlu0 %2511, %v2501
        %v2513 = vpop.permute.xlu0 %2512
        %2516 = vset.pattern.permute.xlu0 0
        %2517 = vperm.xlu0 %2516, %v2502
        %v2518 = vpop.permute.xlu0 %2517
        %2521 = vset.pattern.permute.xlu0 0
        %2522 = vperm.xlu0 %2521, %v2503
        %v2523 = vpop.permute.xlu0 %2522
        %2526 = vset.pattern.permute.xlu0 0
        %2527 = vperm.xlu0 %2526, %v2504
        %v2528 = vpop.permute.xlu0 %2527
        %2531 = vset.pattern.permute.xlu0 0
        %2532 = vperm.xlu0 %2531, %v2505
        %v2533 = vpop.permute.xlu0 %2532
        %2536 = vset.pattern.permute.xlu0 0
        %2537 = vperm.xlu0 %2536, %v2506
        %v2538 = vpop.permute.xlu0 %2537
        %2541 = vset.pattern.permute.xlu0 0
        %2542 = vperm.xlu0 %2541, %v2507
        %v2543 = vpop.permute.xlu0 %2542
        %2546 = vset.pattern.permute.xlu0 0
        %2547 = vperm.xlu0 %2546, %v2508
        %v2548 = vpop.permute.xlu0 %2547
        %2551 = vset.pattern.permute.xlu0 0
        %2552 = vperm.xlu0 %2551, %v2509
        %v2553 = vpop.permute.xlu0 %2552
        %v2555 = vmul.f32 %v2513, %v1022
        %v2556 = vmul.f32 %v2518, %v1022
        %v2557 = vmul.f32 %v2523, %v1022
        %v2558 = vmul.f32 %v2528, %v1022
        %v2559 = vmul.f32 %v2533, %v1022
        %v2560 = vmul.f32 %v2538, %v1022
        %v2561 = vmul.f32 %v2543, %v1022
        %v2562 = vmul.f32 %v2548, %v1022
        %v2563 = vmul.f32 %v2553, %v1022
        %v2564 = vadd.f32 %v2491, %v2555
        %v2565 = vadd.f32 %v2492, %v2556
        %v2566 = vadd.f32 %v2493, %v2557
        %v2567 = vadd.f32 %v2494, %v2558
        %v2568 = vadd.f32 %v2495, %v2559
        %v2569 = vadd.f32 %v2496, %v2560
        %v2570 = vadd.f32 %v2497, %v2561
        %v2571 = vadd.f32 %v2498, %v2562
        %v2572 = vadd.f32 %v2499, %v2563
        %v2573 = vmax.f32 %v2246, %v2564
        %v2574 = vmax.f32 %v2247, %v2565
        %v2575 = vmax.f32 %v2248, %v2566
        %v2576 = vmax.f32 %v2249, %v2567
        %v2577 = vmax.f32 %v2250, %v2568
        %v2578 = vmax.f32 %v2251, %v2569
        %v2579 = vmax.f32 %v2252, %v2570
        %v2580 = vmax.f32 %v2253, %v2571
        %v2581 = vmax.f32 %v2254, %v2572
        %v2582 = vmul.f32 %v739, %v399
        %v2583 = vmul.f32 %v744, %v399
        %v2584 = vmul.f32 %v749, %v399
        %v2585 = vmul.f32 %v754, %v399
        %v2586 = vmul.f32 %v759, %v399
        %v2587 = vmul.f32 %v764, %v399
        %v2588 = vmul.f32 %v769, %v399
        %v2589 = vmul.f32 %v774, %v399
        %v2590 = vmul.f32 %v779, %v399
        %v2591 = vmul.f32 %v1191, %v469
        %v2592 = vmul.f32 %v1196, %v469
        %v2593 = vmul.f32 %v1201, %v469
        %v2594 = vmul.f32 %v1206, %v469
        %v2595 = vmul.f32 %v1211, %v469
        %v2596 = vmul.f32 %v1216, %v469
        %v2597 = vmul.f32 %v1221, %v469
        %v2598 = vmul.f32 %v1226, %v469
        %v2599 = vmul.f32 %v1231, %v469
        %v2600 = vadd.f32 %v2582, %v2591
        %v2601 = vadd.f32 %v2583, %v2592
        %v2602 = vadd.f32 %v2584, %v2593
        %v2603 = vadd.f32 %v2585, %v2594
        %v2604 = vadd.f32 %v2586, %v2595
        %v2605 = vadd.f32 %v2587, %v2596
        %v2606 = vadd.f32 %v2588, %v2597
        %v2607 = vadd.f32 %v2589, %v2598
        %v2608 = vadd.f32 %v2590, %v2599
        %v2609 = vmul.f32 %v2086, %v548
        %v2610 = vmul.f32 %v2091, %v548
        %v2611 = vmul.f32 %v2096, %v548
        %v2612 = vmul.f32 %v2101, %v548
        %v2613 = vmul.f32 %v2106, %v548
        %v2614 = vmul.f32 %v2111, %v548
        %v2615 = vmul.f32 %v2116, %v548
        %v2616 = vmul.f32 %v2121, %v548
        %v2617 = vmul.f32 %v2126, %v548
        %v2618 = vadd.f32 %v2600, %v2609
        %v2619 = vadd.f32 %v2601, %v2610
        %v2620 = vadd.f32 %v2602, %v2611
        %v2621 = vadd.f32 %v2603, %v2612
        %v2622 = vadd.f32 %v2604, %v2613
        %v2623 = vadd.f32 %v2605, %v2614
        %v2624 = vadd.f32 %v2606, %v2615
        %v2625 = vadd.f32 %v2607, %v2616
        %v2626 = vadd.f32 %v2608, %v2617
        %v2627 = vmul.f32 %v976, %v627
        %v2628 = vmul.f32 %v981, %v627
        %v2629 = vmul.f32 %v986, %v627
        %v2630 = vmul.f32 %v991, %v627
        %v2631 = vmul.f32 %v996, %v627
        %v2632 = vmul.f32 %v1001, %v627
        %v2633 = vmul.f32 %v1006, %v627
        %v2634 = vmul.f32 %v1011, %v627
        %v2635 = vmul.f32 %v1016, %v627
        %v2636 = vadd.f32 %v2618, %v2627
        %v2637 = vadd.f32 %v2619, %v2628
        %v2638 = vadd.f32 %v2620, %v2629
        %v2639 = vadd.f32 %v2621, %v2630
        %v2640 = vadd.f32 %v2622, %v2631
        %v2641 = vadd.f32 %v2623, %v2632
        %v2642 = vadd.f32 %v2624, %v2633
        %v2643 = vadd.f32 %v2625, %v2634
        %v2644 = vadd.f32 %v2626, %v2635
        %v2645 = vmul.f32 %v1300, %v706
        %v2646 = vmul.f32 %v1305, %v706
        %v2647 = vmul.f32 %v1310, %v706
        %v2648 = vmul.f32 %v1315, %v706
        %v2649 = vmul.f32 %v1320, %v706
        %v2650 = vmul.f32 %v1325, %v706
        %v2651 = vmul.f32 %v1330, %v706
        %v2652 = vmul.f32 %v1335, %v706
        %v2653 = vmul.f32 %v1340, %v706
        %v2654 = vadd.f32 %v2636, %v2645
        %v2655 = vadd.f32 %v2637, %v2646
        %v2656 = vadd.f32 %v2638, %v2647
        %v2657 = vadd.f32 %v2639, %v2648
        %v2658 = vadd.f32 %v2640, %v2649
        %v2659 = vadd.f32 %v2641, %v2650
        %v2660 = vadd.f32 %v2642, %v2651
        %v2661 = vadd.f32 %v2643, %v2652
        %v2662 = vadd.f32 %v2644, %v2653
        %v2663 = vmul.f32 %v2195, %v785
        %v2664 = vmul.f32 %v2200, %v785
        %v2665 = vmul.f32 %v2205, %v785
        %v2666 = vmul.f32 %v2210, %v785
        %v2667 = vmul.f32 %v2215, %v785
        %v2668 = vmul.f32 %v2220, %v785
        %v2669 = vmul.f32 %v2225, %v785
        %v2670 = vmul.f32 %v2230, %v785
        %v2671 = vmul.f32 %v2235, %v785
        %v2672 = vadd.f32 %v2654, %v2663
        %v2673 = vadd.f32 %v2655, %v2664
        %v2674 = vadd.f32 %v2656, %v2665
        %v2675 = vadd.f32 %v2657, %v2666
        %v2676 = vadd.f32 %v2658, %v2667
        %v2677 = vadd.f32 %v2659, %v2668
        %v2678 = vadd.f32 %v2660, %v2669
        %v2679 = vadd.f32 %v2661, %v2670
        %v2680 = vadd.f32 %v2662, %v2671
        %v2681 = vmul.f32 %v1627, %v864
        %v2682 = vmul.f32 %v1632, %v864
        %v2683 = vmul.f32 %v1637, %v864
        %v2684 = vmul.f32 %v1642, %v864
        %v2685 = vmul.f32 %v1647, %v864
        %v2686 = vmul.f32 %v1652, %v864
        %v2687 = vmul.f32 %v1657, %v864
        %v2688 = vmul.f32 %v1662, %v864
        %v2689 = vmul.f32 %v1667, %v864
        %v2690 = vadd.f32 %v2672, %v2681
        %v2691 = vadd.f32 %v2673, %v2682
        %v2692 = vadd.f32 %v2674, %v2683
        %v2693 = vadd.f32 %v2675, %v2684
        %v2694 = vadd.f32 %v2676, %v2685
        %v2695 = vadd.f32 %v2677, %v2686
        %v2696 = vadd.f32 %v2678, %v2687
        %v2697 = vadd.f32 %v2679, %v2688
        %v2698 = vadd.f32 %v2680, %v2689
        %v2699 = vmul.f32 %v1844, %v943
        %v2700 = vmul.f32 %v1849, %v943
        %v2701 = vmul.f32 %v1854, %v943
        %v2702 = vmul.f32 %v1859, %v943
        %v2703 = vmul.f32 %v1864, %v943
        %v2704 = vmul.f32 %v1869, %v943
        %v2705 = vmul.f32 %v1874, %v943
        %v2706 = vmul.f32 %v1879, %v943
        %v2707 = vmul.f32 %v1884, %v943
        %v2708 = vadd.f32 %v2690, %v2699
        %v2709 = vadd.f32 %v2691, %v2700
        %v2710 = vadd.f32 %v2692, %v2701
        %v2711 = vadd.f32 %v2693, %v2702
        %v2712 = vadd.f32 %v2694, %v2703
        %v2713 = vadd.f32 %v2695, %v2704
        %v2714 = vadd.f32 %v2696, %v2705
        %v2715 = vadd.f32 %v2697, %v2706
        %v2716 = vadd.f32 %v2698, %v2707
        %s2717 = scalar_lea.vmem %s330, 1544
        %v2718 = vld [vmem:[%s2717] sm:$0xff]
        %v2719 = vld [vmem:[%s2717 + $0x8] sm:$0xff]
        %v2720 = vld [vmem:[%s2717 + $0x10] sm:$0xff]
        %v2721 = vld [vmem:[%s2717 + $0x20] sm:$0xff]
        %v2722 = vld [vmem:[%s2717 + $0x28] sm:$0xff]
        %v2723 = vld [vmem:[%s2717 + $0x30] sm:$0xff]
        %v2724 = vld [vmem:[%s2717 + $0x40] sm:$0xff]
        %v2725 = vld [vmem:[%s2717 + $0x48] sm:$0xff]
        %v2726 = vld [vmem:[%s2717 + $0x50] sm:$0xff]
        %2728 = vset.pattern.permute.xlu0 0
        %2729 = vperm.xlu0 %2728, %v2718
        %v2730 = vpop.permute.xlu0 %2729
        %2733 = vset.pattern.permute.xlu0 0
        %2734 = vperm.xlu0 %2733, %v2719
        %v2735 = vpop.permute.xlu0 %2734
        %2738 = vset.pattern.permute.xlu0 0
        %2739 = vperm.xlu0 %2738, %v2720
        %v2740 = vpop.permute.xlu0 %2739
        %2743 = vset.pattern.permute.xlu0 0
        %2744 = vperm.xlu0 %2743, %v2721
        %v2745 = vpop.permute.xlu0 %2744
        %2748 = vset.pattern.permute.xlu0 0
        %2749 = vperm.xlu0 %2748, %v2722
        %v2750 = vpop.permute.xlu0 %2749
        %2753 = vset.pattern.permute.xlu0 0
        %2754 = vperm.xlu0 %2753, %v2723
        %v2755 = vpop.permute.xlu0 %2754
        %2758 = vset.pattern.permute.xlu0 0
        %2759 = vperm.xlu0 %2758, %v2724
        %v2760 = vpop.permute.xlu0 %2759
        %2763 = vset.pattern.permute.xlu0 0
        %2764 = vperm.xlu0 %2763, %v2725
        %v2765 = vpop.permute.xlu0 %2764
        %2768 = vset.pattern.permute.xlu0 0
        %2769 = vperm.xlu0 %2768, %v2726
        %v2770 = vpop.permute.xlu0 %2769
        %v2772 = vmul.f32 %v2730, %v1022
        %v2773 = vmul.f32 %v2735, %v1022
        %v2774 = vmul.f32 %v2740, %v1022
        %v2775 = vmul.f32 %v2745, %v1022
        %v2776 = vmul.f32 %v2750, %v1022
        %v2777 = vmul.f32 %v2755, %v1022
        %v2778 = vmul.f32 %v2760, %v1022
        %v2779 = vmul.f32 %v2765, %v1022
        %v2780 = vmul.f32 %v2770, %v1022
        %v2781 = vadd.f32 %v2708, %v2772
        %v2782 = vadd.f32 %v2709, %v2773
        %v2783 = vadd.f32 %v2710, %v2774
        %v2784 = vadd.f32 %v2711, %v2775
        %v2785 = vadd.f32 %v2712, %v2776
        %v2786 = vadd.f32 %v2713, %v2777
        %v2787 = vadd.f32 %v2714, %v2778
        %v2788 = vadd.f32 %v2715, %v2779
        %v2789 = vadd.f32 %v2716, %v2780
        %v2790 = vmax.f32 %v2573, %v2781
        %v2791 = vmax.f32 %v2574, %v2782
        %v2792 = vmax.f32 %v2575, %v2783
        %v2793 = vmax.f32 %v2576, %v2784
        %v2794 = vmax.f32 %v2577, %v2785
        %v2795 = vmax.f32 %v2578, %v2786
        %v2796 = vmax.f32 %v2579, %v2787
        %v2797 = vmax.f32 %v2580, %v2788
        %v2798 = vmax.f32 %v2581, %v2789
        %v2799 = vmul.f32 %v1191, %v399
        %v2800 = vmul.f32 %v1196, %v399
        %v2801 = vmul.f32 %v1201, %v399
        %v2802 = vmul.f32 %v1206, %v399
        %v2803 = vmul.f32 %v1211, %v399
        %v2804 = vmul.f32 %v1216, %v399
        %v2805 = vmul.f32 %v1221, %v399
        %v2806 = vmul.f32 %v1226, %v399
        %v2807 = vmul.f32 %v1231, %v399
        %v2808 = vmul.f32 %v2086, %v469
        %v2809 = vmul.f32 %v2091, %v469
        %v2810 = vmul.f32 %v2096, %v469
        %v2811 = vmul.f32 %v2101, %v469
        %v2812 = vmul.f32 %v2106, %v469
        %v2813 = vmul.f32 %v2111, %v469
        %v2814 = vmul.f32 %v2116, %v469
        %v2815 = vmul.f32 %v2121, %v469
        %v2816 = vmul.f32 %v2126, %v469
        %v2817 = vadd.f32 %v2799, %v2808
        %v2818 = vadd.f32 %v2800, %v2809
        %v2819 = vadd.f32 %v2801, %v2810
        %v2820 = vadd.f32 %v2802, %v2811
        %v2821 = vadd.f32 %v2803, %v2812
        %v2822 = vadd.f32 %v2804, %v2813
        %v2823 = vadd.f32 %v2805, %v2814
        %v2824 = vadd.f32 %v2806, %v2815
        %v2825 = vadd.f32 %v2807, %v2816
        %v2826 = vmul.f32 %v2404, %v548
        %v2827 = vmul.f32 %v2409, %v548
        %v2828 = vmul.f32 %v2414, %v548
        %v2829 = vmul.f32 %v2419, %v548
        %v2830 = vmul.f32 %v2424, %v548
        %v2831 = vmul.f32 %v2429, %v548
        %v2832 = vmul.f32 %v2434, %v548
        %v2833 = vmul.f32 %v2439, %v548
        %v2834 = vmul.f32 %v2444, %v548
        %v2835 = vadd.f32 %v2817, %v2826
        %v2836 = vadd.f32 %v2818, %v2827
        %v2837 = vadd.f32 %v2819, %v2828
        %v2838 = vadd.f32 %v2820, %v2829
        %v2839 = vadd.f32 %v2821, %v2830
        %v2840 = vadd.f32 %v2822, %v2831
        %v2841 = vadd.f32 %v2823, %v2832
        %v2842 = vadd.f32 %v2824, %v2833
        %v2843 = vadd.f32 %v2825, %v2834
        %v2844 = vmul.f32 %v1300, %v627
        %v2845 = vmul.f32 %v1305, %v627
        %v2846 = vmul.f32 %v1310, %v627
        %v2847 = vmul.f32 %v1315, %v627
        %v2848 = vmul.f32 %v1320, %v627
        %v2849 = vmul.f32 %v1325, %v627
        %v2850 = vmul.f32 %v1330, %v627
        %v2851 = vmul.f32 %v1335, %v627
        %v2852 = vmul.f32 %v1340, %v627
        %v2853 = vadd.f32 %v2835, %v2844
        %v2854 = vadd.f32 %v2836, %v2845
        %v2855 = vadd.f32 %v2837, %v2846
        %v2856 = vadd.f32 %v2838, %v2847
        %v2857 = vadd.f32 %v2839, %v2848
        %v2858 = vadd.f32 %v2840, %v2849
        %v2859 = vadd.f32 %v2841, %v2850
        %v2860 = vadd.f32 %v2842, %v2851
        %v2861 = vadd.f32 %v2843, %v2852
        %v2862 = vmul.f32 %v2195, %v706
        %v2863 = vmul.f32 %v2200, %v706
        %v2864 = vmul.f32 %v2205, %v706
        %v2865 = vmul.f32 %v2210, %v706
        %v2866 = vmul.f32 %v2215, %v706
        %v2867 = vmul.f32 %v2220, %v706
        %v2868 = vmul.f32 %v2225, %v706
        %v2869 = vmul.f32 %v2230, %v706
        %v2870 = vmul.f32 %v2235, %v706
        %v2871 = vadd.f32 %v2853, %v2862
        %v2872 = vadd.f32 %v2854, %v2863
        %v2873 = vadd.f32 %v2855, %v2864
        %v2874 = vadd.f32 %v2856, %v2865
        %v2875 = vadd.f32 %v2857, %v2866
        %v2876 = vadd.f32 %v2858, %v2867
        %v2877 = vadd.f32 %v2859, %v2868
        %v2878 = vadd.f32 %v2860, %v2869
        %v2879 = vadd.f32 %v2861, %v2870
        %v2880 = vmul.f32 %v2513, %v785
        %v2881 = vmul.f32 %v2518, %v785
        %v2882 = vmul.f32 %v2523, %v785
        %v2883 = vmul.f32 %v2528, %v785
        %v2884 = vmul.f32 %v2533, %v785
        %v2885 = vmul.f32 %v2538, %v785
        %v2886 = vmul.f32 %v2543, %v785
        %v2887 = vmul.f32 %v2548, %v785
        %v2888 = vmul.f32 %v2553, %v785
        %v2889 = vadd.f32 %v2871, %v2880
        %v2890 = vadd.f32 %v2872, %v2881
        %v2891 = vadd.f32 %v2873, %v2882
        %v2892 = vadd.f32 %v2874, %v2883
        %v2893 = vadd.f32 %v2875, %v2884
        %v2894 = vadd.f32 %v2876, %v2885
        %v2895 = vadd.f32 %v2877, %v2886
        %v2896 = vadd.f32 %v2878, %v2887
        %v2897 = vadd.f32 %v2879, %v2888
        %v2898 = vmul.f32 %v1844, %v864
        %v2899 = vmul.f32 %v1849, %v864
        %v2900 = vmul.f32 %v1854, %v864
        %v2901 = vmul.f32 %v1859, %v864
        %v2902 = vmul.f32 %v1864, %v864
        %v2903 = vmul.f32 %v1869, %v864
        %v2904 = vmul.f32 %v1874, %v864
        %v2905 = vmul.f32 %v1879, %v864
        %v2906 = vmul.f32 %v1884, %v864
        %v2907 = vadd.f32 %v2889, %v2898
        %v2908 = vadd.f32 %v2890, %v2899
        %v2909 = vadd.f32 %v2891, %v2900
        %v2910 = vadd.f32 %v2892, %v2901
        %v2911 = vadd.f32 %v2893, %v2902
        %v2912 = vadd.f32 %v2894, %v2903
        %v2913 = vadd.f32 %v2895, %v2904
        %v2914 = vadd.f32 %v2896, %v2905
        %v2915 = vadd.f32 %v2897, %v2906
        %v2916 = vmul.f32 %v2730, %v943
        %v2917 = vmul.f32 %v2735, %v943
        %v2918 = vmul.f32 %v2740, %v943
        %v2919 = vmul.f32 %v2745, %v943
        %v2920 = vmul.f32 %v2750, %v943
        %v2921 = vmul.f32 %v2755, %v943
        %v2922 = vmul.f32 %v2760, %v943
        %v2923 = vmul.f32 %v2765, %v943
        %v2924 = vmul.f32 %v2770, %v943
        %v2925 = vadd.f32 %v2907, %v2916
        %v2926 = vadd.f32 %v2908, %v2917
        %v2927 = vadd.f32 %v2909, %v2918
        %v2928 = vadd.f32 %v2910, %v2919
        %v2929 = vadd.f32 %v2911, %v2920
        %v2930 = vadd.f32 %v2912, %v2921
        %v2931 = vadd.f32 %v2913, %v2922
        %v2932 = vadd.f32 %v2914, %v2923
        %v2933 = vadd.f32 %v2915, %v2924
        %s2934 = scalar_lea.vmem %s330, 1672
        %v2935 = vld [vmem:[%s2934] sm:$0xff]
        %v2936 = vld [vmem:[%s2934 + $0x8] sm:$0xff]
        %v2937 = vld [vmem:[%s2934 + $0x10] sm:$0xff]
        %v2938 = vld [vmem:[%s2934 + $0x20] sm:$0xff]
        %v2939 = vld [vmem:[%s2934 + $0x28] sm:$0xff]
        %v2940 = vld [vmem:[%s2934 + $0x30] sm:$0xff]
        %v2941 = vld [vmem:[%s2934 + $0x40] sm:$0xff]
        %v2942 = vld [vmem:[%s2934 + $0x48] sm:$0xff]
        %v2943 = vld [vmem:[%s2934 + $0x50] sm:$0xff]
        %2945 = vset.pattern.permute.xlu0 0
        %2946 = vperm.xlu0 %2945, %v2935
        %v2947 = vpop.permute.xlu0 %2946
        %2950 = vset.pattern.permute.xlu0 0
        %2951 = vperm.xlu0 %2950, %v2936
        %v2952 = vpop.permute.xlu0 %2951
        %2955 = vset.pattern.permute.xlu0 0
        %2956 = vperm.xlu0 %2955, %v2937
        %v2957 = vpop.permute.xlu0 %2956
        %2960 = vset.pattern.permute.xlu0 0
        %2961 = vperm.xlu0 %2960, %v2938
        %v2962 = vpop.permute.xlu0 %2961
        %2965 = vset.pattern.permute.xlu0 0
        %2966 = vperm.xlu0 %2965, %v2939
        %v2967 = vpop.permute.xlu0 %2966
        %2970 = vset.pattern.permute.xlu0 0
        %2971 = vperm.xlu0 %2970, %v2940
        %v2972 = vpop.permute.xlu0 %2971
        %2975 = vset.pattern.permute.xlu0 0
        %2976 = vperm.xlu0 %2975, %v2941
        %v2977 = vpop.permute.xlu0 %2976
        %2980 = vset.pattern.permute.xlu0 0
        %2981 = vperm.xlu0 %2980, %v2942
        %v2982 = vpop.permute.xlu0 %2981
        %2985 = vset.pattern.permute.xlu0 0
        %2986 = vperm.xlu0 %2985, %v2943
        %v2987 = vpop.permute.xlu0 %2986
        %v2989 = vmul.f32 %v2947, %v1022
        %v2990 = vmul.f32 %v2952, %v1022
        %v2991 = vmul.f32 %v2957, %v1022
        %v2992 = vmul.f32 %v2962, %v1022
        %v2993 = vmul.f32 %v2967, %v1022
        %v2994 = vmul.f32 %v2972, %v1022
        %v2995 = vmul.f32 %v2977, %v1022
        %v2996 = vmul.f32 %v2982, %v1022
        %v2997 = vmul.f32 %v2987, %v1022
        %v2998 = vadd.f32 %v2925, %v2989
        %v2999 = vadd.f32 %v2926, %v2990
        %v3000 = vadd.f32 %v2927, %v2991
        %v3001 = vadd.f32 %v2928, %v2992
        %v3002 = vadd.f32 %v2929, %v2993
        %v3003 = vadd.f32 %v2930, %v2994
        %v3004 = vadd.f32 %v2931, %v2995
        %v3005 = vadd.f32 %v2932, %v2996
        %v3006 = vadd.f32 %v2933, %v2997
        %v3007 = vmax.f32 %v2790, %v2998
        %v3008 = vmax.f32 %v2791, %v2999
        %v3009 = vmax.f32 %v2792, %v3000
        %v3010 = vmax.f32 %v2793, %v3001
        %v3011 = vmax.f32 %v2794, %v3002
        %v3012 = vmax.f32 %v2795, %v3003
        %v3013 = vmax.f32 %v2796, %v3004
        %v3014 = vmax.f32 %v2797, %v3005
        %v3015 = vmax.f32 %v2798, %v3006
        %v3016 = vadd.f32 %v3007, %v1917
        %v3017 = vadd.f32 %v3008, %v1917
        %v3018 = vadd.f32 %v3009, %v1917
        %v3019 = vadd.f32 %v3010, %v1917
        %v3020 = vadd.f32 %v3011, %v1917
        %v3021 = vadd.f32 %v3012, %v1917
        %v3022 = vadd.f32 %v3013, %v1917
        %v3023 = vadd.f32 %v3014, %v1917
        %v3024 = vadd.f32 %v3015, %v1917
        %v3025 = vmax.f32 %v3016, 0.0
        %v3026 = vmax.f32 %v3017, 0.0
        %v3027 = vmax.f32 %v3018, 0.0
        %v3028 = vmax.f32 %v3019, 0.0
        %v3029 = vmax.f32 %v3020, 0.0
        %v3030 = vmax.f32 %v3021, 0.0
        %v3031 = vmax.f32 %v3022, 0.0
        %v3032 = vmax.f32 %v3023, 0.0
        %v3033 = vmax.f32 %v3024, 0.0
        %v3034 = vmul.f32 %v818, %v399
        %v3035 = vmul.f32 %v823, %v399
        %v3036 = vmul.f32 %v828, %v399
        %v3037 = vmul.f32 %v833, %v399
        %v3038 = vmul.f32 %v838, %v399
        %v3039 = vmul.f32 %v843, %v399
        %v3040 = vmul.f32 %v848, %v399
        %v3041 = vmul.f32 %v853, %v399
        %v3042 = vmul.f32 %v858, %v399
        %v3043 = vmul.f32 %v897, %v469
        %v3044 = vmul.f32 %v902, %v469
        %v3045 = vmul.f32 %v907, %v469
        %v3046 = vmul.f32 %v912, %v469
        %v3047 = vmul.f32 %v917, %v469
        %v3048 = vmul.f32 %v922, %v469
        %v3049 = vmul.f32 %v927, %v469
        %v3050 = vmul.f32 %v932, %v469
        %v3051 = vmul.f32 %v937, %v469
        %v3052 = vadd.f32 %v3034, %v3043
        %v3053 = vadd.f32 %v3035, %v3044
        %v3054 = vadd.f32 %v3036, %v3045
        %v3055 = vadd.f32 %v3037, %v3046
        %v3056 = vadd.f32 %v3038, %v3047
        %v3057 = vadd.f32 %v3039, %v3048
        %v3058 = vadd.f32 %v3040, %v3049
        %v3059 = vadd.f32 %v3041, %v3050
        %v3060 = vadd.f32 %v3042, %v3051
        %v3061 = vmul.f32 %v976, %v548
        %v3062 = vmul.f32 %v981, %v548
        %v3063 = vmul.f32 %v986, %v548
        %v3064 = vmul.f32 %v991, %v548
        %v3065 = vmul.f32 %v996, %v548
        %v3066 = vmul.f32 %v1001, %v548
        %v3067 = vmul.f32 %v1006, %v548
        %v3068 = vmul.f32 %v1011, %v548
        %v3069 = vmul.f32 %v1016, %v548
        %v3070 = vadd.f32 %v3052, %v3061
        %v3071 = vadd.f32 %v3053, %v3062
        %v3072 = vadd.f32 %v3054, %v3063
        %v3073 = vadd.f32 %v3055, %v3064
        %v3074 = vadd.f32 %v3056, %v3065
        %v3075 = vadd.f32 %v3057, %v3066
        %v3076 = vadd.f32 %v3058, %v3067
        %v3077 = vadd.f32 %v3059, %v3068
        %v3078 = vadd.f32 %v3060, %v3069
        %v3079 = vmul.f32 %v1481, %v627
        %v3080 = vmul.f32 %v1486, %v627
        %v3081 = vmul.f32 %v1491, %v627
        %v3082 = vmul.f32 %v1496, %v627
        %v3083 = vmul.f32 %v1501, %v627
        %v3084 = vmul.f32 %v1506, %v627
        %v3085 = vmul.f32 %v1511, %v627
        %v3086 = vmul.f32 %v1516, %v627
        %v3087 = vmul.f32 %v1521, %v627
        %v3088 = vadd.f32 %v3070, %v3079
        %v3089 = vadd.f32 %v3071, %v3080
        %v3090 = vadd.f32 %v3072, %v3081
        %v3091 = vadd.f32 %v3073, %v3082
        %v3092 = vadd.f32 %v3074, %v3083
        %v3093 = vadd.f32 %v3075, %v3084
        %v3094 = vadd.f32 %v3076, %v3085
        %v3095 = vadd.f32 %v3077, %v3086
        %v3096 = vadd.f32 %v3078, %v3087
        %v3097 = vmul.f32 %v1554, %v706
        %v3098 = vmul.f32 %v1559, %v706
        %v3099 = vmul.f32 %v1564, %v706
        %v3100 = vmul.f32 %v1569, %v706
        %v3101 = vmul.f32 %v1574, %v706
        %v3102 = vmul.f32 %v1579, %v706
        %v3103 = vmul.f32 %v1584, %v706
        %v3104 = vmul.f32 %v1589, %v706
        %v3105 = vmul.f32 %v1594, %v706
        %v3106 = vadd.f32 %v3088, %v3097
        %v3107 = vadd.f32 %v3089, %v3098
        %v3108 = vadd.f32 %v3090, %v3099
        %v3109 = vadd.f32 %v3091, %v3100
        %v3110 = vadd.f32 %v3092, %v3101
        %v3111 = vadd.f32 %v3093, %v3102
        %v3112 = vadd.f32 %v3094, %v3103
        %v3113 = vadd.f32 %v3095, %v3104
        %v3114 = vadd.f32 %v3096, %v3105
        %v3115 = vmul.f32 %v1627, %v785
        %v3116 = vmul.f32 %v1632, %v785
        %v3117 = vmul.f32 %v1637, %v785
        %v3118 = vmul.f32 %v1642, %v785
        %v3119 = vmul.f32 %v1647, %v785
        %v3120 = vmul.f32 %v1652, %v785
        %v3121 = vmul.f32 %v1657, %v785
        %v3122 = vmul.f32 %v1662, %v785
        %v3123 = vmul.f32 %v1667, %v785
        %v3124 = vadd.f32 %v3106, %v3115
        %v3125 = vadd.f32 %v3107, %v3116
        %v3126 = vadd.f32 %v3108, %v3117
        %v3127 = vadd.f32 %v3109, %v3118
        %v3128 = vadd.f32 %v3110, %v3119
        %v3129 = vadd.f32 %v3111, %v3120
        %v3130 = vadd.f32 %v3112, %v3121
        %v3131 = vadd.f32 %v3113, %v3122
        %v3132 = vadd.f32 %v3114, %v3123
        %s3133 = scalar_lea.vmem %s330, 32
        %v3134 = vld [vmem:[%s3133] sm:$0xff]
        %v3135 = vld [vmem:[%s3133 + $0x8] sm:$0xff]
        %v3136 = vld [vmem:[%s3133 + $0x10] sm:$0xff]
        %v3137 = vld [vmem:[%s3133 + $0x20] sm:$0xff]
        %v3138 = vld [vmem:[%s3133 + $0x28] sm:$0xff]
        %v3139 = vld [vmem:[%s3133 + $0x30] sm:$0xff]
        %v3140 = vld [vmem:[%s3133 + $0x40] sm:$0xff]
        %v3141 = vld [vmem:[%s3133 + $0x48] sm:$0xff]
        %v3142 = vld [vmem:[%s3133 + $0x50] sm:$0xff]
        %3144 = vset.pattern.permute.xlu0 0
        %3145 = vperm.xlu0 %3144, %v3134
        %v3146 = vpop.permute.xlu0 %3145
        %3149 = vset.pattern.permute.xlu0 0
        %3150 = vperm.xlu0 %3149, %v3135
        %v3151 = vpop.permute.xlu0 %3150
        %3154 = vset.pattern.permute.xlu0 0
        %3155 = vperm.xlu0 %3154, %v3136
        %v3156 = vpop.permute.xlu0 %3155
        %3159 = vset.pattern.permute.xlu0 0
        %3160 = vperm.xlu0 %3159, %v3137
        %v3161 = vpop.permute.xlu0 %3160
        %3164 = vset.pattern.permute.xlu0 0
        %3165 = vperm.xlu0 %3164, %v3138
        %v3166 = vpop.permute.xlu0 %3165
        %3169 = vset.pattern.permute.xlu0 0
        %3170 = vperm.xlu0 %3169, %v3139
        %v3171 = vpop.permute.xlu0 %3170
        %3174 = vset.pattern.permute.xlu0 0
        %3175 = vperm.xlu0 %3174, %v3140
        %v3176 = vpop.permute.xlu0 %3175
        %3179 = vset.pattern.permute.xlu0 0
        %3180 = vperm.xlu0 %3179, %v3141
        %v3181 = vpop.permute.xlu0 %3180
        %3184 = vset.pattern.permute.xlu0 0
        %3185 = vperm.xlu0 %3184, %v3142
        %v3186 = vpop.permute.xlu0 %3185
        %v3188 = vmul.f32 %v3146, %v864
        %v3189 = vmul.f32 %v3151, %v864
        %v3190 = vmul.f32 %v3156, %v864
        %v3191 = vmul.f32 %v3161, %v864
        %v3192 = vmul.f32 %v3166, %v864
        %v3193 = vmul.f32 %v3171, %v864
        %v3194 = vmul.f32 %v3176, %v864
        %v3195 = vmul.f32 %v3181, %v864
        %v3196 = vmul.f32 %v3186, %v864
        %v3197 = vadd.f32 %v3124, %v3188
        %v3198 = vadd.f32 %v3125, %v3189
        %v3199 = vadd.f32 %v3126, %v3190
        %v3200 = vadd.f32 %v3127, %v3191
        %v3201 = vadd.f32 %v3128, %v3192
        %v3202 = vadd.f32 %v3129, %v3193
        %v3203 = vadd.f32 %v3130, %v3194
        %v3204 = vadd.f32 %v3131, %v3195
        %v3205 = vadd.f32 %v3132, %v3196
        %s3206 = scalar_lea.vmem %s330, 160
        %v3207 = vld [vmem:[%s3206] sm:$0xff]
        %v3208 = vld [vmem:[%s3206 + $0x8] sm:$0xff]
        %v3209 = vld [vmem:[%s3206 + $0x10] sm:$0xff]
        %v3210 = vld [vmem:[%s3206 + $0x20] sm:$0xff]
        %v3211 = vld [vmem:[%s3206 + $0x28] sm:$0xff]
        %v3212 = vld [vmem:[%s3206 + $0x30] sm:$0xff]
        %v3213 = vld [vmem:[%s3206 + $0x40] sm:$0xff]
        %v3214 = vld [vmem:[%s3206 + $0x48] sm:$0xff]
        %v3215 = vld [vmem:[%s3206 + $0x50] sm:$0xff]
        %3217 = vset.pattern.permute.xlu0 0
        %3218 = vperm.xlu0 %3217, %v3207
        %v3219 = vpop.permute.xlu0 %3218
        %3222 = vset.pattern.permute.xlu0 0
        %3223 = vperm.xlu0 %3222, %v3208
        %v3224 = vpop.permute.xlu0 %3223
        %3227 = vset.pattern.permute.xlu0 0
        %3228 = vperm.xlu0 %3227, %v3209
        %v3229 = vpop.permute.xlu0 %3228
        %3232 = vset.pattern.permute.xlu0 0
        %3233 = vperm.xlu0 %3232, %v3210
        %v3234 = vpop.permute.xlu0 %3233
        %3237 = vset.pattern.permute.xlu0 0
        %3238 = vperm.xlu0 %3237, %v3211
        %v3239 = vpop.permute.xlu0 %3238
        %3242 = vset.pattern.permute.xlu0 0
        %3243 = vperm.xlu0 %3242, %v3212
        %v3244 = vpop.permute.xlu0 %3243
        %3247 = vset.pattern.permute.xlu0 0
        %3248 = vperm.xlu0 %3247, %v3213
        %v3249 = vpop.permute.xlu0 %3248
        %3252 = vset.pattern.permute.xlu0 0
        %3253 = vperm.xlu0 %3252, %v3214
        %v3254 = vpop.permute.xlu0 %3253
        %3257 = vset.pattern.permute.xlu0 0
        %3258 = vperm.xlu0 %3257, %v3215
        %v3259 = vpop.permute.xlu0 %3258
        %v3261 = vmul.f32 %v3219, %v943
        %v3262 = vmul.f32 %v3224, %v943
        %v3263 = vmul.f32 %v3229, %v943
        %v3264 = vmul.f32 %v3234, %v943
        %v3265 = vmul.f32 %v3239, %v943
        %v3266 = vmul.f32 %v3244, %v943
        %v3267 = vmul.f32 %v3249, %v943
        %v3268 = vmul.f32 %v3254, %v943
        %v3269 = vmul.f32 %v3259, %v943
        %v3270 = vadd.f32 %v3197, %v3261
        %v3271 = vadd.f32 %v3198, %v3262
        %v3272 = vadd.f32 %v3199, %v3263
        %v3273 = vadd.f32 %v3200, %v3264
        %v3274 = vadd.f32 %v3201, %v3265
        %v3275 = vadd.f32 %v3202, %v3266
        %v3276 = vadd.f32 %v3203, %v3267
        %v3277 = vadd.f32 %v3204, %v3268
        %v3278 = vadd.f32 %v3205, %v3269
        %s3279 = scalar_lea.vmem %s330, 288
        %v3280 = vld [vmem:[%s3279] sm:$0xff]
        %v3281 = vld [vmem:[%s3279 + $0x8] sm:$0xff]
        %v3282 = vld [vmem:[%s3279 + $0x10] sm:$0xff]
        %v3283 = vld [vmem:[%s3279 + $0x20] sm:$0xff]
        %v3284 = vld [vmem:[%s3279 + $0x28] sm:$0xff]
        %v3285 = vld [vmem:[%s3279 + $0x30] sm:$0xff]
        %v3286 = vld [vmem:[%s3279 + $0x40] sm:$0xff]
        %v3287 = vld [vmem:[%s3279 + $0x48] sm:$0xff]
        %v3288 = vld [vmem:[%s3279 + $0x50] sm:$0xff]
        %3290 = vset.pattern.permute.xlu0 0
        %3291 = vperm.xlu0 %3290, %v3280
        %v3292 = vpop.permute.xlu0 %3291
        %3295 = vset.pattern.permute.xlu0 0
        %3296 = vperm.xlu0 %3295, %v3281
        %v3297 = vpop.permute.xlu0 %3296
        %3300 = vset.pattern.permute.xlu0 0
        %3301 = vperm.xlu0 %3300, %v3282
        %v3302 = vpop.permute.xlu0 %3301
        %3305 = vset.pattern.permute.xlu0 0
        %3306 = vperm.xlu0 %3305, %v3283
        %v3307 = vpop.permute.xlu0 %3306
        %3310 = vset.pattern.permute.xlu0 0
        %3311 = vperm.xlu0 %3310, %v3284
        %v3312 = vpop.permute.xlu0 %3311
        %3315 = vset.pattern.permute.xlu0 0
        %3316 = vperm.xlu0 %3315, %v3285
        %v3317 = vpop.permute.xlu0 %3316
        %3320 = vset.pattern.permute.xlu0 0
        %3321 = vperm.xlu0 %3320, %v3286
        %v3322 = vpop.permute.xlu0 %3321
        %3325 = vset.pattern.permute.xlu0 0
        %3326 = vperm.xlu0 %3325, %v3287
        %v3327 = vpop.permute.xlu0 %3326
        %3330 = vset.pattern.permute.xlu0 0
        %3331 = vperm.xlu0 %3330, %v3288
        %v3332 = vpop.permute.xlu0 %3331
        %v3334 = vmul.f32 %v3292, %v1022
        %v3335 = vmul.f32 %v3297, %v1022
        %v3336 = vmul.f32 %v3302, %v1022
        %v3337 = vmul.f32 %v3307, %v1022
        %v3338 = vmul.f32 %v3312, %v1022
        %v3339 = vmul.f32 %v3317, %v1022
        %v3340 = vmul.f32 %v3322, %v1022
        %v3341 = vmul.f32 %v3327, %v1022
        %v3342 = vmul.f32 %v3332, %v1022
        %v3343 = vadd.f32 %v3270, %v3334
        %v3344 = vadd.f32 %v3271, %v3335
        %v3345 = vadd.f32 %v3272, %v3336
        %v3346 = vadd.f32 %v3273, %v3337
        %v3347 = vadd.f32 %v3274, %v3338
        %v3348 = vadd.f32 %v3275, %v3339
        %v3349 = vadd.f32 %v3276, %v3340
        %v3350 = vadd.f32 %v3277, %v3341
        %v3351 = vadd.f32 %v3278, %v3342
        %v3352 = vmul.f32 %v897, %v399
        %v3353 = vmul.f32 %v902, %v399
        %v3354 = vmul.f32 %v907, %v399
        %v3355 = vmul.f32 %v912, %v399
        %v3356 = vmul.f32 %v917, %v399
        %v3357 = vmul.f32 %v922, %v399
        %v3358 = vmul.f32 %v927, %v399
        %v3359 = vmul.f32 %v932, %v399
        %v3360 = vmul.f32 %v937, %v399
        %v3361 = vmul.f32 %v976, %v469
        %v3362 = vmul.f32 %v981, %v469
        %v3363 = vmul.f32 %v986, %v469
        %v3364 = vmul.f32 %v991, %v469
        %v3365 = vmul.f32 %v996, %v469
        %v3366 = vmul.f32 %v1001, %v469
        %v3367 = vmul.f32 %v1006, %v469
        %v3368 = vmul.f32 %v1011, %v469
        %v3369 = vmul.f32 %v1016, %v469
        %v3370 = vadd.f32 %v3352, %v3361
        %v3371 = vadd.f32 %v3353, %v3362
        %v3372 = vadd.f32 %v3354, %v3363
        %v3373 = vadd.f32 %v3355, %v3364
        %v3374 = vadd.f32 %v3356, %v3365
        %v3375 = vadd.f32 %v3357, %v3366
        %v3376 = vadd.f32 %v3358, %v3367
        %v3377 = vadd.f32 %v3359, %v3368
        %v3378 = vadd.f32 %v3360, %v3369
        %v3379 = vmul.f32 %v1300, %v548
        %v3380 = vmul.f32 %v1305, %v548
        %v3381 = vmul.f32 %v1310, %v548
        %v3382 = vmul.f32 %v1315, %v548
        %v3383 = vmul.f32 %v1320, %v548
        %v3384 = vmul.f32 %v1325, %v548
        %v3385 = vmul.f32 %v1330, %v548
        %v3386 = vmul.f32 %v1335, %v548
        %v3387 = vmul.f32 %v1340, %v548
        %v3388 = vadd.f32 %v3370, %v3379
        %v3389 = vadd.f32 %v3371, %v3380
        %v3390 = vadd.f32 %v3372, %v3381
        %v3391 = vadd.f32 %v3373, %v3382
        %v3392 = vadd.f32 %v3374, %v3383
        %v3393 = vadd.f32 %v3375, %v3384
        %v3394 = vadd.f32 %v3376, %v3385
        %v3395 = vadd.f32 %v3377, %v3386
        %v3396 = vadd.f32 %v3378, %v3387
        %v3397 = vmul.f32 %v1554, %v627
        %v3398 = vmul.f32 %v1559, %v627
        %v3399 = vmul.f32 %v1564, %v627
        %v3400 = vmul.f32 %v1569, %v627
        %v3401 = vmul.f32 %v1574, %v627
        %v3402 = vmul.f32 %v1579, %v627
        %v3403 = vmul.f32 %v1584, %v627
        %v3404 = vmul.f32 %v1589, %v627
        %v3405 = vmul.f32 %v1594, %v627
        %v3406 = vadd.f32 %v3388, %v3397
        %v3407 = vadd.f32 %v3389, %v3398
        %v3408 = vadd.f32 %v3390, %v3399
        %v3409 = vadd.f32 %v3391, %v3400
        %v3410 = vadd.f32 %v3392, %v3401
        %v3411 = vadd.f32 %v3393, %v3402
        %v3412 = vadd.f32 %v3394, %v3403
        %v3413 = vadd.f32 %v3395, %v3404
        %v3414 = vadd.f32 %v3396, %v3405
        %v3415 = vmul.f32 %v1627, %v706
        %v3416 = vmul.f32 %v1632, %v706
        %v3417 = vmul.f32 %v1637, %v706
        %v3418 = vmul.f32 %v1642, %v706
        %v3419 = vmul.f32 %v1647, %v706
        %v3420 = vmul.f32 %v1652, %v706
        %v3421 = vmul.f32 %v1657, %v706
        %v3422 = vmul.f32 %v1662, %v706
        %v3423 = vmul.f32 %v1667, %v706
        %v3424 = vadd.f32 %v3406, %v3415
        %v3425 = vadd.f32 %v3407, %v3416
        %v3426 = vadd.f32 %v3408, %v3417
        %v3427 = vadd.f32 %v3409, %v3418
        %v3428 = vadd.f32 %v3410, %v3419
        %v3429 = vadd.f32 %v3411, %v3420
        %v3430 = vadd.f32 %v3412, %v3421
        %v3431 = vadd.f32 %v3413, %v3422
        %v3432 = vadd.f32 %v3414, %v3423
        %v3433 = vmul.f32 %v1844, %v785
        %v3434 = vmul.f32 %v1849, %v785
        %v3435 = vmul.f32 %v1854, %v785
        %v3436 = vmul.f32 %v1859, %v785
        %v3437 = vmul.f32 %v1864, %v785
        %v3438 = vmul.f32 %v1869, %v785
        %v3439 = vmul.f32 %v1874, %v785
        %v3440 = vmul.f32 %v1879, %v785
        %v3441 = vmul.f32 %v1884, %v785
        %v3442 = vadd.f32 %v3424, %v3433
        %v3443 = vadd.f32 %v3425, %v3434
        %v3444 = vadd.f32 %v3426, %v3435
        %v3445 = vadd.f32 %v3427, %v3436
        %v3446 = vadd.f32 %v3428, %v3437
        %v3447 = vadd.f32 %v3429, %v3438
        %v3448 = vadd.f32 %v3430, %v3439
        %v3449 = vadd.f32 %v3431, %v3440
        %v3450 = vadd.f32 %v3432, %v3441
        %v3451 = vmul.f32 %v3219, %v864
        %v3452 = vmul.f32 %v3224, %v864
        %v3453 = vmul.f32 %v3229, %v864
        %v3454 = vmul.f32 %v3234, %v864
        %v3455 = vmul.f32 %v3239, %v864
        %v3456 = vmul.f32 %v3244, %v864
        %v3457 = vmul.f32 %v3249, %v864
        %v3458 = vmul.f32 %v3254, %v864
        %v3459 = vmul.f32 %v3259, %v864
        %v3460 = vadd.f32 %v3442, %v3451
        %v3461 = vadd.f32 %v3443, %v3452
        %v3462 = vadd.f32 %v3444, %v3453
        %v3463 = vadd.f32 %v3445, %v3454
        %v3464 = vadd.f32 %v3446, %v3455
        %v3465 = vadd.f32 %v3447, %v3456
        %v3466 = vadd.f32 %v3448, %v3457
        %v3467 = vadd.f32 %v3449, %v3458
        %v3468 = vadd.f32 %v3450, %v3459
        %v3469 = vmul.f32 %v3292, %v943
        %v3470 = vmul.f32 %v3297, %v943
        %v3471 = vmul.f32 %v3302, %v943
        %v3472 = vmul.f32 %v3307, %v943
        %v3473 = vmul.f32 %v3312, %v943
        %v3474 = vmul.f32 %v3317, %v943
        %v3475 = vmul.f32 %v3322, %v943
        %v3476 = vmul.f32 %v3327, %v943
        %v3477 = vmul.f32 %v3332, %v943
        %v3478 = vadd.f32 %v3460, %v3469
        %v3479 = vadd.f32 %v3461, %v3470
        %v3480 = vadd.f32 %v3462, %v3471
        %v3481 = vadd.f32 %v3463, %v3472
        %v3482 = vadd.f32 %v3464, %v3473
        %v3483 = vadd.f32 %v3465, %v3474
        %v3484 = vadd.f32 %v3466, %v3475
        %v3485 = vadd.f32 %v3467, %v3476
        %v3486 = vadd.f32 %v3468, %v3477
        %s3487 = scalar_lea.vmem %s330, 416
        %v3488 = vld [vmem:[%s3487] sm:$0xff]
        %v3489 = vld [vmem:[%s3487 + $0x8] sm:$0xff]
        %v3490 = vld [vmem:[%s3487 + $0x10] sm:$0xff]
        %v3491 = vld [vmem:[%s3487 + $0x20] sm:$0xff]
        %v3492 = vld [vmem:[%s3487 + $0x28] sm:$0xff]
        %v3493 = vld [vmem:[%s3487 + $0x30] sm:$0xff]
        %v3494 = vld [vmem:[%s3487 + $0x40] sm:$0xff]
        %v3495 = vld [vmem:[%s3487 + $0x48] sm:$0xff]
        %v3496 = vld [vmem:[%s3487 + $0x50] sm:$0xff]
        %3498 = vset.pattern.permute.xlu0 0
        %3499 = vperm.xlu0 %3498, %v3488
        %v3500 = vpop.permute.xlu0 %3499
        %3503 = vset.pattern.permute.xlu0 0
        %3504 = vperm.xlu0 %3503, %v3489
        %v3505 = vpop.permute.xlu0 %3504
        %3508 = vset.pattern.permute.xlu0 0
        %3509 = vperm.xlu0 %3508, %v3490
        %v3510 = vpop.permute.xlu0 %3509
        %3513 = vset.pattern.permute.xlu0 0
        %3514 = vperm.xlu0 %3513, %v3491
        %v3515 = vpop.permute.xlu0 %3514
        %3518 = vset.pattern.permute.xlu0 0
        %3519 = vperm.xlu0 %3518, %v3492
        %v3520 = vpop.permute.xlu0 %3519
        %3523 = vset.pattern.permute.xlu0 0
        %3524 = vperm.xlu0 %3523, %v3493
        %v3525 = vpop.permute.xlu0 %3524
        %3528 = vset.pattern.permute.xlu0 0
        %3529 = vperm.xlu0 %3528, %v3494
        %v3530 = vpop.permute.xlu0 %3529
        %3533 = vset.pattern.permute.xlu0 0
        %3534 = vperm.xlu0 %3533, %v3495
        %v3535 = vpop.permute.xlu0 %3534
        %3538 = vset.pattern.permute.xlu0 0
        %3539 = vperm.xlu0 %3538, %v3496
        %v3540 = vpop.permute.xlu0 %3539
        %v3542 = vmul.f32 %v3500, %v1022
        %v3543 = vmul.f32 %v3505, %v1022
        %v3544 = vmul.f32 %v3510, %v1022
        %v3545 = vmul.f32 %v3515, %v1022
        %v3546 = vmul.f32 %v3520, %v1022
        %v3547 = vmul.f32 %v3525, %v1022
        %v3548 = vmul.f32 %v3530, %v1022
        %v3549 = vmul.f32 %v3535, %v1022
        %v3550 = vmul.f32 %v3540, %v1022
        %v3551 = vadd.f32 %v3478, %v3542
        %v3552 = vadd.f32 %v3479, %v3543
        %v3553 = vadd.f32 %v3480, %v3544
        %v3554 = vadd.f32 %v3481, %v3545
        %v3555 = vadd.f32 %v3482, %v3546
        %v3556 = vadd.f32 %v3483, %v3547
        %v3557 = vadd.f32 %v3484, %v3548
        %v3558 = vadd.f32 %v3485, %v3549
        %v3559 = vadd.f32 %v3486, %v3550
        %v3560 = vmax.f32 %v3343, %v3551
        %v3561 = vmax.f32 %v3344, %v3552
        %v3562 = vmax.f32 %v3345, %v3553
        %v3563 = vmax.f32 %v3346, %v3554
        %v3564 = vmax.f32 %v3347, %v3555
        %v3565 = vmax.f32 %v3348, %v3556
        %v3566 = vmax.f32 %v3349, %v3557
        %v3567 = vmax.f32 %v3350, %v3558
        %v3568 = vmax.f32 %v3351, %v3559
        %v3569 = vmul.f32 %v1481, %v399
        %v3570 = vmul.f32 %v1486, %v399
        %v3571 = vmul.f32 %v1491, %v399
        %v3572 = vmul.f32 %v1496, %v399
        %v3573 = vmul.f32 %v1501, %v399
        %v3574 = vmul.f32 %v1506, %v399
        %v3575 = vmul.f32 %v1511, %v399
        %v3576 = vmul.f32 %v1516, %v399
        %v3577 = vmul.f32 %v1521, %v399
        %v3578 = vmul.f32 %v1554, %v469
        %v3579 = vmul.f32 %v1559, %v469
        %v3580 = vmul.f32 %v1564, %v469
        %v3581 = vmul.f32 %v1569, %v469
        %v3582 = vmul.f32 %v1574, %v469
        %v3583 = vmul.f32 %v1579, %v469
        %v3584 = vmul.f32 %v1584, %v469
        %v3585 = vmul.f32 %v1589, %v469
        %v3586 = vmul.f32 %v1594, %v469
        %v3587 = vadd.f32 %v3569, %v3578
        %v3588 = vadd.f32 %v3570, %v3579
        %v3589 = vadd.f32 %v3571, %v3580
        %v3590 = vadd.f32 %v3572, %v3581
        %v3591 = vadd.f32 %v3573, %v3582
        %v3592 = vadd.f32 %v3574, %v3583
        %v3593 = vadd.f32 %v3575, %v3584
        %v3594 = vadd.f32 %v3576, %v3585
        %v3595 = vadd.f32 %v3577, %v3586
        %v3596 = vmul.f32 %v1627, %v548
        %v3597 = vmul.f32 %v1632, %v548
        %v3598 = vmul.f32 %v1637, %v548
        %v3599 = vmul.f32 %v1642, %v548
        %v3600 = vmul.f32 %v1647, %v548
        %v3601 = vmul.f32 %v1652, %v548
        %v3602 = vmul.f32 %v1657, %v548
        %v3603 = vmul.f32 %v1662, %v548
        %v3604 = vmul.f32 %v1667, %v548
        %v3605 = vadd.f32 %v3587, %v3596
        %v3606 = vadd.f32 %v3588, %v3597
        %v3607 = vadd.f32 %v3589, %v3598
        %v3608 = vadd.f32 %v3590, %v3599
        %v3609 = vadd.f32 %v3591, %v3600
        %v3610 = vadd.f32 %v3592, %v3601
        %v3611 = vadd.f32 %v3593, %v3602
        %v3612 = vadd.f32 %v3594, %v3603
        %v3613 = vadd.f32 %v3595, %v3604
        %v3614 = vmul.f32 %v3146, %v627
        %v3615 = vmul.f32 %v3151, %v627
        %v3616 = vmul.f32 %v3156, %v627
        %v3617 = vmul.f32 %v3161, %v627
        %v3618 = vmul.f32 %v3166, %v627
        %v3619 = vmul.f32 %v3171, %v627
        %v3620 = vmul.f32 %v3176, %v627
        %v3621 = vmul.f32 %v3181, %v627
        %v3622 = vmul.f32 %v3186, %v627
        %v3623 = vadd.f32 %v3605, %v3614
        %v3624 = vadd.f32 %v3606, %v3615
        %v3625 = vadd.f32 %v3607, %v3616
        %v3626 = vadd.f32 %v3608, %v3617
        %v3627 = vadd.f32 %v3609, %v3618
        %v3628 = vadd.f32 %v3610, %v3619
        %v3629 = vadd.f32 %v3611, %v3620
        %v3630 = vadd.f32 %v3612, %v3621
        %v3631 = vadd.f32 %v3613, %v3622
        %v3632 = vmul.f32 %v3219, %v706
        %v3633 = vmul.f32 %v3224, %v706
        %v3634 = vmul.f32 %v3229, %v706
        %v3635 = vmul.f32 %v3234, %v706
        %v3636 = vmul.f32 %v3239, %v706
        %v3637 = vmul.f32 %v3244, %v706
        %v3638 = vmul.f32 %v3249, %v706
        %v3639 = vmul.f32 %v3254, %v706
        %v3640 = vmul.f32 %v3259, %v706
        %v3641 = vadd.f32 %v3623, %v3632
        %v3642 = vadd.f32 %v3624, %v3633
        %v3643 = vadd.f32 %v3625, %v3634
        %v3644 = vadd.f32 %v3626, %v3635
        %v3645 = vadd.f32 %v3627, %v3636
        %v3646 = vadd.f32 %v3628, %v3637
        %v3647 = vadd.f32 %v3629, %v3638
        %v3648 = vadd.f32 %v3630, %v3639
        %v3649 = vadd.f32 %v3631, %v3640
        %v3650 = vmul.f32 %v3292, %v785
        %v3651 = vmul.f32 %v3297, %v785
        %v3652 = vmul.f32 %v3302, %v785
        %v3653 = vmul.f32 %v3307, %v785
        %v3654 = vmul.f32 %v3312, %v785
        %v3655 = vmul.f32 %v3317, %v785
        %v3656 = vmul.f32 %v3322, %v785
        %v3657 = vmul.f32 %v3327, %v785
        %v3658 = vmul.f32 %v3332, %v785
        %v3659 = vadd.f32 %v3641, %v3650
        %v3660 = vadd.f32 %v3642, %v3651
        %v3661 = vadd.f32 %v3643, %v3652
        %v3662 = vadd.f32 %v3644, %v3653
        %v3663 = vadd.f32 %v3645, %v3654
        %v3664 = vadd.f32 %v3646, %v3655
        %v3665 = vadd.f32 %v3647, %v3656
        %v3666 = vadd.f32 %v3648, %v3657
        %v3667 = vadd.f32 %v3649, %v3658
        %s3668 = scalar_lea.vmem %s330, 544
        %v3669 = vld [vmem:[%s3668] sm:$0xff]
        %v3670 = vld [vmem:[%s3668 + $0x8] sm:$0xff]
        %v3671 = vld [vmem:[%s3668 + $0x10] sm:$0xff]
        %v3672 = vld [vmem:[%s3668 + $0x20] sm:$0xff]
        %v3673 = vld [vmem:[%s3668 + $0x28] sm:$0xff]
        %v3674 = vld [vmem:[%s3668 + $0x30] sm:$0xff]
        %v3675 = vld [vmem:[%s3668 + $0x40] sm:$0xff]
        %v3676 = vld [vmem:[%s3668 + $0x48] sm:$0xff]
        %v3677 = vld [vmem:[%s3668 + $0x50] sm:$0xff]
        %3679 = vset.pattern.permute.xlu0 0
        %3680 = vperm.xlu0 %3679, %v3669
        %v3681 = vpop.permute.xlu0 %3680
        %3684 = vset.pattern.permute.xlu0 0
        %3685 = vperm.xlu0 %3684, %v3670
        %v3686 = vpop.permute.xlu0 %3685
        %3689 = vset.pattern.permute.xlu0 0
        %3690 = vperm.xlu0 %3689, %v3671
        %v3691 = vpop.permute.xlu0 %3690
        %3694 = vset.pattern.permute.xlu0 0
        %3695 = vperm.xlu0 %3694, %v3672
        %v3696 = vpop.permute.xlu0 %3695
        %3699 = vset.pattern.permute.xlu0 0
        %3700 = vperm.xlu0 %3699, %v3673
        %v3701 = vpop.permute.xlu0 %3700
        %3704 = vset.pattern.permute.xlu0 0
        %3705 = vperm.xlu0 %3704, %v3674
        %v3706 = vpop.permute.xlu0 %3705
        %3709 = vset.pattern.permute.xlu0 0
        %3710 = vperm.xlu0 %3709, %v3675
        %v3711 = vpop.permute.xlu0 %3710
        %3714 = vset.pattern.permute.xlu0 0
        %3715 = vperm.xlu0 %3714, %v3676
        %v3716 = vpop.permute.xlu0 %3715
        %3719 = vset.pattern.permute.xlu0 0
        %3720 = vperm.xlu0 %3719, %v3677
        %v3721 = vpop.permute.xlu0 %3720
        %v3723 = vmul.f32 %v3681, %v864
        %v3724 = vmul.f32 %v3686, %v864
        %v3725 = vmul.f32 %v3691, %v864
        %v3726 = vmul.f32 %v3696, %v864
        %v3727 = vmul.f32 %v3701, %v864
        %v3728 = vmul.f32 %v3706, %v864
        %v3729 = vmul.f32 %v3711, %v864
        %v3730 = vmul.f32 %v3716, %v864
        %v3731 = vmul.f32 %v3721, %v864
        %v3732 = vadd.f32 %v3659, %v3723
        %v3733 = vadd.f32 %v3660, %v3724
        %v3734 = vadd.f32 %v3661, %v3725
        %v3735 = vadd.f32 %v3662, %v3726
        %v3736 = vadd.f32 %v3663, %v3727
        %v3737 = vadd.f32 %v3664, %v3728
        %v3738 = vadd.f32 %v3665, %v3729
        %v3739 = vadd.f32 %v3666, %v3730
        %v3740 = vadd.f32 %v3667, %v3731
        %s3741 = scalar_lea.vmem %s330, 672
        %v3742 = vld [vmem:[%s3741] sm:$0xff]
        %v3743 = vld [vmem:[%s3741 + $0x8] sm:$0xff]
        %v3744 = vld [vmem:[%s3741 + $0x10] sm:$0xff]
        %v3745 = vld [vmem:[%s3741 + $0x20] sm:$0xff]
        %v3746 = vld [vmem:[%s3741 + $0x28] sm:$0xff]
        %v3747 = vld [vmem:[%s3741 + $0x30] sm:$0xff]
        %v3748 = vld [vmem:[%s3741 + $0x40] sm:$0xff]
        %v3749 = vld [vmem:[%s3741 + $0x48] sm:$0xff]
        %v3750 = vld [vmem:[%s3741 + $0x50] sm:$0xff]
        %3752 = vset.pattern.permute.xlu0 0
        %3753 = vperm.xlu0 %3752, %v3742
        %v3754 = vpop.permute.xlu0 %3753
        %3757 = vset.pattern.permute.xlu0 0
        %3758 = vperm.xlu0 %3757, %v3743
        %v3759 = vpop.permute.xlu0 %3758
        %3762 = vset.pattern.permute.xlu0 0
        %3763 = vperm.xlu0 %3762, %v3744
        %v3764 = vpop.permute.xlu0 %3763
        %3767 = vset.pattern.permute.xlu0 0
        %3768 = vperm.xlu0 %3767, %v3745
        %v3769 = vpop.permute.xlu0 %3768
        %3772 = vset.pattern.permute.xlu0 0
        %3773 = vperm.xlu0 %3772, %v3746
        %v3774 = vpop.permute.xlu0 %3773
        %3777 = vset.pattern.permute.xlu0 0
        %3778 = vperm.xlu0 %3777, %v3747
        %v3779 = vpop.permute.xlu0 %3778
        %3782 = vset.pattern.permute.xlu0 0
        %3783 = vperm.xlu0 %3782, %v3748
        %v3784 = vpop.permute.xlu0 %3783
        %3787 = vset.pattern.permute.xlu0 0
        %3788 = vperm.xlu0 %3787, %v3749
        %v3789 = vpop.permute.xlu0 %3788
        %3792 = vset.pattern.permute.xlu0 0
        %3793 = vperm.xlu0 %3792, %v3750
        %v3794 = vpop.permute.xlu0 %3793
        %v3796 = vmul.f32 %v3754, %v943
        %v3797 = vmul.f32 %v3759, %v943
        %v3798 = vmul.f32 %v3764, %v943
        %v3799 = vmul.f32 %v3769, %v943
        %v3800 = vmul.f32 %v3774, %v943
        %v3801 = vmul.f32 %v3779, %v943
        %v3802 = vmul.f32 %v3784, %v943
        %v3803 = vmul.f32 %v3789, %v943
        %v3804 = vmul.f32 %v3794, %v943
        %v3805 = vadd.f32 %v3732, %v3796
        %v3806 = vadd.f32 %v3733, %v3797
        %v3807 = vadd.f32 %v3734, %v3798
        %v3808 = vadd.f32 %v3735, %v3799
        %v3809 = vadd.f32 %v3736, %v3800
        %v3810 = vadd.f32 %v3737, %v3801
        %v3811 = vadd.f32 %v3738, %v3802
        %v3812 = vadd.f32 %v3739, %v3803
        %v3813 = vadd.f32 %v3740, %v3804
        %s3814 = scalar_lea.vmem %s330, 800
        %v3815 = vld [vmem:[%s3814] sm:$0xff]
        %v3816 = vld [vmem:[%s3814 + $0x8] sm:$0xff]
        %v3817 = vld [vmem:[%s3814 + $0x10] sm:$0xff]
        %v3818 = vld [vmem:[%s3814 + $0x20] sm:$0xff]
        %v3819 = vld [vmem:[%s3814 + $0x28] sm:$0xff]
        %v3820 = vld [vmem:[%s3814 + $0x30] sm:$0xff]
        %v3821 = vld [vmem:[%s3814 + $0x40] sm:$0xff]
        %v3822 = vld [vmem:[%s3814 + $0x48] sm:$0xff]
        %v3823 = vld [vmem:[%s3814 + $0x50] sm:$0xff]
        %3825 = vset.pattern.permute.xlu0 0
        %3826 = vperm.xlu0 %3825, %v3815
        %v3827 = vpop.permute.xlu0 %3826
        %3830 = vset.pattern.permute.xlu0 0
        %3831 = vperm.xlu0 %3830, %v3816
        %v3832 = vpop.permute.xlu0 %3831
        %3835 = vset.pattern.permute.xlu0 0
        %3836 = vperm.xlu0 %3835, %v3817
        %v3837 = vpop.permute.xlu0 %3836
        %3840 = vset.pattern.permute.xlu0 0
        %3841 = vperm.xlu0 %3840, %v3818
        %v3842 = vpop.permute.xlu0 %3841
        %3845 = vset.pattern.permute.xlu0 0
        %3846 = vperm.xlu0 %3845, %v3819
        %v3847 = vpop.permute.xlu0 %3846
        %3850 = vset.pattern.permute.xlu0 0
        %3851 = vperm.xlu0 %3850, %v3820
        %v3852 = vpop.permute.xlu0 %3851
        %3855 = vset.pattern.permute.xlu0 0
        %3856 = vperm.xlu0 %3855, %v3821
        %v3857 = vpop.permute.xlu0 %3856
        %3860 = vset.pattern.permute.xlu0 0
        %3861 = vperm.xlu0 %3860, %v3822
        %v3862 = vpop.permute.xlu0 %3861
        %3865 = vset.pattern.permute.xlu0 0
        %3866 = vperm.xlu0 %3865, %v3823
        %v3867 = vpop.permute.xlu0 %3866
        %v3869 = vmul.f32 %v3827, %v1022
        %v3870 = vmul.f32 %v3832, %v1022
        %v3871 = vmul.f32 %v3837, %v1022
        %v3872 = vmul.f32 %v3842, %v1022
        %v3873 = vmul.f32 %v3847, %v1022
        %v3874 = vmul.f32 %v3852, %v1022
        %v3875 = vmul.f32 %v3857, %v1022
        %v3876 = vmul.f32 %v3862, %v1022
        %v3877 = vmul.f32 %v3867, %v1022
        %v3878 = vadd.f32 %v3805, %v3869
        %v3879 = vadd.f32 %v3806, %v3870
        %v3880 = vadd.f32 %v3807, %v3871
        %v3881 = vadd.f32 %v3808, %v3872
        %v3882 = vadd.f32 %v3809, %v3873
        %v3883 = vadd.f32 %v3810, %v3874
        %v3884 = vadd.f32 %v3811, %v3875
        %v3885 = vadd.f32 %v3812, %v3876
        %v3886 = vadd.f32 %v3813, %v3877
        %v3887 = vmax.f32 %v3560, %v3878
        %v3888 = vmax.f32 %v3561, %v3879
        %v3889 = vmax.f32 %v3562, %v3880
        %v3890 = vmax.f32 %v3563, %v3881
        %v3891 = vmax.f32 %v3564, %v3882
        %v3892 = vmax.f32 %v3565, %v3883
        %v3893 = vmax.f32 %v3566, %v3884
        %v3894 = vmax.f32 %v3567, %v3885
        %v3895 = vmax.f32 %v3568, %v3886
        %v3896 = vmul.f32 %v1554, %v399
        %v3897 = vmul.f32 %v1559, %v399
        %v3898 = vmul.f32 %v1564, %v399
        %v3899 = vmul.f32 %v1569, %v399
        %v3900 = vmul.f32 %v1574, %v399
        %v3901 = vmul.f32 %v1579, %v399
        %v3902 = vmul.f32 %v1584, %v399
        %v3903 = vmul.f32 %v1589, %v399
        %v3904 = vmul.f32 %v1594, %v399
        %v3905 = vmul.f32 %v1627, %v469
        %v3906 = vmul.f32 %v1632, %v469
        %v3907 = vmul.f32 %v1637, %v469
        %v3908 = vmul.f32 %v1642, %v469
        %v3909 = vmul.f32 %v1647, %v469
        %v3910 = vmul.f32 %v1652, %v469
        %v3911 = vmul.f32 %v1657, %v469
        %v3912 = vmul.f32 %v1662, %v469
        %v3913 = vmul.f32 %v1667, %v469
        %v3914 = vadd.f32 %v3896, %v3905
        %v3915 = vadd.f32 %v3897, %v3906
        %v3916 = vadd.f32 %v3898, %v3907
        %v3917 = vadd.f32 %v3899, %v3908
        %v3918 = vadd.f32 %v3900, %v3909
        %v3919 = vadd.f32 %v3901, %v3910
        %v3920 = vadd.f32 %v3902, %v3911
        %v3921 = vadd.f32 %v3903, %v3912
        %v3922 = vadd.f32 %v3904, %v3913
        %v3923 = vmul.f32 %v1844, %v548
        %v3924 = vmul.f32 %v1849, %v548
        %v3925 = vmul.f32 %v1854, %v548
        %v3926 = vmul.f32 %v1859, %v548
        %v3927 = vmul.f32 %v1864, %v548
        %v3928 = vmul.f32 %v1869, %v548
        %v3929 = vmul.f32 %v1874, %v548
        %v3930 = vmul.f32 %v1879, %v548
        %v3931 = vmul.f32 %v1884, %v548
        %v3932 = vadd.f32 %v3914, %v3923
        %v3933 = vadd.f32 %v3915, %v3924
        %v3934 = vadd.f32 %v3916, %v3925
        %v3935 = vadd.f32 %v3917, %v3926
        %v3936 = vadd.f32 %v3918, %v3927
        %v3937 = vadd.f32 %v3919, %v3928
        %v3938 = vadd.f32 %v3920, %v3929
        %v3939 = vadd.f32 %v3921, %v3930
        %v3940 = vadd.f32 %v3922, %v3931
        %v3941 = vmul.f32 %v3219, %v627
        %v3942 = vmul.f32 %v3224, %v627
        %v3943 = vmul.f32 %v3229, %v627
        %v3944 = vmul.f32 %v3234, %v627
        %v3945 = vmul.f32 %v3239, %v627
        %v3946 = vmul.f32 %v3244, %v627
        %v3947 = vmul.f32 %v3249, %v627
        %v3948 = vmul.f32 %v3254, %v627
        %v3949 = vmul.f32 %v3259, %v627
        %v3950 = vadd.f32 %v3932, %v3941
        %v3951 = vadd.f32 %v3933, %v3942
        %v3952 = vadd.f32 %v3934, %v3943
        %v3953 = vadd.f32 %v3935, %v3944
        %v3954 = vadd.f32 %v3936, %v3945
        %v3955 = vadd.f32 %v3937, %v3946
        %v3956 = vadd.f32 %v3938, %v3947
        %v3957 = vadd.f32 %v3939, %v3948
        %v3958 = vadd.f32 %v3940, %v3949
        %v3959 = vmul.f32 %v3292, %v706
        %v3960 = vmul.f32 %v3297, %v706
        %v3961 = vmul.f32 %v3302, %v706
        %v3962 = vmul.f32 %v3307, %v706
        %v3963 = vmul.f32 %v3312, %v706
        %v3964 = vmul.f32 %v3317, %v706
        %v3965 = vmul.f32 %v3322, %v706
        %v3966 = vmul.f32 %v3327, %v706
        %v3967 = vmul.f32 %v3332, %v706
        %v3968 = vadd.f32 %v3950, %v3959
        %v3969 = vadd.f32 %v3951, %v3960
        %v3970 = vadd.f32 %v3952, %v3961
        %v3971 = vadd.f32 %v3953, %v3962
        %v3972 = vadd.f32 %v3954, %v3963
        %v3973 = vadd.f32 %v3955, %v3964
        %v3974 = vadd.f32 %v3956, %v3965
        %v3975 = vadd.f32 %v3957, %v3966
        %v3976 = vadd.f32 %v3958, %v3967
        %v3977 = vmul.f32 %v3500, %v785
        %v3978 = vmul.f32 %v3505, %v785
        %v3979 = vmul.f32 %v3510, %v785
        %v3980 = vmul.f32 %v3515, %v785
        %v3981 = vmul.f32 %v3520, %v785
        %v3982 = vmul.f32 %v3525, %v785
        %v3983 = vmul.f32 %v3530, %v785
        %v3984 = vmul.f32 %v3535, %v785
        %v3985 = vmul.f32 %v3540, %v785
        %v3986 = vadd.f32 %v3968, %v3977
        %v3987 = vadd.f32 %v3969, %v3978
        %v3988 = vadd.f32 %v3970, %v3979
        %v3989 = vadd.f32 %v3971, %v3980
        %v3990 = vadd.f32 %v3972, %v3981
        %v3991 = vadd.f32 %v3973, %v3982
        %v3992 = vadd.f32 %v3974, %v3983
        %v3993 = vadd.f32 %v3975, %v3984
        %v3994 = vadd.f32 %v3976, %v3985
        %v3995 = vmul.f32 %v3754, %v864
        %v3996 = vmul.f32 %v3759, %v864
        %v3997 = vmul.f32 %v3764, %v864
        %v3998 = vmul.f32 %v3769, %v864
        %v3999 = vmul.f32 %v3774, %v864
        %v4000 = vmul.f32 %v3779, %v864
        %v4001 = vmul.f32 %v3784, %v864
        %v4002 = vmul.f32 %v3789, %v864
        %v4003 = vmul.f32 %v3794, %v864
        %v4004 = vadd.f32 %v3986, %v3995
        %v4005 = vadd.f32 %v3987, %v3996
        %v4006 = vadd.f32 %v3988, %v3997
        %v4007 = vadd.f32 %v3989, %v3998
        %v4008 = vadd.f32 %v3990, %v3999
        %v4009 = vadd.f32 %v3991, %v4000
        %v4010 = vadd.f32 %v3992, %v4001
        %v4011 = vadd.f32 %v3993, %v4002
        %v4012 = vadd.f32 %v3994, %v4003
        %v4013 = vmul.f32 %v3827, %v943
        %v4014 = vmul.f32 %v3832, %v943
        %v4015 = vmul.f32 %v3837, %v943
        %v4016 = vmul.f32 %v3842, %v943
        %v4017 = vmul.f32 %v3847, %v943
        %v4018 = vmul.f32 %v3852, %v943
        %v4019 = vmul.f32 %v3857, %v943
        %v4020 = vmul.f32 %v3862, %v943
        %v4021 = vmul.f32 %v3867, %v943
        %v4022 = vadd.f32 %v4004, %v4013
        %v4023 = vadd.f32 %v4005, %v4014
        %v4024 = vadd.f32 %v4006, %v4015
        %v4025 = vadd.f32 %v4007, %v4016
        %v4026 = vadd.f32 %v4008, %v4017
        %v4027 = vadd.f32 %v4009, %v4018
        %v4028 = vadd.f32 %v4010, %v4019
        %v4029 = vadd.f32 %v4011, %v4020
        %v4030 = vadd.f32 %v4012, %v4021
        %s4031 = scalar_lea.vmem %s330, 928
        %v4032 = vld [vmem:[%s4031] sm:$0xff]
        %v4033 = vld [vmem:[%s4031 + $0x8] sm:$0xff]
        %v4034 = vld [vmem:[%s4031 + $0x10] sm:$0xff]
        %v4035 = vld [vmem:[%s4031 + $0x20] sm:$0xff]
        %v4036 = vld [vmem:[%s4031 + $0x28] sm:$0xff]
        %v4037 = vld [vmem:[%s4031 + $0x30] sm:$0xff]
        %v4038 = vld [vmem:[%s4031 + $0x40] sm:$0xff]
        %v4039 = vld [vmem:[%s4031 + $0x48] sm:$0xff]
        %v4040 = vld [vmem:[%s4031 + $0x50] sm:$0xff]
        %4042 = vset.pattern.permute.xlu0 0
        %4043 = vperm.xlu0 %4042, %v4032
        %v4044 = vpop.permute.xlu0 %4043
        %4047 = vset.pattern.permute.xlu0 0
        %4048 = vperm.xlu0 %4047, %v4033
        %v4049 = vpop.permute.xlu0 %4048
        %4052 = vset.pattern.permute.xlu0 0
        %4053 = vperm.xlu0 %4052, %v4034
        %v4054 = vpop.permute.xlu0 %4053
        %4057 = vset.pattern.permute.xlu0 0
        %4058 = vperm.xlu0 %4057, %v4035
        %v4059 = vpop.permute.xlu0 %4058
        %4062 = vset.pattern.permute.xlu0 0
        %4063 = vperm.xlu0 %4062, %v4036
        %v4064 = vpop.permute.xlu0 %4063
        %4067 = vset.pattern.permute.xlu0 0
        %4068 = vperm.xlu0 %4067, %v4037
        %v4069 = vpop.permute.xlu0 %4068
        %4072 = vset.pattern.permute.xlu0 0
        %4073 = vperm.xlu0 %4072, %v4038
        %v4074 = vpop.permute.xlu0 %4073
        %4077 = vset.pattern.permute.xlu0 0
        %4078 = vperm.xlu0 %4077, %v4039
        %v4079 = vpop.permute.xlu0 %4078
        %4082 = vset.pattern.permute.xlu0 0
        %4083 = vperm.xlu0 %4082, %v4040
        %v4084 = vpop.permute.xlu0 %4083
        %v4086 = vmul.f32 %v4044, %v1022
        %v4087 = vmul.f32 %v4049, %v1022
        %v4088 = vmul.f32 %v4054, %v1022
        %v4089 = vmul.f32 %v4059, %v1022
        %v4090 = vmul.f32 %v4064, %v1022
        %v4091 = vmul.f32 %v4069, %v1022
        %v4092 = vmul.f32 %v4074, %v1022
        %v4093 = vmul.f32 %v4079, %v1022
        %v4094 = vmul.f32 %v4084, %v1022
        %v4095 = vadd.f32 %v4022, %v4086
        %v4096 = vadd.f32 %v4023, %v4087
        %v4097 = vadd.f32 %v4024, %v4088
        %v4098 = vadd.f32 %v4025, %v4089
        %v4099 = vadd.f32 %v4026, %v4090
        %v4100 = vadd.f32 %v4027, %v4091
        %v4101 = vadd.f32 %v4028, %v4092
        %v4102 = vadd.f32 %v4029, %v4093
        %v4103 = vadd.f32 %v4030, %v4094
        %v4104 = vmax.f32 %v3887, %v4095
        %v4105 = vmax.f32 %v3888, %v4096
        %v4106 = vmax.f32 %v3889, %v4097
        %v4107 = vmax.f32 %v3890, %v4098
        %v4108 = vmax.f32 %v3891, %v4099
        %v4109 = vmax.f32 %v3892, %v4100
        %v4110 = vmax.f32 %v3893, %v4101
        %v4111 = vmax.f32 %v3894, %v4102
        %v4112 = vmax.f32 %v3895, %v4103
        %v4113 = vadd.f32 %v4104, %v1917
        %v4114 = vadd.f32 %v4105, %v1917
        %v4115 = vadd.f32 %v4106, %v1917
        %v4116 = vadd.f32 %v4107, %v1917
        %v4117 = vadd.f32 %v4108, %v1917
        %v4118 = vadd.f32 %v4109, %v1917
        %v4119 = vadd.f32 %v4110, %v1917
        %v4120 = vadd.f32 %v4111, %v1917
        %v4121 = vadd.f32 %v4112, %v1917
        %v4122 = vmax.f32 %v4113, 0.0
        %v4123 = vmax.f32 %v4114, 0.0
        %v4124 = vmax.f32 %v4115, 0.0
        %v4125 = vmax.f32 %v4116, 0.0
        %v4126 = vmax.f32 %v4117, 0.0
        %v4127 = vmax.f32 %v4118, 0.0
        %v4128 = vmax.f32 %v4119, 0.0
        %v4129 = vmax.f32 %v4120, 0.0
        %v4130 = vmax.f32 %v4121, 0.0
        %v4131 = vmul.f32 %v976, %v399
        %v4132 = vmul.f32 %v981, %v399
        %v4133 = vmul.f32 %v986, %v399
        %v4134 = vmul.f32 %v991, %v399
        %v4135 = vmul.f32 %v996, %v399
        %v4136 = vmul.f32 %v1001, %v399
        %v4137 = vmul.f32 %v1006, %v399
        %v4138 = vmul.f32 %v1011, %v399
        %v4139 = vmul.f32 %v1016, %v399
        %v4140 = vmul.f32 %v1300, %v469
        %v4141 = vmul.f32 %v1305, %v469
        %v4142 = vmul.f32 %v1310, %v469
        %v4143 = vmul.f32 %v1315, %v469
        %v4144 = vmul.f32 %v1320, %v469
        %v4145 = vmul.f32 %v1325, %v469
        %v4146 = vmul.f32 %v1330, %v469
        %v4147 = vmul.f32 %v1335, %v469
        %v4148 = vmul.f32 %v1340, %v469
        %v4149 = vadd.f32 %v4131, %v4140
        %v4150 = vadd.f32 %v4132, %v4141
        %v4151 = vadd.f32 %v4133, %v4142
        %v4152 = vadd.f32 %v4134, %v4143
        %v4153 = vadd.f32 %v4135, %v4144
        %v4154 = vadd.f32 %v4136, %v4145
        %v4155 = vadd.f32 %v4137, %v4146
        %v4156 = vadd.f32 %v4138, %v4147
        %v4157 = vadd.f32 %v4139, %v4148
        %v4158 = vmul.f32 %v2195, %v548
        %v4159 = vmul.f32 %v2200, %v548
        %v4160 = vmul.f32 %v2205, %v548
        %v4161 = vmul.f32 %v2210, %v548
        %v4162 = vmul.f32 %v2215, %v548
        %v4163 = vmul.f32 %v2220, %v548
        %v4164 = vmul.f32 %v2225, %v548
        %v4165 = vmul.f32 %v2230, %v548
        %v4166 = vmul.f32 %v2235, %v548
        %v4167 = vadd.f32 %v4149, %v4158
        %v4168 = vadd.f32 %v4150, %v4159
        %v4169 = vadd.f32 %v4151, %v4160
        %v4170 = vadd.f32 %v4152, %v4161
        %v4171 = vadd.f32 %v4153, %v4162
        %v4172 = vadd.f32 %v4154, %v4163
        %v4173 = vadd.f32 %v4155, %v4164
        %v4174 = vadd.f32 %v4156, %v4165
        %v4175 = vadd.f32 %v4157, %v4166
        %v4176 = vmul.f32 %v1627, %v627
        %v4177 = vmul.f32 %v1632, %v627
        %v4178 = vmul.f32 %v1637, %v627
        %v4179 = vmul.f32 %v1642, %v627
        %v4180 = vmul.f32 %v1647, %v627
        %v4181 = vmul.f32 %v1652, %v627
        %v4182 = vmul.f32 %v1657, %v627
        %v4183 = vmul.f32 %v1662, %v627
        %v4184 = vmul.f32 %v1667, %v627
        %v4185 = vadd.f32 %v4167, %v4176
        %v4186 = vadd.f32 %v4168, %v4177
        %v4187 = vadd.f32 %v4169, %v4178
        %v4188 = vadd.f32 %v4170, %v4179
        %v4189 = vadd.f32 %v4171, %v4180
        %v4190 = vadd.f32 %v4172, %v4181
        %v4191 = vadd.f32 %v4173, %v4182
        %v4192 = vadd.f32 %v4174, %v4183
        %v4193 = vadd.f32 %v4175, %v4184
        %v4194 = vmul.f32 %v1844, %v706
        %v4195 = vmul.f32 %v1849, %v706
        %v4196 = vmul.f32 %v1854, %v706
        %v4197 = vmul.f32 %v1859, %v706
        %v4198 = vmul.f32 %v1864, %v706
        %v4199 = vmul.f32 %v1869, %v706
        %v4200 = vmul.f32 %v1874, %v706
        %v4201 = vmul.f32 %v1879, %v706
        %v4202 = vmul.f32 %v1884, %v706
        %v4203 = vadd.f32 %v4185, %v4194
        %v4204 = vadd.f32 %v4186, %v4195
        %v4205 = vadd.f32 %v4187, %v4196
        %v4206 = vadd.f32 %v4188, %v4197
        %v4207 = vadd.f32 %v4189, %v4198
        %v4208 = vadd.f32 %v4190, %v4199
        %v4209 = vadd.f32 %v4191, %v4200
        %v4210 = vadd.f32 %v4192, %v4201
        %v4211 = vadd.f32 %v4193, %v4202
        %v4212 = vmul.f32 %v2730, %v785
        %v4213 = vmul.f32 %v2735, %v785
        %v4214 = vmul.f32 %v2740, %v785
        %v4215 = vmul.f32 %v2745, %v785
        %v4216 = vmul.f32 %v2750, %v785
        %v4217 = vmul.f32 %v2755, %v785
        %v4218 = vmul.f32 %v2760, %v785
        %v4219 = vmul.f32 %v2765, %v785
        %v4220 = vmul.f32 %v2770, %v785
        %v4221 = vadd.f32 %v4203, %v4212
        %v4222 = vadd.f32 %v4204, %v4213
        %v4223 = vadd.f32 %v4205, %v4214
        %v4224 = vadd.f32 %v4206, %v4215
        %v4225 = vadd.f32 %v4207, %v4216
        %v4226 = vadd.f32 %v4208, %v4217
        %v4227 = vadd.f32 %v4209, %v4218
        %v4228 = vadd.f32 %v4210, %v4219
        %v4229 = vadd.f32 %v4211, %v4220
        %v4230 = vmul.f32 %v3292, %v864
        %v4231 = vmul.f32 %v3297, %v864
        %v4232 = vmul.f32 %v3302, %v864
        %v4233 = vmul.f32 %v3307, %v864
        %v4234 = vmul.f32 %v3312, %v864
        %v4235 = vmul.f32 %v3317, %v864
        %v4236 = vmul.f32 %v3322, %v864
        %v4237 = vmul.f32 %v3327, %v864
        %v4238 = vmul.f32 %v3332, %v864
        %v4239 = vadd.f32 %v4221, %v4230
        %v4240 = vadd.f32 %v4222, %v4231
        %v4241 = vadd.f32 %v4223, %v4232
        %v4242 = vadd.f32 %v4224, %v4233
        %v4243 = vadd.f32 %v4225, %v4234
        %v4244 = vadd.f32 %v4226, %v4235
        %v4245 = vadd.f32 %v4227, %v4236
        %v4246 = vadd.f32 %v4228, %v4237
        %v4247 = vadd.f32 %v4229, %v4238
        %v4248 = vmul.f32 %v3500, %v943
        %v4249 = vmul.f32 %v3505, %v943
        %v4250 = vmul.f32 %v3510, %v943
        %v4251 = vmul.f32 %v3515, %v943
        %v4252 = vmul.f32 %v3520, %v943
        %v4253 = vmul.f32 %v3525, %v943
        %v4254 = vmul.f32 %v3530, %v943
        %v4255 = vmul.f32 %v3535, %v943
        %v4256 = vmul.f32 %v3540, %v943
        %v4257 = vadd.f32 %v4239, %v4248
        %v4258 = vadd.f32 %v4240, %v4249
        %v4259 = vadd.f32 %v4241, %v4250
        %v4260 = vadd.f32 %v4242, %v4251
        %v4261 = vadd.f32 %v4243, %v4252
        %v4262 = vadd.f32 %v4244, %v4253
        %v4263 = vadd.f32 %v4245, %v4254
        %v4264 = vadd.f32 %v4246, %v4255
        %v4265 = vadd.f32 %v4247, %v4256
        %s4266 = scalar_lea.vmem %s330, 40
        %v4267 = vld [vmem:[%s4266] sm:$0xff]
        %v4268 = vld [vmem:[%s4266 + $0x8] sm:$0xff]
        %v4269 = vld [vmem:[%s4266 + $0x10] sm:$0xff]
        %v4270 = vld [vmem:[%s4266 + $0x20] sm:$0xff]
        %v4271 = vld [vmem:[%s4266 + $0x28] sm:$0xff]
        %v4272 = vld [vmem:[%s4266 + $0x30] sm:$0xff]
        %v4273 = vld [vmem:[%s4266 + $0x40] sm:$0xff]
        %v4274 = vld [vmem:[%s4266 + $0x48] sm:$0xff]
        %v4275 = vld [vmem:[%s4266 + $0x50] sm:$0xff]
        %4277 = vset.pattern.permute.xlu0 0
        %4278 = vperm.xlu0 %4277, %v4267
        %v4279 = vpop.permute.xlu0 %4278
        %4282 = vset.pattern.permute.xlu0 0
        %4283 = vperm.xlu0 %4282, %v4268
        %v4284 = vpop.permute.xlu0 %4283
        %4287 = vset.pattern.permute.xlu0 0
        %4288 = vperm.xlu0 %4287, %v4269
        %v4289 = vpop.permute.xlu0 %4288
        %4292 = vset.pattern.permute.xlu0 0
        %4293 = vperm.xlu0 %4292, %v4270
        %v4294 = vpop.permute.xlu0 %4293
        %4297 = vset.pattern.permute.xlu0 0
        %4298 = vperm.xlu0 %4297, %v4271
        %v4299 = vpop.permute.xlu0 %4298
        %4302 = vset.pattern.permute.xlu0 0
        %4303 = vperm.xlu0 %4302, %v4272
        %v4304 = vpop.permute.xlu0 %4303
        %4307 = vset.pattern.permute.xlu0 0
        %4308 = vperm.xlu0 %4307, %v4273
        %v4309 = vpop.permute.xlu0 %4308
        %4312 = vset.pattern.permute.xlu0 0
        %4313 = vperm.xlu0 %4312, %v4274
        %v4314 = vpop.permute.xlu0 %4313
        %4317 = vset.pattern.permute.xlu0 0
        %4318 = vperm.xlu0 %4317, %v4275
        %v4319 = vpop.permute.xlu0 %4318
        %v4321 = vmul.f32 %v4279, %v1022
        %v4322 = vmul.f32 %v4284, %v1022
        %v4323 = vmul.f32 %v4289, %v1022
        %v4324 = vmul.f32 %v4294, %v1022
        %v4325 = vmul.f32 %v4299, %v1022
        %v4326 = vmul.f32 %v4304, %v1022
        %v4327 = vmul.f32 %v4309, %v1022
        %v4328 = vmul.f32 %v4314, %v1022
        %v4329 = vmul.f32 %v4319, %v1022
        %v4330 = vadd.f32 %v4257, %v4321
        %v4331 = vadd.f32 %v4258, %v4322
        %v4332 = vadd.f32 %v4259, %v4323
        %v4333 = vadd.f32 %v4260, %v4324
        %v4334 = vadd.f32 %v4261, %v4325
        %v4335 = vadd.f32 %v4262, %v4326
        %v4336 = vadd.f32 %v4263, %v4327
        %v4337 = vadd.f32 %v4264, %v4328
        %v4338 = vadd.f32 %v4265, %v4329
        %v4339 = vmul.f32 %v1300, %v399
        %v4340 = vmul.f32 %v1305, %v399
        %v4341 = vmul.f32 %v1310, %v399
        %v4342 = vmul.f32 %v1315, %v399
        %v4343 = vmul.f32 %v1320, %v399
        %v4344 = vmul.f32 %v1325, %v399
        %v4345 = vmul.f32 %v1330, %v399
        %v4346 = vmul.f32 %v1335, %v399
        %v4347 = vmul.f32 %v1340, %v399
        %v4348 = vmul.f32 %v2195, %v469
        %v4349 = vmul.f32 %v2200, %v469
        %v4350 = vmul.f32 %v2205, %v469
        %v4351 = vmul.f32 %v2210, %v469
        %v4352 = vmul.f32 %v2215, %v469
        %v4353 = vmul.f32 %v2220, %v469
        %v4354 = vmul.f32 %v2225, %v469
        %v4355 = vmul.f32 %v2230, %v469
        %v4356 = vmul.f32 %v2235, %v469
        %v4357 = vadd.f32 %v4339, %v4348
        %v4358 = vadd.f32 %v4340, %v4349
        %v4359 = vadd.f32 %v4341, %v4350
        %v4360 = vadd.f32 %v4342, %v4351
        %v4361 = vadd.f32 %v4343, %v4352
        %v4362 = vadd.f32 %v4344, %v4353
        %v4363 = vadd.f32 %v4345, %v4354
        %v4364 = vadd.f32 %v4346, %v4355
        %v4365 = vadd.f32 %v4347, %v4356
        %v4366 = vmul.f32 %v2513, %v548
        %v4367 = vmul.f32 %v2518, %v548
        %v4368 = vmul.f32 %v2523, %v548
        %v4369 = vmul.f32 %v2528, %v548
        %v4370 = vmul.f32 %v2533, %v548
        %v4371 = vmul.f32 %v2538, %v548
        %v4372 = vmul.f32 %v2543, %v548
        %v4373 = vmul.f32 %v2548, %v548
        %v4374 = vmul.f32 %v2553, %v548
        %v4375 = vadd.f32 %v4357, %v4366
        %v4376 = vadd.f32 %v4358, %v4367
        %v4377 = vadd.f32 %v4359, %v4368
        %v4378 = vadd.f32 %v4360, %v4369
        %v4379 = vadd.f32 %v4361, %v4370
        %v4380 = vadd.f32 %v4362, %v4371
        %v4381 = vadd.f32 %v4363, %v4372
        %v4382 = vadd.f32 %v4364, %v4373
        %v4383 = vadd.f32 %v4365, %v4374
        %v4384 = vmul.f32 %v1844, %v627
        %v4385 = vmul.f32 %v1849, %v627
        %v4386 = vmul.f32 %v1854, %v627
        %v4387 = vmul.f32 %v1859, %v627
        %v4388 = vmul.f32 %v1864, %v627
        %v4389 = vmul.f32 %v1869, %v627
        %v4390 = vmul.f32 %v1874, %v627
        %v4391 = vmul.f32 %v1879, %v627
        %v4392 = vmul.f32 %v1884, %v627
        %v4393 = vadd.f32 %v4375, %v4384
        %v4394 = vadd.f32 %v4376, %v4385
        %v4395 = vadd.f32 %v4377, %v4386
        %v4396 = vadd.f32 %v4378, %v4387
        %v4397 = vadd.f32 %v4379, %v4388
        %v4398 = vadd.f32 %v4380, %v4389
        %v4399 = vadd.f32 %v4381, %v4390
        %v4400 = vadd.f32 %v4382, %v4391
        %v4401 = vadd.f32 %v4383, %v4392
        %v4402 = vmul.f32 %v2730, %v706
        %v4403 = vmul.f32 %v2735, %v706
        %v4404 = vmul.f32 %v2740, %v706
        %v4405 = vmul.f32 %v2745, %v706
        %v4406 = vmul.f32 %v2750, %v706
        %v4407 = vmul.f32 %v2755, %v706
        %v4408 = vmul.f32 %v2760, %v706
        %v4409 = vmul.f32 %v2765, %v706
        %v4410 = vmul.f32 %v2770, %v706
        %v4411 = vadd.f32 %v4393, %v4402
        %v4412 = vadd.f32 %v4394, %v4403
        %v4413 = vadd.f32 %v4395, %v4404
        %v4414 = vadd.f32 %v4396, %v4405
        %v4415 = vadd.f32 %v4397, %v4406
        %v4416 = vadd.f32 %v4398, %v4407
        %v4417 = vadd.f32 %v4399, %v4408
        %v4418 = vadd.f32 %v4400, %v4409
        %v4419 = vadd.f32 %v4401, %v4410
        %v4420 = vmul.f32 %v2947, %v785
        %v4421 = vmul.f32 %v2952, %v785
        %v4422 = vmul.f32 %v2957, %v785
        %v4423 = vmul.f32 %v2962, %v785
        %v4424 = vmul.f32 %v2967, %v785
        %v4425 = vmul.f32 %v2972, %v785
        %v4426 = vmul.f32 %v2977, %v785
        %v4427 = vmul.f32 %v2982, %v785
        %v4428 = vmul.f32 %v2987, %v785
        %v4429 = vadd.f32 %v4411, %v4420
        %v4430 = vadd.f32 %v4412, %v4421
        %v4431 = vadd.f32 %v4413, %v4422
        %v4432 = vadd.f32 %v4414, %v4423
        %v4433 = vadd.f32 %v4415, %v4424
        %v4434 = vadd.f32 %v4416, %v4425
        %v4435 = vadd.f32 %v4417, %v4426
        %v4436 = vadd.f32 %v4418, %v4427
        %v4437 = vadd.f32 %v4419, %v4428
        %v4438 = vmul.f32 %v3500, %v864
        %v4439 = vmul.f32 %v3505, %v864
        %v4440 = vmul.f32 %v3510, %v864
        %v4441 = vmul.f32 %v3515, %v864
        %v4442 = vmul.f32 %v3520, %v864
        %v4443 = vmul.f32 %v3525, %v864
        %v4444 = vmul.f32 %v3530, %v864
        %v4445 = vmul.f32 %v3535, %v864
        %v4446 = vmul.f32 %v3540, %v864
        %v4447 = vadd.f32 %v4429, %v4438
        %v4448 = vadd.f32 %v4430, %v4439
        %v4449 = vadd.f32 %v4431, %v4440
        %v4450 = vadd.f32 %v4432, %v4441
        %v4451 = vadd.f32 %v4433, %v4442
        %v4452 = vadd.f32 %v4434, %v4443
        %v4453 = vadd.f32 %v4435, %v4444
        %v4454 = vadd.f32 %v4436, %v4445
        %v4455 = vadd.f32 %v4437, %v4446
        %v4456 = vmul.f32 %v4279, %v943
        %v4457 = vmul.f32 %v4284, %v943
        %v4458 = vmul.f32 %v4289, %v943
        %v4459 = vmul.f32 %v4294, %v943
        %v4460 = vmul.f32 %v4299, %v943
        %v4461 = vmul.f32 %v4304, %v943
        %v4462 = vmul.f32 %v4309, %v943
        %v4463 = vmul.f32 %v4314, %v943
        %v4464 = vmul.f32 %v4319, %v943
        %v4465 = vadd.f32 %v4447, %v4456
        %v4466 = vadd.f32 %v4448, %v4457
        %v4467 = vadd.f32 %v4449, %v4458
        %v4468 = vadd.f32 %v4450, %v4459
        %v4469 = vadd.f32 %v4451, %v4460
        %v4470 = vadd.f32 %v4452, %v4461
        %v4471 = vadd.f32 %v4453, %v4462
        %v4472 = vadd.f32 %v4454, %v4463
        %v4473 = vadd.f32 %v4455, %v4464
        %s4474 = scalar_lea.vmem %s330, 168
        %v4475 = vld [vmem:[%s4474] sm:$0xff]
        %v4476 = vld [vmem:[%s4474 + $0x8] sm:$0xff]
        %v4477 = vld [vmem:[%s4474 + $0x10] sm:$0xff]
        %v4478 = vld [vmem:[%s4474 + $0x20] sm:$0xff]
        %v4479 = vld [vmem:[%s4474 + $0x28] sm:$0xff]
        %v4480 = vld [vmem:[%s4474 + $0x30] sm:$0xff]
        %v4481 = vld [vmem:[%s4474 + $0x40] sm:$0xff]
        %v4482 = vld [vmem:[%s4474 + $0x48] sm:$0xff]
        %v4483 = vld [vmem:[%s4474 + $0x50] sm:$0xff]
        %4485 = vset.pattern.permute.xlu0 0
        %4486 = vperm.xlu0 %4485, %v4475
        %v4487 = vpop.permute.xlu0 %4486
        %4490 = vset.pattern.permute.xlu0 0
        %4491 = vperm.xlu0 %4490, %v4476
        %v4492 = vpop.permute.xlu0 %4491
        %4495 = vset.pattern.permute.xlu0 0
        %4496 = vperm.xlu0 %4495, %v4477
        %v4497 = vpop.permute.xlu0 %4496
        %4500 = vset.pattern.permute.xlu0 0
        %4501 = vperm.xlu0 %4500, %v4478
        %v4502 = vpop.permute.xlu0 %4501
        %4505 = vset.pattern.permute.xlu0 0
        %4506 = vperm.xlu0 %4505, %v4479
        %v4507 = vpop.permute.xlu0 %4506
        %4510 = vset.pattern.permute.xlu0 0
        %4511 = vperm.xlu0 %4510, %v4480
        %v4512 = vpop.permute.xlu0 %4511
        %4515 = vset.pattern.permute.xlu0 0
        %4516 = vperm.xlu0 %4515, %v4481
        %v4517 = vpop.permute.xlu0 %4516
        %4520 = vset.pattern.permute.xlu0 0
        %4521 = vperm.xlu0 %4520, %v4482
        %v4522 = vpop.permute.xlu0 %4521
        %4525 = vset.pattern.permute.xlu0 0
        %4526 = vperm.xlu0 %4525, %v4483
        %v4527 = vpop.permute.xlu0 %4526
        %v4529 = vmul.f32 %v4487, %v1022
        %v4530 = vmul.f32 %v4492, %v1022
        %v4531 = vmul.f32 %v4497, %v1022
        %v4532 = vmul.f32 %v4502, %v1022
        %v4533 = vmul.f32 %v4507, %v1022
        %v4534 = vmul.f32 %v4512, %v1022
        %v4535 = vmul.f32 %v4517, %v1022
        %v4536 = vmul.f32 %v4522, %v1022
        %v4537 = vmul.f32 %v4527, %v1022
        %v4538 = vadd.f32 %v4465, %v4529
        %v4539 = vadd.f32 %v4466, %v4530
        %v4540 = vadd.f32 %v4467, %v4531
        %v4541 = vadd.f32 %v4468, %v4532
        %v4542 = vadd.f32 %v4469, %v4533
        %v4543 = vadd.f32 %v4470, %v4534
        %v4544 = vadd.f32 %v4471, %v4535
        %v4545 = vadd.f32 %v4472, %v4536
        %v4546 = vadd.f32 %v4473, %v4537
        %v4547 = vmax.f32 %v4330, %v4538
        %v4548 = vmax.f32 %v4331, %v4539
        %v4549 = vmax.f32 %v4332, %v4540
        %v4550 = vmax.f32 %v4333, %v4541
        %v4551 = vmax.f32 %v4334, %v4542
        %v4552 = vmax.f32 %v4335, %v4543
        %v4553 = vmax.f32 %v4336, %v4544
        %v4554 = vmax.f32 %v4337, %v4545
        %v4555 = vmax.f32 %v4338, %v4546
        %v4556 = vmul.f32 %v1627, %v399
        %v4557 = vmul.f32 %v1632, %v399
        %v4558 = vmul.f32 %v1637, %v399
        %v4559 = vmul.f32 %v1642, %v399
        %v4560 = vmul.f32 %v1647, %v399
        %v4561 = vmul.f32 %v1652, %v399
        %v4562 = vmul.f32 %v1657, %v399
        %v4563 = vmul.f32 %v1662, %v399
        %v4564 = vmul.f32 %v1667, %v399
        %v4565 = vmul.f32 %v1844, %v469
        %v4566 = vmul.f32 %v1849, %v469
        %v4567 = vmul.f32 %v1854, %v469
        %v4568 = vmul.f32 %v1859, %v469
        %v4569 = vmul.f32 %v1864, %v469
        %v4570 = vmul.f32 %v1869, %v469
        %v4571 = vmul.f32 %v1874, %v469
        %v4572 = vmul.f32 %v1879, %v469
        %v4573 = vmul.f32 %v1884, %v469
        %v4574 = vadd.f32 %v4556, %v4565
        %v4575 = vadd.f32 %v4557, %v4566
        %v4576 = vadd.f32 %v4558, %v4567
        %v4577 = vadd.f32 %v4559, %v4568
        %v4578 = vadd.f32 %v4560, %v4569
        %v4579 = vadd.f32 %v4561, %v4570
        %v4580 = vadd.f32 %v4562, %v4571
        %v4581 = vadd.f32 %v4563, %v4572
        %v4582 = vadd.f32 %v4564, %v4573
        %v4583 = vmul.f32 %v2730, %v548
        %v4584 = vmul.f32 %v2735, %v548
        %v4585 = vmul.f32 %v2740, %v548
        %v4586 = vmul.f32 %v2745, %v548
        %v4587 = vmul.f32 %v2750, %v548
        %v4588 = vmul.f32 %v2755, %v548
        %v4589 = vmul.f32 %v2760, %v548
        %v4590 = vmul.f32 %v2765, %v548
        %v4591 = vmul.f32 %v2770, %v548
        %v4592 = vadd.f32 %v4574, %v4583
        %v4593 = vadd.f32 %v4575, %v4584
        %v4594 = vadd.f32 %v4576, %v4585
        %v4595 = vadd.f32 %v4577, %v4586
        %v4596 = vadd.f32 %v4578, %v4587
        %v4597 = vadd.f32 %v4579, %v4588
        %v4598 = vadd.f32 %v4580, %v4589
        %v4599 = vadd.f32 %v4581, %v4590
        %v4600 = vadd.f32 %v4582, %v4591
        %v4601 = vmul.f32 %v3292, %v627
        %v4602 = vmul.f32 %v3297, %v627
        %v4603 = vmul.f32 %v3302, %v627
        %v4604 = vmul.f32 %v3307, %v627
        %v4605 = vmul.f32 %v3312, %v627
        %v4606 = vmul.f32 %v3317, %v627
        %v4607 = vmul.f32 %v3322, %v627
        %v4608 = vmul.f32 %v3327, %v627
        %v4609 = vmul.f32 %v3332, %v627
        %v4610 = vadd.f32 %v4592, %v4601
        %v4611 = vadd.f32 %v4593, %v4602
        %v4612 = vadd.f32 %v4594, %v4603
        %v4613 = vadd.f32 %v4595, %v4604
        %v4614 = vadd.f32 %v4596, %v4605
        %v4615 = vadd.f32 %v4597, %v4606
        %v4616 = vadd.f32 %v4598, %v4607
        %v4617 = vadd.f32 %v4599, %v4608
        %v4618 = vadd.f32 %v4600, %v4609
        %v4619 = vmul.f32 %v3500, %v706
        %v4620 = vmul.f32 %v3505, %v706
        %v4621 = vmul.f32 %v3510, %v706
        %v4622 = vmul.f32 %v3515, %v706
        %v4623 = vmul.f32 %v3520, %v706
        %v4624 = vmul.f32 %v3525, %v706
        %v4625 = vmul.f32 %v3530, %v706
        %v4626 = vmul.f32 %v3535, %v706
        %v4627 = vmul.f32 %v3540, %v706
        %v4628 = vadd.f32 %v4610, %v4619
        %v4629 = vadd.f32 %v4611, %v4620
        %v4630 = vadd.f32 %v4612, %v4621
        %v4631 = vadd.f32 %v4613, %v4622
        %v4632 = vadd.f32 %v4614, %v4623
        %v4633 = vadd.f32 %v4615, %v4624
        %v4634 = vadd.f32 %v4616, %v4625
        %v4635 = vadd.f32 %v4617, %v4626
        %v4636 = vadd.f32 %v4618, %v4627
        %v4637 = vmul.f32 %v4279, %v785
        %v4638 = vmul.f32 %v4284, %v785
        %v4639 = vmul.f32 %v4289, %v785
        %v4640 = vmul.f32 %v4294, %v785
        %v4641 = vmul.f32 %v4299, %v785
        %v4642 = vmul.f32 %v4304, %v785
        %v4643 = vmul.f32 %v4309, %v785
        %v4644 = vmul.f32 %v4314, %v785
        %v4645 = vmul.f32 %v4319, %v785
        %v4646 = vadd.f32 %v4628, %v4637
        %v4647 = vadd.f32 %v4629, %v4638
        %v4648 = vadd.f32 %v4630, %v4639
        %v4649 = vadd.f32 %v4631, %v4640
        %v4650 = vadd.f32 %v4632, %v4641
        %v4651 = vadd.f32 %v4633, %v4642
        %v4652 = vadd.f32 %v4634, %v4643
        %v4653 = vadd.f32 %v4635, %v4644
        %v4654 = vadd.f32 %v4636, %v4645
        %v4655 = vmul.f32 %v3827, %v864
        %v4656 = vmul.f32 %v3832, %v864
        %v4657 = vmul.f32 %v3837, %v864
        %v4658 = vmul.f32 %v3842, %v864
        %v4659 = vmul.f32 %v3847, %v864
        %v4660 = vmul.f32 %v3852, %v864
        %v4661 = vmul.f32 %v3857, %v864
        %v4662 = vmul.f32 %v3862, %v864
        %v4663 = vmul.f32 %v3867, %v864
        %v4664 = vadd.f32 %v4646, %v4655
        %v4665 = vadd.f32 %v4647, %v4656
        %v4666 = vadd.f32 %v4648, %v4657
        %v4667 = vadd.f32 %v4649, %v4658
        %v4668 = vadd.f32 %v4650, %v4659
        %v4669 = vadd.f32 %v4651, %v4660
        %v4670 = vadd.f32 %v4652, %v4661
        %v4671 = vadd.f32 %v4653, %v4662
        %v4672 = vadd.f32 %v4654, %v4663
        %v4673 = vmul.f32 %v4044, %v943
        %v4674 = vmul.f32 %v4049, %v943
        %v4675 = vmul.f32 %v4054, %v943
        %v4676 = vmul.f32 %v4059, %v943
        %v4677 = vmul.f32 %v4064, %v943
        %v4678 = vmul.f32 %v4069, %v943
        %v4679 = vmul.f32 %v4074, %v943
        %v4680 = vmul.f32 %v4079, %v943
        %v4681 = vmul.f32 %v4084, %v943
        %v4682 = vadd.f32 %v4664, %v4673
        %v4683 = vadd.f32 %v4665, %v4674
        %v4684 = vadd.f32 %v4666, %v4675
        %v4685 = vadd.f32 %v4667, %v4676
        %v4686 = vadd.f32 %v4668, %v4677
        %v4687 = vadd.f32 %v4669, %v4678
        %v4688 = vadd.f32 %v4670, %v4679
        %v4689 = vadd.f32 %v4671, %v4680
        %v4690 = vadd.f32 %v4672, %v4681
        %s4691 = scalar_lea.vmem %s330, 552
        %v4692 = vld [vmem:[%s4691] sm:$0xff]
        %v4693 = vld [vmem:[%s4691 + $0x8] sm:$0xff]
        %v4694 = vld [vmem:[%s4691 + $0x10] sm:$0xff]
        %v4695 = vld [vmem:[%s4691 + $0x20] sm:$0xff]
        %v4696 = vld [vmem:[%s4691 + $0x28] sm:$0xff]
        %v4697 = vld [vmem:[%s4691 + $0x30] sm:$0xff]
        %v4698 = vld [vmem:[%s4691 + $0x40] sm:$0xff]
        %v4699 = vld [vmem:[%s4691 + $0x48] sm:$0xff]
        %v4700 = vld [vmem:[%s4691 + $0x50] sm:$0xff]
        %4702 = vset.pattern.permute.xlu0 0
        %4703 = vperm.xlu0 %4702, %v4692
        %v4704 = vpop.permute.xlu0 %4703
        %4707 = vset.pattern.permute.xlu0 0
        %4708 = vperm.xlu0 %4707, %v4693
        %v4709 = vpop.permute.xlu0 %4708
        %4712 = vset.pattern.permute.xlu0 0
        %4713 = vperm.xlu0 %4712, %v4694
        %v4714 = vpop.permute.xlu0 %4713
        %4717 = vset.pattern.permute.xlu0 0
        %4718 = vperm.xlu0 %4717, %v4695
        %v4719 = vpop.permute.xlu0 %4718
        %4722 = vset.pattern.permute.xlu0 0
        %4723 = vperm.xlu0 %4722, %v4696
        %v4724 = vpop.permute.xlu0 %4723
        %4727 = vset.pattern.permute.xlu0 0
        %4728 = vperm.xlu0 %4727, %v4697
        %v4729 = vpop.permute.xlu0 %4728
        %4732 = vset.pattern.permute.xlu0 0
        %4733 = vperm.xlu0 %4732, %v4698
        %v4734 = vpop.permute.xlu0 %4733
        %4737 = vset.pattern.permute.xlu0 0
        %4738 = vperm.xlu0 %4737, %v4699
        %v4739 = vpop.permute.xlu0 %4738
        %4742 = vset.pattern.permute.xlu0 0
        %4743 = vperm.xlu0 %4742, %v4700
        %v4744 = vpop.permute.xlu0 %4743
        %v4746 = vmul.f32 %v4704, %v1022
        %v4747 = vmul.f32 %v4709, %v1022
        %v4748 = vmul.f32 %v4714, %v1022
        %v4749 = vmul.f32 %v4719, %v1022
        %v4750 = vmul.f32 %v4724, %v1022
        %v4751 = vmul.f32 %v4729, %v1022
        %v4752 = vmul.f32 %v4734, %v1022
        %v4753 = vmul.f32 %v4739, %v1022
        %v4754 = vmul.f32 %v4744, %v1022
        %v4755 = vadd.f32 %v4682, %v4746
        %v4756 = vadd.f32 %v4683, %v4747
        %v4757 = vadd.f32 %v4684, %v4748
        %v4758 = vadd.f32 %v4685, %v4749
        %v4759 = vadd.f32 %v4686, %v4750
        %v4760 = vadd.f32 %v4687, %v4751
        %v4761 = vadd.f32 %v4688, %v4752
        %v4762 = vadd.f32 %v4689, %v4753
        %v4763 = vadd.f32 %v4690, %v4754
        %v4764 = vmax.f32 %v4547, %v4755
        %v4765 = vmax.f32 %v4548, %v4756
        %v4766 = vmax.f32 %v4549, %v4757
        %v4767 = vmax.f32 %v4550, %v4758
        %v4768 = vmax.f32 %v4551, %v4759
        %v4769 = vmax.f32 %v4552, %v4760
        %v4770 = vmax.f32 %v4553, %v4761
        %v4771 = vmax.f32 %v4554, %v4762
        %v4772 = vmax.f32 %v4555, %v4763
        %v4773 = vmul.f32 %v1844, %v399
        %v4774 = vmul.f32 %v1849, %v399
        %v4775 = vmul.f32 %v1854, %v399
        %v4776 = vmul.f32 %v1859, %v399
        %v4777 = vmul.f32 %v1864, %v399
        %v4778 = vmul.f32 %v1869, %v399
        %v4779 = vmul.f32 %v1874, %v399
        %v4780 = vmul.f32 %v1879, %v399
        %v4781 = vmul.f32 %v1884, %v399
        %v4782 = vmul.f32 %v2730, %v469
        %v4783 = vmul.f32 %v2735, %v469
        %v4784 = vmul.f32 %v2740, %v469
        %v4785 = vmul.f32 %v2745, %v469
        %v4786 = vmul.f32 %v2750, %v469
        %v4787 = vmul.f32 %v2755, %v469
        %v4788 = vmul.f32 %v2760, %v469
        %v4789 = vmul.f32 %v2765, %v469
        %v4790 = vmul.f32 %v2770, %v469
        %v4791 = vadd.f32 %v4773, %v4782
        %v4792 = vadd.f32 %v4774, %v4783
        %v4793 = vadd.f32 %v4775, %v4784
        %v4794 = vadd.f32 %v4776, %v4785
        %v4795 = vadd.f32 %v4777, %v4786
        %v4796 = vadd.f32 %v4778, %v4787
        %v4797 = vadd.f32 %v4779, %v4788
        %v4798 = vadd.f32 %v4780, %v4789
        %v4799 = vadd.f32 %v4781, %v4790
        %v4800 = vmul.f32 %v2947, %v548
        %v4801 = vmul.f32 %v2952, %v548
        %v4802 = vmul.f32 %v2957, %v548
        %v4803 = vmul.f32 %v2962, %v548
        %v4804 = vmul.f32 %v2967, %v548
        %v4805 = vmul.f32 %v2972, %v548
        %v4806 = vmul.f32 %v2977, %v548
        %v4807 = vmul.f32 %v2982, %v548
        %v4808 = vmul.f32 %v2987, %v548
        %v4809 = vadd.f32 %v4791, %v4800
        %v4810 = vadd.f32 %v4792, %v4801
        %v4811 = vadd.f32 %v4793, %v4802
        %v4812 = vadd.f32 %v4794, %v4803
        %v4813 = vadd.f32 %v4795, %v4804
        %v4814 = vadd.f32 %v4796, %v4805
        %v4815 = vadd.f32 %v4797, %v4806
        %v4816 = vadd.f32 %v4798, %v4807
        %v4817 = vadd.f32 %v4799, %v4808
        %v4818 = vmul.f32 %v3500, %v627
        %v4819 = vmul.f32 %v3505, %v627
        %v4820 = vmul.f32 %v3510, %v627
        %v4821 = vmul.f32 %v3515, %v627
        %v4822 = vmul.f32 %v3520, %v627
        %v4823 = vmul.f32 %v3525, %v627
        %v4824 = vmul.f32 %v3530, %v627
        %v4825 = vmul.f32 %v3535, %v627
        %v4826 = vmul.f32 %v3540, %v627
        %v4827 = vadd.f32 %v4809, %v4818
        %v4828 = vadd.f32 %v4810, %v4819
        %v4829 = vadd.f32 %v4811, %v4820
        %v4830 = vadd.f32 %v4812, %v4821
        %v4831 = vadd.f32 %v4813, %v4822
        %v4832 = vadd.f32 %v4814, %v4823
        %v4833 = vadd.f32 %v4815, %v4824
        %v4834 = vadd.f32 %v4816, %v4825
        %v4835 = vadd.f32 %v4817, %v4826
        %v4836 = vmul.f32 %v4279, %v706
        %v4837 = vmul.f32 %v4284, %v706
        %v4838 = vmul.f32 %v4289, %v706
        %v4839 = vmul.f32 %v4294, %v706
        %v4840 = vmul.f32 %v4299, %v706
        %v4841 = vmul.f32 %v4304, %v706
        %v4842 = vmul.f32 %v4309, %v706
        %v4843 = vmul.f32 %v4314, %v706
        %v4844 = vmul.f32 %v4319, %v706
        %v4845 = vadd.f32 %v4827, %v4836
        %v4846 = vadd.f32 %v4828, %v4837
        %v4847 = vadd.f32 %v4829, %v4838
        %v4848 = vadd.f32 %v4830, %v4839
        %v4849 = vadd.f32 %v4831, %v4840
        %v4850 = vadd.f32 %v4832, %v4841
        %v4851 = vadd.f32 %v4833, %v4842
        %v4852 = vadd.f32 %v4834, %v4843
        %v4853 = vadd.f32 %v4835, %v4844
        %v4854 = vmul.f32 %v4487, %v785
        %v4855 = vmul.f32 %v4492, %v785
        %v4856 = vmul.f32 %v4497, %v785
        %v4857 = vmul.f32 %v4502, %v785
        %v4858 = vmul.f32 %v4507, %v785
        %v4859 = vmul.f32 %v4512, %v785
        %v4860 = vmul.f32 %v4517, %v785
        %v4861 = vmul.f32 %v4522, %v785
        %v4862 = vmul.f32 %v4527, %v785
        %v4863 = vadd.f32 %v4845, %v4854
        %v4864 = vadd.f32 %v4846, %v4855
        %v4865 = vadd.f32 %v4847, %v4856
        %v4866 = vadd.f32 %v4848, %v4857
        %v4867 = vadd.f32 %v4849, %v4858
        %v4868 = vadd.f32 %v4850, %v4859
        %v4869 = vadd.f32 %v4851, %v4860
        %v4870 = vadd.f32 %v4852, %v4861
        %v4871 = vadd.f32 %v4853, %v4862
        %v4872 = vmul.f32 %v4044, %v864
        %v4873 = vmul.f32 %v4049, %v864
        %v4874 = vmul.f32 %v4054, %v864
        %v4875 = vmul.f32 %v4059, %v864
        %v4876 = vmul.f32 %v4064, %v864
        %v4877 = vmul.f32 %v4069, %v864
        %v4878 = vmul.f32 %v4074, %v864
        %v4879 = vmul.f32 %v4079, %v864
        %v4880 = vmul.f32 %v4084, %v864
        %v4881 = vadd.f32 %v4863, %v4872
        %v4882 = vadd.f32 %v4864, %v4873
        %v4883 = vadd.f32 %v4865, %v4874
        %v4884 = vadd.f32 %v4866, %v4875
        %v4885 = vadd.f32 %v4867, %v4876
        %v4886 = vadd.f32 %v4868, %v4877
        %v4887 = vadd.f32 %v4869, %v4878
        %v4888 = vadd.f32 %v4870, %v4879
        %v4889 = vadd.f32 %v4871, %v4880
        %v4890 = vmul.f32 %v4704, %v943
        %v4891 = vmul.f32 %v4709, %v943
        %v4892 = vmul.f32 %v4714, %v943
        %v4893 = vmul.f32 %v4719, %v943
        %v4894 = vmul.f32 %v4724, %v943
        %v4895 = vmul.f32 %v4729, %v943
        %v4896 = vmul.f32 %v4734, %v943
        %v4897 = vmul.f32 %v4739, %v943
        %v4898 = vmul.f32 %v4744, %v943
        %v4899 = vadd.f32 %v4881, %v4890
        %v4900 = vadd.f32 %v4882, %v4891
        %v4901 = vadd.f32 %v4883, %v4892
        %v4902 = vadd.f32 %v4884, %v4893
        %v4903 = vadd.f32 %v4885, %v4894
        %v4904 = vadd.f32 %v4886, %v4895
        %v4905 = vadd.f32 %v4887, %v4896
        %v4906 = vadd.f32 %v4888, %v4897
        %v4907 = vadd.f32 %v4889, %v4898
        %s4908 = scalar_lea.vmem %s330, 680
        %v4909 = vld [vmem:[%s4908] sm:$0xff]
        %v4910 = vld [vmem:[%s4908 + $0x8] sm:$0xff]
        %v4911 = vld [vmem:[%s4908 + $0x10] sm:$0xff]
        %v4912 = vld [vmem:[%s4908 + $0x20] sm:$0xff]
        %v4913 = vld [vmem:[%s4908 + $0x28] sm:$0xff]
        %v4914 = vld [vmem:[%s4908 + $0x30] sm:$0xff]
        %v4915 = vld [vmem:[%s4908 + $0x40] sm:$0xff]
        %v4916 = vld [vmem:[%s4908 + $0x48] sm:$0xff]
        %v4917 = vld [vmem:[%s4908 + $0x50] sm:$0xff]
        %4919 = vset.pattern.permute.xlu0 0
        %4920 = vperm.xlu0 %4919, %v4909
        %v4921 = vpop.permute.xlu0 %4920
        %4924 = vset.pattern.permute.xlu0 0
        %4925 = vperm.xlu0 %4924, %v4910
        %v4926 = vpop.permute.xlu0 %4925
        %4929 = vset.pattern.permute.xlu0 0
        %4930 = vperm.xlu0 %4929, %v4911
        %v4931 = vpop.permute.xlu0 %4930
        %4934 = vset.pattern.permute.xlu0 0
        %4935 = vperm.xlu0 %4934, %v4912
        %v4936 = vpop.permute.xlu0 %4935
        %4939 = vset.pattern.permute.xlu0 0
        %4940 = vperm.xlu0 %4939, %v4913
        %v4941 = vpop.permute.xlu0 %4940
        %4944 = vset.pattern.permute.xlu0 0
        %4945 = vperm.xlu0 %4944, %v4914
        %v4946 = vpop.permute.xlu0 %4945
        %4949 = vset.pattern.permute.xlu0 0
        %4950 = vperm.xlu0 %4949, %v4915
        %v4951 = vpop.permute.xlu0 %4950
        %4954 = vset.pattern.permute.xlu0 0
        %4955 = vperm.xlu0 %4954, %v4916
        %v4956 = vpop.permute.xlu0 %4955
        %4959 = vset.pattern.permute.xlu0 0
        %4960 = vperm.xlu0 %4959, %v4917
        %v4961 = vpop.permute.xlu0 %4960
        %v4963 = vmul.f32 %v4921, %v1022
        %v4964 = vmul.f32 %v4926, %v1022
        %v4965 = vmul.f32 %v4931, %v1022
        %v4966 = vmul.f32 %v4936, %v1022
        %v4967 = vmul.f32 %v4941, %v1022
        %v4968 = vmul.f32 %v4946, %v1022
        %v4969 = vmul.f32 %v4951, %v1022
        %v4970 = vmul.f32 %v4956, %v1022
        %v4971 = vmul.f32 %v4961, %v1022
        %v4972 = vadd.f32 %v4899, %v4963
        %v4973 = vadd.f32 %v4900, %v4964
        %v4974 = vadd.f32 %v4901, %v4965
        %v4975 = vadd.f32 %v4902, %v4966
        %v4976 = vadd.f32 %v4903, %v4967
        %v4977 = vadd.f32 %v4904, %v4968
        %v4978 = vadd.f32 %v4905, %v4969
        %v4979 = vadd.f32 %v4906, %v4970
        %v4980 = vadd.f32 %v4907, %v4971
        %v4981 = vmax.f32 %v4764, %v4972
        %v4982 = vmax.f32 %v4765, %v4973
        %v4983 = vmax.f32 %v4766, %v4974
        %v4984 = vmax.f32 %v4767, %v4975
        %v4985 = vmax.f32 %v4768, %v4976
        %v4986 = vmax.f32 %v4769, %v4977
        %v4987 = vmax.f32 %v4770, %v4978
        %v4988 = vmax.f32 %v4771, %v4979
        %v4989 = vmax.f32 %v4772, %v4980
        %v4990 = vadd.f32 %v4981, %v1917
        %v4991 = vadd.f32 %v4982, %v1917
        %v4992 = vadd.f32 %v4983, %v1917
        %v4993 = vadd.f32 %v4984, %v1917
        %v4994 = vadd.f32 %v4985, %v1917
        %v4995 = vadd.f32 %v4986, %v1917
        %v4996 = vadd.f32 %v4987, %v1917
        %v4997 = vadd.f32 %v4988, %v1917
        %v4998 = vadd.f32 %v4989, %v1917
        %v4999 = vmax.f32 %v4990, 0.0
        %v5000 = vmax.f32 %v4991, 0.0
        %v5001 = vmax.f32 %v4992, 0.0
        %v5002 = vmax.f32 %v4993, 0.0
        %v5003 = vmax.f32 %v4994, 0.0
        %v5004 = vmax.f32 %v4995, 0.0
        %v5005 = vmax.f32 %v4996, 0.0
        %v5006 = vmax.f32 %v4997, 0.0
        %v5007 = vmax.f32 %v4998, 0.0
        %v5008 = vld [vmem:[%s3] sm:$0xff]
        %v5009 = vld [vmem:[%s3 + $0x8] sm:$0xff]
        %v5010 = vld [vmem:[%s3 + $0x10] sm:$0xff]
        %v5011 = vld [vmem:[%s3 + $0x18] sm:$0xff]
        %v5012 = vld [vmem:[%s3 + $0x20] sm:$0xff]
        %v5013 = vld [vmem:[%s3 + $0x28] sm:$0xff]
        %v5014 = vld [vmem:[%s3 + $0x30] sm:$0xff]
        %v5015 = vld [vmem:[%s3 + $0x38] sm:$0xff]
        %v5016 = vld [vmem:[%s3 + $0x40] sm:$0xff]
        %v5017 = vld [vmem:[%s3 + $0x48] sm:$0xff]
        %v5018 = vld [vmem:[%s3 + $0x50] sm:$0xff]
        %v5019 = vld [vmem:[%s3 + $0x58] sm:$0xff]
        %v5020 = vld [vmem:[%s3 + $0x60] sm:$0xff]
        %v5021 = vld [vmem:[%s3 + $0x68] sm:$0xff]
        %v5022 = vld [vmem:[%s3 + $0x70] sm:$0xff]
        %v5023 = vld [vmem:[%s3 + $0x78] sm:$0xff]
        %v5024 = vld [vmem:[%s3 + $0x80] sm:$0xff]
        %v5025 = vld [vmem:[%s3 + $0x88] sm:$0xff]
        %v5026 = vld [vmem:[%s3 + $0x90] sm:$0xff]
        %v5027 = vld [vmem:[%s3 + $0x98] sm:$0xff]
        %v5028 = vld [vmem:[%s3 + $0xa0] sm:$0xff]
        %v5029 = vld [vmem:[%s3 + $0xa8] sm:$0xff]
        %v5030 = vld [vmem:[%s3 + $0xb0] sm:$0xff]
        %v5031 = vld [vmem:[%s3 + $0xb8] sm:$0xff]
        %v5032 = vld [vmem:[%s3 + $0xc0] sm:$0xff]
        %v5033 = vld [vmem:[%s3 + $0xc8] sm:$0xff]
        %v5034 = vld [vmem:[%s3 + $0xd0] sm:$0xff]
        %v5035 = vld [vmem:[%s3 + $0xd8] sm:$0xff]
        %v5036 = vld [vmem:[%s3 + $0xe0] sm:$0xff]
        %v5037 = vld [vmem:[%s3 + $0xe8] sm:$0xff]
        %v5038 = vld [vmem:[%s3 + $0xf0] sm:$0xff]
        %v5039 = vld [vmem:[%s3 + $0xf8] sm:$0xff]
        %v5040 = vld [vmem:[%s3 + $0x100] sm:$0xff]
        %v5041 = vld [vmem:[%s3 + $0x108] sm:$0xff]
        %v5042 = vld [vmem:[%s3 + $0x110] sm:$0xff]
        %v5043 = vld [vmem:[%s3 + $0x118] sm:$0xff]
        %vm5044 = vcmask 261120
        %v5046 = vsel %vm5044, %v3025, 0
        %v5049 = vsel %vm5044, %v3026, 0
        %v5052 = vsel %vm5044, %v3028, 0
        %v5055 = vsel %vm5044, %v3029, 0
        %v5058 = vsel %vm5044, %v1929, 0
        %v5061 = vsel %vm5044, %v1930, 0
        %v5064 = vsel %vm5044, %v1932, 0
        %v5067 = vsel %vm5044, %v1933, 0
        %v5070 = vsel %vm5044, %v4999, 0
        %v5073 = vsel %vm5044, %v5000, 0
        %v5076 = vsel %vm5044, %v5002, 0
        %v5079 = vsel %vm5044, %v5003, 0
        %v5082 = vsel %vm5044, %v4123, 0
        %v5085 = vsel %vm5044, %v4124, 0
        %v5088 = vsel %vm5044, %v4126, 0
        %v5091 = vsel %vm5044, %v4127, 0
        %5093 = vmatprep.subr.mxu0 0.0
        %5094 = vmatpush1.msra.mxu0 %v5012
        %5095 = vmatprep.subr.mxu0 0.0
        %5096 = vmatpush1.msra.mxu0 %v5013
        %5097 = vmatprep.subr.mxu0 0.0
        %5098 = vmatpush1.msra.mxu0 %v5014
        %5099 = vmatprep.subr.mxu0 0.0
        %5100 = vmatpush1.msra.mxu0 %v5015
        %5101 = vmatprep.subr.mxu0 0.0
        %5102 = vmatpush1.msra.mxu0 0.0
        %5103 = vmatprep.subr.mxu0 0.0
        %5104 = vmatpush1.msra.mxu0 0.0
        %5105 = vmatprep.subr.mxu0 0.0
        %5106 = vmatpush1.msra.mxu0 0.0
        %5107 = vmatprep.subr.mxu0 0.0
        %5108 = vmatpush1.msra.mxu0 0.0
        %5109 = vmatprep.subr.mxu0 0.0
        %5110 = vmatpush1.msra.mxu0 0.0
        %5111 = vmatprep.subr.mxu0 0.0
        %5112 = vmatpush1.msra.mxu0 0.0
        %5113 = vmatprep.subr.mxu0 0.0
        %5114 = vmatpush1.msra.mxu0 0.0
        %5115 = vmatprep.subr.mxu0 0.0
        %5116 = vmatpush1.msra.mxu0 0.0
        %5117 = vmatprep.subr.mxu0 0.0
        %5118 = vmatpush1.msra.mxu0 0.0
        %5119 = vmatprep.subr.mxu0 0.0
        %5120 = vmatpush1.msra.mxu0 0.0
        %5121 = vmatprep.subr.mxu0 0.0
        %5122 = vmatpush1.msra.mxu0 0.0
        %5123 = vmatprep.subr.mxu0 0.0
        %5124 = vmatpush1.msra.mxu0 0.0
        %5125 = vmatprep.subr.mxu0 0.0
        %5126 = vmatpush1.msra.mxu0 0.0
        %5127 = vmatprep.subr.mxu0 0.0
        %5128 = vmatpush1.msra.mxu0 0.0
        %5129 = vmatprep.subr.mxu0 0.0
        %5130 = vmatpush1.msra.mxu0 0.0
        %5131 = vmatprep.subr.mxu0 0.0
        %5132 = vmatpush1.msra.mxu0 0.0
        %5133 = vmatprep.subr.mxu0 0.0
        %5134 = vmatpush1.msra.mxu0 0.0
        %5135 = vmatprep.subr.mxu0 0.0
        %5136 = vmatpush1.msra.mxu0 0.0
        %5137 = vmatprep.subr.mxu0 0.0
        %5138 = vmatpush1.msra.mxu0 0.0
        %5139 = vmatprep.subr.mxu0 0.0
        %5140 = vmatpush1.msra.mxu0 0.0
        %5141 = vmatprep.subr.mxu0 0.0
        %5142 = vmatpush1.msra.mxu0 0.0
        %5143 = vmatprep.subr.mxu0 0.0
        %5144 = vmatpush1.msra.mxu0 0.0
        %5145 = vmatprep.subr.mxu0 0.0
        %5146 = vmatpush1.msra.mxu0 0.0
        %5147 = vmatprep.subr.mxu0 0.0
        %5148 = vmatpush1.msra.mxu0 0.0
        %5149 = vmatprep.subr.mxu0 0.0
        %5150 = vmatpush1.msra.mxu0 0.0
        %5151 = vmatprep.subr.mxu0 0.0
        %5152 = vmatpush1.msra.mxu0 0.0
        %5153 = vmatprep.subr.mxu0 0.0
        %5154 = vmatpush1.msra.mxu0 0.0
        %5155 = vmatprep.subr.mxu0 0.0
        %5156 = vmatpush1.msra.mxu0 0.0
        %5157 = vmatprep.mubr.f32.mxu0 0.0
        %5158 = vmatmul.mubr.f32.gmra.mrb[0].mxu0 %v5046
        %v5159 = vpop.f32.mrb[0].mxu0
        %v5160 = vadd.f32 0.0, %v5159
        %v5161 = vpop.f32.mrb[0].mxu0
        %5162 = vmatprep.mubr.f32.mxu0 0.0
        %5163 = vmatmul.mubr.f32.gmra.mrb[0].mxu0 %v5049
        %v5164 = vpop.f32.mrb[0].mxu0
        %v5165 = vadd.f32 0.0, %v5164
        %v5166 = vpop.f32.mrb[0].mxu0
        %5167 = vmatprep.mubr.f32.mxu0 0.0
        %5168 = vmatmul.mubr.f32.gmra.mrb[0].mxu0 %v5052
        %v5169 = vpop.f32.mrb[0].mxu0
        %v5170 = vadd.f32 0.0, %v5169
        %v5171 = vpop.f32.mrb[0].mxu0
        %5172 = vmatprep.mubr.f32.mxu0 0.0
        %5173 = vmatmul.mubr.f32.gmra.mrb[0].mxu0 %v5055
        %v5174 = vpop.f32.mrb[0].mxu0
        %v5175 = vadd.f32 0.0, %v5174
        %v5176 = vpop.f32.mrb[0].mxu0
        %5177 = vmatprep.mubr.f32.mxu0 0.0
        %5178 = vmatmul.mubr.f32.gmra.mrb[0].mxu0 %v5058
        %v5179 = vpop.f32.mrb[0].mxu0
        %v5180 = vadd.f32 0.0, %v5179
        %v5181 = vpop.f32.mrb[0].mxu0
        %5182 = vmatprep.mubr.f32.mxu0 0.0
        %5183 = vmatmul.mubr.f32.gmra.mrb[0].mxu0 %v5061
        %v5184 = vpop.f32.mrb[0].mxu0
        %v5185 = vadd.f32 0.0, %v5184
        %v5186 = vpop.f32.mrb[0].mxu0
        %5187 = vmatprep.mubr.f32.mxu0 0.0
        %5188 = vmatmul.mubr.f32.gmra.mrb[0].mxu0 %v5064
        %v5189 = vpop.f32.mrb[0].mxu0
        %v5190 = vadd.f32 0.0, %v5189
        %v5191 = vpop.f32.mrb[0].mxu0
        %5192 = vmatprep.mubr.f32.mxu0 0.0
        %5193 = vmatmul.mubr.f32.gmra.mrb[0].mxu0 %v5067
        %v5194 = vpop.f32.mrb[0].mxu0
        %v5195 = vadd.f32 0.0, %v5194
        %v5196 = vpop.f32.mrb[0].mxu0
        %5197 = vmatprep.mubr.f32.mxu0 0.0
        %5198 = vmatmul.mubr.f32.gmra.mrb[0].mxu0 %v5070
        %v5199 = vpop.f32.mrb[0].mxu0
        %v5200 = vadd.f32 0.0, %v5199
        %v5201 = vpop.f32.mrb[0].mxu0
        %5202 = vmatprep.mubr.f32.mxu0 0.0
        %5203 = vmatmul.mubr.f32.gmra.mrb[0].mxu0 %v5073
        %v5204 = vpop.f32.mrb[0].mxu0
        %v5205 = vadd.f32 0.0, %v5204
        %v5206 = vpop.f32.mrb[0].mxu0
        %5207 = vmatprep.mubr.f32.mxu0 0.0
        %5208 = vmatmul.mubr.f32.gmra.mrb[0].mxu0 %v5076
        %v5209 = vpop.f32.mrb[0].mxu0
        %v5210 = vadd.f32 0.0, %v5209
        %v5211 = vpop.f32.mrb[0].mxu0
        %5212 = vmatprep.mubr.f32.mxu0 0.0
        %5213 = vmatmul.mubr.f32.gmra.mrb[0].mxu0 %v5079
        %v5214 = vpop.f32.mrb[0].mxu0
        %v5215 = vadd.f32 0.0, %v5214
        %v5216 = vpop.f32.mrb[0].mxu0
        %5217 = vmatprep.mubr.f32.mxu0 0.0
        %5218 = vmatmul.mubr.f32.gmra.mrb[0].mxu0 %v5082
        %v5219 = vpop.f32.mrb[0].mxu0
        %v5220 = vadd.f32 0.0, %v5219
        %v5221 = vpop.f32.mrb[0].mxu0
        %5222 = vmatprep.mubr.f32.mxu0 0.0
        %5223 = vmatmul.mubr.f32.gmra.mrb[0].mxu0 %v5085
        %v5224 = vpop.f32.mrb[0].mxu0
        %v5225 = vadd.f32 0.0, %v5224
        %v5226 = vpop.f32.mrb[0].mxu0
        %5227 = vmatprep.mubr.f32.mxu0 0.0
        %5228 = vmatmul.mubr.f32.gmra.mrb[0].mxu0 %v5088
        %v5229 = vpop.f32.mrb[0].mxu0
        %v5230 = vadd.f32 0.0, %v5229
        %v5231 = vpop.f32.mrb[0].mxu0
        %5232 = vmatprep.mubr.f32.mxu0 0.0
        %5233 = vmatmul.mubr.f32.gmra.mrb[0].mxu0 %v5091
        %v5234 = vpop.f32.mrb[0].mxu0
        %v5235 = vadd.f32 0.0, %v5234
        %v5236 = vpop.f32.mrb[0].mxu0
        %5237 = vdwg.mxu0
        %v5239 = vsel %vm5044, %v1928, 0
        %v5242 = vsel %vm5044, %v1931, 0
        %v5245 = vsel %vm5044, %v4122, 0
        %v5248 = vsel %vm5044, %v4125, 0
        %5250 = vmatprep.subr.mxu0 0.0
        %5251 = vmatpush1.msra.mxu0 %v5008
        %5252 = vmatprep.subr.mxu0 0.0
        %5253 = vmatpush1.msra.mxu0 %v5009
        %5254 = vmatprep.subr.mxu0 0.0
        %5255 = vmatpush1.msra.mxu0 %v5010
        %5256 = vmatprep.subr.mxu0 0.0
        %5257 = vmatpush1.msra.mxu0 %v5011
        %5258 = vmatprep.subr.mxu0 0.0
        %5259 = vmatpush1.msra.mxu0 0.0
        %5260 = vmatprep.subr.mxu0 0.0
        %5261 = vmatpush1.msra.mxu0 0.0
        %5262 = vmatprep.subr.mxu0 0.0
        %5263 = vmatpush1.msra.mxu0 0.0
        %5264 = vmatprep.subr.mxu0 0.0
        %5265 = vmatpush1.msra.mxu0 0.0
        %5266 = vmatprep.subr.mxu0 0.0
        %5267 = vmatpush1.msra.mxu0 0.0
        %5268 = vmatprep.subr.mxu0 0.0
        %5269 = vmatpush1.msra.mxu0 0.0
        %5270 = vmatprep.subr.mxu0 0.0
        %5271 = vmatpush1.msra.mxu0 0.0
        %5272 = vmatprep.subr.mxu0 0.0
        %5273 = vmatpush1.msra.mxu0 0.0
        %5274 = vmatprep.subr.mxu0 0.0
        %5275 = vmatpush1.msra.mxu0 0.0
        %5276 = vmatprep.subr.mxu0 0.0
        %5277 = vmatpush1.msra.mxu0 0.0
        %5278 = vmatprep.subr.mxu0 0.0
        %5279 = vmatpush1.msra.mxu0 0.0
        %5280 = vmatprep.subr.mxu0 0.0
        %5281 = vmatpush1.msra.mxu0 0.0
        %5282 = vmatprep.subr.mxu0 0.0
        %5283 = vmatpush1.msra.mxu0 0.0
        %5284 = vmatprep.subr.mxu0 0.0
        %5285 = vmatpush1.msra.mxu0 0.0
        %5286 = vmatprep.subr.mxu0 0.0
        %5287 = vmatpush1.msra.mxu0 0.0
        %5288 = vmatprep.subr.mxu0 0.0
        %5289 = vmatpush1.msra.mxu0 0.0
        %5290 = vmatprep.subr.mxu0 0.0
        %5291 = vmatpush1.msra.mxu0 0.0
        %5292 = vmatprep.subr.mxu0 0.0
        %5293 = vmatpush1.msra.mxu0 0.0
        %5294 = vmatprep.subr.mxu0 0.0
        %5295 = vmatpush1.msra.mxu0 0.0
        %5296 = vmatprep.subr.mxu0 0.0
        %5297 = vmatpush1.msra.mxu0 0.0
        %5298 = vmatprep.subr.mxu0 0.0
        %5299 = vmatpush1.msra.mxu0 0.0
        %5300 = vmatprep.subr.mxu0 0.0
        %5301 = vmatpush1.msra.mxu0 0.0
        %5302 = vmatprep.subr.mxu0 0.0
        %5303 = vmatpush1.msra.mxu0 0.0
        %5304 = vmatprep.subr.mxu0 0.0
        %5305 = vmatpush1.msra.mxu0 0.0
        %5306 = vmatprep.subr.mxu0 0.0
        %5307 = vmatpush1.msra.mxu0 0.0
        %5308 = vmatprep.subr.mxu0 0.0
        %5309 = vmatpush1.msra.mxu0 0.0
        %5310 = vmatprep.subr.mxu0 0.0
        %5311 = vmatpush1.msra.mxu0 0.0
        %5312 = vmatprep.subr.mxu0 0.0
        %5313 = vmatpush1.msra.mxu0 0.0
        %5314 = vmatprep.mubr.f32.mxu0 0.0
        %5315 = vmatmul.mubr.f32.gmra.mrb[0].mxu0 %v5239
        %v5316 = vpop.f32.mrb[0].mxu0
        %v5317 = vadd.f32 %v5160, %v5316
        %v5318 = vpop.f32.mrb[0].mxu0
        %5319 = vmatprep.mubr.f32.mxu0 0.0
        %5320 = vmatmul.mubr.f32.gmra.mrb[0].mxu0 %v5058
        %v5321 = vpop.f32.mrb[0].mxu0
        %v5322 = vadd.f32 %v5165, %v5321
        %v5323 = vpop.f32.mrb[0].mxu0
        %5324 = vmatprep.mubr.f32.mxu0 0.0
        %5325 = vmatmul.mubr.f32.gmra.mrb[0].mxu0 %v5242
        %v5326 = vpop.f32.mrb[0].mxu0
        %v5327 = vadd.f32 %v5170, %v5326
        %v5328 = vpop.f32.mrb[0].mxu0
        %5329 = vmatprep.mubr.f32.mxu0 0.0
        %5330 = vmatmul.mubr.f32.gmra.mrb[0].mxu0 %v5064
        %v5331 = vpop.f32.mrb[0].mxu0
        %v5332 = vadd.f32 %v5175, %v5331
        %v5333 = vpop.f32.mrb[0].mxu0
        %5334 = vmatprep.mubr.f32.mxu0 0.0
        %5335 = vmatmul.mubr.f32.gmra.mrb[0].mxu0 %v5046
        %v5336 = vpop.f32.mrb[0].mxu0
        %v5337 = vadd.f32 %v5180, %v5336
        %v5338 = vpop.f32.mrb[0].mxu0
        %5339 = vmatprep.mubr.f32.mxu0 0.0
        %5340 = vmatmul.mubr.f32.gmra.mrb[0].mxu0 %v5049
        %v5341 = vpop.f32.mrb[0].mxu0
        %v5342 = vadd.f32 %v5185, %v5341
        %v5343 = vpop.f32.mrb[0].mxu0
        %5344 = vmatprep.mubr.f32.mxu0 0.0
        %5345 = vmatmul.mubr.f32.gmra.mrb[0].mxu0 %v5052
        %v5346 = vpop.f32.mrb[0].mxu0
        %v5347 = vadd.f32 %v5190, %v5346
        %v5348 = vpop.f32.mrb[0].mxu0
        %5349 = vmatprep.mubr.f32.mxu0 0.0
        %5350 = vmatmul.mubr.f32.gmra.mrb[0].mxu0 %v5055
        %v5351 = vpop.f32.mrb[0].mxu0
        %v5352 = vadd.f32 %v5195, %v5351
        %v5353 = vpop.f32.mrb[0].mxu0
        %5354 = vmatprep.mubr.f32.mxu0 0.0
        %5355 = vmatmul.mubr.f32.gmra.mrb[0].mxu0 %v5245
        %v5356 = vpop.f32.mrb[0].mxu0
        %v5357 = vadd.f32 %v5200, %v5356
        %v5358 = vpop.f32.mrb[0].mxu0
        %5359 = vmatprep.mubr.f32.mxu0 0.0
        %5360 = vmatmul.mubr.f32.gmra.mrb[0].mxu0 %v5082
        %v5361 = vpop.f32.mrb[0].mxu0
        %v5362 = vadd.f32 %v5205, %v5361
        %v5363 = vpop.f32.mrb[0].mxu0
        %5364 = vmatprep.mubr.f32.mxu0 0.0
        %5365 = vmatmul.mubr.f32.gmra.mrb[0].mxu0 %v5248
        %v5366 = vpop.f32.mrb[0].mxu0
        %v5367 = vadd.f32 %v5210, %v5366
        %v5368 = vpop.f32.mrb[0].mxu0
        %5369 = vmatprep.mubr.f32.mxu0 0.0
        %5370 = vmatmul.mubr.f32.gmra.mrb[0].mxu0 %v5088
        %v5371 = vpop.f32.mrb[0].mxu0
        %v5372 = vadd.f32 %v5215, %v5371
        %v5373 = vpop.f32.mrb[0].mxu0
        %5374 = vmatprep.mubr.f32.mxu0 0.0
        %5375 = vmatmul.mubr.f32.gmra.mrb[0].mxu0 %v5070
        %v5376 = vpop.f32.mrb[0].mxu0
        %v5377 = vadd.f32 %v5220, %v5376
        %v5378 = vpop.f32.mrb[0].mxu0
        %5379 = vmatprep.mubr.f32.mxu0 0.0
        %5380 = vmatmul.mubr.f32.gmra.mrb[0].mxu0 %v5073
        %v5381 = vpop.f32.mrb[0].mxu0
        %v5382 = vadd.f32 %v5225, %v5381
        %v5383 = vpop.f32.mrb[0].mxu0
        %5384 = vmatprep.mubr.f32.mxu0 0.0
        %5385 = vmatmul.mubr.f32.gmra.mrb[0].mxu0 %v5076
        %v5386 = vpop.f32.mrb[0].mxu0
        %v5387 = vadd.f32 %v5230, %v5386
        %v5388 = vpop.f32.mrb[0].mxu0
        %5389 = vmatprep.mubr.f32.mxu0 0.0
        %5390 = vmatmul.mubr.f32.gmra.mrb[0].mxu0 %v5079
        %v5391 = vpop.f32.mrb[0].mxu0
        %v5392 = vadd.f32 %v5235, %v5391
        %v5393 = vpop.f32.mrb[0].mxu0
        %5394 = vdwg.mxu0
        %v5396 = vsel %vm5044, %v3027, 0
        %v5399 = vsel %vm5044, %v3030, 0
        %v5402 = vsel %vm5044, %v5001, 0
        %v5405 = vsel %vm5044, %v5004, 0
        %5407 = vmatprep.subr.mxu0 0.0
        %5408 = vmatpush1.msra.mxu0 %v5016
        %5409 = vmatprep.subr.mxu0 0.0
        %5410 = vmatpush1.msra.mxu0 %v5017
        %5411 = vmatprep.subr.mxu0 0.0
        %5412 = vmatpush1.msra.mxu0 %v5018
        %5413 = vmatprep.subr.mxu0 0.0
        %5414 = vmatpush1.msra.mxu0 %v5019
        %5415 = vmatprep.subr.mxu0 0.0
        %5416 = vmatpush1.msra.mxu0 0.0
        %5417 = vmatprep.subr.mxu0 0.0
        %5418 = vmatpush1.msra.mxu0 0.0
        %5419 = vmatprep.subr.mxu0 0.0
        %5420 = vmatpush1.msra.mxu0 0.0
        %5421 = vmatprep.subr.mxu0 0.0
        %5422 = vmatpush1.msra.mxu0 0.0
        %5423 = vmatprep.subr.mxu0 0.0
        %5424 = vmatpush1.msra.mxu0 0.0
        %5425 = vmatprep.subr.mxu0 0.0
        %5426 = vmatpush1.msra.mxu0 0.0
        %5427 = vmatprep.subr.mxu0 0.0
        %5428 = vmatpush1.msra.mxu0 0.0
        %5429 = vmatprep.subr.mxu0 0.0
        %5430 = vmatpush1.msra.mxu0 0.0
        %5431 = vmatprep.subr.mxu0 0.0
        %5432 = vmatpush1.msra.mxu0 0.0
        %5433 = vmatprep.subr.mxu0 0.0
        %5434 = vmatpush1.msra.mxu0 0.0
        %5435 = vmatprep.subr.mxu0 0.0
        %5436 = vmatpush1.msra.mxu0 0.0
        %5437 = vmatprep.subr.mxu0 0.0
        %5438 = vmatpush1.msra.mxu0 0.0
        %5439 = vmatprep.subr.mxu0 0.0
        %5440 = vmatpush1.msra.mxu0 0.0
        %5441 = vmatprep.subr.mxu0 0.0
        %5442 = vmatpush1.msra.mxu0 0.0
        %5443 = vmatprep.subr.mxu0 0.0
        %5444 = vmatpush1.msra.mxu0 0.0
        %5445 = vmatprep.subr.mxu0 0.0
        %5446 = vmatpush1.msra.mxu0 0.0
        %5447 = vmatprep.subr.mxu0 0.0
        %5448 = vmatpush1.msra.mxu0 0.0
        %5449 = vmatprep.subr.mxu0 0.0
        %5450 = vmatpush1.msra.mxu0 0.0
        %5451 = vmatprep.subr.mxu0 0.0
        %5452 = vmatpush1.msra.mxu0 0.0
        %5453 = vmatprep.subr.mxu0 0.0
        %5454 = vmatpush1.msra.mxu0 0.0
        %5455 = vmatprep.subr.mxu0 0.0
        %5456 = vmatpush1.msra.mxu0 0.0
        %5457 = vmatprep.subr.mxu0 0.0
        %5458 = vmatpush1.msra.mxu0 0.0
        %5459 = vmatprep.subr.mxu0 0.0
        %5460 = vmatpush1.msra.mxu0 0.0
        %5461 = vmatprep.subr.mxu0 0.0
        %5462 = vmatpush1.msra.mxu0 0.0
        %5463 = vmatprep.subr.mxu0 0.0
        %5464 = vmatpush1.msra.mxu0 0.0
        %5465 = vmatprep.subr.mxu0 0.0
        %5466 = vmatpush1.msra.mxu0 0.0
        %5467 = vmatprep.subr.mxu0 0.0
        %5468 = vmatpush1.msra.mxu0 0.0
        %5469 = vmatprep.subr.mxu0 0.0
        %5470 = vmatpush1.msra.mxu0 0.0
        %5471 = vmatprep.mubr.f32.mxu0 0.0
        %5472 = vmatmul.mubr.f32.gmra.mrb[0].mxu0 %v5058
        %v5473 = vpop.f32.mrb[0].mxu0
        %v5474 = vadd.f32 0.0, %v5473
        %v5475 = vpop.f32.mrb[0].mxu0
        %5476 = vmatprep.mubr.f32.mxu0 0.0
        %5477 = vmatmul.mubr.f32.gmra.mrb[0].mxu0 %v5061
        %v5478 = vpop.f32.mrb[0].mxu0
        %v5479 = vadd.f32 0.0, %v5478
        %v5480 = vpop.f32.mrb[0].mxu0
        %5481 = vmatprep.mubr.f32.mxu0 0.0
        %5482 = vmatmul.mubr.f32.gmra.mrb[0].mxu0 %v5064
        %v5483 = vpop.f32.mrb[0].mxu0
        %v5484 = vadd.f32 0.0, %v5483
        %v5485 = vpop.f32.mrb[0].mxu0
        %5486 = vmatprep.mubr.f32.mxu0 0.0
        %5487 = vmatmul.mubr.f32.gmra.mrb[0].mxu0 %v5067
        %v5488 = vpop.f32.mrb[0].mxu0
        %v5489 = vadd.f32 0.0, %v5488
        %v5490 = vpop.f32.mrb[0].mxu0
        %5491 = vmatprep.mubr.f32.mxu0 0.0
        %5492 = vmatmul.mubr.f32.gmra.mrb[0].mxu0 %v5049
        %v5493 = vpop.f32.mrb[0].mxu0
        %v5494 = vadd.f32 0.0, %v5493
        %v5495 = vpop.f32.mrb[0].mxu0
        %5496 = vmatprep.mubr.f32.mxu0 0.0
        %5497 = vmatmul.mubr.f32.gmra.mrb[0].mxu0 %v5396
        %v5498 = vpop.f32.mrb[0].mxu0
        %v5499 = vadd.f32 0.0, %v5498
        %v5500 = vpop.f32.mrb[0].mxu0
        %5501 = vmatprep.mubr.f32.mxu0 0.0
        %5502 = vmatmul.mubr.f32.gmra.mrb[0].mxu0 %v5055
        %v5503 = vpop.f32.mrb[0].mxu0
        %v5504 = vadd.f32 0.0, %v5503
        %v5505 = vpop.f32.mrb[0].mxu0
        %5506 = vmatprep.mubr.f32.mxu0 0.0
        %5507 = vmatmul.mubr.f32.gmra.mrb[0].mxu0 %v5399
        %v5508 = vpop.f32.mrb[0].mxu0
        %v5509 = vadd.f32 0.0, %v5508
        %v5510 = vpop.f32.mrb[0].mxu0
        %5511 = vmatprep.mubr.f32.mxu0 0.0
        %5512 = vmatmul.mubr.f32.gmra.mrb[0].mxu0 %v5082
        %v5513 = vpop.f32.mrb[0].mxu0
        %v5514 = vadd.f32 0.0, %v5513
        %v5515 = vpop.f32.mrb[0].mxu0
        %5516 = vmatprep.mubr.f32.mxu0 0.0
        %5517 = vmatmul.mubr.f32.gmra.mrb[0].mxu0 %v5085
        %v5518 = vpop.f32.mrb[0].mxu0
        %v5519 = vadd.f32 0.0, %v5518
        %v5520 = vpop.f32.mrb[0].mxu0
        %5521 = vmatprep.mubr.f32.mxu0 0.0
        %5522 = vmatmul.mubr.f32.gmra.mrb[0].mxu0 %v5088
        %v5523 = vpop.f32.mrb[0].mxu0
        %v5524 = vadd.f32 0.0, %v5523
        %v5525 = vpop.f32.mrb[0].mxu0
        %5526 = vmatprep.mubr.f32.mxu0 0.0
        %5527 = vmatmul.mubr.f32.gmra.mrb[0].mxu0 %v5091
        %v5528 = vpop.f32.mrb[0].mxu0
        %v5529 = vadd.f32 0.0, %v5528
        %v5530 = vpop.f32.mrb[0].mxu0
        %5531 = vmatprep.mubr.f32.mxu0 0.0
        %5532 = vmatmul.mubr.f32.gmra.mrb[0].mxu0 %v5073
        %v5533 = vpop.f32.mrb[0].mxu0
        %v5534 = vadd.f32 0.0, %v5533
        %v5535 = vpop.f32.mrb[0].mxu0
        %5536 = vmatprep.mubr.f32.mxu0 0.0
        %5537 = vmatmul.mubr.f32.gmra.mrb[0].mxu0 %v5402
        %v5538 = vpop.f32.mrb[0].mxu0
        %v5539 = vadd.f32 0.0, %v5538
        %v5540 = vpop.f32.mrb[0].mxu0
        %5541 = vmatprep.mubr.f32.mxu0 0.0
        %5542 = vmatmul.mubr.f32.gmra.mrb[0].mxu0 %v5079
        %v5543 = vpop.f32.mrb[0].mxu0
        %v5544 = vadd.f32 0.0, %v5543
        %v5545 = vpop.f32.mrb[0].mxu0
        %5546 = vmatprep.mubr.f32.mxu0 0.0
        %5547 = vmatmul.mubr.f32.gmra.mrb[0].mxu0 %v5405
        %v5548 = vpop.f32.mrb[0].mxu0
        %v5549 = vadd.f32 0.0, %v5548
        %v5550 = vpop.f32.mrb[0].mxu0
        %5551 = vdwg.mxu0
        %v5552 = vadd.f32 %v5317, %v5474
        %v5553 = vadd.f32 %v5322, %v5479
        %v5554 = vadd.f32 %v5327, %v5484
        %v5555 = vadd.f32 %v5332, %v5489
        %v5556 = vadd.f32 %v5337, %v5494
        %v5557 = vadd.f32 %v5342, %v5499
        %v5558 = vadd.f32 %v5347, %v5504
        %v5559 = vadd.f32 %v5352, %v5509
        %v5560 = vadd.f32 %v5357, %v5514
        %v5561 = vadd.f32 %v5362, %v5519
        %v5562 = vadd.f32 %v5367, %v5524
        %v5563 = vadd.f32 %v5372, %v5529
        %v5564 = vadd.f32 %v5377, %v5534
        %v5565 = vadd.f32 %v5382, %v5539
        %v5566 = vadd.f32 %v5387, %v5544
        %v5567 = vadd.f32 %v5392, %v5549
        %v5569 = vsel %vm5044, %v1934, 0
        %v5572 = vsel %vm5044, %v1935, 0
        %v5575 = vsel %vm5044, %v3031, 0
        %v5578 = vsel %vm5044, %v3032, 0
        %5580 = vmatprep.subr.mxu0 0.0
        %5581 = vmatpush1.msra.mxu0 %v5020
        %5582 = vmatprep.subr.mxu0 0.0
        %5583 = vmatpush1.msra.mxu0 %v5021
        %5584 = vmatprep.subr.mxu0 0.0
        %5585 = vmatpush1.msra.mxu0 %v5022
        %5586 = vmatprep.subr.mxu0 0.0
        %5587 = vmatpush1.msra.mxu0 %v5023
        %5588 = vmatprep.subr.mxu0 0.0
        %5589 = vmatpush1.msra.mxu0 0.0
        %5590 = vmatprep.subr.mxu0 0.0
        %5591 = vmatpush1.msra.mxu0 0.0
        %5592 = vmatprep.subr.mxu0 0.0
        %5593 = vmatpush1.msra.mxu0 0.0
        %5594 = vmatprep.subr.mxu0 0.0
        %5595 = vmatpush1.msra.mxu0 0.0
        %5596 = vmatprep.subr.mxu0 0.0
        %5597 = vmatpush1.msra.mxu0 0.0
        %5598 = vmatprep.subr.mxu0 0.0
        %5599 = vmatpush1.msra.mxu0 0.0
        %5600 = vmatprep.subr.mxu0 0.0
        %5601 = vmatpush1.msra.mxu0 0.0
        %5602 = vmatprep.subr.mxu0 0.0
        %5603 = vmatpush1.msra.mxu0 0.0
        %5604 = vmatprep.subr.mxu0 0.0
        %5605 = vmatpush1.msra.mxu0 0.0
        %5606 = vmatprep.subr.mxu0 0.0
        %5607 = vmatpush1.msra.mxu0 0.0
        %5608 = vmatprep.subr.mxu0 0.0
        %5609 = vmatpush1.msra.mxu0 0.0
        %5610 = vmatprep.subr.mxu0 0.0
        %5611 = vmatpush1.msra.mxu0 0.0
        %5612 = vmatprep.subr.mxu0 0.0
        %5613 = vmatpush1.msra.mxu0 0.0
        %5614 = vmatprep.subr.mxu0 0.0
        %5615 = vmatpush1.msra.mxu0 0.0
        %5616 = vmatprep.subr.mxu0 0.0
        %5617 = vmatpush1.msra.mxu0 0.0
        %5618 = vmatprep.subr.mxu0 0.0
        %5619 = vmatpush1.msra.mxu0 0.0
        %5620 = vmatprep.subr.mxu0 0.0
        %5621 = vmatpush1.msra.mxu0 0.0
        %5622 = vmatprep.subr.mxu0 0.0
        %5623 = vmatpush1.msra.mxu0 0.0
        %5624 = vmatprep.subr.mxu0 0.0
        %5625 = vmatpush1.msra.mxu0 0.0
        %5626 = vmatprep.subr.mxu0 0.0
        %5627 = vmatpush1.msra.mxu0 0.0
        %5628 = vmatprep.subr.mxu0 0.0
        %5629 = vmatpush1.msra.mxu0 0.0
        %5630 = vmatprep.subr.mxu0 0.0
        %5631 = vmatpush1.msra.mxu0 0.0
        %5632 = vmatprep.subr.mxu0 0.0
        %5633 = vmatpush1.msra.mxu0 0.0
        %5634 = vmatprep.subr.mxu0 0.0
        %5635 = vmatpush1.msra.mxu0 0.0
        %5636 = vmatprep.subr.mxu0 0.0
        %5637 = vmatpush1.msra.mxu0 0.0
        %5638 = vmatprep.subr.mxu0 0.0
        %5639 = vmatpush1.msra.mxu0 0.0
        %5640 = vmatprep.subr.mxu0 0.0
        %5641 = vmatpush1.msra.mxu0 0.0
        %5642 = vmatprep.subr.mxu0 0.0
        %5643 = vmatpush1.msra.mxu0 0.0
        %5644 = vmatprep.mubr.f32.mxu0 0.0
        %5645 = vmatmul.mubr.f32.gmra.mrb[0].mxu0 %v5245
        %v5646 = vpop.f32.mrb[0].mxu0
        %v5647 = vadd.f32 0.0, %v5646
        %v5648 = vpop.f32.mrb[0].mxu0
        %5649 = vmatprep.mubr.f32.mxu0 0.0
        %5650 = vmatmul.mubr.f32.gmra.mrb[0].mxu0 %v5082
        %v5651 = vpop.f32.mrb[0].mxu0
        %v5652 = vadd.f32 0.0, %v5651
        %v5653 = vpop.f32.mrb[0].mxu0
        %5654 = vmatprep.mubr.f32.mxu0 0.0
        %5655 = vmatmul.mubr.f32.gmra.mrb[0].mxu0 %v5248
        %v5656 = vpop.f32.mrb[0].mxu0
        %v5657 = vadd.f32 0.0, %v5656
        %v5658 = vpop.f32.mrb[0].mxu0
        %5659 = vmatprep.mubr.f32.mxu0 0.0
        %5660 = vmatmul.mubr.f32.gmra.mrb[0].mxu0 %v5088
        %v5661 = vpop.f32.mrb[0].mxu0
        %v5662 = vadd.f32 0.0, %v5661
        %v5663 = vpop.f32.mrb[0].mxu0
        %5664 = vmatprep.mubr.f32.mxu0 0.0
        %5665 = vmatmul.mubr.f32.gmra.mrb[0].mxu0 %v5070
        %v5666 = vpop.f32.mrb[0].mxu0
        %v5667 = vadd.f32 0.0, %v5666
        %v5668 = vpop.f32.mrb[0].mxu0
        %5669 = vmatprep.mubr.f32.mxu0 0.0
        %5670 = vmatmul.mubr.f32.gmra.mrb[0].mxu0 %v5073
        %v5671 = vpop.f32.mrb[0].mxu0
        %v5672 = vadd.f32 0.0, %v5671
        %v5673 = vpop.f32.mrb[0].mxu0
        %5674 = vmatprep.mubr.f32.mxu0 0.0
        %5675 = vmatmul.mubr.f32.gmra.mrb[0].mxu0 %v5076
        %v5676 = vpop.f32.mrb[0].mxu0
        %v5677 = vadd.f32 0.0, %v5676
        %v5678 = vpop.f32.mrb[0].mxu0
        %5679 = vmatprep.mubr.f32.mxu0 0.0
        %5680 = vmatmul.mubr.f32.gmra.mrb[0].mxu0 %v5079
        %v5681 = vpop.f32.mrb[0].mxu0
        %v5682 = vadd.f32 0.0, %v5681
        %v5683 = vpop.f32.mrb[0].mxu0
        %5684 = vmatprep.mubr.f32.mxu0 0.0
        %5685 = vmatmul.mubr.f32.gmra.mrb[0].mxu0 %v5242
        %v5686 = vpop.f32.mrb[0].mxu0
        %v5687 = vadd.f32 0.0, %v5686
        %v5688 = vpop.f32.mrb[0].mxu0
        %5689 = vmatprep.mubr.f32.mxu0 0.0
        %5690 = vmatmul.mubr.f32.gmra.mrb[0].mxu0 %v5064
        %v5691 = vpop.f32.mrb[0].mxu0
        %v5692 = vadd.f32 0.0, %v5691
        %v5693 = vpop.f32.mrb[0].mxu0
        %5694 = vmatprep.mubr.f32.mxu0 0.0
        %5695 = vmatmul.mubr.f32.gmra.mrb[0].mxu0 %v5569
        %v5696 = vpop.f32.mrb[0].mxu0
        %v5697 = vadd.f32 0.0, %v5696
        %v5698 = vpop.f32.mrb[0].mxu0
        %5699 = vmatprep.mubr.f32.mxu0 0.0
        %5700 = vmatmul.mubr.f32.gmra.mrb[0].mxu0 %v5572
        %v5701 = vpop.f32.mrb[0].mxu0
        %v5702 = vadd.f32 0.0, %v5701
        %v5703 = vpop.f32.mrb[0].mxu0
        %5704 = vmatprep.mubr.f32.mxu0 0.0
        %5705 = vmatmul.mubr.f32.gmra.mrb[0].mxu0 %v5052
        %v5706 = vpop.f32.mrb[0].mxu0
        %v5707 = vadd.f32 0.0, %v5706
        %v5708 = vpop.f32.mrb[0].mxu0
        %5709 = vmatprep.mubr.f32.mxu0 0.0
        %5710 = vmatmul.mubr.f32.gmra.mrb[0].mxu0 %v5055
        %v5711 = vpop.f32.mrb[0].mxu0
        %v5712 = vadd.f32 0.0, %v5711
        %v5713 = vpop.f32.mrb[0].mxu0
        %5714 = vmatprep.mubr.f32.mxu0 0.0
        %5715 = vmatmul.mubr.f32.gmra.mrb[0].mxu0 %v5575
        %v5716 = vpop.f32.mrb[0].mxu0
        %v5717 = vadd.f32 0.0, %v5716
        %v5718 = vpop.f32.mrb[0].mxu0
        %5719 = vmatprep.mubr.f32.mxu0 0.0
        %5720 = vmatmul.mubr.f32.gmra.mrb[0].mxu0 %v5578
        %v5721 = vpop.f32.mrb[0].mxu0
        %v5722 = vadd.f32 0.0, %v5721
        %v5723 = vpop.f32.mrb[0].mxu0
        %5724 = vdwg.mxu0
        %v5725 = vadd.f32 %v5552, %v5647
        %v5726 = vadd.f32 %v5553, %v5652
        %v5727 = vadd.f32 %v5554, %v5657
        %v5728 = vadd.f32 %v5555, %v5662
        %v5729 = vadd.f32 %v5556, %v5667
        %v5730 = vadd.f32 %v5557, %v5672
        %v5731 = vadd.f32 %v5558, %v5677
        %v5732 = vadd.f32 %v5559, %v5682
        %v5733 = vadd.f32 %v5560, %v5687
        %v5734 = vadd.f32 %v5561, %v5692
        %v5735 = vadd.f32 %v5562, %v5697
        %v5736 = vadd.f32 %v5563, %v5702
        %v5737 = vadd.f32 %v5564, %v5707
        %v5738 = vadd.f32 %v5565, %v5712
        %v5739 = vadd.f32 %v5566, %v5717
        %v5740 = vadd.f32 %v5567, %v5722
        %v5742 = vsel %vm5044, %v1936, 0
        %5744 = vmatprep.subr.mxu0 0.0
        %5745 = vmatpush1.msra.mxu0 %v5024
        %5746 = vmatprep.subr.mxu0 0.0
        %5747 = vmatpush1.msra.mxu0 %v5025
        %5748 = vmatprep.subr.mxu0 0.0
        %5749 = vmatpush1.msra.mxu0 %v5026
        %5750 = vmatprep.subr.mxu0 0.0
        %5751 = vmatpush1.msra.mxu0 %v5027
        %5752 = vmatprep.subr.mxu0 0.0
        %5753 = vmatpush1.msra.mxu0 0.0
        %5754 = vmatprep.subr.mxu0 0.0
        %5755 = vmatpush1.msra.mxu0 0.0
        %5756 = vmatprep.subr.mxu0 0.0
        %5757 = vmatpush1.msra.mxu0 0.0
        %5758 = vmatprep.subr.mxu0 0.0
        %5759 = vmatpush1.msra.mxu0 0.0
        %5760 = vmatprep.subr.mxu0 0.0
        %5761 = vmatpush1.msra.mxu0 0.0
        %5762 = vmatprep.subr.mxu0 0.0
        %5763 = vmatpush1.msra.mxu0 0.0
        %5764 = vmatprep.subr.mxu0 0.0
        %5765 = vmatpush1.msra.mxu0 0.0
        %5766 = vmatprep.subr.mxu0 0.0
        %5767 = vmatpush1.msra.mxu0 0.0
        %5768 = vmatprep.subr.mxu0 0.0
        %5769 = vmatpush1.msra.mxu0 0.0
        %5770 = vmatprep.subr.mxu0 0.0
        %5771 = vmatpush1.msra.mxu0 0.0
        %5772 = vmatprep.subr.mxu0 0.0
        %5773 = vmatpush1.msra.mxu0 0.0
        %5774 = vmatprep.subr.mxu0 0.0
        %5775 = vmatpush1.msra.mxu0 0.0
        %5776 = vmatprep.subr.mxu0 0.0
        %5777 = vmatpush1.msra.mxu0 0.0
        %5778 = vmatprep.subr.mxu0 0.0
        %5779 = vmatpush1.msra.mxu0 0.0
        %5780 = vmatprep.subr.mxu0 0.0
        %5781 = vmatpush1.msra.mxu0 0.0
        %5782 = vmatprep.subr.mxu0 0.0
        %5783 = vmatpush1.msra.mxu0 0.0
        %5784 = vmatprep.subr.mxu0 0.0
        %5785 = vmatpush1.msra.mxu0 0.0
        %5786 = vmatprep.subr.mxu0 0.0
        %5787 = vmatpush1.msra.mxu0 0.0
        %5788 = vmatprep.subr.mxu0 0.0
        %5789 = vmatpush1.msra.mxu0 0.0
        %5790 = vmatprep.subr.mxu0 0.0
        %5791 = vmatpush1.msra.mxu0 0.0
        %5792 = vmatprep.subr.mxu0 0.0
        %5793 = vmatpush1.msra.mxu0 0.0
        %5794 = vmatprep.subr.mxu0 0.0
        %5795 = vmatpush1.msra.mxu0 0.0
        %5796 = vmatprep.subr.mxu0 0.0
        %5797 = vmatpush1.msra.mxu0 0.0
        %5798 = vmatprep.subr.mxu0 0.0
        %5799 = vmatpush1.msra.mxu0 0.0
        %5800 = vmatprep.subr.mxu0 0.0
        %5801 = vmatpush1.msra.mxu0 0.0
        %5802 = vmatprep.subr.mxu0 0.0
        %5803 = vmatpush1.msra.mxu0 0.0
        %5804 = vmatprep.subr.mxu0 0.0
        %5805 = vmatpush1.msra.mxu0 0.0
        %5806 = vmatprep.subr.mxu0 0.0
        %5807 = vmatpush1.msra.mxu0 0.0
        %5808 = vmatprep.mubr.f32.mxu0 0.0
        %5809 = vmatmul.mubr.f32.gmra.mrb[0].mxu0 %v5070
        %v5810 = vpop.f32.mrb[0].mxu0
        %v5811 = vadd.f32 0.0, %v5810
        %v5812 = vpop.f32.mrb[0].mxu0
        %5813 = vmatprep.mubr.f32.mxu0 0.0
        %5814 = vmatmul.mubr.f32.gmra.mrb[0].mxu0 %v5073
        %v5815 = vpop.f32.mrb[0].mxu0
        %v5816 = vadd.f32 0.0, %v5815
        %v5817 = vpop.f32.mrb[0].mxu0
        %5818 = vmatprep.mubr.f32.mxu0 0.0
        %5819 = vmatmul.mubr.f32.gmra.mrb[0].mxu0 %v5076
        %v5820 = vpop.f32.mrb[0].mxu0
        %v5821 = vadd.f32 0.0, %v5820
        %v5822 = vpop.f32.mrb[0].mxu0
        %5823 = vmatprep.mubr.f32.mxu0 0.0
        %5824 = vmatmul.mubr.f32.gmra.mrb[0].mxu0 %v5079
        %v5825 = vpop.f32.mrb[0].mxu0
        %v5826 = vadd.f32 0.0, %v5825
        %v5827 = vpop.f32.mrb[0].mxu0
        %5828 = vmatprep.mubr.f32.mxu0 0.0
        %5829 = vmatmul.mubr.f32.gmra.mrb[0].mxu0 %v5082
        %v5830 = vpop.f32.mrb[0].mxu0
        %v5831 = vadd.f32 0.0, %v5830
        %v5832 = vpop.f32.mrb[0].mxu0
        %5833 = vmatprep.mubr.f32.mxu0 0.0
        %5834 = vmatmul.mubr.f32.gmra.mrb[0].mxu0 %v5085
        %v5835 = vpop.f32.mrb[0].mxu0
        %v5836 = vadd.f32 0.0, %v5835
        %v5837 = vpop.f32.mrb[0].mxu0
        %5838 = vmatprep.mubr.f32.mxu0 0.0
        %5839 = vmatmul.mubr.f32.gmra.mrb[0].mxu0 %v5088
        %v5840 = vpop.f32.mrb[0].mxu0
        %v5841 = vadd.f32 0.0, %v5840
        %v5842 = vpop.f32.mrb[0].mxu0
        %5843 = vmatprep.mubr.f32.mxu0 0.0
        %5844 = vmatmul.mubr.f32.gmra.mrb[0].mxu0 %v5091
        %v5845 = vpop.f32.mrb[0].mxu0
        %v5846 = vadd.f32 0.0, %v5845
        %v5847 = vpop.f32.mrb[0].mxu0
        %5848 = vmatprep.mubr.f32.mxu0 0.0
        %5849 = vmatmul.mubr.f32.gmra.mrb[0].mxu0 %v5052
        %v5850 = vpop.f32.mrb[0].mxu0
        %v5851 = vadd.f32 0.0, %v5850
        %v5852 = vpop.f32.mrb[0].mxu0
        %5853 = vmatprep.mubr.f32.mxu0 0.0
        %5854 = vmatmul.mubr.f32.gmra.mrb[0].mxu0 %v5055
        %v5855 = vpop.f32.mrb[0].mxu0
        %v5856 = vadd.f32 0.0, %v5855
        %v5857 = vpop.f32.mrb[0].mxu0
        %5858 = vmatprep.mubr.f32.mxu0 0.0
        %5859 = vmatmul.mubr.f32.gmra.mrb[0].mxu0 %v5575
        %v5860 = vpop.f32.mrb[0].mxu0
        %v5861 = vadd.f32 0.0, %v5860
        %v5862 = vpop.f32.mrb[0].mxu0
        %5863 = vmatprep.mubr.f32.mxu0 0.0
        %5864 = vmatmul.mubr.f32.gmra.mrb[0].mxu0 %v5578
        %v5865 = vpop.f32.mrb[0].mxu0
        %v5866 = vadd.f32 0.0, %v5865
        %v5867 = vpop.f32.mrb[0].mxu0
        %5868 = vmatprep.mubr.f32.mxu0 0.0
        %5869 = vmatmul.mubr.f32.gmra.mrb[0].mxu0 %v5064
        %v5870 = vpop.f32.mrb[0].mxu0
        %v5871 = vadd.f32 0.0, %v5870
        %v5872 = vpop.f32.mrb[0].mxu0
        %5873 = vmatprep.mubr.f32.mxu0 0.0
        %5874 = vmatmul.mubr.f32.gmra.mrb[0].mxu0 %v5067
        %v5875 = vpop.f32.mrb[0].mxu0
        %v5876 = vadd.f32 0.0, %v5875
        %v5877 = vpop.f32.mrb[0].mxu0
        %5878 = vmatprep.mubr.f32.mxu0 0.0
        %5879 = vmatmul.mubr.f32.gmra.mrb[0].mxu0 %v5572
        %v5880 = vpop.f32.mrb[0].mxu0
        %v5881 = vadd.f32 0.0, %v5880
        %v5882 = vpop.f32.mrb[0].mxu0
        %5883 = vmatprep.mubr.f32.mxu0 0.0
        %5884 = vmatmul.mubr.f32.gmra.mrb[0].mxu0 %v5742
        %v5885 = vpop.f32.mrb[0].mxu0
        %v5886 = vadd.f32 0.0, %v5885
        %v5887 = vpop.f32.mrb[0].mxu0
        %5888 = vdwg.mxu0
        %v5889 = vadd.f32 %v5725, %v5811
        %v5890 = vadd.f32 %v5726, %v5816
        %v5891 = vadd.f32 %v5727, %v5821
        %v5892 = vadd.f32 %v5728, %v5826
        %v5893 = vadd.f32 %v5729, %v5831
        %v5894 = vadd.f32 %v5730, %v5836
        %v5895 = vadd.f32 %v5731, %v5841
        %v5896 = vadd.f32 %v5732, %v5846
        %v5897 = vadd.f32 %v5733, %v5851
        %v5898 = vadd.f32 %v5734, %v5856
        %v5899 = vadd.f32 %v5735, %v5861
        %v5900 = vadd.f32 %v5736, %v5866
        %v5901 = vadd.f32 %v5737, %v5871
        %v5902 = vadd.f32 %v5738, %v5876
        %v5903 = vadd.f32 %v5739, %v5881
        %v5904 = vadd.f32 %v5740, %v5886
        %v5906 = vsel %vm5044, %v3033, 0
        %5908 = vmatprep.subr.mxu0 0.0
        %5909 = vmatpush1.msra.mxu0 %v5028
        %5910 = vmatprep.subr.mxu0 0.0
        %5911 = vmatpush1.msra.mxu0 %v5029
        %5912 = vmatprep.subr.mxu0 0.0
        %5913 = vmatpush1.msra.mxu0 %v5030
        %5914 = vmatprep.subr.mxu0 0.0
        %5915 = vmatpush1.msra.mxu0 %v5031
        %5916 = vmatprep.subr.mxu0 0.0
        %5917 = vmatpush1.msra.mxu0 0.0
        %5918 = vmatprep.subr.mxu0 0.0
        %5919 = vmatpush1.msra.mxu0 0.0
        %5920 = vmatprep.subr.mxu0 0.0
        %5921 = vmatpush1.msra.mxu0 0.0
        %5922 = vmatprep.subr.mxu0 0.0
        %5923 = vmatpush1.msra.mxu0 0.0
        %5924 = vmatprep.subr.mxu0 0.0
        %5925 = vmatpush1.msra.mxu0 0.0
        %5926 = vmatprep.subr.mxu0 0.0
        %5927 = vmatpush1.msra.mxu0 0.0
        %5928 = vmatprep.subr.mxu0 0.0
        %5929 = vmatpush1.msra.mxu0 0.0
        %5930 = vmatprep.subr.mxu0 0.0
        %5931 = vmatpush1.msra.mxu0 0.0
        %5932 = vmatprep.subr.mxu0 0.0
        %5933 = vmatpush1.msra.mxu0 0.0
        %5934 = vmatprep.subr.mxu0 0.0
        %5935 = vmatpush1.msra.mxu0 0.0
        %5936 = vmatprep.subr.mxu0 0.0
        %5937 = vmatpush1.msra.mxu0 0.0
        %5938 = vmatprep.subr.mxu0 0.0
        %5939 = vmatpush1.msra.mxu0 0.0
        %5940 = vmatprep.subr.mxu0 0.0
        %5941 = vmatpush1.msra.mxu0 0.0
        %5942 = vmatprep.subr.mxu0 0.0
        %5943 = vmatpush1.msra.mxu0 0.0
        %5944 = vmatprep.subr.mxu0 0.0
        %5945 = vmatpush1.msra.mxu0 0.0
        %5946 = vmatprep.subr.mxu0 0.0
        %5947 = vmatpush1.msra.mxu0 0.0
        %5948 = vmatprep.subr.mxu0 0.0
        %5949 = vmatpush1.msra.mxu0 0.0
        %5950 = vmatprep.subr.mxu0 0.0
        %5951 = vmatpush1.msra.mxu0 0.0
        %5952 = vmatprep.subr.mxu0 0.0
        %5953 = vmatpush1.msra.mxu0 0.0
        %5954 = vmatprep.subr.mxu0 0.0
        %5955 = vmatpush1.msra.mxu0 0.0
        %5956 = vmatprep.subr.mxu0 0.0
        %5957 = vmatpush1.msra.mxu0 0.0
        %5958 = vmatprep.subr.mxu0 0.0
        %5959 = vmatpush1.msra.mxu0 0.0
        %5960 = vmatprep.subr.mxu0 0.0
        %5961 = vmatpush1.msra.mxu0 0.0
        %5962 = vmatprep.subr.mxu0 0.0
        %5963 = vmatpush1.msra.mxu0 0.0
        %5964 = vmatprep.subr.mxu0 0.0
        %5965 = vmatpush1.msra.mxu0 0.0
        %5966 = vmatprep.subr.mxu0 0.0
        %5967 = vmatpush1.msra.mxu0 0.0
        %5968 = vmatprep.subr.mxu0 0.0
        %5969 = vmatpush1.msra.mxu0 0.0
        %5970 = vmatprep.subr.mxu0 0.0
        %5971 = vmatpush1.msra.mxu0 0.0
        %5972 = vmatprep.mubr.f32.mxu0 0.0
        %5973 = vmatmul.mubr.f32.gmra.mrb[0].mxu0 %v5082
        %v5974 = vpop.f32.mrb[0].mxu0
        %v5975 = vadd.f32 0.0, %v5974
        %v5976 = vpop.f32.mrb[0].mxu0
        %5977 = vmatprep.mubr.f32.mxu0 0.0
        %5978 = vmatmul.mubr.f32.gmra.mrb[0].mxu0 %v5085
        %v5979 = vpop.f32.mrb[0].mxu0
        %v5980 = vadd.f32 0.0, %v5979
        %v5981 = vpop.f32.mrb[0].mxu0
        %5982 = vmatprep.mubr.f32.mxu0 0.0
        %5983 = vmatmul.mubr.f32.gmra.mrb[0].mxu0 %v5088
        %v5984 = vpop.f32.mrb[0].mxu0
        %v5985 = vadd.f32 0.0, %v5984
        %v5986 = vpop.f32.mrb[0].mxu0
        %5987 = vmatprep.mubr.f32.mxu0 0.0
        %5988 = vmatmul.mubr.f32.gmra.mrb[0].mxu0 %v5091
        %v5989 = vpop.f32.mrb[0].mxu0
        %v5990 = vadd.f32 0.0, %v5989
        %v5991 = vpop.f32.mrb[0].mxu0
        %5992 = vmatprep.mubr.f32.mxu0 0.0
        %5993 = vmatmul.mubr.f32.gmra.mrb[0].mxu0 %v5073
        %v5994 = vpop.f32.mrb[0].mxu0
        %v5995 = vadd.f32 0.0, %v5994
        %v5996 = vpop.f32.mrb[0].mxu0
        %5997 = vmatprep.mubr.f32.mxu0 0.0
        %5998 = vmatmul.mubr.f32.gmra.mrb[0].mxu0 %v5402
        %v5999 = vpop.f32.mrb[0].mxu0
        %v6000 = vadd.f32 0.0, %v5999
        %v6001 = vpop.f32.mrb[0].mxu0
        %6002 = vmatprep.mubr.f32.mxu0 0.0
        %6003 = vmatmul.mubr.f32.gmra.mrb[0].mxu0 %v5079
        %v6004 = vpop.f32.mrb[0].mxu0
        %v6005 = vadd.f32 0.0, %v6004
        %v6006 = vpop.f32.mrb[0].mxu0
        %6007 = vmatprep.mubr.f32.mxu0 0.0
        %6008 = vmatmul.mubr.f32.gmra.mrb[0].mxu0 %v5405
        %v6009 = vpop.f32.mrb[0].mxu0
        %v6010 = vadd.f32 0.0, %v6009
        %v6011 = vpop.f32.mrb[0].mxu0
        %6012 = vmatprep.mubr.f32.mxu0 0.0
        %6013 = vmatmul.mubr.f32.gmra.mrb[0].mxu0 %v5064
        %v6014 = vpop.f32.mrb[0].mxu0
        %v6015 = vadd.f32 0.0, %v6014
        %v6016 = vpop.f32.mrb[0].mxu0
        %6017 = vmatprep.mubr.f32.mxu0 0.0
        %6018 = vmatmul.mubr.f32.gmra.mrb[0].mxu0 %v5067
        %v6019 = vpop.f32.mrb[0].mxu0
        %v6020 = vadd.f32 0.0, %v6019
        %v6021 = vpop.f32.mrb[0].mxu0
        %6022 = vmatprep.mubr.f32.mxu0 0.0
        %6023 = vmatmul.mubr.f32.gmra.mrb[0].mxu0 %v5572
        %v6024 = vpop.f32.mrb[0].mxu0
        %v6025 = vadd.f32 0.0, %v6024
        %v6026 = vpop.f32.mrb[0].mxu0
        %6027 = vmatprep.mubr.f32.mxu0 0.0
        %6028 = vmatmul.mubr.f32.gmra.mrb[0].mxu0 %v5742
        %v6029 = vpop.f32.mrb[0].mxu0
        %v6030 = vadd.f32 0.0, %v6029
        %v6031 = vpop.f32.mrb[0].mxu0
        %6032 = vmatprep.mubr.f32.mxu0 0.0
        %6033 = vmatmul.mubr.f32.gmra.mrb[0].mxu0 %v5055
        %v6034 = vpop.f32.mrb[0].mxu0
        %v6035 = vadd.f32 0.0, %v6034
        %v6036 = vpop.f32.mrb[0].mxu0
        %6037 = vmatprep.mubr.f32.mxu0 0.0
        %6038 = vmatmul.mubr.f32.gmra.mrb[0].mxu0 %v5399
        %v6039 = vpop.f32.mrb[0].mxu0
        %v6040 = vadd.f32 0.0, %v6039
        %v6041 = vpop.f32.mrb[0].mxu0
        %6042 = vmatprep.mubr.f32.mxu0 0.0
        %6043 = vmatmul.mubr.f32.gmra.mrb[0].mxu0 %v5578
        %v6044 = vpop.f32.mrb[0].mxu0
        %v6045 = vadd.f32 0.0, %v6044
        %v6046 = vpop.f32.mrb[0].mxu0
        %6047 = vmatprep.mubr.f32.mxu0 0.0
        %6048 = vmatmul.mubr.f32.gmra.mrb[0].mxu0 %v5906
        %v6049 = vpop.f32.mrb[0].mxu0
        %v6050 = vadd.f32 0.0, %v6049
        %v6051 = vpop.f32.mrb[0].mxu0
        %6052 = vdwg.mxu0
        %v6053 = vadd.f32 %v5889, %v5975
        %v6054 = vadd.f32 %v5890, %v5980
        %v6055 = vadd.f32 %v5891, %v5985
        %v6056 = vadd.f32 %v5892, %v5990
        %v6057 = vadd.f32 %v5893, %v5995
        %v6058 = vadd.f32 %v5894, %v6000
        %v6059 = vadd.f32 %v5895, %v6005
        %v6060 = vadd.f32 %v5896, %v6010
        %v6061 = vadd.f32 %v5897, %v6015
        %v6062 = vadd.f32 %v5898, %v6020
        %v6063 = vadd.f32 %v5899, %v6025
        %v6064 = vadd.f32 %v5900, %v6030
        %v6065 = vadd.f32 %v5901, %v6035
        %v6066 = vadd.f32 %v5902, %v6040
        %v6067 = vadd.f32 %v5903, %v6045
        %v6068 = vadd.f32 %v5904, %v6050
        %v6070 = vsel %vm5044, %v4128, 0
        %v6073 = vsel %vm5044, %v4129, 0
        %v6076 = vsel %vm5044, %v5005, 0
        %v6079 = vsel %vm5044, %v5006, 0
        %6081 = vmatprep.subr.mxu0 0.0
        %6082 = vmatpush1.msra.mxu0 %v5032
        %6083 = vmatprep.subr.mxu0 0.0
        %6084 = vmatpush1.msra.mxu0 %v5033
        %6085 = vmatprep.subr.mxu0 0.0
        %6086 = vmatpush1.msra.mxu0 %v5034
        %6087 = vmatprep.subr.mxu0 0.0
        %6088 = vmatpush1.msra.mxu0 %v5035
        %6089 = vmatprep.subr.mxu0 0.0
        %6090 = vmatpush1.msra.mxu0 0.0
        %6091 = vmatprep.subr.mxu0 0.0
        %6092 = vmatpush1.msra.mxu0 0.0
        %6093 = vmatprep.subr.mxu0 0.0
        %6094 = vmatpush1.msra.mxu0 0.0
        %6095 = vmatprep.subr.mxu0 0.0
        %6096 = vmatpush1.msra.mxu0 0.0
        %6097 = vmatprep.subr.mxu0 0.0
        %6098 = vmatpush1.msra.mxu0 0.0
        %6099 = vmatprep.subr.mxu0 0.0
        %6100 = vmatpush1.msra.mxu0 0.0
        %6101 = vmatprep.subr.mxu0 0.0
        %6102 = vmatpush1.msra.mxu0 0.0
        %6103 = vmatprep.subr.mxu0 0.0
        %6104 = vmatpush1.msra.mxu0 0.0
        %6105 = vmatprep.subr.mxu0 0.0
        %6106 = vmatpush1.msra.mxu0 0.0
        %6107 = vmatprep.subr.mxu0 0.0
        %6108 = vmatpush1.msra.mxu0 0.0
        %6109 = vmatprep.subr.mxu0 0.0
        %6110 = vmatpush1.msra.mxu0 0.0
        %6111 = vmatprep.subr.mxu0 0.0
        %6112 = vmatpush1.msra.mxu0 0.0
        %6113 = vmatprep.subr.mxu0 0.0
        %6114 = vmatpush1.msra.mxu0 0.0
        %6115 = vmatprep.subr.mxu0 0.0
        %6116 = vmatpush1.msra.mxu0 0.0
        %6117 = vmatprep.subr.mxu0 0.0
        %6118 = vmatpush1.msra.mxu0 0.0
        %6119 = vmatprep.subr.mxu0 0.0
        %6120 = vmatpush1.msra.mxu0 0.0
        %6121 = vmatprep.subr.mxu0 0.0
        %6122 = vmatpush1.msra.mxu0 0.0
        %6123 = vmatprep.subr.mxu0 0.0
        %6124 = vmatpush1.msra.mxu0 0.0
        %6125 = vmatprep.subr.mxu0 0.0
        %6126 = vmatpush1.msra.mxu0 0.0
        %6127 = vmatprep.subr.mxu0 0.0
        %6128 = vmatpush1.msra.mxu0 0.0
        %6129 = vmatprep.subr.mxu0 0.0
        %6130 = vmatpush1.msra.mxu0 0.0
        %6131 = vmatprep.subr.mxu0 0.0
        %6132 = vmatpush1.msra.mxu0 0.0
        %6133 = vmatprep.subr.mxu0 0.0
        %6134 = vmatpush1.msra.mxu0 0.0
        %6135 = vmatprep.subr.mxu0 0.0
        %6136 = vmatpush1.msra.mxu0 0.0
        %6137 = vmatprep.subr.mxu0 0.0
        %6138 = vmatpush1.msra.mxu0 0.0
        %6139 = vmatprep.subr.mxu0 0.0
        %6140 = vmatpush1.msra.mxu0 0.0
        %6141 = vmatprep.subr.mxu0 0.0
        %6142 = vmatpush1.msra.mxu0 0.0
        %6143 = vmatprep.subr.mxu0 0.0
        %6144 = vmatpush1.msra.mxu0 0.0
        %6145 = vmatprep.mubr.f32.mxu0 0.0
        %6146 = vmatmul.mubr.f32.gmra.mrb[0].mxu0 %v5242
        %v6147 = vpop.f32.mrb[0].mxu0
        %v6148 = vadd.f32 0.0, %v6147
        %v6149 = vpop.f32.mrb[0].mxu0
        %6150 = vmatprep.mubr.f32.mxu0 0.0
        %6151 = vmatmul.mubr.f32.gmra.mrb[0].mxu0 %v5064
        %v6152 = vpop.f32.mrb[0].mxu0
        %v6153 = vadd.f32 0.0, %v6152
        %v6154 = vpop.f32.mrb[0].mxu0
        %6155 = vmatprep.mubr.f32.mxu0 0.0
        %6156 = vmatmul.mubr.f32.gmra.mrb[0].mxu0 %v5569
        %v6157 = vpop.f32.mrb[0].mxu0
        %v6158 = vadd.f32 0.0, %v6157
        %v6159 = vpop.f32.mrb[0].mxu0
        %6160 = vmatprep.mubr.f32.mxu0 0.0
        %6161 = vmatmul.mubr.f32.gmra.mrb[0].mxu0 %v5572
        %v6162 = vpop.f32.mrb[0].mxu0
        %v6163 = vadd.f32 0.0, %v6162
        %v6164 = vpop.f32.mrb[0].mxu0
        %6165 = vmatprep.mubr.f32.mxu0 0.0
        %6166 = vmatmul.mubr.f32.gmra.mrb[0].mxu0 %v5052
        %v6167 = vpop.f32.mrb[0].mxu0
        %v6168 = vadd.f32 0.0, %v6167
        %v6169 = vpop.f32.mrb[0].mxu0
        %6170 = vmatprep.mubr.f32.mxu0 0.0
        %6171 = vmatmul.mubr.f32.gmra.mrb[0].mxu0 %v5055
        %v6172 = vpop.f32.mrb[0].mxu0
        %v6173 = vadd.f32 0.0, %v6172
        %v6174 = vpop.f32.mrb[0].mxu0
        %6175 = vmatprep.mubr.f32.mxu0 0.0
        %6176 = vmatmul.mubr.f32.gmra.mrb[0].mxu0 %v5575
        %v6177 = vpop.f32.mrb[0].mxu0
        %v6178 = vadd.f32 0.0, %v6177
        %v6179 = vpop.f32.mrb[0].mxu0
        %6180 = vmatprep.mubr.f32.mxu0 0.0
        %6181 = vmatmul.mubr.f32.gmra.mrb[0].mxu0 %v5578
        %v6182 = vpop.f32.mrb[0].mxu0
        %v6183 = vadd.f32 0.0, %v6182
        %v6184 = vpop.f32.mrb[0].mxu0
        %6185 = vmatprep.mubr.f32.mxu0 0.0
        %6186 = vmatmul.mubr.f32.gmra.mrb[0].mxu0 %v5248
        %v6187 = vpop.f32.mrb[0].mxu0
        %v6188 = vadd.f32 0.0, %v6187
        %v6189 = vpop.f32.mrb[0].mxu0
        %6190 = vmatprep.mubr.f32.mxu0 0.0
        %6191 = vmatmul.mubr.f32.gmra.mrb[0].mxu0 %v5088
        %v6192 = vpop.f32.mrb[0].mxu0
        %v6193 = vadd.f32 0.0, %v6192
        %v6194 = vpop.f32.mrb[0].mxu0
        %6195 = vmatprep.mubr.f32.mxu0 0.0
        %6196 = vmatmul.mubr.f32.gmra.mrb[0].mxu0 %v6070
        %v6197 = vpop.f32.mrb[0].mxu0
        %v6198 = vadd.f32 0.0, %v6197
        %v6199 = vpop.f32.mrb[0].mxu0
        %6200 = vmatprep.mubr.f32.mxu0 0.0
        %6201 = vmatmul.mubr.f32.gmra.mrb[0].mxu0 %v6073
        %v6202 = vpop.f32.mrb[0].mxu0
        %v6203 = vadd.f32 0.0, %v6202
        %v6204 = vpop.f32.mrb[0].mxu0
        %6205 = vmatprep.mubr.f32.mxu0 0.0
        %6206 = vmatmul.mubr.f32.gmra.mrb[0].mxu0 %v5076
        %v6207 = vpop.f32.mrb[0].mxu0
        %v6208 = vadd.f32 0.0, %v6207
        %v6209 = vpop.f32.mrb[0].mxu0
        %6210 = vmatprep.mubr.f32.mxu0 0.0
        %6211 = vmatmul.mubr.f32.gmra.mrb[0].mxu0 %v5079
        %v6212 = vpop.f32.mrb[0].mxu0
        %v6213 = vadd.f32 0.0, %v6212
        %v6214 = vpop.f32.mrb[0].mxu0
        %6215 = vmatprep.mubr.f32.mxu0 0.0
        %6216 = vmatmul.mubr.f32.gmra.mrb[0].mxu0 %v6076
        %v6217 = vpop.f32.mrb[0].mxu0
        %v6218 = vadd.f32 0.0, %v6217
        %v6219 = vpop.f32.mrb[0].mxu0
        %6220 = vmatprep.mubr.f32.mxu0 0.0
        %6221 = vmatmul.mubr.f32.gmra.mrb[0].mxu0 %v6079
        %v6222 = vpop.f32.mrb[0].mxu0
        %v6223 = vadd.f32 0.0, %v6222
        %v6224 = vpop.f32.mrb[0].mxu0
        %6225 = vdwg.mxu0
        %v6226 = vadd.f32 %v6053, %v6148
        %v6227 = vadd.f32 %v6054, %v6153
        %v6228 = vadd.f32 %v6055, %v6158
        %v6229 = vadd.f32 %v6056, %v6163
        %v6230 = vadd.f32 %v6057, %v6168
        %v6231 = vadd.f32 %v6058, %v6173
        %v6232 = vadd.f32 %v6059, %v6178
        %v6233 = vadd.f32 %v6060, %v6183
        %v6234 = vadd.f32 %v6061, %v6188
        %v6235 = vadd.f32 %v6062, %v6193
        %v6236 = vadd.f32 %v6063, %v6198
        %v6237 = vadd.f32 %v6064, %v6203
        %v6238 = vadd.f32 %v6065, %v6208
        %v6239 = vadd.f32 %v6066, %v6213
        %v6240 = vadd.f32 %v6067, %v6218
        %v6241 = vadd.f32 %v6068, %v6223
        %v6243 = vsel %vm5044, %v4130, 0
        %6245 = vmatprep.subr.mxu0 0.0
        %6246 = vmatpush1.msra.mxu0 %v5036
        %6247 = vmatprep.subr.mxu0 0.0
        %6248 = vmatpush1.msra.mxu0 %v5037
        %6249 = vmatprep.subr.mxu0 0.0
        %6250 = vmatpush1.msra.mxu0 %v5038
        %6251 = vmatprep.subr.mxu0 0.0
        %6252 = vmatpush1.msra.mxu0 %v5039
        %6253 = vmatprep.subr.mxu0 0.0
        %6254 = vmatpush1.msra.mxu0 0.0
        %6255 = vmatprep.subr.mxu0 0.0
        %6256 = vmatpush1.msra.mxu0 0.0
        %6257 = vmatprep.subr.mxu0 0.0
        %6258 = vmatpush1.msra.mxu0 0.0
        %6259 = vmatprep.subr.mxu0 0.0
        %6260 = vmatpush1.msra.mxu0 0.0
        %6261 = vmatprep.subr.mxu0 0.0
        %6262 = vmatpush1.msra.mxu0 0.0
        %6263 = vmatprep.subr.mxu0 0.0
        %6264 = vmatpush1.msra.mxu0 0.0
        %6265 = vmatprep.subr.mxu0 0.0
        %6266 = vmatpush1.msra.mxu0 0.0
        %6267 = vmatprep.subr.mxu0 0.0
        %6268 = vmatpush1.msra.mxu0 0.0
        %6269 = vmatprep.subr.mxu0 0.0
        %6270 = vmatpush1.msra.mxu0 0.0
        %6271 = vmatprep.subr.mxu0 0.0
        %6272 = vmatpush1.msra.mxu0 0.0
        %6273 = vmatprep.subr.mxu0 0.0
        %6274 = vmatpush1.msra.mxu0 0.0
        %6275 = vmatprep.subr.mxu0 0.0
        %6276 = vmatpush1.msra.mxu0 0.0
        %6277 = vmatprep.subr.mxu0 0.0
        %6278 = vmatpush1.msra.mxu0 0.0
        %6279 = vmatprep.subr.mxu0 0.0
        %6280 = vmatpush1.msra.mxu0 0.0
        %6281 = vmatprep.subr.mxu0 0.0
        %6282 = vmatpush1.msra.mxu0 0.0
        %6283 = vmatprep.subr.mxu0 0.0
        %6284 = vmatpush1.msra.mxu0 0.0
        %6285 = vmatprep.subr.mxu0 0.0
        %6286 = vmatpush1.msra.mxu0 0.0
        %6287 = vmatprep.subr.mxu0 0.0
        %6288 = vmatpush1.msra.mxu0 0.0
        %6289 = vmatprep.subr.mxu0 0.0
        %6290 = vmatpush1.msra.mxu0 0.0
        %6291 = vmatprep.subr.mxu0 0.0
        %6292 = vmatpush1.msra.mxu0 0.0
        %6293 = vmatprep.subr.mxu0 0.0
        %6294 = vmatpush1.msra.mxu0 0.0
        %6295 = vmatprep.subr.mxu0 0.0
        %6296 = vmatpush1.msra.mxu0 0.0
        %6297 = vmatprep.subr.mxu0 0.0
        %6298 = vmatpush1.msra.mxu0 0.0
        %6299 = vmatprep.subr.mxu0 0.0
        %6300 = vmatpush1.msra.mxu0 0.0
        %6301 = vmatprep.subr.mxu0 0.0
        %6302 = vmatpush1.msra.mxu0 0.0
        %6303 = vmatprep.subr.mxu0 0.0
        %6304 = vmatpush1.msra.mxu0 0.0
        %6305 = vmatprep.subr.mxu0 0.0
        %6306 = vmatpush1.msra.mxu0 0.0
        %6307 = vmatprep.subr.mxu0 0.0
        %6308 = vmatpush1.msra.mxu0 0.0
        %6309 = vmatprep.mubr.f32.mxu0 0.0
        %6310 = vmatmul.mubr.f32.gmra.mrb[0].mxu0 %v5052
        %v6311 = vpop.f32.mrb[0].mxu0
        %v6312 = vadd.f32 0.0, %v6311
        %v6313 = vpop.f32.mrb[0].mxu0
        %6314 = vmatprep.mubr.f32.mxu0 0.0
        %6315 = vmatmul.mubr.f32.gmra.mrb[0].mxu0 %v5055
        %v6316 = vpop.f32.mrb[0].mxu0
        %v6317 = vadd.f32 0.0, %v6316
        %v6318 = vpop.f32.mrb[0].mxu0
        %6319 = vmatprep.mubr.f32.mxu0 0.0
        %6320 = vmatmul.mubr.f32.gmra.mrb[0].mxu0 %v5575
        %v6321 = vpop.f32.mrb[0].mxu0
        %v6322 = vadd.f32 0.0, %v6321
        %v6323 = vpop.f32.mrb[0].mxu0
        %6324 = vmatprep.mubr.f32.mxu0 0.0
        %6325 = vmatmul.mubr.f32.gmra.mrb[0].mxu0 %v5578
        %v6326 = vpop.f32.mrb[0].mxu0
        %v6327 = vadd.f32 0.0, %v6326
        %v6328 = vpop.f32.mrb[0].mxu0
        %6329 = vmatprep.mubr.f32.mxu0 0.0
        %6330 = vmatmul.mubr.f32.gmra.mrb[0].mxu0 %v5064
        %v6331 = vpop.f32.mrb[0].mxu0
        %v6332 = vadd.f32 0.0, %v6331
        %v6333 = vpop.f32.mrb[0].mxu0
        %6334 = vmatprep.mubr.f32.mxu0 0.0
        %6335 = vmatmul.mubr.f32.gmra.mrb[0].mxu0 %v5067
        %v6336 = vpop.f32.mrb[0].mxu0
        %v6337 = vadd.f32 0.0, %v6336
        %v6338 = vpop.f32.mrb[0].mxu0
        %6339 = vmatprep.mubr.f32.mxu0 0.0
        %6340 = vmatmul.mubr.f32.gmra.mrb[0].mxu0 %v5572
        %v6341 = vpop.f32.mrb[0].mxu0
        %v6342 = vadd.f32 0.0, %v6341
        %v6343 = vpop.f32.mrb[0].mxu0
        %6344 = vmatprep.mubr.f32.mxu0 0.0
        %6345 = vmatmul.mubr.f32.gmra.mrb[0].mxu0 %v5742
        %v6346 = vpop.f32.mrb[0].mxu0
        %v6347 = vadd.f32 0.0, %v6346
        %v6348 = vpop.f32.mrb[0].mxu0
        %6349 = vmatprep.mubr.f32.mxu0 0.0
        %6350 = vmatmul.mubr.f32.gmra.mrb[0].mxu0 %v5076
        %v6351 = vpop.f32.mrb[0].mxu0
        %v6352 = vadd.f32 0.0, %v6351
        %v6353 = vpop.f32.mrb[0].mxu0
        %6354 = vmatprep.mubr.f32.mxu0 0.0
        %6355 = vmatmul.mubr.f32.gmra.mrb[0].mxu0 %v5079
        %v6356 = vpop.f32.mrb[0].mxu0
        %v6357 = vadd.f32 0.0, %v6356
        %v6358 = vpop.f32.mrb[0].mxu0
        %6359 = vmatprep.mubr.f32.mxu0 0.0
        %6360 = vmatmul.mubr.f32.gmra.mrb[0].mxu0 %v6076
        %v6361 = vpop.f32.mrb[0].mxu0
        %v6362 = vadd.f32 0.0, %v6361
        %v6363 = vpop.f32.mrb[0].mxu0
        %6364 = vmatprep.mubr.f32.mxu0 0.0
        %6365 = vmatmul.mubr.f32.gmra.mrb[0].mxu0 %v6079
        %v6366 = vpop.f32.mrb[0].mxu0
        %v6367 = vadd.f32 0.0, %v6366
        %v6368 = vpop.f32.mrb[0].mxu0
        %6369 = vmatprep.mubr.f32.mxu0 0.0
        %6370 = vmatmul.mubr.f32.gmra.mrb[0].mxu0 %v5088
        %v6371 = vpop.f32.mrb[0].mxu0
        %v6372 = vadd.f32 0.0, %v6371
        %v6373 = vpop.f32.mrb[0].mxu0
        %6374 = vmatprep.mubr.f32.mxu0 0.0
        %6375 = vmatmul.mubr.f32.gmra.mrb[0].mxu0 %v5091
        %v6376 = vpop.f32.mrb[0].mxu0
        %v6377 = vadd.f32 0.0, %v6376
        %v6378 = vpop.f32.mrb[0].mxu0
        %6379 = vmatprep.mubr.f32.mxu0 0.0
        %6380 = vmatmul.mubr.f32.gmra.mrb[0].mxu0 %v6073
        %v6381 = vpop.f32.mrb[0].mxu0
        %v6382 = vadd.f32 0.0, %v6381
        %v6383 = vpop.f32.mrb[0].mxu0
        %6384 = vmatprep.mubr.f32.mxu0 0.0
        %6385 = vmatmul.mubr.f32.gmra.mrb[0].mxu0 %v6243
        %v6386 = vpop.f32.mrb[0].mxu0
        %v6387 = vadd.f32 0.0, %v6386
        %v6388 = vpop.f32.mrb[0].mxu0
        %6389 = vdwg.mxu0
        %v6390 = vadd.f32 %v6226, %v6312
        %v6391 = vadd.f32 %v6227, %v6317
        %v6392 = vadd.f32 %v6228, %v6322
        %v6393 = vadd.f32 %v6229, %v6327
        %v6394 = vadd.f32 %v6230, %v6332
        %v6395 = vadd.f32 %v6231, %v6337
        %v6396 = vadd.f32 %v6232, %v6342
        %v6397 = vadd.f32 %v6233, %v6347
        %v6398 = vadd.f32 %v6234, %v6352
        %v6399 = vadd.f32 %v6235, %v6357
        %v6400 = vadd.f32 %v6236, %v6362
        %v6401 = vadd.f32 %v6237, %v6367
        %v6402 = vadd.f32 %v6238, %v6372
        %v6403 = vadd.f32 %v6239, %v6377
        %v6404 = vadd.f32 %v6240, %v6382
        %v6405 = vadd.f32 %v6241, %v6387
        %v6407 = vsel %vm5044, %v5007, 0
        %6409 = vmatprep.subr.mxu0 0.0
        %6410 = vmatpush1.msra.mxu0 %v5040
        %6411 = vmatprep.subr.mxu0 0.0
        %6412 = vmatpush1.msra.mxu0 %v5041
        %6413 = vmatprep.subr.mxu0 0.0
        %6414 = vmatpush1.msra.mxu0 %v5042
        %6415 = vmatprep.subr.mxu0 0.0
        %6416 = vmatpush1.msra.mxu0 %v5043
        %6417 = vmatprep.subr.mxu0 0.0
        %6418 = vmatpush1.msra.mxu0 0.0
        %6419 = vmatprep.subr.mxu0 0.0
        %6420 = vmatpush1.msra.mxu0 0.0
        %6421 = vmatprep.subr.mxu0 0.0
        %6422 = vmatpush1.msra.mxu0 0.0
        %6423 = vmatprep.subr.mxu0 0.0
        %6424 = vmatpush1.msra.mxu0 0.0
        %6425 = vmatprep.subr.mxu0 0.0
        %6426 = vmatpush1.msra.mxu0 0.0
        %6427 = vmatprep.subr.mxu0 0.0
        %6428 = vmatpush1.msra.mxu0 0.0
        %6429 = vmatprep.subr.mxu0 0.0
        %6430 = vmatpush1.msra.mxu0 0.0
        %6431 = vmatprep.subr.mxu0 0.0
        %6432 = vmatpush1.msra.mxu0 0.0
        %6433 = vmatprep.subr.mxu0 0.0
        %6434 = vmatpush1.msra.mxu0 0.0
        %6435 = vmatprep.subr.mxu0 0.0
        %6436 = vmatpush1.msra.mxu0 0.0
        %6437 = vmatprep.subr.mxu0 0.0
        %6438 = vmatpush1.msra.mxu0 0.0
        %6439 = vmatprep.subr.mxu0 0.0
        %6440 = vmatpush1.msra.mxu0 0.0
        %6441 = vmatprep.subr.mxu0 0.0
        %6442 = vmatpush1.msra.mxu0 0.0
        %6443 = vmatprep.subr.mxu0 0.0
        %6444 = vmatpush1.msra.mxu0 0.0
        %6445 = vmatprep.subr.mxu0 0.0
        %6446 = vmatpush1.msra.mxu0 0.0
        %6447 = vmatprep.subr.mxu0 0.0
        %6448 = vmatpush1.msra.mxu0 0.0
        %6449 = vmatprep.subr.mxu0 0.0
        %6450 = vmatpush1.msra.mxu0 0.0
        %6451 = vmatprep.subr.mxu0 0.0
        %6452 = vmatpush1.msra.mxu0 0.0
        %6453 = vmatprep.subr.mxu0 0.0
        %6454 = vmatpush1.msra.mxu0 0.0
        %6455 = vmatprep.subr.mxu0 0.0
        %6456 = vmatpush1.msra.mxu0 0.0
        %6457 = vmatprep.subr.mxu0 0.0
        %6458 = vmatpush1.msra.mxu0 0.0
        %6459 = vmatprep.subr.mxu0 0.0
        %6460 = vmatpush1.msra.mxu0 0.0
        %6461 = vmatprep.subr.mxu0 0.0
        %6462 = vmatpush1.msra.mxu0 0.0
        %6463 = vmatprep.subr.mxu0 0.0
        %6464 = vmatpush1.msra.mxu0 0.0
        %6465 = vmatprep.subr.mxu0 0.0
        %6466 = vmatpush1.msra.mxu0 0.0
        %6467 = vmatprep.subr.mxu0 0.0
        %6468 = vmatpush1.msra.mxu0 0.0
        %6469 = vmatprep.subr.mxu0 0.0
        %6470 = vmatpush1.msra.mxu0 0.0
        %6471 = vmatprep.subr.mxu0 0.0
        %6472 = vmatpush1.msra.mxu0 0.0
        %6473 = vmatprep.mubr.f32.mxu0 0.0
        %6474 = vmatmul.mubr.f32.gmra.mrb[0].mxu0 %v5064
        %v6475 = vpop.f32.mrb[0].mxu0
        %v6476 = vadd.f32 0.0, %v6475
        %v6477 = vpop.f32.mrb[0].mxu0
        %6478 = vmatprep.mubr.f32.mxu0 0.0
        %6479 = vmatmul.mubr.f32.gmra.mrb[0].mxu0 %v5067
        %v6480 = vpop.f32.mrb[0].mxu0
        %v6481 = vadd.f32 0.0, %v6480
        %v6482 = vpop.f32.mrb[0].mxu0
        %6483 = vmatprep.mubr.f32.mxu0 0.0
        %6484 = vmatmul.mubr.f32.gmra.mrb[0].mxu0 %v5572
        %v6485 = vpop.f32.mrb[0].mxu0
        %v6486 = vadd.f32 0.0, %v6485
        %v6487 = vpop.f32.mrb[0].mxu0
        %6488 = vmatprep.mubr.f32.mxu0 0.0
        %6489 = vmatmul.mubr.f32.gmra.mrb[0].mxu0 %v5742
        %v6490 = vpop.f32.mrb[0].mxu0
        %v6491 = vadd.f32 0.0, %v6490
        %v6492 = vpop.f32.mrb[0].mxu0
        %6493 = vmatprep.mubr.f32.mxu0 0.0
        %6494 = vmatmul.mubr.f32.gmra.mrb[0].mxu0 %v5055
        %v6495 = vpop.f32.mrb[0].mxu0
        %v6496 = vadd.f32 0.0, %v6495
        %v6497 = vpop.f32.mrb[0].mxu0
        %6498 = vmatprep.mubr.f32.mxu0 0.0
        %6499 = vmatmul.mubr.f32.gmra.mrb[0].mxu0 %v5399
        %v6500 = vpop.f32.mrb[0].mxu0
        %v6501 = vadd.f32 0.0, %v6500
        %v6502 = vpop.f32.mrb[0].mxu0
        %6503 = vmatprep.mubr.f32.mxu0 0.0
        %6504 = vmatmul.mubr.f32.gmra.mrb[0].mxu0 %v5578
        %v6505 = vpop.f32.mrb[0].mxu0
        %v6506 = vadd.f32 0.0, %v6505
        %v6507 = vpop.f32.mrb[0].mxu0
        %6508 = vmatprep.mubr.f32.mxu0 0.0
        %6509 = vmatmul.mubr.f32.gmra.mrb[0].mxu0 %v5906
        %v6510 = vpop.f32.mrb[0].mxu0
        %v6511 = vadd.f32 0.0, %v6510
        %v6512 = vpop.f32.mrb[0].mxu0
        %6513 = vmatprep.mubr.f32.mxu0 0.0
        %6514 = vmatmul.mubr.f32.gmra.mrb[0].mxu0 %v5088
        %v6515 = vpop.f32.mrb[0].mxu0
        %v6516 = vadd.f32 0.0, %v6515
        %v6517 = vpop.f32.mrb[0].mxu0
        %6518 = vmatprep.mubr.f32.mxu0 0.0
        %6519 = vmatmul.mubr.f32.gmra.mrb[0].mxu0 %v5091
        %v6520 = vpop.f32.mrb[0].mxu0
        %v6521 = vadd.f32 0.0, %v6520
        %v6522 = vpop.f32.mrb[0].mxu0
        %6523 = vmatprep.mubr.f32.mxu0 0.0
        %6524 = vmatmul.mubr.f32.gmra.mrb[0].mxu0 %v6073
        %v6525 = vpop.f32.mrb[0].mxu0
        %v6526 = vadd.f32 0.0, %v6525
        %v6527 = vpop.f32.mrb[0].mxu0
        %6528 = vmatprep.mubr.f32.mxu0 0.0
        %6529 = vmatmul.mubr.f32.gmra.mrb[0].mxu0 %v6243
        %v6530 = vpop.f32.mrb[0].mxu0
        %v6531 = vadd.f32 0.0, %v6530
        %v6532 = vpop.f32.mrb[0].mxu0
        %6533 = vmatprep.mubr.f32.mxu0 0.0
        %6534 = vmatmul.mubr.f32.gmra.mrb[0].mxu0 %v5079
        %v6535 = vpop.f32.mrb[0].mxu0
        %v6536 = vadd.f32 0.0, %v6535
        %v6537 = vpop.f32.mrb[0].mxu0
        %6538 = vmatprep.mubr.f32.mxu0 0.0
        %6539 = vmatmul.mubr.f32.gmra.mrb[0].mxu0 %v5405
        %v6540 = vpop.f32.mrb[0].mxu0
        %v6541 = vadd.f32 0.0, %v6540
        %v6542 = vpop.f32.mrb[0].mxu0
        %6543 = vmatprep.mubr.f32.mxu0 0.0
        %6544 = vmatmul.mubr.f32.gmra.mrb[0].mxu0 %v6079
        %v6545 = vpop.f32.mrb[0].mxu0
        %v6546 = vadd.f32 0.0, %v6545
        %v6547 = vpop.f32.mrb[0].mxu0
        %6548 = vmatprep.mubr.f32.mxu0 0.0
        %6549 = vmatmul.mubr.f32.gmra.mrb[0].mxu0 %v6407
        %v6550 = vpop.f32.mrb[0].mxu0
        %v6551 = vadd.f32 0.0, %v6550
        %v6552 = vpop.f32.mrb[0].mxu0
        %6553 = vdwg.mxu0
        %v6554 = vadd.f32 %v6390, %v6476
        %v6555 = vadd.f32 %v6391, %v6481
        %v6556 = vadd.f32 %v6392, %v6486
        %v6557 = vadd.f32 %v6393, %v6491
        %v6558 = vadd.f32 %v6394, %v6496
        %v6559 = vadd.f32 %v6395, %v6501
        %v6560 = vadd.f32 %v6396, %v6506
        %v6561 = vadd.f32 %v6397, %v6511
        %v6562 = vadd.f32 %v6398, %v6516
        %v6563 = vadd.f32 %v6399, %v6521
        %v6564 = vadd.f32 %v6400, %v6526
        %v6565 = vadd.f32 %v6401, %v6531
        %v6566 = vadd.f32 %v6402, %v6536
        %v6567 = vadd.f32 %v6403, %v6541
        %v6568 = vadd.f32 %v6404, %v6546
        %v6569 = vadd.f32 %v6405, %v6551
        %v6570 = vmax.f32 %v6554, %v6558
        %v6571 = vmax.f32 %v6555, %v6559
        %v6572 = vmax.f32 %v6556, %v6560
        %v6573 = vmax.f32 %v6557, %v6561
        %v6574 = vmax.f32 %v6562, %v6566
        %v6575 = vmax.f32 %v6563, %v6567
        %v6576 = vmax.f32 %v6564, %v6568
        %v6577 = vmax.f32 %v6565, %v6569
        %v6578 = vmax.f32 %v6570, %v6574
        %v6579 = vmax.f32 %v6571, %v6575
        %v6580 = vmax.f32 %v6572, %v6576
        %v6581 = vmax.f32 %v6573, %v6577
        %v6582 = vld [vmem:[%s4] sm:$0x1]
        %v6584 = vlaneseq
        %v6585 = vshrl.u32 %v6584, 7
        %v6586 = vsub.s32 0, %v6585
        %v6587 = vrot.slane %v6582, %v6586
        %v6589 = vadd.f32 %v6578, %v6587
        %v6590 = vadd.f32 %v6579, %v6587
        %v6591 = vadd.f32 %v6580, %v6587
        %v6592 = vadd.f32 %v6581, %v6587
        %v6593 = vmax.f32 %v6589, 0.0
        %v6594 = vmax.f32 %v6590, 0.0
        %v6595 = vmax.f32 %v6591, 0.0
        %v6596 = vmax.f32 %v6592, 0.0
        %v6597 = vld [vmem:[%s5] sm:$0xff]
        %v6598 = vld [vmem:[%s5 + $0x8] sm:$0xff]
        %v6599 = vld [vmem:[%s5 + $0x10] sm:$0xff]
        %v6600 = vld [vmem:[%s5 + $0x18] sm:$0xff]
        %v6601 = vld [vmem:[%s5 + $0x20] sm:$0xff]
        %v6602 = vld [vmem:[%s5 + $0x28] sm:$0xff]
        %v6603 = vld [vmem:[%s5 + $0x30] sm:$0xff]
        %v6604 = vld [vmem:[%s5 + $0x38] sm:$0xff]
        %v6605 = vld [vmem:[%s5 + $0x40] sm:$0xff]
        %v6606 = vld [vmem:[%s5 + $0x48] sm:$0xff]
        %v6607 = vld [vmem:[%s5 + $0x50] sm:$0xff]
        %v6608 = vld [vmem:[%s5 + $0x58] sm:$0xff]
        %v6609 = vld [vmem:[%s5 + $0x60] sm:$0xff]
        %v6610 = vld [vmem:[%s5 + $0x68] sm:$0xff]
        %v6611 = vld [vmem:[%s5 + $0x70] sm:$0xff]
        %v6612 = vld [vmem:[%s5 + $0x78] sm:$0xff]
        %v6613 = vld [vmem:[%s5 + $0x80] sm:$0xff]
        %v6614 = vld [vmem:[%s5 + $0x88] sm:$0xff]
        %v6615 = vld [vmem:[%s5 + $0x90] sm:$0xff]
        %v6616 = vld [vmem:[%s5 + $0x98] sm:$0xff]
        %v6617 = vld [vmem:[%s5 + $0xa0] sm:$0xff]
        %v6618 = vld [vmem:[%s5 + $0xa8] sm:$0xff]
        %v6619 = vld [vmem:[%s5 + $0xb0] sm:$0xff]
        %v6620 = vld [vmem:[%s5 + $0xb8] sm:$0xff]
        %v6621 = vld [vmem:[%s5 + $0xc0] sm:$0xff]
        %v6622 = vld [vmem:[%s5 + $0xc8] sm:$0xff]
        %v6623 = vld [vmem:[%s5 + $0xd0] sm:$0xff]
        %v6624 = vld [vmem:[%s5 + $0xd8] sm:$0xff]
        %v6625 = vld [vmem:[%s5 + $0xe0] sm:$0xff]
        %v6626 = vld [vmem:[%s5 + $0xe8] sm:$0xff]
        %v6627 = vld [vmem:[%s5 + $0xf0] sm:$0xff]
        %v6628 = vld [vmem:[%s5 + $0xf8] sm:$0xff]
        %vm6629 = vcmask 523264
        %v6631 = vsel %vm6629, %v6594, 0
        %6633 = vmatprep.subr.mxu0 0.0
        %6634 = vmatpush1.msra.mxu0 %v6605
        %6635 = vmatprep.subr.mxu0 0.0
        %6636 = vmatpush1.msra.mxu0 %v6606
        %6637 = vmatprep.subr.mxu0 0.0
        %6638 = vmatpush1.msra.mxu0 %v6607
        %6639 = vmatprep.subr.mxu0 0.0
        %6640 = vmatpush1.msra.mxu0 %v6608
        %6641 = vmatprep.subr.mxu0 0.0
        %6642 = vmatpush1.msra.mxu0 %v6609
        %6643 = vmatprep.subr.mxu0 0.0
        %6644 = vmatpush1.msra.mxu0 %v6610
        %6645 = vmatprep.subr.mxu0 0.0
        %6646 = vmatpush1.msra.mxu0 %v6611
        %6647 = vmatprep.subr.mxu0 0.0
        %6648 = vmatpush1.msra.mxu0 %v6612
        %6649 = vmatprep.subr.mxu0 0.0
        %6650 = vmatpush1.msra.mxu0 0.0
        %6651 = vmatprep.subr.mxu0 0.0
        %6652 = vmatpush1.msra.mxu0 0.0
        %6653 = vmatprep.subr.mxu0 0.0
        %6654 = vmatpush1.msra.mxu0 0.0
        %6655 = vmatprep.subr.mxu0 0.0
        %6656 = vmatpush1.msra.mxu0 0.0
        %6657 = vmatprep.subr.mxu0 0.0
        %6658 = vmatpush1.msra.mxu0 0.0
        %6659 = vmatprep.subr.mxu0 0.0
        %6660 = vmatpush1.msra.mxu0 0.0
        %6661 = vmatprep.subr.mxu0 0.0
        %6662 = vmatpush1.msra.mxu0 0.0
        %6663 = vmatprep.subr.mxu0 0.0
        %6664 = vmatpush1.msra.mxu0 0.0
        %6665 = vmatprep.subr.mxu0 0.0
        %6666 = vmatpush1.msra.mxu0 0.0
        %6667 = vmatprep.subr.mxu0 0.0
        %6668 = vmatpush1.msra.mxu0 0.0
        %6669 = vmatprep.subr.mxu0 0.0
        %6670 = vmatpush1.msra.mxu0 0.0
        %6671 = vmatprep.subr.mxu0 0.0
        %6672 = vmatpush1.msra.mxu0 0.0
        %6673 = vmatprep.subr.mxu0 0.0
        %6674 = vmatpush1.msra.mxu0 0.0
        %6675 = vmatprep.subr.mxu0 0.0
        %6676 = vmatpush1.msra.mxu0 0.0
        %6677 = vmatprep.subr.mxu0 0.0
        %6678 = vmatpush1.msra.mxu0 0.0
        %6679 = vmatprep.subr.mxu0 0.0
        %6680 = vmatpush1.msra.mxu0 0.0
        %6681 = vmatprep.subr.mxu0 0.0
        %6682 = vmatpush1.msra.mxu0 0.0
        %6683 = vmatprep.subr.mxu0 0.0
        %6684 = vmatpush1.msra.mxu0 0.0
        %6685 = vmatprep.subr.mxu0 0.0
        %6686 = vmatpush1.msra.mxu0 0.0
        %6687 = vmatprep.subr.mxu0 0.0
        %6688 = vmatpush1.msra.mxu0 0.0
        %6689 = vmatprep.subr.mxu0 0.0
        %6690 = vmatpush1.msra.mxu0 0.0
        %6691 = vmatprep.subr.mxu0 0.0
        %6692 = vmatpush1.msra.mxu0 0.0
        %6693 = vmatprep.subr.mxu0 0.0
        %6694 = vmatpush1.msra.mxu0 0.0
        %6695 = vmatprep.subr.mxu0 0.0
        %6696 = vmatpush1.msra.mxu0 0.0
        %6697 = vmatprep.mubr.f32.mxu0 0.0
        %6698 = vmatmul.mubr.f32.gmra.mrb[0].mxu0 %v6631
        %v6699 = vpop.f32.mrb[0].mxu0
        %v6700 = vadd.f32 0.0, %v6699
        %v6701 = vpop.f32.mrb[0].mxu0
        %6702 = vdwg.mxu0
        %v6704 = vsel %vm6629, %v6593, 0
        %6706 = vmatprep.subr.mxu0 0.0
        %6707 = vmatpush1.msra.mxu0 %v6597
        %6708 = vmatprep.subr.mxu0 0.0
        %6709 = vmatpush1.msra.mxu0 %v6598
        %6710 = vmatprep.subr.mxu0 0.0
        %6711 = vmatpush1.msra.mxu0 %v6599
        %6712 = vmatprep.subr.mxu0 0.0
        %6713 = vmatpush1.msra.mxu0 %v6600
        %6714 = vmatprep.subr.mxu0 0.0
        %6715 = vmatpush1.msra.mxu0 %v6601
        %6716 = vmatprep.subr.mxu0 0.0
        %6717 = vmatpush1.msra.mxu0 %v6602
        %6718 = vmatprep.subr.mxu0 0.0
        %6719 = vmatpush1.msra.mxu0 %v6603
        %6720 = vmatprep.subr.mxu0 0.0
        %6721 = vmatpush1.msra.mxu0 %v6604
        %6722 = vmatprep.subr.mxu0 0.0
        %6723 = vmatpush1.msra.mxu0 0.0
        %6724 = vmatprep.subr.mxu0 0.0
        %6725 = vmatpush1.msra.mxu0 0.0
        %6726 = vmatprep.subr.mxu0 0.0
        %6727 = vmatpush1.msra.mxu0 0.0
        %6728 = vmatprep.subr.mxu0 0.0
        %6729 = vmatpush1.msra.mxu0 0.0
        %6730 = vmatprep.subr.mxu0 0.0
        %6731 = vmatpush1.msra.mxu0 0.0
        %6732 = vmatprep.subr.mxu0 0.0
        %6733 = vmatpush1.msra.mxu0 0.0
        %6734 = vmatprep.subr.mxu0 0.0
        %6735 = vmatpush1.msra.mxu0 0.0
        %6736 = vmatprep.subr.mxu0 0.0
        %6737 = vmatpush1.msra.mxu0 0.0
        %6738 = vmatprep.subr.mxu0 0.0
        %6739 = vmatpush1.msra.mxu0 0.0
        %6740 = vmatprep.subr.mxu0 0.0
        %6741 = vmatpush1.msra.mxu0 0.0
        %6742 = vmatprep.subr.mxu0 0.0
        %6743 = vmatpush1.msra.mxu0 0.0
        %6744 = vmatprep.subr.mxu0 0.0
        %6745 = vmatpush1.msra.mxu0 0.0
        %6746 = vmatprep.subr.mxu0 0.0
        %6747 = vmatpush1.msra.mxu0 0.0
        %6748 = vmatprep.subr.mxu0 0.0
        %6749 = vmatpush1.msra.mxu0 0.0
        %6750 = vmatprep.subr.mxu0 0.0
        %6751 = vmatpush1.msra.mxu0 0.0
        %6752 = vmatprep.subr.mxu0 0.0
        %6753 = vmatpush1.msra.mxu0 0.0
        %6754 = vmatprep.subr.mxu0 0.0
        %6755 = vmatpush1.msra.mxu0 0.0
        %6756 = vmatprep.subr.mxu0 0.0
        %6757 = vmatpush1.msra.mxu0 0.0
        %6758 = vmatprep.subr.mxu0 0.0
        %6759 = vmatpush1.msra.mxu0 0.0
        %6760 = vmatprep.subr.mxu0 0.0
        %6761 = vmatpush1.msra.mxu0 0.0
        %6762 = vmatprep.subr.mxu0 0.0
        %6763 = vmatpush1.msra.mxu0 0.0
        %6764 = vmatprep.subr.mxu0 0.0
        %6765 = vmatpush1.msra.mxu0 0.0
        %6766 = vmatprep.subr.mxu0 0.0
        %6767 = vmatpush1.msra.mxu0 0.0
        %6768 = vmatprep.subr.mxu0 0.0
        %6769 = vmatpush1.msra.mxu0 0.0
        %6770 = vmatprep.mubr.f32.mxu0 0.0
        %6771 = vmatmul.mubr.f32.gmra.mrb[0].mxu0 %v6704
        %v6772 = vpop.f32.mrb[0].mxu0
        %v6773 = vadd.f32 %v6700, %v6772
        %v6774 = vpop.f32.mrb[0].mxu0
        %6775 = vdwg.mxu0
        %v6777 = vsel %vm6629, %v6595, 0
        %6779 = vmatprep.subr.mxu0 0.0
        %6780 = vmatpush1.msra.mxu0 %v6613
        %6781 = vmatprep.subr.mxu0 0.0
        %6782 = vmatpush1.msra.mxu0 %v6614
        %6783 = vmatprep.subr.mxu0 0.0
        %6784 = vmatpush1.msra.mxu0 %v6615
        %6785 = vmatprep.subr.mxu0 0.0
        %6786 = vmatpush1.msra.mxu0 %v6616
        %6787 = vmatprep.subr.mxu0 0.0
        %6788 = vmatpush1.msra.mxu0 %v6617
        %6789 = vmatprep.subr.mxu0 0.0
        %6790 = vmatpush1.msra.mxu0 %v6618
        %6791 = vmatprep.subr.mxu0 0.0
        %6792 = vmatpush1.msra.mxu0 %v6619
        %6793 = vmatprep.subr.mxu0 0.0
        %6794 = vmatpush1.msra.mxu0 %v6620
        %6795 = vmatprep.subr.mxu0 0.0
        %6796 = vmatpush1.msra.mxu0 0.0
        %6797 = vmatprep.subr.mxu0 0.0
        %6798 = vmatpush1.msra.mxu0 0.0
        %6799 = vmatprep.subr.mxu0 0.0
        %6800 = vmatpush1.msra.mxu0 0.0
        %6801 = vmatprep.subr.mxu0 0.0
        %6802 = vmatpush1.msra.mxu0 0.0
        %6803 = vmatprep.subr.mxu0 0.0
        %6804 = vmatpush1.msra.mxu0 0.0
        %6805 = vmatprep.subr.mxu0 0.0
        %6806 = vmatpush1.msra.mxu0 0.0
        %6807 = vmatprep.subr.mxu0 0.0
        %6808 = vmatpush1.msra.mxu0 0.0
        %6809 = vmatprep.subr.mxu0 0.0
        %6810 = vmatpush1.msra.mxu0 0.0
        %6811 = vmatprep.subr.mxu0 0.0
        %6812 = vmatpush1.msra.mxu0 0.0
        %6813 = vmatprep.subr.mxu0 0.0
        %6814 = vmatpush1.msra.mxu0 0.0
        %6815 = vmatprep.subr.mxu0 0.0
        %6816 = vmatpush1.msra.mxu0 0.0
        %6817 = vmatprep.subr.mxu0 0.0
        %6818 = vmatpush1.msra.mxu0 0.0
        %6819 = vmatprep.subr.mxu0 0.0
        %6820 = vmatpush1.msra.mxu0 0.0
        %6821 = vmatprep.subr.mxu0 0.0
        %6822 = vmatpush1.msra.mxu0 0.0
        %6823 = vmatprep.subr.mxu0 0.0
        %6824 = vmatpush1.msra.mxu0 0.0
        %6825 = vmatprep.subr.mxu0 0.0
        %6826 = vmatpush1.msra.mxu0 0.0
        %6827 = vmatprep.subr.mxu0 0.0
        %6828 = vmatpush1.msra.mxu0 0.0
        %6829 = vmatprep.subr.mxu0 0.0
        %6830 = vmatpush1.msra.mxu0 0.0
        %6831 = vmatprep.subr.mxu0 0.0
        %6832 = vmatpush1.msra.mxu0 0.0
        %6833 = vmatprep.subr.mxu0 0.0
        %6834 = vmatpush1.msra.mxu0 0.0
        %6835 = vmatprep.subr.mxu0 0.0
        %6836 = vmatpush1.msra.mxu0 0.0
        %6837 = vmatprep.subr.mxu0 0.0
        %6838 = vmatpush1.msra.mxu0 0.0
        %6839 = vmatprep.subr.mxu0 0.0
        %6840 = vmatpush1.msra.mxu0 0.0
        %6841 = vmatprep.subr.mxu0 0.0
        %6842 = vmatpush1.msra.mxu0 0.0
        %6843 = vmatprep.mubr.f32.mxu0 0.0
        %6844 = vmatmul.mubr.f32.gmra.mrb[0].mxu0 %v6777
        %v6845 = vpop.f32.mrb[0].mxu0
        %v6846 = vadd.f32 0.0, %v6845
        %v6847 = vpop.f32.mrb[0].mxu0
        %6848 = vdwg.mxu0
        %v6849 = vadd.f32 %v6773, %v6846
        %v6851 = vsel %vm6629, %v6596, 0
        %6853 = vmatprep.subr.mxu0 0.0
        %6854 = vmatpush1.msra.mxu0 %v6621
        %6855 = vmatprep.subr.mxu0 0.0
        %6856 = vmatpush1.msra.mxu0 %v6622
        %6857 = vmatprep.subr.mxu0 0.0
        %6858 = vmatpush1.msra.mxu0 %v6623
        %6859 = vmatprep.subr.mxu0 0.0
        %6860 = vmatpush1.msra.mxu0 %v6624
        %6861 = vmatprep.subr.mxu0 0.0
        %6862 = vmatpush1.msra.mxu0 %v6625
        %6863 = vmatprep.subr.mxu0 0.0
        %6864 = vmatpush1.msra.mxu0 %v6626
        %6865 = vmatprep.subr.mxu0 0.0
        %6866 = vmatpush1.msra.mxu0 %v6627
        %6867 = vmatprep.subr.mxu0 0.0
        %6868 = vmatpush1.msra.mxu0 %v6628
        %6869 = vmatprep.subr.mxu0 0.0
        %6870 = vmatpush1.msra.mxu0 0.0
        %6871 = vmatprep.subr.mxu0 0.0
        %6872 = vmatpush1.msra.mxu0 0.0
        %6873 = vmatprep.subr.mxu0 0.0
        %6874 = vmatpush1.msra.mxu0 0.0
        %6875 = vmatprep.subr.mxu0 0.0
        %6876 = vmatpush1.msra.mxu0 0.0
        %6877 = vmatprep.subr.mxu0 0.0
        %6878 = vmatpush1.msra.mxu0 0.0
        %6879 = vmatprep.subr.mxu0 0.0
        %6880 = vmatpush1.msra.mxu0 0.0
        %6881 = vmatprep.subr.mxu0 0.0
        %6882 = vmatpush1.msra.mxu0 0.0
        %6883 = vmatprep.subr.mxu0 0.0
        %6884 = vmatpush1.msra.mxu0 0.0
        %6885 = vmatprep.subr.mxu0 0.0
        %6886 = vmatpush1.msra.mxu0 0.0
        %6887 = vmatprep.subr.mxu0 0.0
        %6888 = vmatpush1.msra.mxu0 0.0
        %6889 = vmatprep.subr.mxu0 0.0
        %6890 = vmatpush1.msra.mxu0 0.0
        %6891 = vmatprep.subr.mxu0 0.0
        %6892 = vmatpush1.msra.mxu0 0.0
        %6893 = vmatprep.subr.mxu0 0.0
        %6894 = vmatpush1.msra.mxu0 0.0
        %6895 = vmatprep.subr.mxu0 0.0
        %6896 = vmatpush1.msra.mxu0 0.0
        %6897 = vmatprep.subr.mxu0 0.0
        %6898 = vmatpush1.msra.mxu0 0.0
        %6899 = vmatprep.subr.mxu0 0.0
        %6900 = vmatpush1.msra.mxu0 0.0
        %6901 = vmatprep.subr.mxu0 0.0
        %6902 = vmatpush1.msra.mxu0 0.0
        %6903 = vmatprep.subr.mxu0 0.0
        %6904 = vmatpush1.msra.mxu0 0.0
        %6905 = vmatprep.subr.mxu0 0.0
        %6906 = vmatpush1.msra.mxu0 0.0
        %6907 = vmatprep.subr.mxu0 0.0
        %6908 = vmatpush1.msra.mxu0 0.0
        %6909 = vmatprep.subr.mxu0 0.0
        %6910 = vmatpush1.msra.mxu0 0.0
        %6911 = vmatprep.subr.mxu0 0.0
        %6912 = vmatpush1.msra.mxu0 0.0
        %6913 = vmatprep.subr.mxu0 0.0
        %6914 = vmatpush1.msra.mxu0 0.0
        %6915 = vmatprep.subr.mxu0 0.0
        %6916 = vmatpush1.msra.mxu0 0.0
        %6917 = vmatprep.mubr.f32.mxu0 0.0
        %6918 = vmatmul.mubr.f32.gmra.mrb[0].mxu0 %v6851
        %v6919 = vpop.f32.mrb[0].mxu0
        %v6920 = vadd.f32 0.0, %v6919
        %v6921 = vpop.f32.mrb[0].mxu0
        %6922 = vdwg.mxu0
        %v6923 = vadd.f32 %v6849, %v6920
        %v6924 = vld [vmem:[%s6] sm:$0x1]
        %v6926 = vlaneseq
        %v6927 = vshrl.u32 %v6926, 7
        %v6928 = vsub.s32 0, %v6927
        %v6929 = vrot.slane %v6924, %v6928
        %v6931 = vadd.f32 %v6923, %v6929
        %v6932 = vmax.f32 %v6931, 0.0
        %v6933 = vld [vmem:[%s7] sm:$0xff]
        %v6934 = vld [vmem:[%s7 + $0x8] sm:$0xff]
        %v6935 = vld [vmem:[%s7 + $0x10] sm:$0xff]
        %v6936 = vld [vmem:[%s7 + $0x18] sm:$0xff]
        %v6937 = vld [vmem:[%s8] sm:$0x1]
        %v6939 = vlaneseq
        %v6940 = vshrl.u32 %v6939, 7
        %v6941 = vsub.s32 0, %v6940
        %v6942 = vrot.slane %v6937, %v6941
        %v6945 = vsel %vm5044, %v6932, 0
        %6947 = vmatprep.subr.mxu0 0.0
        %6948 = vmatpush1.msra.mxu0 %v6933
        %6949 = vmatprep.subr.mxu0 0.0
        %6950 = vmatpush1.msra.mxu0 %v6934
        %6951 = vmatprep.subr.mxu0 0.0
        %6952 = vmatpush1.msra.mxu0 %v6935
        %6953 = vmatprep.subr.mxu0 0.0
        %6954 = vmatpush1.msra.mxu0 %v6936
        %6955 = vmatprep.subr.mxu0 0.0
        %6956 = vmatpush1.msra.mxu0 0.0
        %6957 = vmatprep.subr.mxu0 0.0
        %6958 = vmatpush1.msra.mxu0 0.0
        %6959 = vmatprep.subr.mxu0 0.0
        %6960 = vmatpush1.msra.mxu0 0.0
        %6961 = vmatprep.subr.mxu0 0.0
        %6962 = vmatpush1.msra.mxu0 0.0
        %6963 = vmatprep.subr.mxu0 0.0
        %6964 = vmatpush1.msra.mxu0 0.0
        %6965 = vmatprep.subr.mxu0 0.0
        %6966 = vmatpush1.msra.mxu0 0.0
        %6967 = vmatprep.subr.mxu0 0.0
        %6968 = vmatpush1.msra.mxu0 0.0
        %6969 = vmatprep.subr.mxu0 0.0
        %6970 = vmatpush1.msra.mxu0 0.0
        %6971 = vmatprep.subr.mxu0 0.0
        %6972 = vmatpush1.msra.mxu0 0.0
        %6973 = vmatprep.subr.mxu0 0.0
        %6974 = vmatpush1.msra.mxu0 0.0
        %6975 = vmatprep.subr.mxu0 0.0
        %6976 = vmatpush1.msra.mxu0 0.0
        %6977 = vmatprep.subr.mxu0 0.0
        %6978 = vmatpush1.msra.mxu0 0.0
        %6979 = vmatprep.subr.mxu0 0.0
        %6980 = vmatpush1.msra.mxu0 0.0
        %6981 = vmatprep.subr.mxu0 0.0
        %6982 = vmatpush1.msra.mxu0 0.0
        %6983 = vmatprep.subr.mxu0 0.0
        %6984 = vmatpush1.msra.mxu0 0.0
        %6985 = vmatprep.subr.mxu0 0.0
        %6986 = vmatpush1.msra.mxu0 0.0
        %6987 = vmatprep.subr.mxu0 0.0
        %6988 = vmatpush1.msra.mxu0 0.0
        %6989 = vmatprep.subr.mxu0 0.0
        %6990 = vmatpush1.msra.mxu0 0.0
        %6991 = vmatprep.subr.mxu0 0.0
        %6992 = vmatpush1.msra.mxu0 0.0
        %6993 = vmatprep.subr.mxu0 0.0
        %6994 = vmatpush1.msra.mxu0 0.0
        %6995 = vmatprep.subr.mxu0 0.0
        %6996 = vmatpush1.msra.mxu0 0.0
        %6997 = vmatprep.subr.mxu0 0.0
        %6998 = vmatpush1.msra.mxu0 0.0
        %6999 = vmatprep.subr.mxu0 0.0
        %7000 = vmatpush1.msra.mxu0 0.0
        %7001 = vmatprep.subr.mxu0 0.0
        %7002 = vmatpush1.msra.mxu0 0.0
        %7003 = vmatprep.subr.mxu0 0.0
        %7004 = vmatpush1.msra.mxu0 0.0
        %7005 = vmatprep.subr.mxu0 0.0
        %7006 = vmatpush1.msra.mxu0 0.0
        %7007 = vmatprep.subr.mxu0 0.0
        %7008 = vmatpush1.msra.mxu0 0.0
        %7009 = vmatprep.subr.mxu0 0.0
        %7010 = vmatpush1.msra.mxu0 0.0
        %7011 = vmatprep.mubr.f32.mxu0 0.0
        %7012 = vmatmul.mubr.f32.gmra.mrb[0].mxu0 %v6945
        %v7013 = vpop.f32.mrb[0].mxu0
        %v7014 = vadd.f32 %v6942, %v7013
        %v7015 = vpop.f32.mrb[0].mxu0
        %7016 = vdwg.mxu0
        %7017 = vst [vmem:[%s325] sm:$0xff] %v7014
        %s7018 = sand.u32 %s225, 1
        %s7019 = scalar_lea.sflag [#allocation3], %s7018
        %s7020 = sand.u32 %s225, 1
        %s7021 = smul.addr %s7020, 8
        %s7022 = scalar_lea.vmem [#allocation2], %s7021
        // Predicated region
        $region57: #{digitnet_forward.1} parent=55 // pred_check
          %p7023 = pneg %p235
        $region58: #{digitnet_forward.1} parent=55 // pred_check_branch
          %7025 = sbr.rel (%p7023) target = $region60
        $region59: #{digitnet_forward.1} parent=55 // pred_region
          %s7027 = ssub.s32 128, 128
          %7028 = vsyncadd %s7019, %s7027
          %s7029 = smul.addr %s23, 128
          %s7030 = scalar_lea.hbm %s9, %s7029
          %s7032 = sshll.u32 %s7022, 4
          %s7033 = int_to_ptr.vmem [resolvable:$true] %s7032
          %7035 = dma.vmem_to_hbm [thread:$0]  %s7033, 128, %s7030, %s7019
        $region60: #{digitnet_forward.1} parent=55 // pred_fallthru
          _
      $region56: #{digitnet_forward.1} parent=5 // pred_fallthru
        _
      %p7036 = scmp.le.s32.totalorder 2, %s18
      // Predicated region
      $region61: #{digitnet_forward.1} parent=5 // pred_check
        %p7037 = pneg %p7036
      $region62: #{digitnet_forward.1} parent=5 // pred_check_branch
        %7039 = sbr.rel (%p7037) target = $region64
      $region63: #{digitnet_forward.1} parent=5 // pred_region
        %s7040 = ssub.s32 %s18, 2
        // Predicated region
        $region65: #{digitnet_forward.1} parent=63 // pred_check
          %p7041 = pneg %p241
        $region66: #{digitnet_forward.1} parent=63 // pred_check_branch
          %7043 = sbr.rel (%p7041) target = $region68
        $region67: #{digitnet_forward.1} parent=63 // pred_region
          %s7044 = sand.u32 %s226, 1
          %s7045 = scalar_lea.sflag [#allocation3], %s7044
          %s7046 = sand.u32 %s226, 1
          %s7047 = smul.addr %s7046, 8
          %s7048 = scalar_lea.vmem [#allocation2], %s7047
          %7049 = dma.done %s7045, 128
        $region68: #{digitnet_forward.1} parent=63 // pred_fallthru
          _
      $region64: #{digitnet_forward.1} parent=5 // pred_fallthru
        _
    $region6: #{digitnet_forward.1} parent=1 // loop_footer
      %s22 = sadd.s32 1, %s18
    $region7: #{digitnet_forward.1} parent=1 // loop_footer_branch
      %17 = sbr.rel target = $region3
    $region8: #{digitnet_forward.1} parent=1 // loop_exit
      _
    %7050 = vsyncpa [#allocation3], 1
    %s7051 = scalar_lea.sflag [#allocation3], 1
    %7052 = vsyncpa %s7051, 1

</llo_original>
